<compile_context>
chip_gen: v6e
topology: v6e:2x2x1
jax: 0.10.0
libtpu: 0.0.40
codegen_flags: <defaults>
</compile_context>

<pallas_src>
import math

import jax
import jax.numpy as jnp
from jax import lax
from jax.experimental import pallas as pl
from jax.experimental.pallas import tpu as pltpu

_EPS = 1e-5
_GELU_C = 0.7978845608028654  # sqrt(2/pi)


# ----------------------------- in-kernel helpers -----------------------------

def _gelu(x):
    # tanh-approximate GELU: tanh goes to the EUP (its own VLIW slot); the exact
    # erf form lowers to a long VPU polynomial and this kernel is VALU-bound.
    return 0.5 * x * (1.0 + jnp.tanh(_GELU_C * (x + 0.044715 * (x * x * x))))


def _linear(x, w_bf16, b_f32):
    # bf16 MXU matmul, f32 accumulate, f32 bias add.
    y = jnp.dot(x.astype(jnp.bfloat16), w_bf16, preferred_element_type=jnp.float32)
    return y + b_f32


def _group_norm(h, gmat_s, gmat_tg, beta):
    """GroupNorm + affine on (R, C) rows.

    gmat_s:  (C, G) bf16 one-hot / group_size  (exact: 1/16, 1/4 are powers of 2)
    gmat_tg: (G, C) bf16 one-hot with gamma folded into the columns
    beta:    (1, C) f32
    """
    hb = h.astype(jnp.bfloat16)
    sq = (h * h).astype(jnp.bfloat16)          # square in f32, round once for the MXU
    mean_g = jnp.dot(hb, gmat_s, preferred_element_type=jnp.float32)   # (R, G)
    msq_g = jnp.dot(sq, gmat_s, preferred_element_type=jnp.float32)    # (R, G)
    var_g = jnp.maximum(msq_g - mean_g * mean_g, 0.0)                  # f32, clamped
    inv_g = lax.rsqrt(var_g + _EPS)                                    # EUP, group granularity
    # Broadcast back with gamma folded into the one-hot: s = gamma * inv, and
    # t = beta - gamma * inv * mean  (mean*inv computed at group granularity).
    s = jnp.dot(inv_g.astype(jnp.bfloat16), gmat_tg,
                preferred_element_type=jnp.float32)                    # (R, C)
    t = beta - jnp.dot((mean_g * inv_g).astype(jnp.bfloat16), gmat_tg,
                       preferred_element_type=jnp.float32)             # (R, C)
    return h * s + t


# --------------------------------- kernel ------------------------------------

def onn4tc_kernel(x_ref,
                  fe_w1, fe_w2, gm512_s, gm512_tg, gm128_s, gm32_s,
                  res_gt0, res_gt1, res_gt2, res_gt3,
                  res_wa, res_wb, res_wc, res_wd,
                  comp_w, ont_wm,
                  s512, s128, s32, sout,
                  o_ref):
    x = x_ref[...]                                              # (TB, cin) bf16 (pre-cast)

    # ---- FELayer: Flatten -> Linear -> GroupNorm -> GELU -> Linear ----
    h = jnp.dot(x, fe_w1[...], preferred_element_type=jnp.float32) + s512[0:1]   # (TB, 512)
    h = _group_norm(h, gm512_s[...], gm512_tg[...], s512[1:2])
    h = _gelu(h)
    h = _linear(h, fe_w2[...], s128[0:1])                       # (TB, 128)

    # ---- ResBlock: 4 x ResLayer (static unroll; per-layer loads stay inside) ----
    n_res = res_wa.shape[0]
    for l in range(n_res):
        base = 6 * l
        r = _group_norm(h, gm128_s[...], res_gt0[l], s128[1 + l:2 + l])
        r = _linear(_gelu(r), res_wa[l], s32[base + 0:base + 1])     # 128 -> 32
        r = _group_norm(r, gm32_s[...], res_gt1[l], s32[base + 1:base + 2])
        r = _linear(_gelu(r), res_wb[l], s32[base + 2:base + 3])     # 32 -> 32
        r = _group_norm(r, gm32_s[...], res_gt2[l], s32[base + 3:base + 4])
        r = _linear(_gelu(r), res_wc[l], s32[base + 4:base + 5])     # 32 -> 32
        r = _group_norm(r, gm32_s[...], res_gt3[l], s32[base + 5:base + 6])
        r = _linear(_gelu(r), res_wd[l], s128[5 + l:6 + l])          # 32 -> 128
        h = h + r                                                    # Dropout -> identity (eval)

    # ---- CompLayer: BatchNorm1d (eval, folded scale/shift) -> GELU -> Linear ----
    h = _gelu(h * s128[9:10] + s128[10:11])
    h = _linear(h, comp_w[...], sout[0:1])                      # (TB, size_out)

    # ---- OntBlock (depth 1): x + Linear_masked(GELU(LayerNorm(x))) ----
    mean = jnp.mean(h, axis=-1, keepdims=True)
    var = jnp.maximum(jnp.mean(h * h, axis=-1, keepdims=True) - mean * mean, 0.0)
    hn = (h - mean) * (sout[1:2] * lax.rsqrt(var + _EPS)) + sout[2:3]
    xx = _linear(_gelu(hn), ont_wm[...], sout[3:4])
    o_ref[...] = (h + xx).astype(o_ref.dtype)                   # Dropout -> identity (eval)


# -------------------------------- wrapper ------------------------------------

def _round_up(v, m):
    return -(-v // m) * m


def onn4tc_forward(x1, x2, params, *, tb=None):
    """Mirrors ONN4TC.forward(x1, x2); x1 is unused by the reference forward."""
    del x1
    B = x2.shape[0]
    # Pre-cast the streamed input to bf16: the first matmul truncates to bf16
    # anyway; this halves input HBM traffic and the (TB, cin) VMEM tile.
    x = x2.reshape(B, -1).astype(jnp.bfloat16)
    cin = x.shape[1]
    size_out = params[-1].shape[-1]          # slabout is (4, size_out)

    # Batch tile: big tiles amortize the ~0.35us/grid-step overhead; for small
    # batches split into 2 blocks so both v7x TensorCores get work.
    if tb is None:
        tb = 512 if B > 1024 else max(8, _round_up(_round_up(B, 2) // 2, 8))
    tb = max(8, min(_round_up(tb, 8), _round_up(B, 8)))
    n_blocks = pl.cdiv(B, tb)
    bp = n_blocks * tb
    if bp != B:
        x = jnp.pad(x, ((0, bp - B), (0, 0)))   # per-row model: padded rows are inert

    def _resident_spec(p):
        # Full-array block, constant index_map -> stays VMEM-resident across steps.
        if p.ndim == 3:
            return pl.BlockSpec(p.shape, lambda i: (0, 0, 0))
        return pl.BlockSpec(p.shape, lambda i: (0, 0))

    x_spec = pl.BlockSpec((tb, cin), lambda i: (i, 0))
    # size_out (=128 here) is lane-dense; for non-multiple-of-128 ontologies pad
    # the head width to the next multiple of 128 to avoid masked partial stores.
    out_spec = pl.BlockSpec((tb, size_out), lambda i: (i, 0))
    in_specs = [x_spec] + [_resident_spec(p) for p in params]

    # Rough cost estimate for the XLA scheduler.
    bf16_elems = sum(int(p.size) for p in params if p.dtype == jnp.bfloat16)
    gelu_per_row = 512 + 4 * (128 + 3 * 32) + 128 + size_out
    cost = pl.CostEstimate(
        flops=int(2 * bp * bf16_elems),
        transcendentals=int(bp * gelu_per_row),
        bytes_accessed=int(x.size * x.dtype.itemsize
                           + sum(int(p.size) * p.dtype.itemsize for p in params)
                           + bp * size_out * 4),
    )

    # Explicit VMEM budget: resident weights (pipeline double-buffers inputs) +
    # live f32 activations; clamp to <= 48 MiB so it is safe on v7x (64 MiB).
    param_bytes = sum(int(p.size) * p.dtype.itemsize for p in params)
    act_bytes = tb * (cin * 2 + 512 * 4 * 4)
    vmem_limit = int(min(max(2 * (param_bytes + act_bytes) + (4 << 20), 32 << 20), 48 << 20))

    out = pl.pallas_call(
        onn4tc_kernel,
        out_shape=jax.ShapeDtypeStruct((bp, size_out), jnp.float32),
        grid=(n_blocks,),
        in_specs=in_specs,
        out_specs=out_spec,
        compiler_params=pltpu.CompilerParams(
            dimension_semantics=("parallel",),
            vmem_limit_bytes=vmem_limit),
        cost_estimate=cost,
    )(x, *params)
    return out[:B]


# ----------------------------- parameter init --------------------------------

def init_onn4tc_params(key, size_genus, size_out):
    """Deterministic synthetic params mirroring the PyTorch shapes.

    Linear weights stored transposed as (in, out) in bf16.  GroupNorm one-hot
    matrices stored bf16 (exact), with gamma folded into the broadcast-back
    matrix.  All small f32 params packed into 4 slabs.
    """
    width2 = 128
    chid_fe = 4 * width2          # 512
    res_hid = width2 // 4         # 32
    depth2 = 4
    fe_groups = chid_fe // 16     # 32
    res_groups = width2 // 16     # 8

    keys = iter(jax.random.split(key, 96))
    nk = lambda: next(keys)

    def linear(cin, cout):
        bound = 1.0 / math.sqrt(cin)
        w = jax.random.uniform(nk(), (cin, cout), jnp.float32, -bound, bound)
        b = jax.random.uniform(nk(), (cout,), jnp.float32, -bound, bound)
        return w.astype(jnp.bfloat16), b

    def norm_affine(c):
        g = 1.0 + 0.01 * jax.random.normal(nk(), (c,), jnp.float32)
        b = 0.01 * jax.random.normal(nk(), (c,), jnp.float32)
        return g, b

    def gn_stats_mat(c, groups):
        gs = c // groups
        oh = jnp.repeat(jnp.eye(groups, dtype=jnp.float32), gs, axis=0)  # (C, G)
        return (oh / gs).astype(jnp.bfloat16)     # 1/16, 1/4: exact in bf16

    def gn_back_mat(c, groups, gamma):
        gs = c // groups
        oh = jnp.repeat(jnp.eye(groups, dtype=jnp.float32), gs, axis=0)  # (C, G)
        return (oh.T * gamma[None, :]).astype(jnp.bfloat16)              # (G, C), gamma folded

    # FELayer(size_genus, width2)
    fe_w1, fe_b1 = linear(size_genus, chid_fe)
    fe_gn_g, fe_gn_b = norm_affine(chid_fe)
    fe_w2, fe_b2 = linear(chid_fe, width2)

    gm512_s = gn_stats_mat(chid_fe, fe_groups)
    gm512_tg = gn_back_mat(chid_fe, fe_groups, fe_gn_g)
    gm128_s = gn_stats_mat(width2, res_groups)
    gm32_s = gn_stats_mat(res_hid, res_groups)

    # ResBlock(width2, depth2)
    res_gt0, res_gt1, res_gt2, res_gt3 = [], [], [], []
    res_wa, res_wb, res_wc, res_wd = [], [], [], []
    beta0_rows, bd_rows, s32_rows = [], [], []
    for _ in range(depth2):
        g0, b0 = norm_affine(width2)
        wa, ba = linear(width2, res_hid)
        g1, b1 = norm_affine(res_hid)
        wb, bb = linear(res_hid, res_hid)
        g2, b2 = norm_affine(res_hid)
        wc, bc = linear(res_hid, res_hid)
        g3, b3 = norm_affine(res_hid)
        wd, bd = linear(res_hid, width2)
        res_gt0.append(gn_back_mat(width2, res_groups, g0))
        res_gt1.append(gn_back_mat(res_hid, res_groups, g1))
        res_gt2.append(gn_back_mat(res_hid, res_groups, g2))
        res_gt3.append(gn_back_mat(res_hid, res_groups, g3))
        res_wa.append(wa); res_wb.append(wb); res_wc.append(wc); res_wd.append(wd)
        beta0_rows.append(b0); bd_rows.append(bd)
        s32_rows += [ba, b1, bb, b2, bc, b3]     # layout must match kernel indexing

    # CompLayer(width2, size_out): eval-mode BatchNorm folded into scale/shift.
    bn_g, bn_b = norm_affine(width2)
    running_mean = 0.1 * jax.random.normal(nk(), (width2,), jnp.float32)
    running_var = 1.0 + 0.1 * jax.random.uniform(nk(), (width2,), jnp.float32)
    comp_scale = bn_g / jnp.sqrt(running_var + _EPS)
    comp_shift = bn_b - running_mean * comp_scale
    comp_w, comp_b = linear(width2, size_out)

    # OntLayer(size_out): LayerNorm + masked Linear (mask pre-applied, pre-transposed).
    ont_ln_g, ont_ln_b = norm_affine(size_out)
    bound = 1.0 / math.sqrt(size_out)
    w_ont = jax.random.uniform(nk(), (size_out, size_out), jnp.float32, -bound, bound)
    ont_bias = jax.random.uniform(nk(), (size_out,), jnp.float32, -bound, bound)
    ontology = (jax.random.uniform(nk(), (size_out, size_out), jnp.float32) < 0.5
                ).astype(jnp.float32)
    # TODO(synk): when importing real torch weights, match the mask orientation to W (out,in).
    ont_wm = ((w_ont * ontology).T).astype(jnp.bfloat16)

    # ---- pack the small f32 params into slabs ----
    slab512 = jnp.stack([fe_b1, fe_gn_b], axis=0)                          # (2, 512)
    slab128 = jnp.stack([fe_b2] + beta0_rows + bd_rows
                        + [comp_scale, comp_shift], axis=0)                # (11, 128)
    slab32 = jnp.stack(s32_rows, axis=0)                                   # (24, 32)
    slabout = jnp.stack([comp_b, ont_ln_g, ont_ln_b, ont_bias], axis=0)    # (4, size_out)

    return (fe_w1, fe_w2, gm512_s, gm512_tg, gm128_s, gm32_s,
            jnp.stack(res_gt0), jnp.stack(res_gt1),
            jnp.stack(res_gt2), jnp.stack(res_gt3),
            jnp.stack(res_wa), jnp.stack(res_wb),
            jnp.stack(res_wc), jnp.stack(res_wd),
            comp_w, ont_wm,
            slab512, slab128, slab32, slabout)


if __name__ == "__main__":
    # Small shapes: B=16, size_marker=64 (x1, unused), size_genus=256, size_out=128.
    B, size_marker, size_genus, size_out = 16, 64, 256, 128

    key = jax.random.PRNGKey(0)
    kx1, kx2, kp = jax.random.split(key, 3)
    x1 = jax.random.normal(kx1, (B, size_marker), jnp.float32)   # unused by forward
    x2 = jax.random.normal(kx2, (B, size_genus), jnp.float32)
    params = init_onn4tc_params(kp, size_genus, size_out)

    out = onn4tc_forward(x1, x2, params)       # auto tile -> 2 blocks of 8 rows
    out = jax.block_until_ready(out)
    assert out.shape == (B, size_out), out.shape
    assert bool(jnp.all(jnp.isfinite(out)))
    print("KERNEL_OK")
</pallas_src>

<mosaic_0001>
module attributes {stable_mosaic.version = 11 : i64} {
  func.func @onn4tc_kernel(%arg0: i32, %arg1: memref<8x256xbf16, #tpu.memory_space<vmem>>, %arg2: memref<256x512xbf16, #tpu.memory_space<vmem>>, %arg3: memref<512x128xbf16, #tpu.memory_space<vmem>>, %arg4: memref<512x32xbf16, #tpu.memory_space<vmem>>, %arg5: memref<32x512xbf16, #tpu.memory_space<vmem>>, %arg6: memref<128x8xbf16, #tpu.memory_space<vmem>>, %arg7: memref<32x8xbf16, #tpu.memory_space<vmem>>, %arg8: memref<4x8x128xbf16, #tpu.memory_space<vmem>>, %arg9: memref<4x8x32xbf16, #tpu.memory_space<vmem>>, %arg10: memref<4x8x32xbf16, #tpu.memory_space<vmem>>, %arg11: memref<4x8x32xbf16, #tpu.memory_space<vmem>>, %arg12: memref<4x128x32xbf16, #tpu.memory_space<vmem>>, %arg13: memref<4x32x32xbf16, #tpu.memory_space<vmem>>, %arg14: memref<4x32x32xbf16, #tpu.memory_space<vmem>>, %arg15: memref<4x32x128xbf16, #tpu.memory_space<vmem>>, %arg16: memref<128x128xbf16, #tpu.memory_space<vmem>>, %arg17: memref<128x128xbf16, #tpu.memory_space<vmem>>, %arg18: memref<2x512xf32, #tpu.memory_space<vmem>>, %arg19: memref<11x128xf32, #tpu.memory_space<vmem>>, %arg20: memref<24x32xf32, #tpu.memory_space<vmem>>, %arg21: memref<4x128xf32, #tpu.memory_space<vmem>>, %arg22: memref<8x128xf32, #tpu.memory_space<vmem>>) attributes {dimension_semantics = [#tpu.dimension_semantics<parallel>], iteration_bounds = array<i64: 2>, scalar_prefetch = 0 : i64, scratch_operands = 0 : i64, tpu.core_type = #tpu.core_type<tc>, window_params = [{transform_indices = @transform_0, window_bounds = array<i64: 8, 256>}, {pipeline_mode = #tpu.pipeline_mode<synchronous>, transform_indices = @transform_1, window_bounds = array<i64: 256, 512>}, {pipeline_mode = #tpu.pipeline_mode<synchronous>, transform_indices = @transform_2, window_bounds = array<i64: 512, 128>}, {pipeline_mode = #tpu.pipeline_mode<synchronous>, transform_indices = @transform_3, window_bounds = array<i64: 512, 32>}, {pipeline_mode = #tpu.pipeline_mode<synchronous>, transform_indices = @transform_4, window_bounds = array<i64: 32, 512>}, {pipeline_mode = #tpu.pipeline_mode<synchronous>, transform_indices = @transform_5, window_bounds = array<i64: 128, 8>}, {pipeline_mode = #tpu.pipeline_mode<synchronous>, transform_indices = @transform_6, window_bounds = array<i64: 32, 8>}, {pipeline_mode = #tpu.pipeline_mode<synchronous>, transform_indices = @transform_7, window_bounds = array<i64: 4, 8, 128>}, {pipeline_mode = #tpu.pipeline_mode<synchronous>, transform_indices = @transform_8, window_bounds = array<i64: 4, 8, 32>}, {pipeline_mode = #tpu.pipeline_mode<synchronous>, transform_indices = @transform_9, window_bounds = array<i64: 4, 8, 32>}, {pipeline_mode = #tpu.pipeline_mode<synchronous>, transform_indices = @transform_10, window_bounds = array<i64: 4, 8, 32>}, {pipeline_mode = #tpu.pipeline_mode<synchronous>, transform_indices = @transform_11, window_bounds = array<i64: 4, 128, 32>}, {pipeline_mode = #tpu.pipeline_mode<synchronous>, transform_indices = @transform_12, window_bounds = array<i64: 4, 32, 32>}, {pipeline_mode = #tpu.pipeline_mode<synchronous>, transform_indices = @transform_13, window_bounds = array<i64: 4, 32, 32>}, {pipeline_mode = #tpu.pipeline_mode<synchronous>, transform_indices = @transform_14, window_bounds = array<i64: 4, 32, 128>}, {pipeline_mode = #tpu.pipeline_mode<synchronous>, transform_indices = @transform_15, window_bounds = array<i64: 128, 128>}, {pipeline_mode = #tpu.pipeline_mode<synchronous>, transform_indices = @transform_16, window_bounds = array<i64: 128, 128>}, {pipeline_mode = #tpu.pipeline_mode<synchronous>, transform_indices = @transform_17, window_bounds = array<i64: 2, 512>}, {pipeline_mode = #tpu.pipeline_mode<synchronous>, transform_indices = @transform_18, window_bounds = array<i64: 11, 128>}, {pipeline_mode = #tpu.pipeline_mode<synchronous>, transform_indices = @transform_19, window_bounds = array<i64: 24, 32>}, {pipeline_mode = #tpu.pipeline_mode<synchronous>, transform_indices = @transform_20, window_bounds = array<i64: 4, 128>}, {transform_indices = @transform_21, window_bounds = array<i64: 8, 128>}]} {
    %c0 = arith.constant 0 : index
    %c0_0 = arith.constant 0 : index
    %0 = vector.load %arg1[%c0, %c0_0] : memref<8x256xbf16, #tpu.memory_space<vmem>>, vector<8x256xbf16>
    %c0_1 = arith.constant 0 : index
    %c0_2 = arith.constant 0 : index
    %1 = vector.load %arg2[%c0_1, %c0_2] : memref<256x512xbf16, #tpu.memory_space<vmem>>, vector<256x512xbf16>
    %cst = arith.constant dense<0.000000e+00> : vector<8x512xf32>
    %2 = tpu.matmul %0, %1, %cst {dimension_numbers = #tpu.dot_dimension_numbers<[1], [0], [0], [1], [0, 0, 1, 1], [], []>} : vector<8x256xbf16>, vector<256x512xbf16>, vector<8x512xf32> -> vector<8x512xf32>
    %c0_3 = arith.constant 0 : index
    %c0_4 = arith.constant 0 : index
    %3 = vector.load %arg18[%c0_3, %c0_4] : memref<2x512xf32, #tpu.memory_space<vmem>>, vector<1x512xf32>
    %4 = vector.broadcast %3 : vector<1x512xf32> to vector<8x512xf32>
    %5 = arith.addf %2, %4 : vector<8x512xf32>
    %c0_5 = arith.constant 0 : index
    %c0_6 = arith.constant 0 : index
    %6 = vector.load %arg4[%c0_5, %c0_6] : memref<512x32xbf16, #tpu.memory_space<vmem>>, vector<512x32xbf16>
    %c0_7 = arith.constant 0 : index
    %c0_8 = arith.constant 0 : index
    %7 = vector.load %arg5[%c0_7, %c0_8] : memref<32x512xbf16, #tpu.memory_space<vmem>>, vector<32x512xbf16>
    %c1 = arith.constant 1 : index
    %c0_9 = arith.constant 0 : index
    %8 = vector.load %arg18[%c1, %c0_9] : memref<2x512xf32, #tpu.memory_space<vmem>>, vector<1x512xf32>
    %9 = arith.truncf %5 : vector<8x512xf32> to vector<8x512xbf16>
    %10 = arith.mulf %5, %5 : vector<8x512xf32>
    %11 = arith.truncf %10 : vector<8x512xf32> to vector<8x512xbf16>
    %cst_10 = arith.constant dense<0.000000e+00> : vector<8x32xf32>
    %12 = tpu.matmul %9, %6, %cst_10 {dimension_numbers = #tpu.dot_dimension_numbers<[1], [0], [0], [1], [0, 0, 1, 1], [], []>} : vector<8x512xbf16>, vector<512x32xbf16>, vector<8x32xf32> -> vector<8x32xf32>
    %cst_11 = arith.constant dense<0.000000e+00> : vector<8x32xf32>
    %13 = tpu.matmul %11, %6, %cst_11 {dimension_numbers = #tpu.dot_dimension_numbers<[1], [0], [0], [1], [0, 0, 1, 1], [], []>} : vector<8x512xbf16>, vector<512x32xbf16>, vector<8x32xf32> -> vector<8x32xf32>
    %14 = arith.mulf %12, %12 : vector<8x32xf32>
    %15 = arith.subf %13, %14 : vector<8x32xf32>
    %cst_12 = arith.constant 0.000000e+00 : f32
    %16 = vector.broadcast %cst_12 : f32 to vector<8x32xf32>
    %17 = arith.maximumf %15, %16 : vector<8x32xf32>
    %cst_13 = arith.constant 9.99999974E-6 : f32
    %18 = vector.broadcast %cst_13 : f32 to vector<8x32xf32>
    %19 = arith.addf %17, %18 : vector<8x32xf32>
    %20 = math.rsqrt %19 : vector<8x32xf32>
    %21 = arith.truncf %20 : vector<8x32xf32> to vector<8x32xbf16>
    %cst_14 = arith.constant dense<0.000000e+00> : vector<8x512xf32>
    %22 = tpu.matmul %21, %7, %cst_14 {dimension_numbers = #tpu.dot_dimension_numbers<[1], [0], [0], [1], [0, 0, 1, 1], [], []>} : vector<8x32xbf16>, vector<32x512xbf16>, vector<8x512xf32> -> vector<8x512xf32>
    %23 = arith.mulf %12, %20 : vector<8x32xf32>
    %24 = arith.truncf %23 : vector<8x32xf32> to vector<8x32xbf16>
    %cst_15 = arith.constant dense<0.000000e+00> : vector<8x512xf32>
    %25 = tpu.matmul %24, %7, %cst_15 {dimension_numbers = #tpu.dot_dimension_numbers<[1], [0], [0], [1], [0, 0, 1, 1], [], []>} : vector<8x32xbf16>, vector<32x512xbf16>, vector<8x512xf32> -> vector<8x512xf32>
    %26 = vector.broadcast %8 : vector<1x512xf32> to vector<8x512xf32>
    %27 = arith.subf %26, %25 : vector<8x512xf32>
    %28 = arith.mulf %5, %22 : vector<8x512xf32>
    %29 = arith.addf %28, %27 : vector<8x512xf32>
    %cst_16 = arith.constant 5.000000e-01 : f32
    %30 = vector.broadcast %cst_16 : f32 to vector<8x512xf32>
    %31 = arith.mulf %30, %29 : vector<8x512xf32>
    %32 = arith.mulf %29, %29 : vector<8x512xf32>
    %33 = arith.mulf %32, %29 : vector<8x512xf32>
    %cst_17 = arith.constant 4.471500e-02 : f32
    %34 = vector.broadcast %cst_17 : f32 to vector<8x512xf32>
    %35 = arith.mulf %34, %33 : vector<8x512xf32>
    %36 = arith.addf %29, %35 : vector<8x512xf32>
    %cst_18 = arith.constant 0.797884583 : f32
    %37 = vector.broadcast %cst_18 : f32 to vector<8x512xf32>
    %38 = arith.mulf %37, %36 : vector<8x512xf32>
    %39 = math.tanh %38 : vector<8x512xf32>
    %cst_19 = arith.constant 1.000000e+00 : f32
    %40 = vector.broadcast %cst_19 : f32 to vector<8x512xf32>
    %41 = arith.addf %40, %39 : vector<8x512xf32>
    %42 = arith.mulf %31, %41 : vector<8x512xf32>
    %c0_20 = arith.constant 0 : index
    %c0_21 = arith.constant 0 : index
    %43 = vector.load %arg3[%c0_20, %c0_21] : memref<512x128xbf16, #tpu.memory_space<vmem>>, vector<512x128xbf16>
    %c0_22 = arith.constant 0 : index
    %c0_23 = arith.constant 0 : index
    %44 = vector.load %arg19[%c0_22, %c0_23] : memref<11x128xf32, #tpu.memory_space<vmem>>, vector<1x128xf32>
    %45 = arith.truncf %42 : vector<8x512xf32> to vector<8x512xbf16>
    %cst_24 = arith.constant dense<0.000000e+00> : vector<8x128xf32>
    %46 = tpu.matmul %45, %43, %cst_24 {dimension_numbers = #tpu.dot_dimension_numbers<[1], [0], [0], [1], [0, 0, 1, 1], [], []>} : vector<8x512xbf16>, vector<512x128xbf16>, vector<8x128xf32> -> vector<8x128xf32>
    %47 = vector.broadcast %44 : vector<1x128xf32> to vector<8x128xf32>
    %48 = arith.addf %46, %47 : vector<8x128xf32>
    %c0_25 = arith.constant 0 : index
    %c0_26 = arith.constant 0 : index
    %49 = vector.load %arg6[%c0_25, %c0_26] : memref<128x8xbf16, #tpu.memory_space<vmem>>, vector<128x8xbf16>
    %c0_27 = arith.constant 0 : index
    %c0_28 = arith.constant 0 : index
    %c0_29 = arith.constant 0 : index
    %50 = vector.load %arg8[%c0_27, %c0_28, %c0_29] : memref<4x8x128xbf16, #tpu.memory_space<vmem>>, vector<1x8x128xbf16>
    %51 = vector.shape_cast %50 : vector<1x8x128xbf16> to vector<8x128xbf16>
    %c1_30 = arith.constant 1 : index
    %c0_31 = arith.constant 0 : index
    %52 = vector.load %arg19[%c1_30, %c0_31] : memref<11x128xf32, #tpu.memory_space<vmem>>, vector<1x128xf32>
    %53 = arith.truncf %48 : vector<8x128xf32> to vector<8x128xbf16>
    %54 = arith.mulf %48, %48 : vector<8x128xf32>
    %55 = arith.truncf %54 : vector<8x128xf32> to vector<8x128xbf16>
    %cst_32 = arith.constant dense<0.000000e+00> : vector<8x8xf32>
    %56 = tpu.matmul %53, %49, %cst_32 {dimension_numbers = #tpu.dot_dimension_numbers<[1], [0], [0], [1], [0, 0, 1, 1], [], []>} : vector<8x128xbf16>, vector<128x8xbf16>, vector<8x8xf32> -> vector<8x8xf32>
    %cst_33 = arith.constant dense<0.000000e+00> : vector<8x8xf32>
    %57 = tpu.matmul %55, %49, %cst_33 {dimension_numbers = #tpu.dot_dimension_numbers<[1], [0], [0], [1], [0, 0, 1, 1], [], []>} : vector<8x128xbf16>, vector<128x8xbf16>, vector<8x8xf32> -> vector<8x8xf32>
    %58 = arith.mulf %56, %56 : vector<8x8xf32>
    %59 = arith.subf %57, %58 : vector<8x8xf32>
    %cst_34 = arith.constant 0.000000e+00 : f32
    %60 = vector.broadcast %cst_34 : f32 to vector<8x8xf32>
    %61 = arith.maximumf %59, %60 : vector<8x8xf32>
    %cst_35 = arith.constant 9.99999974E-6 : f32
    %62 = vector.broadcast %cst_35 : f32 to vector<8x8xf32>
    %63 = arith.addf %61, %62 : vector<8x8xf32>
    %64 = math.rsqrt %63 : vector<8x8xf32>
    %65 = arith.truncf %64 : vector<8x8xf32> to vector<8x8xbf16>
    %cst_36 = arith.constant dense<0.000000e+00> : vector<8x128xf32>
    %66 = tpu.matmul %65, %51, %cst_36 {dimension_numbers = #tpu.dot_dimension_numbers<[1], [0], [0], [1], [0, 0, 1, 1], [], []>} : vector<8x8xbf16>, vector<8x128xbf16>, vector<8x128xf32> -> vector<8x128xf32>
    %67 = arith.mulf %56, %64 : vector<8x8xf32>
    %68 = arith.truncf %67 : vector<8x8xf32> to vector<8x8xbf16>
    %cst_37 = arith.constant dense<0.000000e+00> : vector<8x128xf32>
    %69 = tpu.matmul %68, %51, %cst_37 {dimension_numbers = #tpu.dot_dimension_numbers<[1], [0], [0], [1], [0, 0, 1, 1], [], []>} : vector<8x8xbf16>, vector<8x128xbf16>, vector<8x128xf32> -> vector<8x128xf32>
    %70 = vector.broadcast %52 : vector<1x128xf32> to vector<8x128xf32>
    %71 = arith.subf %70, %69 : vector<8x128xf32>
    %72 = arith.mulf %48, %66 : vector<8x128xf32>
    %73 = arith.addf %72, %71 : vector<8x128xf32>
    %cst_38 = arith.constant 5.000000e-01 : f32
    %74 = vector.broadcast %cst_38 : f32 to vector<8x128xf32>
    %75 = arith.mulf %74, %73 : vector<8x128xf32>
    %76 = arith.mulf %73, %73 : vector<8x128xf32>
    %77 = arith.mulf %76, %73 : vector<8x128xf32>
    %cst_39 = arith.constant 4.471500e-02 : f32
    %78 = vector.broadcast %cst_39 : f32 to vector<8x128xf32>
    %79 = arith.mulf %78, %77 : vector<8x128xf32>
    %80 = arith.addf %73, %79 : vector<8x128xf32>
    %cst_40 = arith.constant 0.797884583 : f32
    %81 = vector.broadcast %cst_40 : f32 to vector<8x128xf32>
    %82 = arith.mulf %81, %80 : vector<8x128xf32>
    %83 = math.tanh %82 : vector<8x128xf32>
    %cst_41 = arith.constant 1.000000e+00 : f32
    %84 = vector.broadcast %cst_41 : f32 to vector<8x128xf32>
    %85 = arith.addf %84, %83 : vector<8x128xf32>
    %86 = arith.mulf %75, %85 : vector<8x128xf32>
    %c0_42 = arith.constant 0 : index
    %c0_43 = arith.constant 0 : index
    %c0_44 = arith.constant 0 : index
    %87 = vector.load %arg12[%c0_42, %c0_43, %c0_44] : memref<4x128x32xbf16, #tpu.memory_space<vmem>>, vector<1x128x32xbf16>
    %88 = vector.shape_cast %87 : vector<1x128x32xbf16> to vector<128x32xbf16>
    %c0_45 = arith.constant 0 : index
    %c0_46 = arith.constant 0 : index
    %89 = vector.load %arg20[%c0_45, %c0_46] : memref<24x32xf32, #tpu.memory_space<vmem>>, vector<1x32xf32>
    %90 = arith.truncf %86 : vector<8x128xf32> to vector<8x128xbf16>
    %cst_47 = arith.constant dense<0.000000e+00> : vector<8x32xf32>
    %91 = tpu.matmul %90, %88, %cst_47 {dimension_numbers = #tpu.dot_dimension_numbers<[1], [0], [0], [1], [0, 0, 1, 1], [], []>} : vector<8x128xbf16>, vector<128x32xbf16>, vector<8x32xf32> -> vector<8x32xf32>
    %92 = vector.broadcast %89 : vector<1x32xf32> to vector<8x32xf32>
    %93 = arith.addf %91, %92 : vector<8x32xf32>
    %c0_48 = arith.constant 0 : index
    %c0_49 = arith.constant 0 : index
    %94 = vector.load %arg7[%c0_48, %c0_49] : memref<32x8xbf16, #tpu.memory_space<vmem>>, vector<32x8xbf16>
    %c0_50 = arith.constant 0 : index
    %c0_51 = arith.constant 0 : index
    %c0_52 = arith.constant 0 : index
    %95 = vector.load %arg9[%c0_50, %c0_51, %c0_52] : memref<4x8x32xbf16, #tpu.memory_space<vmem>>, vector<1x8x32xbf16>
    %96 = vector.shape_cast %95 : vector<1x8x32xbf16> to vector<8x32xbf16>
    %c1_53 = arith.constant 1 : index
    %c0_54 = arith.constant 0 : index
    %97 = vector.load %arg20[%c1_53, %c0_54] : memref<24x32xf32, #tpu.memory_space<vmem>>, vector<1x32xf32>
    %98 = arith.truncf %93 : vector<8x32xf32> to vector<8x32xbf16>
    %99 = arith.mulf %93, %93 : vector<8x32xf32>
    %100 = arith.truncf %99 : vector<8x32xf32> to vector<8x32xbf16>
    %cst_55 = arith.constant dense<0.000000e+00> : vector<8x8xf32>
    %101 = tpu.matmul %98, %94, %cst_55 {dimension_numbers = #tpu.dot_dimension_numbers<[1], [0], [0], [1], [0, 0, 1, 1], [], []>} : vector<8x32xbf16>, vector<32x8xbf16>, vector<8x8xf32> -> vector<8x8xf32>
    %cst_56 = arith.constant dense<0.000000e+00> : vector<8x8xf32>
    %102 = tpu.matmul %100, %94, %cst_56 {dimension_numbers = #tpu.dot_dimension_numbers<[1], [0], [0], [1], [0, 0, 1, 1], [], []>} : vector<8x32xbf16>, vector<32x8xbf16>, vector<8x8xf32> -> vector<8x8xf32>
    %103 = arith.mulf %101, %101 : vector<8x8xf32>
    %104 = arith.subf %102, %103 : vector<8x8xf32>
    %cst_57 = arith.constant 0.000000e+00 : f32
    %105 = vector.broadcast %cst_57 : f32 to vector<8x8xf32>
    %106 = arith.maximumf %104, %105 : vector<8x8xf32>
    %cst_58 = arith.constant 9.99999974E-6 : f32
    %107 = vector.broadcast %cst_58 : f32 to vector<8x8xf32>
    %108 = arith.addf %106, %107 : vector<8x8xf32>
    %109 = math.rsqrt %108 : vector<8x8xf32>
    %110 = arith.truncf %109 : vector<8x8xf32> to vector<8x8xbf16>
    %cst_59 = arith.constant dense<0.000000e+00> : vector<8x32xf32>
    %111 = tpu.matmul %110, %96, %cst_59 {dimension_numbers = #tpu.dot_dimension_numbers<[1], [0], [0], [1], [0, 0, 1, 1], [], []>} : vector<8x8xbf16>, vector<8x32xbf16>, vector<8x32xf32> -> vector<8x32xf32>
    %112 = arith.mulf %101, %109 : vector<8x8xf32>
    %113 = arith.truncf %112 : vector<8x8xf32> to vector<8x8xbf16>
    %cst_60 = arith.constant dense<0.000000e+00> : vector<8x32xf32>
    %114 = tpu.matmul %113, %96, %cst_60 {dimension_numbers = #tpu.dot_dimension_numbers<[1], [0], [0], [1], [0, 0, 1, 1], [], []>} : vector<8x8xbf16>, vector<8x32xbf16>, vector<8x32xf32> -> vector<8x32xf32>
    %115 = vector.broadcast %97 : vector<1x32xf32> to vector<8x32xf32>
    %116 = arith.subf %115, %114 : vector<8x32xf32>
    %117 = arith.mulf %93, %111 : vector<8x32xf32>
    %118 = arith.addf %117, %116 : vector<8x32xf32>
    %cst_61 = arith.constant 5.000000e-01 : f32
    %119 = vector.broadcast %cst_61 : f32 to vector<8x32xf32>
    %120 = arith.mulf %119, %118 : vector<8x32xf32>
    %121 = arith.mulf %118, %118 : vector<8x32xf32>
    %122 = arith.mulf %121, %118 : vector<8x32xf32>
    %cst_62 = arith.constant 4.471500e-02 : f32
    %123 = vector.broadcast %cst_62 : f32 to vector<8x32xf32>
    %124 = arith.mulf %123, %122 : vector<8x32xf32>
    %125 = arith.addf %118, %124 : vector<8x32xf32>
    %cst_63 = arith.constant 0.797884583 : f32
    %126 = vector.broadcast %cst_63 : f32 to vector<8x32xf32>
    %127 = arith.mulf %126, %125 : vector<8x32xf32>
    %128 = math.tanh %127 : vector<8x32xf32>
    %cst_64 = arith.constant 1.000000e+00 : f32
    %129 = vector.broadcast %cst_64 : f32 to vector<8x32xf32>
    %130 = arith.addf %129, %128 : vector<8x32xf32>
    %131 = arith.mulf %120, %130 : vector<8x32xf32>
    %c0_65 = arith.constant 0 : index
    %c0_66 = arith.constant 0 : index
    %c0_67 = arith.constant 0 : index
    %132 = vector.load %arg13[%c0_65, %c0_66, %c0_67] : memref<4x32x32xbf16, #tpu.memory_space<vmem>>, vector<1x32x32xbf16>
    %133 = vector.shape_cast %132 : vector<1x32x32xbf16> to vector<32x32xbf16>
    %c2 = arith.constant 2 : index
    %c0_68 = arith.constant 0 : index
    %134 = vector.load %arg20[%c2, %c0_68] : memref<24x32xf32, #tpu.memory_space<vmem>>, vector<1x32xf32>
    %135 = arith.truncf %131 : vector<8x32xf32> to vector<8x32xbf16>
    %cst_69 = arith.constant dense<0.000000e+00> : vector<8x32xf32>
    %136 = tpu.matmul %135, %133, %cst_69 {dimension_numbers = #tpu.dot_dimension_numbers<[1], [0], [0], [1], [0, 0, 1, 1], [], []>} : vector<8x32xbf16>, vector<32x32xbf16>, vector<8x32xf32> -> vector<8x32xf32>
    %137 = vector.broadcast %134 : vector<1x32xf32> to vector<8x32xf32>
    %138 = arith.addf %136, %137 : vector<8x32xf32>
    %c0_70 = arith.constant 0 : index
    %c0_71 = arith.constant 0 : index
    %139 = vector.load %arg7[%c0_70, %c0_71] : memref<32x8xbf16, #tpu.memory_space<vmem>>, vector<32x8xbf16>
    %c0_72 = arith.constant 0 : index
    %c0_73 = arith.constant 0 : index
    %c0_74 = arith.constant 0 : index
    %140 = vector.load %arg10[%c0_72, %c0_73, %c0_74] : memref<4x8x32xbf16, #tpu.memory_space<vmem>>, vector<1x8x32xbf16>
    %141 = vector.shape_cast %140 : vector<1x8x32xbf16> to vector<8x32xbf16>
    %c3 = arith.constant 3 : index
    %c0_75 = arith.constant 0 : index
    %142 = vector.load %arg20[%c3, %c0_75] : memref<24x32xf32, #tpu.memory_space<vmem>>, vector<1x32xf32>
    %143 = arith.truncf %138 : vector<8x32xf32> to vector<8x32xbf16>
    %144 = arith.mulf %138, %138 : vector<8x32xf32>
    %145 = arith.truncf %144 : vector<8x32xf32> to vector<8x32xbf16>
    %cst_76 = arith.constant dense<0.000000e+00> : vector<8x8xf32>
    %146 = tpu.matmul %143, %139, %cst_76 {dimension_numbers = #tpu.dot_dimension_numbers<[1], [0], [0], [1], [0, 0, 1, 1], [], []>} : vector<8x32xbf16>, vector<32x8xbf16>, vector<8x8xf32> -> vector<8x8xf32>
    %cst_77 = arith.constant dense<0.000000e+00> : vector<8x8xf32>
    %147 = tpu.matmul %145, %139, %cst_77 {dimension_numbers = #tpu.dot_dimension_numbers<[1], [0], [0], [1], [0, 0, 1, 1], [], []>} : vector<8x32xbf16>, vector<32x8xbf16>, vector<8x8xf32> -> vector<8x8xf32>
    %148 = arith.mulf %146, %146 : vector<8x8xf32>
    %149 = arith.subf %147, %148 : vector<8x8xf32>
    %cst_78 = arith.constant 0.000000e+00 : f32
    %150 = vector.broadcast %cst_78 : f32 to vector<8x8xf32>
    %151 = arith.maximumf %149, %150 : vector<8x8xf32>
    %cst_79 = arith.constant 9.99999974E-6 : f32
    %152 = vector.broadcast %cst_79 : f32 to vector<8x8xf32>
    %153 = arith.addf %151, %152 : vector<8x8xf32>
    %154 = math.rsqrt %153 : vector<8x8xf32>
    %155 = arith.truncf %154 : vector<8x8xf32> to vector<8x8xbf16>
    %cst_80 = arith.constant dense<0.000000e+00> : vector<8x32xf32>
    %156 = tpu.matmul %155, %141, %cst_80 {dimension_numbers = #tpu.dot_dimension_numbers<[1], [0], [0], [1], [0, 0, 1, 1], [], []>} : vector<8x8xbf16>, vector<8x32xbf16>, vector<8x32xf32> -> vector<8x32xf32>
    %157 = arith.mulf %146, %154 : vector<8x8xf32>
    %158 = arith.truncf %157 : vector<8x8xf32> to vector<8x8xbf16>
    %cst_81 = arith.constant dense<0.000000e+00> : vector<8x32xf32>
    %159 = tpu.matmul %158, %141, %cst_81 {dimension_numbers = #tpu.dot_dimension_numbers<[1], [0], [0], [1], [0, 0, 1, 1], [], []>} : vector<8x8xbf16>, vector<8x32xbf16>, vector<8x32xf32> -> vector<8x32xf32>
    %160 = vector.broadcast %142 : vector<1x32xf32> to vector<8x32xf32>
    %161 = arith.subf %160, %159 : vector<8x32xf32>
    %162 = arith.mulf %138, %156 : vector<8x32xf32>
    %163 = arith.addf %162, %161 : vector<8x32xf32>
    %cst_82 = arith.constant 5.000000e-01 : f32
    %164 = vector.broadcast %cst_82 : f32 to vector<8x32xf32>
    %165 = arith.mulf %164, %163 : vector<8x32xf32>
    %166 = arith.mulf %163, %163 : vector<8x32xf32>
    %167 = arith.mulf %166, %163 : vector<8x32xf32>
    %cst_83 = arith.constant 4.471500e-02 : f32
    %168 = vector.broadcast %cst_83 : f32 to vector<8x32xf32>
    %169 = arith.mulf %168, %167 : vector<8x32xf32>
    %170 = arith.addf %163, %169 : vector<8x32xf32>
    %cst_84 = arith.constant 0.797884583 : f32
    %171 = vector.broadcast %cst_84 : f32 to vector<8x32xf32>
    %172 = arith.mulf %171, %170 : vector<8x32xf32>
    %173 = math.tanh %172 : vector<8x32xf32>
    %cst_85 = arith.constant 1.000000e+00 : f32
    %174 = vector.broadcast %cst_85 : f32 to vector<8x32xf32>
    %175 = arith.addf %174, %173 : vector<8x32xf32>
    %176 = arith.mulf %165, %175 : vector<8x32xf32>
    %c0_86 = arith.constant 0 : index
    %c0_87 = arith.constant 0 : index
    %c0_88 = arith.constant 0 : index
    %177 = vector.load %arg14[%c0_86, %c0_87, %c0_88] : memref<4x32x32xbf16, #tpu.memory_space<vmem>>, vector<1x32x32xbf16>
    %178 = vector.shape_cast %177 : vector<1x32x32xbf16> to vector<32x32xbf16>
    %c4 = arith.constant 4 : index
    %c0_89 = arith.constant 0 : index
    %179 = vector.load %arg20[%c4, %c0_89] : memref<24x32xf32, #tpu.memory_space<vmem>>, vector<1x32xf32>
    %180 = arith.truncf %176 : vector<8x32xf32> to vector<8x32xbf16>
    %cst_90 = arith.constant dense<0.000000e+00> : vector<8x32xf32>
    %181 = tpu.matmul %180, %178, %cst_90 {dimension_numbers = #tpu.dot_dimension_numbers<[1], [0], [0], [1], [0, 0, 1, 1], [], []>} : vector<8x32xbf16>, vector<32x32xbf16>, vector<8x32xf32> -> vector<8x32xf32>
    %182 = vector.broadcast %179 : vector<1x32xf32> to vector<8x32xf32>
    %183 = arith.addf %181, %182 : vector<8x32xf32>
    %c0_91 = arith.constant 0 : index
    %c0_92 = arith.constant 0 : index
    %184 = vector.load %arg7[%c0_91, %c0_92] : memref<32x8xbf16, #tpu.memory_space<vmem>>, vector<32x8xbf16>
    %c0_93 = arith.constant 0 : index
    %c0_94 = arith.constant 0 : index
    %c0_95 = arith.constant 0 : index
    %185 = vector.load %arg11[%c0_93, %c0_94, %c0_95] : memref<4x8x32xbf16, #tpu.memory_space<vmem>>, vector<1x8x32xbf16>
    %186 = vector.shape_cast %185 : vector<1x8x32xbf16> to vector<8x32xbf16>
    %c5 = arith.constant 5 : index
    %c0_96 = arith.constant 0 : index
    %187 = vector.load %arg20[%c5, %c0_96] : memref<24x32xf32, #tpu.memory_space<vmem>>, vector<1x32xf32>
    %188 = arith.truncf %183 : vector<8x32xf32> to vector<8x32xbf16>
    %189 = arith.mulf %183, %183 : vector<8x32xf32>
    %190 = arith.truncf %189 : vector<8x32xf32> to vector<8x32xbf16>
    %cst_97 = arith.constant dense<0.000000e+00> : vector<8x8xf32>
    %191 = tpu.matmul %188, %184, %cst_97 {dimension_numbers = #tpu.dot_dimension_numbers<[1], [0], [0], [1], [0, 0, 1, 1], [], []>} : vector<8x32xbf16>, vector<32x8xbf16>, vector<8x8xf32> -> vector<8x8xf32>
    %cst_98 = arith.constant dense<0.000000e+00> : vector<8x8xf32>
    %192 = tpu.matmul %190, %184, %cst_98 {dimension_numbers = #tpu.dot_dimension_numbers<[1], [0], [0], [1], [0, 0, 1, 1], [], []>} : vector<8x32xbf16>, vector<32x8xbf16>, vector<8x8xf32> -> vector<8x8xf32>
    %193 = arith.mulf %191, %191 : vector<8x8xf32>
    %194 = arith.subf %192, %193 : vector<8x8xf32>
    %cst_99 = arith.constant 0.000000e+00 : f32
    %195 = vector.broadcast %cst_99 : f32 to vector<8x8xf32>
    %196 = arith.maximumf %194, %195 : vector<8x8xf32>
    %cst_100 = arith.constant 9.99999974E-6 : f32
    %197 = vector.broadcast %cst_100 : f32 to vector<8x8xf32>
    %198 = arith.addf %196, %197 : vector<8x8xf32>
    %199 = math.rsqrt %198 : vector<8x8xf32>
    %200 = arith.truncf %199 : vector<8x8xf32> to vector<8x8xbf16>
    %cst_101 = arith.constant dense<0.000000e+00> : vector<8x32xf32>
    %201 = tpu.matmul %200, %186, %cst_101 {dimension_numbers = #tpu.dot_dimension_numbers<[1], [0], [0], [1], [0, 0, 1, 1], [], []>} : vector<8x8xbf16>, vector<8x32xbf16>, vector<8x32xf32> -> vector<8x32xf32>
    %202 = arith.mulf %191, %199 : vector<8x8xf32>
    %203 = arith.truncf %202 : vector<8x8xf32> to vector<8x8xbf16>
    %cst_102 = arith.constant dense<0.000000e+00> : vector<8x32xf32>
    %204 = tpu.matmul %203, %186, %cst_102 {dimension_numbers = #tpu.dot_dimension_numbers<[1], [0], [0], [1], [0, 0, 1, 1], [], []>} : vector<8x8xbf16>, vector<8x32xbf16>, vector<8x32xf32> -> vector<8x32xf32>
    %205 = vector.broadcast %187 : vector<1x32xf32> to vector<8x32xf32>
    %206 = arith.subf %205, %204 : vector<8x32xf32>
    %207 = arith.mulf %183, %201 : vector<8x32xf32>
    %208 = arith.addf %207, %206 : vector<8x32xf32>
    %cst_103 = arith.constant 5.000000e-01 : f32
    %209 = vector.broadcast %cst_103 : f32 to vector<8x32xf32>
    %210 = arith.mulf %209, %208 : vector<8x32xf32>
    %211 = arith.mulf %208, %208 : vector<8x32xf32>
    %212 = arith.mulf %211, %208 : vector<8x32xf32>
    %cst_104 = arith.constant 4.471500e-02 : f32
    %213 = vector.broadcast %cst_104 : f32 to vector<8x32xf32>
    %214 = arith.mulf %213, %212 : vector<8x32xf32>
    %215 = arith.addf %208, %214 : vector<8x32xf32>
    %cst_105 = arith.constant 0.797884583 : f32
    %216 = vector.broadcast %cst_105 : f32 to vector<8x32xf32>
    %217 = arith.mulf %216, %215 : vector<8x32xf32>
    %218 = math.tanh %217 : vector<8x32xf32>
    %cst_106 = arith.constant 1.000000e+00 : f32
    %219 = vector.broadcast %cst_106 : f32 to vector<8x32xf32>
    %220 = arith.addf %219, %218 : vector<8x32xf32>
    %221 = arith.mulf %210, %220 : vector<8x32xf32>
    %c0_107 = arith.constant 0 : index
    %c0_108 = arith.constant 0 : index
    %c0_109 = arith.constant 0 : index
    %222 = vector.load %arg15[%c0_107, %c0_108, %c0_109] : memref<4x32x128xbf16, #tpu.memory_space<vmem>>, vector<1x32x128xbf16>
    %223 = vector.shape_cast %222 : vector<1x32x128xbf16> to vector<32x128xbf16>
    %c5_110 = arith.constant 5 : index
    %c0_111 = arith.constant 0 : index
    %224 = vector.load %arg19[%c5_110, %c0_111] : memref<11x128xf32, #tpu.memory_space<vmem>>, vector<1x128xf32>
    %225 = arith.truncf %221 : vector<8x32xf32> to vector<8x32xbf16>
    %cst_112 = arith.constant dense<0.000000e+00> : vector<8x128xf32>
    %226 = tpu.matmul %225, %223, %cst_112 {dimension_numbers = #tpu.dot_dimension_numbers<[1], [0], [0], [1], [0, 0, 1, 1], [], []>} : vector<8x32xbf16>, vector<32x128xbf16>, vector<8x128xf32> -> vector<8x128xf32>
    %227 = vector.broadcast %224 : vector<1x128xf32> to vector<8x128xf32>
    %228 = arith.addf %226, %227 : vector<8x128xf32>
    %229 = arith.addf %48, %228 : vector<8x128xf32>
    %c0_113 = arith.constant 0 : index
    %c0_114 = arith.constant 0 : index
    %230 = vector.load %arg6[%c0_113, %c0_114] : memref<128x8xbf16, #tpu.memory_space<vmem>>, vector<128x8xbf16>
    %c1_115 = arith.constant 1 : index
    %c0_116 = arith.constant 0 : index
    %c0_117 = arith.constant 0 : index
    %231 = vector.load %arg8[%c1_115, %c0_116, %c0_117] : memref<4x8x128xbf16, #tpu.memory_space<vmem>>, vector<1x8x128xbf16>
    %232 = vector.shape_cast %231 : vector<1x8x128xbf16> to vector<8x128xbf16>
    %c2_118 = arith.constant 2 : index
    %c0_119 = arith.constant 0 : index
    %233 = vector.load %arg19[%c2_118, %c0_119] : memref<11x128xf32, #tpu.memory_space<vmem>>, vector<1x128xf32>
    %234 = arith.truncf %229 : vector<8x128xf32> to vector<8x128xbf16>
    %235 = arith.mulf %229, %229 : vector<8x128xf32>
    %236 = arith.truncf %235 : vector<8x128xf32> to vector<8x128xbf16>
    %cst_120 = arith.constant dense<0.000000e+00> : vector<8x8xf32>
    %237 = tpu.matmul %234, %230, %cst_120 {dimension_numbers = #tpu.dot_dimension_numbers<[1], [0], [0], [1], [0, 0, 1, 1], [], []>} : vector<8x128xbf16>, vector<128x8xbf16>, vector<8x8xf32> -> vector<8x8xf32>
    %cst_121 = arith.constant dense<0.000000e+00> : vector<8x8xf32>
    %238 = tpu.matmul %236, %230, %cst_121 {dimension_numbers = #tpu.dot_dimension_numbers<[1], [0], [0], [1], [0, 0, 1, 1], [], []>} : vector<8x128xbf16>, vector<128x8xbf16>, vector<8x8xf32> -> vector<8x8xf32>
    %239 = arith.mulf %237, %237 : vector<8x8xf32>
    %240 = arith.subf %238, %239 : vector<8x8xf32>
    %cst_122 = arith.constant 0.000000e+00 : f32
    %241 = vector.broadcast %cst_122 : f32 to vector<8x8xf32>
    %242 = arith.maximumf %240, %241 : vector<8x8xf32>
    %cst_123 = arith.constant 9.99999974E-6 : f32
    %243 = vector.broadcast %cst_123 : f32 to vector<8x8xf32>
    %244 = arith.addf %242, %243 : vector<8x8xf32>
    %245 = math.rsqrt %244 : vector<8x8xf32>
    %246 = arith.truncf %245 : vector<8x8xf32> to vector<8x8xbf16>
    %cst_124 = arith.constant dense<0.000000e+00> : vector<8x128xf32>
    %247 = tpu.matmul %246, %232, %cst_124 {dimension_numbers = #tpu.dot_dimension_numbers<[1], [0], [0], [1], [0, 0, 1, 1], [], []>} : vector<8x8xbf16>, vector<8x128xbf16>, vector<8x128xf32> -> vector<8x128xf32>
    %248 = arith.mulf %237, %245 : vector<8x8xf32>
    %249 = arith.truncf %248 : vector<8x8xf32> to vector<8x8xbf16>
    %cst_125 = arith.constant dense<0.000000e+00> : vector<8x128xf32>
    %250 = tpu.matmul %249, %232, %cst_125 {dimension_numbers = #tpu.dot_dimension_numbers<[1], [0], [0], [1], [0, 0, 1, 1], [], []>} : vector<8x8xbf16>, vector<8x128xbf16>, vector<8x128xf32> -> vector<8x128xf32>
    %251 = vector.broadcast %233 : vector<1x128xf32> to vector<8x128xf32>
    %252 = arith.subf %251, %250 : vector<8x128xf32>
    %253 = arith.mulf %229, %247 : vector<8x128xf32>
    %254 = arith.addf %253, %252 : vector<8x128xf32>
    %cst_126 = arith.constant 5.000000e-01 : f32
    %255 = vector.broadcast %cst_126 : f32 to vector<8x128xf32>
    %256 = arith.mulf %255, %254 : vector<8x128xf32>
    %257 = arith.mulf %254, %254 : vector<8x128xf32>
    %258 = arith.mulf %257, %254 : vector<8x128xf32>
    %cst_127 = arith.constant 4.471500e-02 : f32
    %259 = vector.broadcast %cst_127 : f32 to vector<8x128xf32>
    %260 = arith.mulf %259, %258 : vector<8x128xf32>
    %261 = arith.addf %254, %260 : vector<8x128xf32>
    %cst_128 = arith.constant 0.797884583 : f32
    %262 = vector.broadcast %cst_128 : f32 to vector<8x128xf32>
    %263 = arith.mulf %262, %261 : vector<8x128xf32>
    %264 = math.tanh %263 : vector<8x128xf32>
    %cst_129 = arith.constant 1.000000e+00 : f32
    %265 = vector.broadcast %cst_129 : f32 to vector<8x128xf32>
    %266 = arith.addf %265, %264 : vector<8x128xf32>
    %267 = arith.mulf %256, %266 : vector<8x128xf32>
    %c1_130 = arith.constant 1 : index
    %c0_131 = arith.constant 0 : index
    %c0_132 = arith.constant 0 : index
    %268 = vector.load %arg12[%c1_130, %c0_131, %c0_132] : memref<4x128x32xbf16, #tpu.memory_space<vmem>>, vector<1x128x32xbf16>
    %269 = vector.shape_cast %268 : vector<1x128x32xbf16> to vector<128x32xbf16>
    %c6 = arith.constant 6 : index
    %c0_133 = arith.constant 0 : index
    %270 = vector.load %arg20[%c6, %c0_133] : memref<24x32xf32, #tpu.memory_space<vmem>>, vector<1x32xf32>
    %271 = arith.truncf %267 : vector<8x128xf32> to vector<8x128xbf16>
    %cst_134 = arith.constant dense<0.000000e+00> : vector<8x32xf32>
    %272 = tpu.matmul %271, %269, %cst_134 {dimension_numbers = #tpu.dot_dimension_numbers<[1], [0], [0], [1], [0, 0, 1, 1], [], []>} : vector<8x128xbf16>, vector<128x32xbf16>, vector<8x32xf32> -> vector<8x32xf32>
    %273 = vector.broadcast %270 : vector<1x32xf32> to vector<8x32xf32>
    %274 = arith.addf %272, %273 : vector<8x32xf32>
    %c0_135 = arith.constant 0 : index
    %c0_136 = arith.constant 0 : index
    %275 = vector.load %arg7[%c0_135, %c0_136] : memref<32x8xbf16, #tpu.memory_space<vmem>>, vector<32x8xbf16>
    %c1_137 = arith.constant 1 : index
    %c0_138 = arith.constant 0 : index
    %c0_139 = arith.constant 0 : index
    %276 = vector.load %arg9[%c1_137, %c0_138, %c0_139] : memref<4x8x32xbf16, #tpu.memory_space<vmem>>, vector<1x8x32xbf16>
    %277 = vector.shape_cast %276 : vector<1x8x32xbf16> to vector<8x32xbf16>
    %c7 = arith.constant 7 : index
    %c0_140 = arith.constant 0 : index
    %278 = vector.load %arg20[%c7, %c0_140] : memref<24x32xf32, #tpu.memory_space<vmem>>, vector<1x32xf32>
    %279 = arith.truncf %274 : vector<8x32xf32> to vector<8x32xbf16>
    %280 = arith.mulf %274, %274 : vector<8x32xf32>
    %281 = arith.truncf %280 : vector<8x32xf32> to vector<8x32xbf16>
    %cst_141 = arith.constant dense<0.000000e+00> : vector<8x8xf32>
    %282 = tpu.matmul %279, %275, %cst_141 {dimension_numbers = #tpu.dot_dimension_numbers<[1], [0], [0], [1], [0, 0, 1, 1], [], []>} : vector<8x32xbf16>, vector<32x8xbf16>, vector<8x8xf32> -> vector<8x8xf32>
    %cst_142 = arith.constant dense<0.000000e+00> : vector<8x8xf32>
    %283 = tpu.matmul %281, %275, %cst_142 {dimension_numbers = #tpu.dot_dimension_numbers<[1], [0], [0], [1], [0, 0, 1, 1], [], []>} : vector<8x32xbf16>, vector<32x8xbf16>, vector<8x8xf32> -> vector<8x8xf32>
    %284 = arith.mulf %282, %282 : vector<8x8xf32>
    %285 = arith.subf %283, %284 : vector<8x8xf32>
    %cst_143 = arith.constant 0.000000e+00 : f32
    %286 = vector.broadcast %cst_143 : f32 to vector<8x8xf32>
    %287 = arith.maximumf %285, %286 : vector<8x8xf32>
    %cst_144 = arith.constant 9.99999974E-6 : f32
    %288 = vector.broadcast %cst_144 : f32 to vector<8x8xf32>
    %289 = arith.addf %287, %288 : vector<8x8xf32>
    %290 = math.rsqrt %289 : vector<8x8xf32>
    %291 = arith.truncf %290 : vector<8x8xf32> to vector<8x8xbf16>
    %cst_145 = arith.constant dense<0.000000e+00> : vector<8x32xf32>
    %292 = tpu.matmul %291, %277, %cst_145 {dimension_numbers = #tpu.dot_dimension_numbers<[1], [0], [0], [1], [0, 0, 1, 1], [], []>} : vector<8x8xbf16>, vector<8x32xbf16>, vector<8x32xf32> -> vector<8x32xf32>
    %293 = arith.mulf %282, %290 : vector<8x8xf32>
    %294 = arith.truncf %293 : vector<8x8xf32> to vector<8x8xbf16>
    %cst_146 = arith.constant dense<0.000000e+00> : vector<8x32xf32>
    %295 = tpu.matmul %294, %277, %cst_146 {dimension_numbers = #tpu.dot_dimension_numbers<[1], [0], [0], [1], [0, 0, 1, 1], [], []>} : vector<8x8xbf16>, vector<8x32xbf16>, vector<8x32xf32> -> vector<8x32xf32>
    %296 = vector.broadcast %278 : vector<1x32xf32> to vector<8x32xf32>
    %297 = arith.subf %296, %295 : vector<8x32xf32>
    %298 = arith.mulf %274, %292 : vector<8x32xf32>
    %299 = arith.addf %298, %297 : vector<8x32xf32>
    %cst_147 = arith.constant 5.000000e-01 : f32
    %300 = vector.broadcast %cst_147 : f32 to vector<8x32xf32>
    %301 = arith.mulf %300, %299 : vector<8x32xf32>
    %302 = arith.mulf %299, %299 : vector<8x32xf32>
    %303 = arith.mulf %302, %299 : vector<8x32xf32>
    %cst_148 = arith.constant 4.471500e-02 : f32
    %304 = vector.broadcast %cst_148 : f32 to vector<8x32xf32>
    %305 = arith.mulf %304, %303 : vector<8x32xf32>
    %306 = arith.addf %299, %305 : vector<8x32xf32>
    %cst_149 = arith.constant 0.797884583 : f32
    %307 = vector.broadcast %cst_149 : f32 to vector<8x32xf32>
    %308 = arith.mulf %307, %306 : vector<8x32xf32>
    %309 = math.tanh %308 : vector<8x32xf32>
    %cst_150 = arith.constant 1.000000e+00 : f32
    %310 = vector.broadcast %cst_150 : f32 to vector<8x32xf32>
    %311 = arith.addf %310, %309 : vector<8x32xf32>
    %312 = arith.mulf %301, %311 : vector<8x32xf32>
    %c1_151 = arith.constant 1 : index
    %c0_152 = arith.constant 0 : index
    %c0_153 = arith.constant 0 : index
    %313 = vector.load %arg13[%c1_151, %c0_152, %c0_153] : memref<4x32x32xbf16, #tpu.memory_space<vmem>>, vector<1x32x32xbf16>
    %314 = vector.shape_cast %313 : vector<1x32x32xbf16> to vector<32x32xbf16>
    %c8 = arith.constant 8 : index
    %c0_154 = arith.constant 0 : index
    %315 = vector.load %arg20[%c8, %c0_154] : memref<24x32xf32, #tpu.memory_space<vmem>>, vector<1x32xf32>
    %316 = arith.truncf %312 : vector<8x32xf32> to vector<8x32xbf16>
    %cst_155 = arith.constant dense<0.000000e+00> : vector<8x32xf32>
    %317 = tpu.matmul %316, %314, %cst_155 {dimension_numbers = #tpu.dot_dimension_numbers<[1], [0], [0], [1], [0, 0, 1, 1], [], []>} : vector<8x32xbf16>, vector<32x32xbf16>, vector<8x32xf32> -> vector<8x32xf32>
    %318 = vector.broadcast %315 : vector<1x32xf32> to vector<8x32xf32>
    %319 = arith.addf %317, %318 : vector<8x32xf32>
    %c0_156 = arith.constant 0 : index
    %c0_157 = arith.constant 0 : index
    %320 = vector.load %arg7[%c0_156, %c0_157] : memref<32x8xbf16, #tpu.memory_space<vmem>>, vector<32x8xbf16>
    %c1_158 = arith.constant 1 : index
    %c0_159 = arith.constant 0 : index
    %c0_160 = arith.constant 0 : index
    %321 = vector.load %arg10[%c1_158, %c0_159, %c0_160] : memref<4x8x32xbf16, #tpu.memory_space<vmem>>, vector<1x8x32xbf16>
    %322 = vector.shape_cast %321 : vector<1x8x32xbf16> to vector<8x32xbf16>
    %c9 = arith.constant 9 : index
    %c0_161 = arith.constant 0 : index
    %323 = vector.load %arg20[%c9, %c0_161] : memref<24x32xf32, #tpu.memory_space<vmem>>, vector<1x32xf32>
    %324 = arith.truncf %319 : vector<8x32xf32> to vector<8x32xbf16>
    %325 = arith.mulf %319, %319 : vector<8x32xf32>
    %326 = arith.truncf %325 : vector<8x32xf32> to vector<8x32xbf16>
    %cst_162 = arith.constant dense<0.000000e+00> : vector<8x8xf32>
    %327 = tpu.matmul %324, %320, %cst_162 {dimension_numbers = #tpu.dot_dimension_numbers<[1], [0], [0], [1], [0, 0, 1, 1], [], []>} : vector<8x32xbf16>, vector<32x8xbf16>, vector<8x8xf32> -> vector<8x8xf32>
    %cst_163 = arith.constant dense<0.000000e+00> : vector<8x8xf32>
    %328 = tpu.matmul %326, %320, %cst_163 {dimension_numbers = #tpu.dot_dimension_numbers<[1], [0], [0], [1], [0, 0, 1, 1], [], []>} : vector<8x32xbf16>, vector<32x8xbf16>, vector<8x8xf32> -> vector<8x8xf32>
    %329 = arith.mulf %327, %327 : vector<8x8xf32>
    %330 = arith.subf %328, %329 : vector<8x8xf32>
    %cst_164 = arith.constant 0.000000e+00 : f32
    %331 = vector.broadcast %cst_164 : f32 to vector<8x8xf32>
    %332 = arith.maximumf %330, %331 : vector<8x8xf32>
    %cst_165 = arith.constant 9.99999974E-6 : f32
    %333 = vector.broadcast %cst_165 : f32 to vector<8x8xf32>
    %334 = arith.addf %332, %333 : vector<8x8xf32>
    %335 = math.rsqrt %334 : vector<8x8xf32>
    %336 = arith.truncf %335 : vector<8x8xf32> to vector<8x8xbf16>
    %cst_166 = arith.constant dense<0.000000e+00> : vector<8x32xf32>
    %337 = tpu.matmul %336, %322, %cst_166 {dimension_numbers = #tpu.dot_dimension_numbers<[1], [0], [0], [1], [0, 0, 1, 1], [], []>} : vector<8x8xbf16>, vector<8x32xbf16>, vector<8x32xf32> -> vector<8x32xf32>
    %338 = arith.mulf %327, %335 : vector<8x8xf32>
    %339 = arith.truncf %338 : vector<8x8xf32> to vector<8x8xbf16>
    %cst_167 = arith.constant dense<0.000000e+00> : vector<8x32xf32>
    %340 = tpu.matmul %339, %322, %cst_167 {dimension_numbers = #tpu.dot_dimension_numbers<[1], [0], [0], [1], [0, 0, 1, 1], [], []>} : vector<8x8xbf16>, vector<8x32xbf16>, vector<8x32xf32> -> vector<8x32xf32>
    %341 = vector.broadcast %323 : vector<1x32xf32> to vector<8x32xf32>
    %342 = arith.subf %341, %340 : vector<8x32xf32>
    %343 = arith.mulf %319, %337 : vector<8x32xf32>
    %344 = arith.addf %343, %342 : vector<8x32xf32>
    %cst_168 = arith.constant 5.000000e-01 : f32
    %345 = vector.broadcast %cst_168 : f32 to vector<8x32xf32>
    %346 = arith.mulf %345, %344 : vector<8x32xf32>
    %347 = arith.mulf %344, %344 : vector<8x32xf32>
    %348 = arith.mulf %347, %344 : vector<8x32xf32>
    %cst_169 = arith.constant 4.471500e-02 : f32
    %349 = vector.broadcast %cst_169 : f32 to vector<8x32xf32>
    %350 = arith.mulf %349, %348 : vector<8x32xf32>
    %351 = arith.addf %344, %350 : vector<8x32xf32>
    %cst_170 = arith.constant 0.797884583 : f32
    %352 = vector.broadcast %cst_170 : f32 to vector<8x32xf32>
    %353 = arith.mulf %352, %351 : vector<8x32xf32>
    %354 = math.tanh %353 : vector<8x32xf32>
    %cst_171 = arith.constant 1.000000e+00 : f32
    %355 = vector.broadcast %cst_171 : f32 to vector<8x32xf32>
    %356 = arith.addf %355, %354 : vector<8x32xf32>
    %357 = arith.mulf %346, %356 : vector<8x32xf32>
    %c1_172 = arith.constant 1 : index
    %c0_173 = arith.constant 0 : index
    %c0_174 = arith.constant 0 : index
    %358 = vector.load %arg14[%c1_172, %c0_173, %c0_174] : memref<4x32x32xbf16, #tpu.memory_space<vmem>>, vector<1x32x32xbf16>
    %359 = vector.shape_cast %358 : vector<1x32x32xbf16> to vector<32x32xbf16>
    %c10 = arith.constant 10 : index
    %c0_175 = arith.constant 0 : index
    %360 = vector.load %arg20[%c10, %c0_175] : memref<24x32xf32, #tpu.memory_space<vmem>>, vector<1x32xf32>
    %361 = arith.truncf %357 : vector<8x32xf32> to vector<8x32xbf16>
    %cst_176 = arith.constant dense<0.000000e+00> : vector<8x32xf32>
    %362 = tpu.matmul %361, %359, %cst_176 {dimension_numbers = #tpu.dot_dimension_numbers<[1], [0], [0], [1], [0, 0, 1, 1], [], []>} : vector<8x32xbf16>, vector<32x32xbf16>, vector<8x32xf32> -> vector<8x32xf32>
    %363 = vector.broadcast %360 : vector<1x32xf32> to vector<8x32xf32>
    %364 = arith.addf %362, %363 : vector<8x32xf32>
    %c0_177 = arith.constant 0 : index
    %c0_178 = arith.constant 0 : index
    %365 = vector.load %arg7[%c0_177, %c0_178] : memref<32x8xbf16, #tpu.memory_space<vmem>>, vector<32x8xbf16>
    %c1_179 = arith.constant 1 : index
    %c0_180 = arith.constant 0 : index
    %c0_181 = arith.constant 0 : index
    %366 = vector.load %arg11[%c1_179, %c0_180, %c0_181] : memref<4x8x32xbf16, #tpu.memory_space<vmem>>, vector<1x8x32xbf16>
    %367 = vector.shape_cast %366 : vector<1x8x32xbf16> to vector<8x32xbf16>
    %c11 = arith.constant 11 : index
    %c0_182 = arith.constant 0 : index
    %368 = vector.load %arg20[%c11, %c0_182] : memref<24x32xf32, #tpu.memory_space<vmem>>, vector<1x32xf32>
    %369 = arith.truncf %364 : vector<8x32xf32> to vector<8x32xbf16>
    %370 = arith.mulf %364, %364 : vector<8x32xf32>
    %371 = arith.truncf %370 : vector<8x32xf32> to vector<8x32xbf16>
    %cst_183 = arith.constant dense<0.000000e+00> : vector<8x8xf32>
    %372 = tpu.matmul %369, %365, %cst_183 {dimension_numbers = #tpu.dot_dimension_numbers<[1], [0], [0], [1], [0, 0, 1, 1], [], []>} : vector<8x32xbf16>, vector<32x8xbf16>, vector<8x8xf32> -> vector<8x8xf32>
    %cst_184 = arith.constant dense<0.000000e+00> : vector<8x8xf32>
    %373 = tpu.matmul %371, %365, %cst_184 {dimension_numbers = #tpu.dot_dimension_numbers<[1], [0], [0], [1], [0, 0, 1, 1], [], []>} : vector<8x32xbf16>, vector<32x8xbf16>, vector<8x8xf32> -> vector<8x8xf32>
    %374 = arith.mulf %372, %372 : vector<8x8xf32>
    %375 = arith.subf %373, %374 : vector<8x8xf32>
    %cst_185 = arith.constant 0.000000e+00 : f32
    %376 = vector.broadcast %cst_185 : f32 to vector<8x8xf32>
    %377 = arith.maximumf %375, %376 : vector<8x8xf32>
    %cst_186 = arith.constant 9.99999974E-6 : f32
    %378 = vector.broadcast %cst_186 : f32 to vector<8x8xf32>
    %379 = arith.addf %377, %378 : vector<8x8xf32>
    %380 = math.rsqrt %379 : vector<8x8xf32>
    %381 = arith.truncf %380 : vector<8x8xf32> to vector<8x8xbf16>
    %cst_187 = arith.constant dense<0.000000e+00> : vector<8x32xf32>
    %382 = tpu.matmul %381, %367, %cst_187 {dimension_numbers = #tpu.dot_dimension_numbers<[1], [0], [0], [1], [0, 0, 1, 1], [], []>} : vector<8x8xbf16>, vector<8x32xbf16>, vector<8x32xf32> -> vector<8x32xf32>
    %383 = arith.mulf %372, %380 : vector<8x8xf32>
    %384 = arith.truncf %383 : vector<8x8xf32> to vector<8x8xbf16>
    %cst_188 = arith.constant dense<0.000000e+00> : vector<8x32xf32>
    %385 = tpu.matmul %384, %367, %cst_188 {dimension_numbers = #tpu.dot_dimension_numbers<[1], [0], [0], [1], [0, 0, 1, 1], [], []>} : vector<8x8xbf16>, vector<8x32xbf16>, vector<8x32xf32> -> vector<8x32xf32>
    %386 = vector.broadcast %368 : vector<1x32xf32> to vector<8x32xf32>
    %387 = arith.subf %386, %385 : vector<8x32xf32>
    %388 = arith.mulf %364, %382 : vector<8x32xf32>
    %389 = arith.addf %388, %387 : vector<8x32xf32>
    %cst_189 = arith.constant 5.000000e-01 : f32
    %390 = vector.broadcast %cst_189 : f32 to vector<8x32xf32>
    %391 = arith.mulf %390, %389 : vector<8x32xf32>
    %392 = arith.mulf %389, %389 : vector<8x32xf32>
    %393 = arith.mulf %392, %389 : vector<8x32xf32>
    %cst_190 = arith.constant 4.471500e-02 : f32
    %394 = vector.broadcast %cst_190 : f32 to vector<8x32xf32>
    %395 = arith.mulf %394, %393 : vector<8x32xf32>
    %396 = arith.addf %389, %395 : vector<8x32xf32>
    %cst_191 = arith.constant 0.797884583 : f32
    %397 = vector.broadcast %cst_191 : f32 to vector<8x32xf32>
    %398 = arith.mulf %397, %396 : vector<8x32xf32>
    %399 = math.tanh %398 : vector<8x32xf32>
    %cst_192 = arith.constant 1.000000e+00 : f32
    %400 = vector.broadcast %cst_192 : f32 to vector<8x32xf32>
    %401 = arith.addf %400, %399 : vector<8x32xf32>
    %402 = arith.mulf %391, %401 : vector<8x32xf32>
    %c1_193 = arith.constant 1 : index
    %c0_194 = arith.constant 0 : index
    %c0_195 = arith.constant 0 : index
    %403 = vector.load %arg15[%c1_193, %c0_194, %c0_195] : memref<4x32x128xbf16, #tpu.memory_space<vmem>>, vector<1x32x128xbf16>
    %404 = vector.shape_cast %403 : vector<1x32x128xbf16> to vector<32x128xbf16>
    %c6_196 = arith.constant 6 : index
    %c0_197 = arith.constant 0 : index
    %405 = vector.load %arg19[%c6_196, %c0_197] : memref<11x128xf32, #tpu.memory_space<vmem>>, vector<1x128xf32>
    %406 = arith.truncf %402 : vector<8x32xf32> to vector<8x32xbf16>
    %cst_198 = arith.constant dense<0.000000e+00> : vector<8x128xf32>
    %407 = tpu.matmul %406, %404, %cst_198 {dimension_numbers = #tpu.dot_dimension_numbers<[1], [0], [0], [1], [0, 0, 1, 1], [], []>} : vector<8x32xbf16>, vector<32x128xbf16>, vector<8x128xf32> -> vector<8x128xf32>
    %408 = vector.broadcast %405 : vector<1x128xf32> to vector<8x128xf32>
    %409 = arith.addf %407, %408 : vector<8x128xf32>
    %410 = arith.addf %229, %409 : vector<8x128xf32>
    %c0_199 = arith.constant 0 : index
    %c0_200 = arith.constant 0 : index
    %411 = vector.load %arg6[%c0_199, %c0_200] : memref<128x8xbf16, #tpu.memory_space<vmem>>, vector<128x8xbf16>
    %c2_201 = arith.constant 2 : index
    %c0_202 = arith.constant 0 : index
    %c0_203 = arith.constant 0 : index
    %412 = vector.load %arg8[%c2_201, %c0_202, %c0_203] : memref<4x8x128xbf16, #tpu.memory_space<vmem>>, vector<1x8x128xbf16>
    %413 = vector.shape_cast %412 : vector<1x8x128xbf16> to vector<8x128xbf16>
    %c3_204 = arith.constant 3 : index
    %c0_205 = arith.constant 0 : index
    %414 = vector.load %arg19[%c3_204, %c0_205] : memref<11x128xf32, #tpu.memory_space<vmem>>, vector<1x128xf32>
    %415 = arith.truncf %410 : vector<8x128xf32> to vector<8x128xbf16>
    %416 = arith.mulf %410, %410 : vector<8x128xf32>
    %417 = arith.truncf %416 : vector<8x128xf32> to vector<8x128xbf16>
    %cst_206 = arith.constant dense<0.000000e+00> : vector<8x8xf32>
    %418 = tpu.matmul %415, %411, %cst_206 {dimension_numbers = #tpu.dot_dimension_numbers<[1], [0], [0], [1], [0, 0, 1, 1], [], []>} : vector<8x128xbf16>, vector<128x8xbf16>, vector<8x8xf32> -> vector<8x8xf32>
    %cst_207 = arith.constant dense<0.000000e+00> : vector<8x8xf32>
    %419 = tpu.matmul %417, %411, %cst_207 {dimension_numbers = #tpu.dot_dimension_numbers<[1], [0], [0], [1], [0, 0, 1, 1], [], []>} : vector<8x128xbf16>, vector<128x8xbf16>, vector<8x8xf32> -> vector<8x8xf32>
    %420 = arith.mulf %418, %418 : vector<8x8xf32>
    %421 = arith.subf %419, %420 : vector<8x8xf32>
    %cst_208 = arith.constant 0.000000e+00 : f32
    %422 = vector.broadcast %cst_208 : f32 to vector<8x8xf32>
    %423 = arith.maximumf %421, %422 : vector<8x8xf32>
    %cst_209 = arith.constant 9.99999974E-6 : f32
    %424 = vector.broadcast %cst_209 : f32 to vector<8x8xf32>
    %425 = arith.addf %423, %424 : vector<8x8xf32>
    %426 = math.rsqrt %425 : vector<8x8xf32>
    %427 = arith.truncf %426 : vector<8x8xf32> to vector<8x8xbf16>
    %cst_210 = arith.constant dense<0.000000e+00> : vector<8x128xf32>
    %428 = tpu.matmul %427, %413, %cst_210 {dimension_numbers = #tpu.dot_dimension_numbers<[1], [0], [0], [1], [0, 0, 1, 1], [], []>} : vector<8x8xbf16>, vector<8x128xbf16>, vector<8x128xf32> -> vector<8x128xf32>
    %429 = arith.mulf %418, %426 : vector<8x8xf32>
    %430 = arith.truncf %429 : vector<8x8xf32> to vector<8x8xbf16>
    %cst_211 = arith.constant dense<0.000000e+00> : vector<8x128xf32>
    %431 = tpu.matmul %430, %413, %cst_211 {dimension_numbers = #tpu.dot_dimension_numbers<[1], [0], [0], [1], [0, 0, 1, 1], [], []>} : vector<8x8xbf16>, vector<8x128xbf16>, vector<8x128xf32> -> vector<8x128xf32>
    %432 = vector.broadcast %414 : vector<1x128xf32> to vector<8x128xf32>
    %433 = arith.subf %432, %431 : vector<8x128xf32>
    %434 = arith.mulf %410, %428 : vector<8x128xf32>
    %435 = arith.addf %434, %433 : vector<8x128xf32>
    %cst_212 = arith.constant 5.000000e-01 : f32
    %436 = vector.broadcast %cst_212 : f32 to vector<8x128xf32>
    %437 = arith.mulf %436, %435 : vector<8x128xf32>
    %438 = arith.mulf %435, %435 : vector<8x128xf32>
    %439 = arith.mulf %438, %435 : vector<8x128xf32>
    %cst_213 = arith.constant 4.471500e-02 : f32
    %440 = vector.broadcast %cst_213 : f32 to vector<8x128xf32>
    %441 = arith.mulf %440, %439 : vector<8x128xf32>
    %442 = arith.addf %435, %441 : vector<8x128xf32>
    %cst_214 = arith.constant 0.797884583 : f32
    %443 = vector.broadcast %cst_214 : f32 to vector<8x128xf32>
    %444 = arith.mulf %443, %442 : vector<8x128xf32>
    %445 = math.tanh %444 : vector<8x128xf32>
    %cst_215 = arith.constant 1.000000e+00 : f32
    %446 = vector.broadcast %cst_215 : f32 to vector<8x128xf32>
    %447 = arith.addf %446, %445 : vector<8x128xf32>
    %448 = arith.mulf %437, %447 : vector<8x128xf32>
    %c2_216 = arith.constant 2 : index
    %c0_217 = arith.constant 0 : index
    %c0_218 = arith.constant 0 : index
    %449 = vector.load %arg12[%c2_216, %c0_217, %c0_218] : memref<4x128x32xbf16, #tpu.memory_space<vmem>>, vector<1x128x32xbf16>
    %450 = vector.shape_cast %449 : vector<1x128x32xbf16> to vector<128x32xbf16>
    %c12 = arith.constant 12 : index
    %c0_219 = arith.constant 0 : index
    %451 = vector.load %arg20[%c12, %c0_219] : memref<24x32xf32, #tpu.memory_space<vmem>>, vector<1x32xf32>
    %452 = arith.truncf %448 : vector<8x128xf32> to vector<8x128xbf16>
    %cst_220 = arith.constant dense<0.000000e+00> : vector<8x32xf32>
    %453 = tpu.matmul %452, %450, %cst_220 {dimension_numbers = #tpu.dot_dimension_numbers<[1], [0], [0], [1], [0, 0, 1, 1], [], []>} : vector<8x128xbf16>, vector<128x32xbf16>, vector<8x32xf32> -> vector<8x32xf32>
    %454 = vector.broadcast %451 : vector<1x32xf32> to vector<8x32xf32>
    %455 = arith.addf %453, %454 : vector<8x32xf32>
    %c0_221 = arith.constant 0 : index
    %c0_222 = arith.constant 0 : index
    %456 = vector.load %arg7[%c0_221, %c0_222] : memref<32x8xbf16, #tpu.memory_space<vmem>>, vector<32x8xbf16>
    %c2_223 = arith.constant 2 : index
    %c0_224 = arith.constant 0 : index
    %c0_225 = arith.constant 0 : index
    %457 = vector.load %arg9[%c2_223, %c0_224, %c0_225] : memref<4x8x32xbf16, #tpu.memory_space<vmem>>, vector<1x8x32xbf16>
    %458 = vector.shape_cast %457 : vector<1x8x32xbf16> to vector<8x32xbf16>
    %c13 = arith.constant 13 : index
    %c0_226 = arith.constant 0 : index
    %459 = vector.load %arg20[%c13, %c0_226] : memref<24x32xf32, #tpu.memory_space<vmem>>, vector<1x32xf32>
    %460 = arith.truncf %455 : vector<8x32xf32> to vector<8x32xbf16>
    %461 = arith.mulf %455, %455 : vector<8x32xf32>
    %462 = arith.truncf %461 : vector<8x32xf32> to vector<8x32xbf16>
    %cst_227 = arith.constant dense<0.000000e+00> : vector<8x8xf32>
    %463 = tpu.matmul %460, %456, %cst_227 {dimension_numbers = #tpu.dot_dimension_numbers<[1], [0], [0], [1], [0, 0, 1, 1], [], []>} : vector<8x32xbf16>, vector<32x8xbf16>, vector<8x8xf32> -> vector<8x8xf32>
    %cst_228 = arith.constant dense<0.000000e+00> : vector<8x8xf32>
    %464 = tpu.matmul %462, %456, %cst_228 {dimension_numbers = #tpu.dot_dimension_numbers<[1], [0], [0], [1], [0, 0, 1, 1], [], []>} : vector<8x32xbf16>, vector<32x8xbf16>, vector<8x8xf32> -> vector<8x8xf32>
    %465 = arith.mulf %463, %463 : vector<8x8xf32>
    %466 = arith.subf %464, %465 : vector<8x8xf32>
    %cst_229 = arith.constant 0.000000e+00 : f32
    %467 = vector.broadcast %cst_229 : f32 to vector<8x8xf32>
    %468 = arith.maximumf %466, %467 : vector<8x8xf32>
    %cst_230 = arith.constant 9.99999974E-6 : f32
    %469 = vector.broadcast %cst_230 : f32 to vector<8x8xf32>
    %470 = arith.addf %468, %469 : vector<8x8xf32>
    %471 = math.rsqrt %470 : vector<8x8xf32>
    %472 = arith.truncf %471 : vector<8x8xf32> to vector<8x8xbf16>
    %cst_231 = arith.constant dense<0.000000e+00> : vector<8x32xf32>
    %473 = tpu.matmul %472, %458, %cst_231 {dimension_numbers = #tpu.dot_dimension_numbers<[1], [0], [0], [1], [0, 0, 1, 1], [], []>} : vector<8x8xbf16>, vector<8x32xbf16>, vector<8x32xf32> -> vector<8x32xf32>
    %474 = arith.mulf %463, %471 : vector<8x8xf32>
    %475 = arith.truncf %474 : vector<8x8xf32> to vector<8x8xbf16>
    %cst_232 = arith.constant dense<0.000000e+00> : vector<8x32xf32>
    %476 = tpu.matmul %475, %458, %cst_232 {dimension_numbers = #tpu.dot_dimension_numbers<[1], [0], [0], [1], [0, 0, 1, 1], [], []>} : vector<8x8xbf16>, vector<8x32xbf16>, vector<8x32xf32> -> vector<8x32xf32>
    %477 = vector.broadcast %459 : vector<1x32xf32> to vector<8x32xf32>
    %478 = arith.subf %477, %476 : vector<8x32xf32>
    %479 = arith.mulf %455, %473 : vector<8x32xf32>
    %480 = arith.addf %479, %478 : vector<8x32xf32>
    %cst_233 = arith.constant 5.000000e-01 : f32
    %481 = vector.broadcast %cst_233 : f32 to vector<8x32xf32>
    %482 = arith.mulf %481, %480 : vector<8x32xf32>
    %483 = arith.mulf %480, %480 : vector<8x32xf32>
    %484 = arith.mulf %483, %480 : vector<8x32xf32>
    %cst_234 = arith.constant 4.471500e-02 : f32
    %485 = vector.broadcast %cst_234 : f32 to vector<8x32xf32>
    %486 = arith.mulf %485, %484 : vector<8x32xf32>
    %487 = arith.addf %480, %486 : vector<8x32xf32>
    %cst_235 = arith.constant 0.797884583 : f32
    %488 = vector.broadcast %cst_235 : f32 to vector<8x32xf32>
    %489 = arith.mulf %488, %487 : vector<8x32xf32>
    %490 = math.tanh %489 : vector<8x32xf32>
    %cst_236 = arith.constant 1.000000e+00 : f32
    %491 = vector.broadcast %cst_236 : f32 to vector<8x32xf32>
    %492 = arith.addf %491, %490 : vector<8x32xf32>
    %493 = arith.mulf %482, %492 : vector<8x32xf32>
    %c2_237 = arith.constant 2 : index
    %c0_238 = arith.constant 0 : index
    %c0_239 = arith.constant 0 : index
    %494 = vector.load %arg13[%c2_237, %c0_238, %c0_239] : memref<4x32x32xbf16, #tpu.memory_space<vmem>>, vector<1x32x32xbf16>
    %495 = vector.shape_cast %494 : vector<1x32x32xbf16> to vector<32x32xbf16>
    %c14 = arith.constant 14 : index
    %c0_240 = arith.constant 0 : index
    %496 = vector.load %arg20[%c14, %c0_240] : memref<24x32xf32, #tpu.memory_space<vmem>>, vector<1x32xf32>
    %497 = arith.truncf %493 : vector<8x32xf32> to vector<8x32xbf16>
    %cst_241 = arith.constant dense<0.000000e+00> : vector<8x32xf32>
    %498 = tpu.matmul %497, %495, %cst_241 {dimension_numbers = #tpu.dot_dimension_numbers<[1], [0], [0], [1], [0, 0, 1, 1], [], []>} : vector<8x32xbf16>, vector<32x32xbf16>, vector<8x32xf32> -> vector<8x32xf32>
    %499 = vector.broadcast %496 : vector<1x32xf32> to vector<8x32xf32>
    %500 = arith.addf %498, %499 : vector<8x32xf32>
    %c0_242 = arith.constant 0 : index
    %c0_243 = arith.constant 0 : index
    %501 = vector.load %arg7[%c0_242, %c0_243] : memref<32x8xbf16, #tpu.memory_space<vmem>>, vector<32x8xbf16>
    %c2_244 = arith.constant 2 : index
    %c0_245 = arith.constant 0 : index
    %c0_246 = arith.constant 0 : index
    %502 = vector.load %arg10[%c2_244, %c0_245, %c0_246] : memref<4x8x32xbf16, #tpu.memory_space<vmem>>, vector<1x8x32xbf16>
    %503 = vector.shape_cast %502 : vector<1x8x32xbf16> to vector<8x32xbf16>
    %c15 = arith.constant 15 : index
    %c0_247 = arith.constant 0 : index
    %504 = vector.load %arg20[%c15, %c0_247] : memref<24x32xf32, #tpu.memory_space<vmem>>, vector<1x32xf32>
    %505 = arith.truncf %500 : vector<8x32xf32> to vector<8x32xbf16>
    %506 = arith.mulf %500, %500 : vector<8x32xf32>
    %507 = arith.truncf %506 : vector<8x32xf32> to vector<8x32xbf16>
    %cst_248 = arith.constant dense<0.000000e+00> : vector<8x8xf32>
    %508 = tpu.matmul %505, %501, %cst_248 {dimension_numbers = #tpu.dot_dimension_numbers<[1], [0], [0], [1], [0, 0, 1, 1], [], []>} : vector<8x32xbf16>, vector<32x8xbf16>, vector<8x8xf32> -> vector<8x8xf32>
    %cst_249 = arith.constant dense<0.000000e+00> : vector<8x8xf32>
    %509 = tpu.matmul %507, %501, %cst_249 {dimension_numbers = #tpu.dot_dimension_numbers<[1], [0], [0], [1], [0, 0, 1, 1], [], []>} : vector<8x32xbf16>, vector<32x8xbf16>, vector<8x8xf32> -> vector<8x8xf32>
    %510 = arith.mulf %508, %508 : vector<8x8xf32>
    %511 = arith.subf %509, %510 : vector<8x8xf32>
    %cst_250 = arith.constant 0.000000e+00 : f32
    %512 = vector.broadcast %cst_250 : f32 to vector<8x8xf32>
    %513 = arith.maximumf %511, %512 : vector<8x8xf32>
    %cst_251 = arith.constant 9.99999974E-6 : f32
    %514 = vector.broadcast %cst_251 : f32 to vector<8x8xf32>
    %515 = arith.addf %513, %514 : vector<8x8xf32>
    %516 = math.rsqrt %515 : vector<8x8xf32>
    %517 = arith.truncf %516 : vector<8x8xf32> to vector<8x8xbf16>
    %cst_252 = arith.constant dense<0.000000e+00> : vector<8x32xf32>
    %518 = tpu.matmul %517, %503, %cst_252 {dimension_numbers = #tpu.dot_dimension_numbers<[1], [0], [0], [1], [0, 0, 1, 1], [], []>} : vector<8x8xbf16>, vector<8x32xbf16>, vector<8x32xf32> -> vector<8x32xf32>
    %519 = arith.mulf %508, %516 : vector<8x8xf32>
    %520 = arith.truncf %519 : vector<8x8xf32> to vector<8x8xbf16>
    %cst_253 = arith.constant dense<0.000000e+00> : vector<8x32xf32>
    %521 = tpu.matmul %520, %503, %cst_253 {dimension_numbers = #tpu.dot_dimension_numbers<[1], [0], [0], [1], [0, 0, 1, 1], [], []>} : vector<8x8xbf16>, vector<8x32xbf16>, vector<8x32xf32> -> vector<8x32xf32>
    %522 = vector.broadcast %504 : vector<1x32xf32> to vector<8x32xf32>
    %523 = arith.subf %522, %521 : vector<8x32xf32>
    %524 = arith.mulf %500, %518 : vector<8x32xf32>
    %525 = arith.addf %524, %523 : vector<8x32xf32>
    %cst_254 = arith.constant 5.000000e-01 : f32
    %526 = vector.broadcast %cst_254 : f32 to vector<8x32xf32>
    %527 = arith.mulf %526, %525 : vector<8x32xf32>
    %528 = arith.mulf %525, %525 : vector<8x32xf32>
    %529 = arith.mulf %528, %525 : vector<8x32xf32>
    %cst_255 = arith.constant 4.471500e-02 : f32
    %530 = vector.broadcast %cst_255 : f32 to vector<8x32xf32>
    %531 = arith.mulf %530, %529 : vector<8x32xf32>
    %532 = arith.addf %525, %531 : vector<8x32xf32>
    %cst_256 = arith.constant 0.797884583 : f32
    %533 = vector.broadcast %cst_256 : f32 to vector<8x32xf32>
    %534 = arith.mulf %533, %532 : vector<8x32xf32>
    %535 = math.tanh %534 : vector<8x32xf32>
    %cst_257 = arith.constant 1.000000e+00 : f32
    %536 = vector.broadcast %cst_257 : f32 to vector<8x32xf32>
    %537 = arith.addf %536, %535 : vector<8x32xf32>
    %538 = arith.mulf %527, %537 : vector<8x32xf32>
    %c2_258 = arith.constant 2 : index
    %c0_259 = arith.constant 0 : index
    %c0_260 = arith.constant 0 : index
    %539 = vector.load %arg14[%c2_258, %c0_259, %c0_260] : memref<4x32x32xbf16, #tpu.memory_space<vmem>>, vector<1x32x32xbf16>
    %540 = vector.shape_cast %539 : vector<1x32x32xbf16> to vector<32x32xbf16>
    %c16 = arith.constant 16 : index
    %c0_261 = arith.constant 0 : index
    %541 = vector.load %arg20[%c16, %c0_261] : memref<24x32xf32, #tpu.memory_space<vmem>>, vector<1x32xf32>
    %542 = arith.truncf %538 : vector<8x32xf32> to vector<8x32xbf16>
    %cst_262 = arith.constant dense<0.000000e+00> : vector<8x32xf32>
    %543 = tpu.matmul %542, %540, %cst_262 {dimension_numbers = #tpu.dot_dimension_numbers<[1], [0], [0], [1], [0, 0, 1, 1], [], []>} : vector<8x32xbf16>, vector<32x32xbf16>, vector<8x32xf32> -> vector<8x32xf32>
    %544 = vector.broadcast %541 : vector<1x32xf32> to vector<8x32xf32>
    %545 = arith.addf %543, %544 : vector<8x32xf32>
    %c0_263 = arith.constant 0 : index
    %c0_264 = arith.constant 0 : index
    %546 = vector.load %arg7[%c0_263, %c0_264] : memref<32x8xbf16, #tpu.memory_space<vmem>>, vector<32x8xbf16>
    %c2_265 = arith.constant 2 : index
    %c0_266 = arith.constant 0 : index
    %c0_267 = arith.constant 0 : index
    %547 = vector.load %arg11[%c2_265, %c0_266, %c0_267] : memref<4x8x32xbf16, #tpu.memory_space<vmem>>, vector<1x8x32xbf16>
    %548 = vector.shape_cast %547 : vector<1x8x32xbf16> to vector<8x32xbf16>
    %c17 = arith.constant 17 : index
    %c0_268 = arith.constant 0 : index
    %549 = vector.load %arg20[%c17, %c0_268] : memref<24x32xf32, #tpu.memory_space<vmem>>, vector<1x32xf32>
    %550 = arith.truncf %545 : vector<8x32xf32> to vector<8x32xbf16>
    %551 = arith.mulf %545, %545 : vector<8x32xf32>
    %552 = arith.truncf %551 : vector<8x32xf32> to vector<8x32xbf16>
    %cst_269 = arith.constant dense<0.000000e+00> : vector<8x8xf32>
    %553 = tpu.matmul %550, %546, %cst_269 {dimension_numbers = #tpu.dot_dimension_numbers<[1], [0], [0], [1], [0, 0, 1, 1], [], []>} : vector<8x32xbf16>, vector<32x8xbf16>, vector<8x8xf32> -> vector<8x8xf32>
    %cst_270 = arith.constant dense<0.000000e+00> : vector<8x8xf32>
    %554 = tpu.matmul %552, %546, %cst_270 {dimension_numbers = #tpu.dot_dimension_numbers<[1], [0], [0], [1], [0, 0, 1, 1], [], []>} : vector<8x32xbf16>, vector<32x8xbf16>, vector<8x8xf32> -> vector<8x8xf32>
    %555 = arith.mulf %553, %553 : vector<8x8xf32>
    %556 = arith.subf %554, %555 : vector<8x8xf32>
    %cst_271 = arith.constant 0.000000e+00 : f32
    %557 = vector.broadcast %cst_271 : f32 to vector<8x8xf32>
    %558 = arith.maximumf %556, %557 : vector<8x8xf32>
    %cst_272 = arith.constant 9.99999974E-6 : f32
    %559 = vector.broadcast %cst_272 : f32 to vector<8x8xf32>
    %560 = arith.addf %558, %559 : vector<8x8xf32>
    %561 = math.rsqrt %560 : vector<8x8xf32>
    %562 = arith.truncf %561 : vector<8x8xf32> to vector<8x8xbf16>
    %cst_273 = arith.constant dense<0.000000e+00> : vector<8x32xf32>
    %563 = tpu.matmul %562, %548, %cst_273 {dimension_numbers = #tpu.dot_dimension_numbers<[1], [0], [0], [1], [0, 0, 1, 1], [], []>} : vector<8x8xbf16>, vector<8x32xbf16>, vector<8x32xf32> -> vector<8x32xf32>
    %564 = arith.mulf %553, %561 : vector<8x8xf32>
    %565 = arith.truncf %564 : vector<8x8xf32> to vector<8x8xbf16>
    %cst_274 = arith.constant dense<0.000000e+00> : vector<8x32xf32>
    %566 = tpu.matmul %565, %548, %cst_274 {dimension_numbers = #tpu.dot_dimension_numbers<[1], [0], [0], [1], [0, 0, 1, 1], [], []>} : vector<8x8xbf16>, vector<8x32xbf16>, vector<8x32xf32> -> vector<8x32xf32>
    %567 = vector.broadcast %549 : vector<1x32xf32> to vector<8x32xf32>
    %568 = arith.subf %567, %566 : vector<8x32xf32>
    %569 = arith.mulf %545, %563 : vector<8x32xf32>
    %570 = arith.addf %569, %568 : vector<8x32xf32>
    %cst_275 = arith.constant 5.000000e-01 : f32
    %571 = vector.broadcast %cst_275 : f32 to vector<8x32xf32>
    %572 = arith.mulf %571, %570 : vector<8x32xf32>
    %573 = arith.mulf %570, %570 : vector<8x32xf32>
    %574 = arith.mulf %573, %570 : vector<8x32xf32>
    %cst_276 = arith.constant 4.471500e-02 : f32
    %575 = vector.broadcast %cst_276 : f32 to vector<8x32xf32>
    %576 = arith.mulf %575, %574 : vector<8x32xf32>
    %577 = arith.addf %570, %576 : vector<8x32xf32>
    %cst_277 = arith.constant 0.797884583 : f32
    %578 = vector.broadcast %cst_277 : f32 to vector<8x32xf32>
    %579 = arith.mulf %578, %577 : vector<8x32xf32>
    %580 = math.tanh %579 : vector<8x32xf32>
    %cst_278 = arith.constant 1.000000e+00 : f32
    %581 = vector.broadcast %cst_278 : f32 to vector<8x32xf32>
    %582 = arith.addf %581, %580 : vector<8x32xf32>
    %583 = arith.mulf %572, %582 : vector<8x32xf32>
    %c2_279 = arith.constant 2 : index
    %c0_280 = arith.constant 0 : index
    %c0_281 = arith.constant 0 : index
    %584 = vector.load %arg15[%c2_279, %c0_280, %c0_281] : memref<4x32x128xbf16, #tpu.memory_space<vmem>>, vector<1x32x128xbf16>
    %585 = vector.shape_cast %584 : vector<1x32x128xbf16> to vector<32x128xbf16>
    %c7_282 = arith.constant 7 : index
    %c0_283 = arith.constant 0 : index
    %586 = vector.load %arg19[%c7_282, %c0_283] : memref<11x128xf32, #tpu.memory_space<vmem>>, vector<1x128xf32>
    %587 = arith.truncf %583 : vector<8x32xf32> to vector<8x32xbf16>
    %cst_284 = arith.constant dense<0.000000e+00> : vector<8x128xf32>
    %588 = tpu.matmul %587, %585, %cst_284 {dimension_numbers = #tpu.dot_dimension_numbers<[1], [0], [0], [1], [0, 0, 1, 1], [], []>} : vector<8x32xbf16>, vector<32x128xbf16>, vector<8x128xf32> -> vector<8x128xf32>
    %589 = vector.broadcast %586 : vector<1x128xf32> to vector<8x128xf32>
    %590 = arith.addf %588, %589 : vector<8x128xf32>
    %591 = arith.addf %410, %590 : vector<8x128xf32>
    %c0_285 = arith.constant 0 : index
    %c0_286 = arith.constant 0 : index
    %592 = vector.load %arg6[%c0_285, %c0_286] : memref<128x8xbf16, #tpu.memory_space<vmem>>, vector<128x8xbf16>
    %c3_287 = arith.constant 3 : index
    %c0_288 = arith.constant 0 : index
    %c0_289 = arith.constant 0 : index
    %593 = vector.load %arg8[%c3_287, %c0_288, %c0_289] : memref<4x8x128xbf16, #tpu.memory_space<vmem>>, vector<1x8x128xbf16>
    %594 = vector.shape_cast %593 : vector<1x8x128xbf16> to vector<8x128xbf16>
    %c4_290 = arith.constant 4 : index
    %c0_291 = arith.constant 0 : index
    %595 = vector.load %arg19[%c4_290, %c0_291] : memref<11x128xf32, #tpu.memory_space<vmem>>, vector<1x128xf32>
    %596 = arith.truncf %591 : vector<8x128xf32> to vector<8x128xbf16>
    %597 = arith.mulf %591, %591 : vector<8x128xf32>
    %598 = arith.truncf %597 : vector<8x128xf32> to vector<8x128xbf16>
    %cst_292 = arith.constant dense<0.000000e+00> : vector<8x8xf32>
    %599 = tpu.matmul %596, %592, %cst_292 {dimension_numbers = #tpu.dot_dimension_numbers<[1], [0], [0], [1], [0, 0, 1, 1], [], []>} : vector<8x128xbf16>, vector<128x8xbf16>, vector<8x8xf32> -> vector<8x8xf32>
    %cst_293 = arith.constant dense<0.000000e+00> : vector<8x8xf32>
    %600 = tpu.matmul %598, %592, %cst_293 {dimension_numbers = #tpu.dot_dimension_numbers<[1], [0], [0], [1], [0, 0, 1, 1], [], []>} : vector<8x128xbf16>, vector<128x8xbf16>, vector<8x8xf32> -> vector<8x8xf32>
    %601 = arith.mulf %599, %599 : vector<8x8xf32>
    %602 = arith.subf %600, %601 : vector<8x8xf32>
    %cst_294 = arith.constant 0.000000e+00 : f32
    %603 = vector.broadcast %cst_294 : f32 to vector<8x8xf32>
    %604 = arith.maximumf %602, %603 : vector<8x8xf32>
    %cst_295 = arith.constant 9.99999974E-6 : f32
    %605 = vector.broadcast %cst_295 : f32 to vector<8x8xf32>
    %606 = arith.addf %604, %605 : vector<8x8xf32>
    %607 = math.rsqrt %606 : vector<8x8xf32>
    %608 = arith.truncf %607 : vector<8x8xf32> to vector<8x8xbf16>
    %cst_296 = arith.constant dense<0.000000e+00> : vector<8x128xf32>
    %609 = tpu.matmul %608, %594, %cst_296 {dimension_numbers = #tpu.dot_dimension_numbers<[1], [0], [0], [1], [0, 0, 1, 1], [], []>} : vector<8x8xbf16>, vector<8x128xbf16>, vector<8x128xf32> -> vector<8x128xf32>
    %610 = arith.mulf %599, %607 : vector<8x8xf32>
    %611 = arith.truncf %610 : vector<8x8xf32> to vector<8x8xbf16>
    %cst_297 = arith.constant dense<0.000000e+00> : vector<8x128xf32>
    %612 = tpu.matmul %611, %594, %cst_297 {dimension_numbers = #tpu.dot_dimension_numbers<[1], [0], [0], [1], [0, 0, 1, 1], [], []>} : vector<8x8xbf16>, vector<8x128xbf16>, vector<8x128xf32> -> vector<8x128xf32>
    %613 = vector.broadcast %595 : vector<1x128xf32> to vector<8x128xf32>
    %614 = arith.subf %613, %612 : vector<8x128xf32>
    %615 = arith.mulf %591, %609 : vector<8x128xf32>
    %616 = arith.addf %615, %614 : vector<8x128xf32>
    %cst_298 = arith.constant 5.000000e-01 : f32
    %617 = vector.broadcast %cst_298 : f32 to vector<8x128xf32>
    %618 = arith.mulf %617, %616 : vector<8x128xf32>
    %619 = arith.mulf %616, %616 : vector<8x128xf32>
    %620 = arith.mulf %619, %616 : vector<8x128xf32>
    %cst_299 = arith.constant 4.471500e-02 : f32
    %621 = vector.broadcast %cst_299 : f32 to vector<8x128xf32>
    %622 = arith.mulf %621, %620 : vector<8x128xf32>
    %623 = arith.addf %616, %622 : vector<8x128xf32>
    %cst_300 = arith.constant 0.797884583 : f32
    %624 = vector.broadcast %cst_300 : f32 to vector<8x128xf32>
    %625 = arith.mulf %624, %623 : vector<8x128xf32>
    %626 = math.tanh %625 : vector<8x128xf32>
    %cst_301 = arith.constant 1.000000e+00 : f32
    %627 = vector.broadcast %cst_301 : f32 to vector<8x128xf32>
    %628 = arith.addf %627, %626 : vector<8x128xf32>
    %629 = arith.mulf %618, %628 : vector<8x128xf32>
    %c3_302 = arith.constant 3 : index
    %c0_303 = arith.constant 0 : index
    %c0_304 = arith.constant 0 : index
    %630 = vector.load %arg12[%c3_302, %c0_303, %c0_304] : memref<4x128x32xbf16, #tpu.memory_space<vmem>>, vector<1x128x32xbf16>
    %631 = vector.shape_cast %630 : vector<1x128x32xbf16> to vector<128x32xbf16>
    %c18 = arith.constant 18 : index
    %c0_305 = arith.constant 0 : index
    %632 = vector.load %arg20[%c18, %c0_305] : memref<24x32xf32, #tpu.memory_space<vmem>>, vector<1x32xf32>
    %633 = arith.truncf %629 : vector<8x128xf32> to vector<8x128xbf16>
    %cst_306 = arith.constant dense<0.000000e+00> : vector<8x32xf32>
    %634 = tpu.matmul %633, %631, %cst_306 {dimension_numbers = #tpu.dot_dimension_numbers<[1], [0], [0], [1], [0, 0, 1, 1], [], []>} : vector<8x128xbf16>, vector<128x32xbf16>, vector<8x32xf32> -> vector<8x32xf32>
    %635 = vector.broadcast %632 : vector<1x32xf32> to vector<8x32xf32>
    %636 = arith.addf %634, %635 : vector<8x32xf32>
    %c0_307 = arith.constant 0 : index
    %c0_308 = arith.constant 0 : index
    %637 = vector.load %arg7[%c0_307, %c0_308] : memref<32x8xbf16, #tpu.memory_space<vmem>>, vector<32x8xbf16>
    %c3_309 = arith.constant 3 : index
    %c0_310 = arith.constant 0 : index
    %c0_311 = arith.constant 0 : index
    %638 = vector.load %arg9[%c3_309, %c0_310, %c0_311] : memref<4x8x32xbf16, #tpu.memory_space<vmem>>, vector<1x8x32xbf16>
    %639 = vector.shape_cast %638 : vector<1x8x32xbf16> to vector<8x32xbf16>
    %c19 = arith.constant 19 : index
    %c0_312 = arith.constant 0 : index
    %640 = vector.load %arg20[%c19, %c0_312] : memref<24x32xf32, #tpu.memory_space<vmem>>, vector<1x32xf32>
    %641 = arith.truncf %636 : vector<8x32xf32> to vector<8x32xbf16>
    %642 = arith.mulf %636, %636 : vector<8x32xf32>
    %643 = arith.truncf %642 : vector<8x32xf32> to vector<8x32xbf16>
    %cst_313 = arith.constant dense<0.000000e+00> : vector<8x8xf32>
    %644 = tpu.matmul %641, %637, %cst_313 {dimension_numbers = #tpu.dot_dimension_numbers<[1], [0], [0], [1], [0, 0, 1, 1], [], []>} : vector<8x32xbf16>, vector<32x8xbf16>, vector<8x8xf32> -> vector<8x8xf32>
    %cst_314 = arith.constant dense<0.000000e+00> : vector<8x8xf32>
    %645 = tpu.matmul %643, %637, %cst_314 {dimension_numbers = #tpu.dot_dimension_numbers<[1], [0], [0], [1], [0, 0, 1, 1], [], []>} : vector<8x32xbf16>, vector<32x8xbf16>, vector<8x8xf32> -> vector<8x8xf32>
    %646 = arith.mulf %644, %644 : vector<8x8xf32>
    %647 = arith.subf %645, %646 : vector<8x8xf32>
    %cst_315 = arith.constant 0.000000e+00 : f32
    %648 = vector.broadcast %cst_315 : f32 to vector<8x8xf32>
    %649 = arith.maximumf %647, %648 : vector<8x8xf32>
    %cst_316 = arith.constant 9.99999974E-6 : f32
    %650 = vector.broadcast %cst_316 : f32 to vector<8x8xf32>
    %651 = arith.addf %649, %650 : vector<8x8xf32>
    %652 = math.rsqrt %651 : vector<8x8xf32>
    %653 = arith.truncf %652 : vector<8x8xf32> to vector<8x8xbf16>
    %cst_317 = arith.constant dense<0.000000e+00> : vector<8x32xf32>
    %654 = tpu.matmul %653, %639, %cst_317 {dimension_numbers = #tpu.dot_dimension_numbers<[1], [0], [0], [1], [0, 0, 1, 1], [], []>} : vector<8x8xbf16>, vector<8x32xbf16>, vector<8x32xf32> -> vector<8x32xf32>
    %655 = arith.mulf %644, %652 : vector<8x8xf32>
    %656 = arith.truncf %655 : vector<8x8xf32> to vector<8x8xbf16>
    %cst_318 = arith.constant dense<0.000000e+00> : vector<8x32xf32>
    %657 = tpu.matmul %656, %639, %cst_318 {dimension_numbers = #tpu.dot_dimension_numbers<[1], [0], [0], [1], [0, 0, 1, 1], [], []>} : vector<8x8xbf16>, vector<8x32xbf16>, vector<8x32xf32> -> vector<8x32xf32>
    %658 = vector.broadcast %640 : vector<1x32xf32> to vector<8x32xf32>
    %659 = arith.subf %658, %657 : vector<8x32xf32>
    %660 = arith.mulf %636, %654 : vector<8x32xf32>
    %661 = arith.addf %660, %659 : vector<8x32xf32>
    %cst_319 = arith.constant 5.000000e-01 : f32
    %662 = vector.broadcast %cst_319 : f32 to vector<8x32xf32>
    %663 = arith.mulf %662, %661 : vector<8x32xf32>
    %664 = arith.mulf %661, %661 : vector<8x32xf32>
    %665 = arith.mulf %664, %661 : vector<8x32xf32>
    %cst_320 = arith.constant 4.471500e-02 : f32
    %666 = vector.broadcast %cst_320 : f32 to vector<8x32xf32>
    %667 = arith.mulf %666, %665 : vector<8x32xf32>
    %668 = arith.addf %661, %667 : vector<8x32xf32>
    %cst_321 = arith.constant 0.797884583 : f32
    %669 = vector.broadcast %cst_321 : f32 to vector<8x32xf32>
    %670 = arith.mulf %669, %668 : vector<8x32xf32>
    %671 = math.tanh %670 : vector<8x32xf32>
    %cst_322 = arith.constant 1.000000e+00 : f32
    %672 = vector.broadcast %cst_322 : f32 to vector<8x32xf32>
    %673 = arith.addf %672, %671 : vector<8x32xf32>
    %674 = arith.mulf %663, %673 : vector<8x32xf32>
    %c3_323 = arith.constant 3 : index
    %c0_324 = arith.constant 0 : index
    %c0_325 = arith.constant 0 : index
    %675 = vector.load %arg13[%c3_323, %c0_324, %c0_325] : memref<4x32x32xbf16, #tpu.memory_space<vmem>>, vector<1x32x32xbf16>
    %676 = vector.shape_cast %675 : vector<1x32x32xbf16> to vector<32x32xbf16>
    %c20 = arith.constant 20 : index
    %c0_326 = arith.constant 0 : index
    %677 = vector.load %arg20[%c20, %c0_326] : memref<24x32xf32, #tpu.memory_space<vmem>>, vector<1x32xf32>
    %678 = arith.truncf %674 : vector<8x32xf32> to vector<8x32xbf16>
    %cst_327 = arith.constant dense<0.000000e+00> : vector<8x32xf32>
    %679 = tpu.matmul %678, %676, %cst_327 {dimension_numbers = #tpu.dot_dimension_numbers<[1], [0], [0], [1], [0, 0, 1, 1], [], []>} : vector<8x32xbf16>, vector<32x32xbf16>, vector<8x32xf32> -> vector<8x32xf32>
    %680 = vector.broadcast %677 : vector<1x32xf32> to vector<8x32xf32>
    %681 = arith.addf %679, %680 : vector<8x32xf32>
    %c0_328 = arith.constant 0 : index
    %c0_329 = arith.constant 0 : index
    %682 = vector.load %arg7[%c0_328, %c0_329] : memref<32x8xbf16, #tpu.memory_space<vmem>>, vector<32x8xbf16>
    %c3_330 = arith.constant 3 : index
    %c0_331 = arith.constant 0 : index
    %c0_332 = arith.constant 0 : index
    %683 = vector.load %arg10[%c3_330, %c0_331, %c0_332] : memref<4x8x32xbf16, #tpu.memory_space<vmem>>, vector<1x8x32xbf16>
    %684 = vector.shape_cast %683 : vector<1x8x32xbf16> to vector<8x32xbf16>
    %c21 = arith.constant 21 : index
    %c0_333 = arith.constant 0 : index
    %685 = vector.load %arg20[%c21, %c0_333] : memref<24x32xf32, #tpu.memory_space<vmem>>, vector<1x32xf32>
    %686 = arith.truncf %681 : vector<8x32xf32> to vector<8x32xbf16>
    %687 = arith.mulf %681, %681 : vector<8x32xf32>
    %688 = arith.truncf %687 : vector<8x32xf32> to vector<8x32xbf16>
    %cst_334 = arith.constant dense<0.000000e+00> : vector<8x8xf32>
    %689 = tpu.matmul %686, %682, %cst_334 {dimension_numbers = #tpu.dot_dimension_numbers<[1], [0], [0], [1], [0, 0, 1, 1], [], []>} : vector<8x32xbf16>, vector<32x8xbf16>, vector<8x8xf32> -> vector<8x8xf32>
    %cst_335 = arith.constant dense<0.000000e+00> : vector<8x8xf32>
    %690 = tpu.matmul %688, %682, %cst_335 {dimension_numbers = #tpu.dot_dimension_numbers<[1], [0], [0], [1], [0, 0, 1, 1], [], []>} : vector<8x32xbf16>, vector<32x8xbf16>, vector<8x8xf32> -> vector<8x8xf32>
    %691 = arith.mulf %689, %689 : vector<8x8xf32>
    %692 = arith.subf %690, %691 : vector<8x8xf32>
    %cst_336 = arith.constant 0.000000e+00 : f32
    %693 = vector.broadcast %cst_336 : f32 to vector<8x8xf32>
    %694 = arith.maximumf %692, %693 : vector<8x8xf32>
    %cst_337 = arith.constant 9.99999974E-6 : f32
    %695 = vector.broadcast %cst_337 : f32 to vector<8x8xf32>
    %696 = arith.addf %694, %695 : vector<8x8xf32>
    %697 = math.rsqrt %696 : vector<8x8xf32>
    %698 = arith.truncf %697 : vector<8x8xf32> to vector<8x8xbf16>
    %cst_338 = arith.constant dense<0.000000e+00> : vector<8x32xf32>
    %699 = tpu.matmul %698, %684, %cst_338 {dimension_numbers = #tpu.dot_dimension_numbers<[1], [0], [0], [1], [0, 0, 1, 1], [], []>} : vector<8x8xbf16>, vector<8x32xbf16>, vector<8x32xf32> -> vector<8x32xf32>
    %700 = arith.mulf %689, %697 : vector<8x8xf32>
    %701 = arith.truncf %700 : vector<8x8xf32> to vector<8x8xbf16>
    %cst_339 = arith.constant dense<0.000000e+00> : vector<8x32xf32>
    %702 = tpu.matmul %701, %684, %cst_339 {dimension_numbers = #tpu.dot_dimension_numbers<[1], [0], [0], [1], [0, 0, 1, 1], [], []>} : vector<8x8xbf16>, vector<8x32xbf16>, vector<8x32xf32> -> vector<8x32xf32>
    %703 = vector.broadcast %685 : vector<1x32xf32> to vector<8x32xf32>
    %704 = arith.subf %703, %702 : vector<8x32xf32>
    %705 = arith.mulf %681, %699 : vector<8x32xf32>
    %706 = arith.addf %705, %704 : vector<8x32xf32>
    %cst_340 = arith.constant 5.000000e-01 : f32
    %707 = vector.broadcast %cst_340 : f32 to vector<8x32xf32>
    %708 = arith.mulf %707, %706 : vector<8x32xf32>
    %709 = arith.mulf %706, %706 : vector<8x32xf32>
    %710 = arith.mulf %709, %706 : vector<8x32xf32>
    %cst_341 = arith.constant 4.471500e-02 : f32
    %711 = vector.broadcast %cst_341 : f32 to vector<8x32xf32>
    %712 = arith.mulf %711, %710 : vector<8x32xf32>
    %713 = arith.addf %706, %712 : vector<8x32xf32>
    %cst_342 = arith.constant 0.797884583 : f32
    %714 = vector.broadcast %cst_342 : f32 to vector<8x32xf32>
    %715 = arith.mulf %714, %713 : vector<8x32xf32>
    %716 = math.tanh %715 : vector<8x32xf32>
    %cst_343 = arith.constant 1.000000e+00 : f32
    %717 = vector.broadcast %cst_343 : f32 to vector<8x32xf32>
    %718 = arith.addf %717, %716 : vector<8x32xf32>
    %719 = arith.mulf %708, %718 : vector<8x32xf32>
    %c3_344 = arith.constant 3 : index
    %c0_345 = arith.constant 0 : index
    %c0_346 = arith.constant 0 : index
    %720 = vector.load %arg14[%c3_344, %c0_345, %c0_346] : memref<4x32x32xbf16, #tpu.memory_space<vmem>>, vector<1x32x32xbf16>
    %721 = vector.shape_cast %720 : vector<1x32x32xbf16> to vector<32x32xbf16>
    %c22 = arith.constant 22 : index
    %c0_347 = arith.constant 0 : index
    %722 = vector.load %arg20[%c22, %c0_347] : memref<24x32xf32, #tpu.memory_space<vmem>>, vector<1x32xf32>
    %723 = arith.truncf %719 : vector<8x32xf32> to vector<8x32xbf16>
    %cst_348 = arith.constant dense<0.000000e+00> : vector<8x32xf32>
    %724 = tpu.matmul %723, %721, %cst_348 {dimension_numbers = #tpu.dot_dimension_numbers<[1], [0], [0], [1], [0, 0, 1, 1], [], []>} : vector<8x32xbf16>, vector<32x32xbf16>, vector<8x32xf32> -> vector<8x32xf32>
    %725 = vector.broadcast %722 : vector<1x32xf32> to vector<8x32xf32>
    %726 = arith.addf %724, %725 : vector<8x32xf32>
    %c0_349 = arith.constant 0 : index
    %c0_350 = arith.constant 0 : index
    %727 = vector.load %arg7[%c0_349, %c0_350] : memref<32x8xbf16, #tpu.memory_space<vmem>>, vector<32x8xbf16>
    %c3_351 = arith.constant 3 : index
    %c0_352 = arith.constant 0 : index
    %c0_353 = arith.constant 0 : index
    %728 = vector.load %arg11[%c3_351, %c0_352, %c0_353] : memref<4x8x32xbf16, #tpu.memory_space<vmem>>, vector<1x8x32xbf16>
    %729 = vector.shape_cast %728 : vector<1x8x32xbf16> to vector<8x32xbf16>
    %c23 = arith.constant 23 : index
    %c0_354 = arith.constant 0 : index
    %730 = vector.load %arg20[%c23, %c0_354] : memref<24x32xf32, #tpu.memory_space<vmem>>, vector<1x32xf32>
    %731 = arith.truncf %726 : vector<8x32xf32> to vector<8x32xbf16>
    %732 = arith.mulf %726, %726 : vector<8x32xf32>
    %733 = arith.truncf %732 : vector<8x32xf32> to vector<8x32xbf16>
    %cst_355 = arith.constant dense<0.000000e+00> : vector<8x8xf32>
    %734 = tpu.matmul %731, %727, %cst_355 {dimension_numbers = #tpu.dot_dimension_numbers<[1], [0], [0], [1], [0, 0, 1, 1], [], []>} : vector<8x32xbf16>, vector<32x8xbf16>, vector<8x8xf32> -> vector<8x8xf32>
    %cst_356 = arith.constant dense<0.000000e+00> : vector<8x8xf32>
    %735 = tpu.matmul %733, %727, %cst_356 {dimension_numbers = #tpu.dot_dimension_numbers<[1], [0], [0], [1], [0, 0, 1, 1], [], []>} : vector<8x32xbf16>, vector<32x8xbf16>, vector<8x8xf32> -> vector<8x8xf32>
    %736 = arith.mulf %734, %734 : vector<8x8xf32>
    %737 = arith.subf %735, %736 : vector<8x8xf32>
    %cst_357 = arith.constant 0.000000e+00 : f32
    %738 = vector.broadcast %cst_357 : f32 to vector<8x8xf32>
    %739 = arith.maximumf %737, %738 : vector<8x8xf32>
    %cst_358 = arith.constant 9.99999974E-6 : f32
    %740 = vector.broadcast %cst_358 : f32 to vector<8x8xf32>
    %741 = arith.addf %739, %740 : vector<8x8xf32>
    %742 = math.rsqrt %741 : vector<8x8xf32>
    %743 = arith.truncf %742 : vector<8x8xf32> to vector<8x8xbf16>
    %cst_359 = arith.constant dense<0.000000e+00> : vector<8x32xf32>
    %744 = tpu.matmul %743, %729, %cst_359 {dimension_numbers = #tpu.dot_dimension_numbers<[1], [0], [0], [1], [0, 0, 1, 1], [], []>} : vector<8x8xbf16>, vector<8x32xbf16>, vector<8x32xf32> -> vector<8x32xf32>
    %745 = arith.mulf %734, %742 : vector<8x8xf32>
    %746 = arith.truncf %745 : vector<8x8xf32> to vector<8x8xbf16>
    %cst_360 = arith.constant dense<0.000000e+00> : vector<8x32xf32>
    %747 = tpu.matmul %746, %729, %cst_360 {dimension_numbers = #tpu.dot_dimension_numbers<[1], [0], [0], [1], [0, 0, 1, 1], [], []>} : vector<8x8xbf16>, vector<8x32xbf16>, vector<8x32xf32> -> vector<8x32xf32>
    %748 = vector.broadcast %730 : vector<1x32xf32> to vector<8x32xf32>
    %749 = arith.subf %748, %747 : vector<8x32xf32>
    %750 = arith.mulf %726, %744 : vector<8x32xf32>
    %751 = arith.addf %750, %749 : vector<8x32xf32>
    %cst_361 = arith.constant 5.000000e-01 : f32
    %752 = vector.broadcast %cst_361 : f32 to vector<8x32xf32>
    %753 = arith.mulf %752, %751 : vector<8x32xf32>
    %754 = arith.mulf %751, %751 : vector<8x32xf32>
    %755 = arith.mulf %754, %751 : vector<8x32xf32>
    %cst_362 = arith.constant 4.471500e-02 : f32
    %756 = vector.broadcast %cst_362 : f32 to vector<8x32xf32>
    %757 = arith.mulf %756, %755 : vector<8x32xf32>
    %758 = arith.addf %751, %757 : vector<8x32xf32>
    %cst_363 = arith.constant 0.797884583 : f32
    %759 = vector.broadcast %cst_363 : f32 to vector<8x32xf32>
    %760 = arith.mulf %759, %758 : vector<8x32xf32>
    %761 = math.tanh %760 : vector<8x32xf32>
    %cst_364 = arith.constant 1.000000e+00 : f32
    %762 = vector.broadcast %cst_364 : f32 to vector<8x32xf32>
    %763 = arith.addf %762, %761 : vector<8x32xf32>
    %764 = arith.mulf %753, %763 : vector<8x32xf32>
    %c3_365 = arith.constant 3 : index
    %c0_366 = arith.constant 0 : index
    %c0_367 = arith.constant 0 : index
    %765 = vector.load %arg15[%c3_365, %c0_366, %c0_367] : memref<4x32x128xbf16, #tpu.memory_space<vmem>>, vector<1x32x128xbf16>
    %766 = vector.shape_cast %765 : vector<1x32x128xbf16> to vector<32x128xbf16>
    %c8_368 = arith.constant 8 : index
    %c0_369 = arith.constant 0 : index
    %767 = vector.load %arg19[%c8_368, %c0_369] : memref<11x128xf32, #tpu.memory_space<vmem>>, vector<1x128xf32>
    %768 = arith.truncf %764 : vector<8x32xf32> to vector<8x32xbf16>
    %cst_370 = arith.constant dense<0.000000e+00> : vector<8x128xf32>
    %769 = tpu.matmul %768, %766, %cst_370 {dimension_numbers = #tpu.dot_dimension_numbers<[1], [0], [0], [1], [0, 0, 1, 1], [], []>} : vector<8x32xbf16>, vector<32x128xbf16>, vector<8x128xf32> -> vector<8x128xf32>
    %770 = vector.broadcast %767 : vector<1x128xf32> to vector<8x128xf32>
    %771 = arith.addf %769, %770 : vector<8x128xf32>
    %772 = arith.addf %591, %771 : vector<8x128xf32>
    %c9_371 = arith.constant 9 : index
    %c0_372 = arith.constant 0 : index
    %773 = vector.load %arg19[%c9_371, %c0_372] : memref<11x128xf32, #tpu.memory_space<vmem>>, vector<1x128xf32>
    %774 = vector.broadcast %773 : vector<1x128xf32> to vector<8x128xf32>
    %775 = arith.mulf %772, %774 : vector<8x128xf32>
    %c10_373 = arith.constant 10 : index
    %c0_374 = arith.constant 0 : index
    %776 = vector.load %arg19[%c10_373, %c0_374] : memref<11x128xf32, #tpu.memory_space<vmem>>, vector<1x128xf32>
    %777 = vector.broadcast %776 : vector<1x128xf32> to vector<8x128xf32>
    %778 = arith.addf %775, %777 : vector<8x128xf32>
    %cst_375 = arith.constant 5.000000e-01 : f32
    %779 = vector.broadcast %cst_375 : f32 to vector<8x128xf32>
    %780 = arith.mulf %779, %778 : vector<8x128xf32>
    %781 = arith.mulf %778, %778 : vector<8x128xf32>
    %782 = arith.mulf %781, %778 : vector<8x128xf32>
    %cst_376 = arith.constant 4.471500e-02 : f32
    %783 = vector.broadcast %cst_376 : f32 to vector<8x128xf32>
    %784 = arith.mulf %783, %782 : vector<8x128xf32>
    %785 = arith.addf %778, %784 : vector<8x128xf32>
    %cst_377 = arith.constant 0.797884583 : f32
    %786 = vector.broadcast %cst_377 : f32 to vector<8x128xf32>
    %787 = arith.mulf %786, %785 : vector<8x128xf32>
    %788 = math.tanh %787 : vector<8x128xf32>
    %cst_378 = arith.constant 1.000000e+00 : f32
    %789 = vector.broadcast %cst_378 : f32 to vector<8x128xf32>
    %790 = arith.addf %789, %788 : vector<8x128xf32>
    %791 = arith.mulf %780, %790 : vector<8x128xf32>
    %c0_379 = arith.constant 0 : index
    %c0_380 = arith.constant 0 : index
    %792 = vector.load %arg16[%c0_379, %c0_380] : memref<128x128xbf16, #tpu.memory_space<vmem>>, vector<128x128xbf16>
    %c0_381 = arith.constant 0 : index
    %c0_382 = arith.constant 0 : index
    %793 = vector.load %arg21[%c0_381, %c0_382] : memref<4x128xf32, #tpu.memory_space<vmem>>, vector<1x128xf32>
    %794 = arith.truncf %791 : vector<8x128xf32> to vector<8x128xbf16>
    %cst_383 = arith.constant dense<0.000000e+00> : vector<8x128xf32>
    %795 = tpu.matmul %794, %792, %cst_383 {dimension_numbers = #tpu.dot_dimension_numbers<[1], [0], [0], [1], [0, 0, 1, 1], [], []>} : vector<8x128xbf16>, vector<128x128xbf16>, vector<8x128xf32> -> vector<8x128xf32>
    %796 = vector.broadcast %793 : vector<1x128xf32> to vector<8x128xf32>
    %797 = arith.addf %795, %796 : vector<8x128xf32>
    %cst_384 = arith.constant dense<0.000000e+00> : vector<8xf32>
    %798 = vector.multi_reduction <add>, %797, %cst_384 [1] : vector<8x128xf32> to vector<8xf32>
    %799 = vector.shape_cast %798 : vector<8xf32> to vector<8x1xf32>
    %cst_385 = arith.constant 1.280000e+02 : f32
    %800 = vector.broadcast %cst_385 : f32 to vector<8x1xf32>
    %801 = arith.divf %799, %800 : vector<8x1xf32>
    %802 = arith.mulf %797, %797 : vector<8x128xf32>
    %cst_386 = arith.constant dense<0.000000e+00> : vector<8xf32>
    %803 = vector.multi_reduction <add>, %802, %cst_386 [1] : vector<8x128xf32> to vector<8xf32>
    %804 = vector.shape_cast %803 : vector<8xf32> to vector<8x1xf32>
    %cst_387 = arith.constant 1.280000e+02 : f32
    %805 = vector.broadcast %cst_387 : f32 to vector<8x1xf32>
    %806 = arith.divf %804, %805 : vector<8x1xf32>
    %807 = arith.mulf %801, %801 : vector<8x1xf32>
    %808 = arith.subf %806, %807 : vector<8x1xf32>
    %cst_388 = arith.constant 0.000000e+00 : f32
    %809 = vector.broadcast %cst_388 : f32 to vector<8x1xf32>
    %810 = arith.maximumf %808, %809 : vector<8x1xf32>
    %811 = vector.broadcast %801 : vector<8x1xf32> to vector<8x128xf32>
    %812 = arith.subf %797, %811 : vector<8x128xf32>
    %c1_389 = arith.constant 1 : index
    %c0_390 = arith.constant 0 : index
    %813 = vector.load %arg21[%c1_389, %c0_390] : memref<4x128xf32, #tpu.memory_space<vmem>>, vector<1x128xf32>
    %cst_391 = arith.constant 9.99999974E-6 : f32
    %814 = vector.broadcast %cst_391 : f32 to vector<8x1xf32>
    %815 = arith.addf %810, %814 : vector<8x1xf32>
    %816 = math.rsqrt %815 : vector<8x1xf32>
    %817 = vector.broadcast %813 : vector<1x128xf32> to vector<8x128xf32>
    %818 = vector.broadcast %816 : vector<8x1xf32> to vector<8x128xf32>
    %819 = arith.mulf %817, %818 : vector<8x128xf32>
    %820 = arith.mulf %812, %819 : vector<8x128xf32>
    %c2_392 = arith.constant 2 : index
    %c0_393 = arith.constant 0 : index
    %821 = vector.load %arg21[%c2_392, %c0_393] : memref<4x128xf32, #tpu.memory_space<vmem>>, vector<1x128xf32>
    %822 = vector.broadcast %821 : vector<1x128xf32> to vector<8x128xf32>
    %823 = arith.addf %820, %822 : vector<8x128xf32>
    %cst_394 = arith.constant 5.000000e-01 : f32
    %824 = vector.broadcast %cst_394 : f32 to vector<8x128xf32>
    %825 = arith.mulf %824, %823 : vector<8x128xf32>
    %826 = arith.mulf %823, %823 : vector<8x128xf32>
    %827 = arith.mulf %826, %823 : vector<8x128xf32>
    %cst_395 = arith.constant 4.471500e-02 : f32
    %828 = vector.broadcast %cst_395 : f32 to vector<8x128xf32>
    %829 = arith.mulf %828, %827 : vector<8x128xf32>
    %830 = arith.addf %823, %829 : vector<8x128xf32>
    %cst_396 = arith.constant 0.797884583 : f32
    %831 = vector.broadcast %cst_396 : f32 to vector<8x128xf32>
    %832 = arith.mulf %831, %830 : vector<8x128xf32>
    %833 = math.tanh %832 : vector<8x128xf32>
    %cst_397 = arith.constant 1.000000e+00 : f32
    %834 = vector.broadcast %cst_397 : f32 to vector<8x128xf32>
    %835 = arith.addf %834, %833 : vector<8x128xf32>
    %836 = arith.mulf %825, %835 : vector<8x128xf32>
    %c0_398 = arith.constant 0 : index
    %c0_399 = arith.constant 0 : index
    %837 = vector.load %arg17[%c0_398, %c0_399] : memref<128x128xbf16, #tpu.memory_space<vmem>>, vector<128x128xbf16>
    %c3_400 = arith.constant 3 : index
    %c0_401 = arith.constant 0 : index
    %838 = vector.load %arg21[%c3_400, %c0_401] : memref<4x128xf32, #tpu.memory_space<vmem>>, vector<1x128xf32>
    %839 = arith.truncf %836 : vector<8x128xf32> to vector<8x128xbf16>
    %cst_402 = arith.constant dense<0.000000e+00> : vector<8x128xf32>
    %840 = tpu.matmul %839, %837, %cst_402 {dimension_numbers = #tpu.dot_dimension_numbers<[1], [0], [0], [1], [0, 0, 1, 1], [], []>} : vector<8x128xbf16>, vector<128x128xbf16>, vector<8x128xf32> -> vector<8x128xf32>
    %841 = vector.broadcast %838 : vector<1x128xf32> to vector<8x128xf32>
    %842 = arith.addf %840, %841 : vector<8x128xf32>
    %843 = arith.addf %797, %842 : vector<8x128xf32>
    %c0_403 = arith.constant 0 : index
    %c0_404 = arith.constant 0 : index
    %844 = vector.load %arg22[%c0_403, %c0_404] : memref<8x128xf32, #tpu.memory_space<vmem>>, vector<8x128xf32>
    tpu.vector_store %arg22[%c0_403, %c0_404], %843 {strides = array<i32>} : memref<8x128xf32, #tpu.memory_space<vmem>>, vector<8x128xf32>,
    return
  }
  func.func @transform_0(%arg0: i32) -> (i32, i32) {
    %c0_i32 = arith.constant 0 : i32
    %c0_i32_0 = arith.constant 0 : i32
    return %arg0, %c0_i32 : i32, i32
  }
  func.func @transform_1(%arg0: i32) -> (i32, i32) {
    %c0_i32 = arith.constant 0 : i32
    %c0_i32_0 = arith.constant 0 : i32
    %c0_i32_1 = arith.constant 0 : i32
    return %c0_i32, %c0_i32_0 : i32, i32
  }
  func.func @transform_2(%arg0: i32) -> (i32, i32) {
    %c0_i32 = arith.constant 0 : i32
    %c0_i32_0 = arith.constant 0 : i32
    %c0_i32_1 = arith.constant 0 : i32
    return %c0_i32, %c0_i32_0 : i32, i32
  }
  func.func @transform_3(%arg0: i32) -> (i32, i32) {
    %c0_i32 = arith.constant 0 : i32
    %c0_i32_0 = arith.constant 0 : i32
    %c0_i32_1 = arith.constant 0 : i32
    return %c0_i32, %c0_i32_0 : i32, i32
  }
  func.func @transform_4(%arg0: i32) -> (i32, i32) {
    %c0_i32 = arith.constant 0 : i32
    %c0_i32_0 = arith.constant 0 : i32
    %c0_i32_1 = arith.constant 0 : i32
    return %c0_i32, %c0_i32_0 : i32, i32
  }
  func.func @transform_5(%arg0: i32) -> (i32, i32) {
    %c0_i32 = arith.constant 0 : i32
    %c0_i32_0 = arith.constant 0 : i32
    %c0_i32_1 = arith.constant 0 : i32
    return %c0_i32, %c0_i32_0 : i32, i32
  }
  func.func @transform_6(%arg0: i32) -> (i32, i32) {
    %c0_i32 = arith.constant 0 : i32
    %c0_i32_0 = arith.constant 0 : i32
    %c0_i32_1 = arith.constant 0 : i32
    return %c0_i32, %c0_i32_0 : i32, i32
  }
  func.func @transform_7(%arg0: i32) -> (i32, i32, i32) {
    %c0_i32 = arith.constant 0 : i32
    %c0_i32_0 = arith.constant 0 : i32
    %c0_i32_1 = arith.constant 0 : i32
    %c0_i32_2 = arith.constant 0 : i32
    return %c0_i32, %c0_i32_0, %c0_i32_1 : i32, i32, i32
  }
  func.func @transform_8(%arg0: i32) -> (i32, i32, i32) {
    %c0_i32 = arith.constant 0 : i32
    %c0_i32_0 = arith.constant 0 : i32
    %c0_i32_1 = arith.constant 0 : i32
    %c0_i32_2 = arith.constant 0 : i32
    return %c0_i32, %c0_i32_0, %c0_i32_1 : i32, i32, i32
  }
  func.func @transform_9(%arg0: i32) -> (i32, i32, i32) {
    %c0_i32 = arith.constant 0 : i32
    %c0_i32_0 = arith.constant 0 : i32
    %c0_i32_1 = arith.constant 0 : i32
    %c0_i32_2 = arith.constant 0 : i32
    return %c0_i32, %c0_i32_0, %c0_i32_1 : i32, i32, i32
  }
  func.func @transform_10(%arg0: i32) -> (i32, i32, i32) {
    %c0_i32 = arith.constant 0 : i32
    %c0_i32_0 = arith.constant 0 : i32
    %c0_i32_1 = arith.constant 0 : i32
    %c0_i32_2 = arith.constant 0 : i32
    return %c0_i32, %c0_i32_0, %c0_i32_1 : i32, i32, i32
  }
  func.func @transform_11(%arg0: i32) -> (i32, i32, i32) {
    %c0_i32 = arith.constant 0 : i32
    %c0_i32_0 = arith.constant 0 : i32
    %c0_i32_1 = arith.constant 0 : i32
    %c0_i32_2 = arith.constant 0 : i32
    return %c0_i32, %c0_i32_0, %c0_i32_1 : i32, i32, i32
  }
  func.func @transform_12(%arg0: i32) -> (i32, i32, i32) {
    %c0_i32 = arith.constant 0 : i32
    %c0_i32_0 = arith.constant 0 : i32
    %c0_i32_1 = arith.constant 0 : i32
    %c0_i32_2 = arith.constant 0 : i32
    return %c0_i32, %c0_i32_0, %c0_i32_1 : i32, i32, i32
  }
  func.func @transform_13(%arg0: i32) -> (i32, i32, i32) {
    %c0_i32 = arith.constant 0 : i32
    %c0_i32_0 = arith.constant 0 : i32
    %c0_i32_1 = arith.constant 0 : i32
    %c0_i32_2 = arith.constant 0 : i32
    return %c0_i32, %c0_i32_0, %c0_i32_1 : i32, i32, i32
  }
  func.func @transform_14(%arg0: i32) -> (i32, i32, i32) {
    %c0_i32 = arith.constant 0 : i32
    %c0_i32_0 = arith.constant 0 : i32
    %c0_i32_1 = arith.constant 0 : i32
    %c0_i32_2 = arith.constant 0 : i32
    return %c0_i32, %c0_i32_0, %c0_i32_1 : i32, i32, i32
  }
  func.func @transform_15(%arg0: i32) -> (i32, i32) {
    %c0_i32 = arith.constant 0 : i32
    %c0_i32_0 = arith.constant 0 : i32
    %c0_i32_1 = arith.constant 0 : i32
    return %c0_i32, %c0_i32_0 : i32, i32
  }
  func.func @transform_16(%arg0: i32) -> (i32, i32) {
    %c0_i32 = arith.constant 0 : i32
    %c0_i32_0 = arith.constant 0 : i32
    %c0_i32_1 = arith.constant 0 : i32
    return %c0_i32, %c0_i32_0 : i32, i32
  }
  func.func @transform_17(%arg0: i32) -> (i32, i32) {
    %c0_i32 = arith.constant 0 : i32
    %c0_i32_0 = arith.constant 0 : i32
    %c0_i32_1 = arith.constant 0 : i32
    return %c0_i32, %c0_i32_0 : i32, i32
  }
  func.func @transform_18(%arg0: i32) -> (i32, i32) {
    %c0_i32 = arith.constant 0 : i32
    %c0_i32_0 = arith.constant 0 : i32
    %c0_i32_1 = arith.constant 0 : i32
    return %c0_i32, %c0_i32_0 : i32, i32
  }
  func.func @transform_19(%arg0: i32) -> (i32, i32) {
    %c0_i32 = arith.constant 0 : i32
    %c0_i32_0 = arith.constant 0 : i32
    %c0_i32_1 = arith.constant 0 : i32
    return %c0_i32, %c0_i32_0 : i32, i32
  }
  func.func @transform_20(%arg0: i32) -> (i32, i32) {
    %c0_i32 = arith.constant 0 : i32
    %c0_i32_0 = arith.constant 0 : i32
    %c0_i32_1 = arith.constant 0 : i32
    return %c0_i32, %c0_i32_0 : i32, i32
  }
  func.func @transform_21(%arg0: i32) -> (i32, i32) {
    %c0_i32 = arith.constant 0 : i32
    %c0_i32_0 = arith.constant 0 : i32
    return %arg0, %c0_i32 : i32, i32
  }
}

</mosaic_0001>

<llo_original>
// kernel: tpu_custom_call.1
$region0: #{tpu_custom_call.1}
  #allocation0 [shape = 'u32[]', space=smem, size = 0x4, offset = 0x4, fixed_abs, tag = 'smem constant byte address 0x4 - core index']
  #allocation1 [shape = 'u32[144,128]{1,0:T(1,128)}', space=vmem, size = 0x12000, scoped, tag = 'internal scratch']
  %s0 = inlined_call_operand.hbm [shape: bf16[16,256], index: 0, kind: input, shape index: {}]
  %s1 = inlined_call_operand.vmem [shape: bf16[256,512], index: 1, kind: input, shape index: {}]
  %s2 = inlined_call_operand.hbm [shape: bf16[512,128], index: 2, kind: input, shape index: {}]
  %s3 = inlined_call_operand.vmem [shape: bf16[512,32], index: 3, kind: input, shape index: {}]
  %s4 = inlined_call_operand.vmem [shape: bf16[32,512], index: 4, kind: input, shape index: {}]
  %s5 = inlined_call_operand.vmem [shape: bf16[128,8], index: 5, kind: input, shape index: {}]
  %s6 = inlined_call_operand.vmem [shape: bf16[32,8], index: 6, kind: input, shape index: {}]
  %s7 = inlined_call_operand.hbm [shape: bf16[4,8,128], index: 7, kind: input, shape index: {}]
  %s8 = inlined_call_operand.hbm [shape: bf16[4,8,32], index: 8, kind: input, shape index: {}]
  %s9 = inlined_call_operand.hbm [shape: bf16[4,8,32], index: 9, kind: input, shape index: {}]
  %s10 = inlined_call_operand.vmem [shape: bf16[4,8,32], index: 10, kind: input, shape index: {}]
  %s11 = inlined_call_operand.vmem [shape: bf16[4,128,32], index: 11, kind: input, shape index: {}]
  %s12 = inlined_call_operand.hbm [shape: bf16[4,32,32], index: 12, kind: input, shape index: {}]
  %s13 = inlined_call_operand.hbm [shape: bf16[4,32,32], index: 13, kind: input, shape index: {}]
  %s14 = inlined_call_operand.hbm [shape: bf16[4,32,128], index: 14, kind: input, shape index: {}]
  %s15 = inlined_call_operand.hbm [shape: bf16[128,128], index: 15, kind: input, shape index: {}]
  %s16 = inlined_call_operand.hbm [shape: bf16[128,128], index: 16, kind: input, shape index: {}]
  %s17 = inlined_call_operand.vmem [shape: f32[2,512], index: 17, kind: input, shape index: {}]
  %s18 = inlined_call_operand.hbm [shape: f32[11,128], index: 18, kind: input, shape index: {}]
  %s19 = inlined_call_operand.vmem [shape: f32[24,32], index: 19, kind: input, shape index: {}]
  %s20 = inlined_call_operand.vmem [shape: f32[4,128], index: 20, kind: input, shape index: {}]
  %s21 = inlined_call_operand.hbm [shape: f32[16,128], index: 21, kind: output, shape index: {}]
  %s22 = sld [smem:[#allocation0]]
  $region161: #{tpu_custom_call.1} parent=0
    _
  %s24 = ssub.s32 1, %s22
  %s25 = scalar_select 0, %s24, %s22
  $region1: #{tpu_custom_call.1} parent=0
    #allocation2 [shape = 'u8[8192]{0}', space=vmem, size = 0x2000, scoped, tag = 'input window, operand 0']
    #allocation3 [shape = 's32[2]{0}', space=sflag, size = 0x8, scoped, tag = 'scoped memory for tpu_custom_call.1']
    #allocation4 [shape = 's32[2]{0}', space=sflag, size = 0x8, scoped, tag = 'scoped memory for tpu_custom_call.1']
    #allocation5 [shape = 'u8[131072]{0}', space=vmem, size = 0x20000, scoped, tag = 'input window, operand 2, single buffered']
    #allocation6 [shape = 's32[1]{0}', space=sflag, size = 0x4, scoped, tag = 'scoped memory for tpu_custom_call.1']
    #allocation7 [shape = 'u8[8192]{0}', space=vmem, size = 0x2000, scoped, tag = 'input window, operand 7, single buffered']
    #allocation8 [shape = 'u8[8192]{0}', space=vmem, size = 0x2000, scoped, tag = 'input window, operand 8, single buffered']
    #allocation9 [shape = 's32[1]{0}', space=sflag, size = 0x4, scoped, tag = 'scoped memory for tpu_custom_call.1']
    #allocation10 [shape = 'u8[8192]{0}', space=vmem, size = 0x2000, scoped, tag = 'input window, operand 9, single buffered']
    #allocation11 [shape = 'u8[32768]{0}', space=vmem, size = 0x8000, scoped, tag = 'input window, operand 12, single buffered']
    #allocation12 [shape = 's32[1]{0}', space=sflag, size = 0x4, scoped, tag = 'scoped memory for tpu_custom_call.1']
    #allocation13 [shape = 'u8[32768]{0}', space=vmem, size = 0x8000, scoped, tag = 'input window, operand 13, single buffered']
    #allocation14 [shape = 'u8[32768]{0}', space=vmem, size = 0x8000, scoped, tag = 'input window, operand 14, single buffered']
    #allocation15 [shape = 's32[1]{0}', space=sflag, size = 0x4, scoped, tag = 'scoped memory for tpu_custom_call.1']
    #allocation16 [shape = 'u8[32768]{0}', space=vmem, size = 0x8000, scoped, tag = 'input window, operand 15, single buffered']
    #allocation17 [shape = 'u8[32768]{0}', space=vmem, size = 0x8000, scoped, tag = 'input window, operand 16, single buffered']
    #allocation18 [shape = 's32[1]{0}', space=sflag, size = 0x4, scoped, tag = 'scoped memory for tpu_custom_call.1']
    #allocation19 [shape = 'u8[8192]{0}', space=vmem, size = 0x2000, scoped, tag = 'input window, operand 18, single buffered']
    #allocation20 [shape = 'u8[8192]{0}', space=vmem, size = 0x2000, scoped, tag = 'output window, operand 0']
    %26 = vsyncpa [#allocation3], 0
    %s27 = scalar_lea.sflag [#allocation3], 1
    %28 = vsyncpa %s27, 0
    %29 = vsyncpa [#allocation6], 0
    %30 = vsyncpa [#allocation9], 0
    %31 = vsyncpa [#allocation12], 0
    %32 = vsyncpa [#allocation15], 0
    %33 = vsyncpa [#allocation18], 0
    %34 = vsyncpa [#allocation4], 0
    %s35 = scalar_lea.sflag [#allocation4], 1
    %36 = vsyncpa %s35, 0
    loop: start=0, step=1, limit=4
    $region2: #{tpu_custom_call.1} parent=1 // loop_pre_header
      _
    $region3: #{tpu_custom_call.1} parent=1 // loop_header
      %s38 = sphi 0, %s42
      %p39 = scmp.ge.s32.totalorder %s38, 4
      %s48 = sphi 0, %s50
      %s51 = sphi 0, %s48
      %s52 = sphi 0, %s51
      %s68 = sphi 0, %s52
      %s72 = sphi 0, %s72
      %s74 = sphi 0, %s72
      %s75 = sphi 0, %s74
      %s89 = sphi 0, %s75
      %s93 = sphi 0, %s93
      %s95 = sphi 0, %s93
      %s96 = sphi 0, %s95
      %s110 = sphi 0, %s96
      %s114 = sphi 0, %s114
      %s116 = sphi 0, %s114
      %s117 = sphi 0, %s116
      %s131 = sphi 0, %s117
      %s135 = sphi 0, %s135
      %s137 = sphi 0, %s135
      %s138 = sphi 0, %s137
      %s152 = sphi 0, %s138
      %s156 = sphi 0, %s156
      %s158 = sphi 0, %s156
      %s159 = sphi 0, %s158
      %s173 = sphi 0, %s159
      %s177 = sphi 0, %s177
      %s179 = sphi 0, %s177
      %s180 = sphi 0, %s179
      %s194 = sphi 0, %s180
      %s198 = sphi 0, %s198
      %s200 = sphi 0, %s198
      %s201 = sphi 0, %s200
      %s215 = sphi 0, %s201
      %s219 = sphi 0, %s219
      %s221 = sphi 0, %s219
      %s222 = sphi 0, %s221
      %s236 = sphi 0, %s222
      %s240 = sphi 0, %s240
      %s242 = sphi 0, %s240
      %s243 = sphi 0, %s242
      %s257 = sphi 0, %s243
      %s261 = sphi 0, %s261
      %s263 = sphi 0, %s261
      %s264 = sphi 0, %s263
      %s278 = sphi 0, %s264
      %s282 = sphi 0, %s282
      %s284 = sphi 0, %s282
      %s285 = sphi 0, %s284
      %s299 = sphi 0, %s285
      %s303 = sphi 0, %s303
      %s305 = sphi 0, %s303
      %s306 = sphi 0, %s305
      %s320 = sphi 0, %s306
      %s324 = sphi 0, %s324
      %s326 = sphi 0, %s324
      %s327 = sphi 0, %s326
      %s341 = sphi 0, %s327
      %s345 = sphi 0, %s345
      %s347 = sphi 0, %s345
      %s348 = sphi 0, %s347
      %s362 = sphi 0, %s348
      %s366 = sphi 0, %s366
      %s368 = sphi 0, %s366
      %s369 = sphi 0, %s368
      %s383 = sphi 0, %s369
      %s387 = sphi 0, %s387
      %s389 = sphi 0, %s387
      %s390 = sphi 0, %s389
      %s404 = sphi 0, %s390
      %s408 = sphi 0, %s408
      %s410 = sphi 0, %s408
      %s411 = sphi 0, %s410
      %s425 = sphi 0, %s411
      %s429 = sphi 0, %s429
      %s431 = sphi 0, %s429
      %s432 = sphi 0, %s431
      %s446 = sphi 0, %s432
      %s450 = sphi 0, %s450
      %s452 = sphi 0, %s450
      %s453 = sphi 0, %s452
      %s467 = sphi 0, %s453
      %s471 = sphi 0, %s471
      %s473 = sphi 0, %s471
      %s474 = sphi 0, %s473
      %s488 = sphi 0, %s474
      %s494 = sphi 0, %s496
      %s497 = sphi 0, %s494
      %s498 = sphi 0, %s497
      %s514 = sphi 0, %s498
    $region4: #{tpu_custom_call.1} parent=1 // loop_header_branch
      %41 = sbr.rel (%p39) target = $region8
    $region5: #{tpu_custom_call.1} parent=1 // loop_body
      %s43 = ssub.s32 %s38, 1
      %s44 = ssub.s32 %s38, 2
      %s45 = sadd.s32 %s38, 1
      %s46 = ssub.s32 %s38, %s45
      %p47 = scmp.eq.s32.totalorder %s46, 0
      %s49 = sadd.s32 %s48, 1
      %s50 = scalar_select %p47, %s48, %s49
      %p53 = pneg %p47
      %p54 = scmp.eq.s32.totalorder %s38, 1
      %p55 = por %p53, %p54
      %p56 = scmp.ne.s32.totalorder %s48, %s51
      %p57 = scmp.eq.s32.totalorder %s38, 0
      %p58 = por %p56, %p57
      %p59 = scmp.ne.s32.totalorder %s48, %s51
      %p60 = scmp.eq.s32.totalorder %s43, 1
      %p61 = por %p59, %p60
      %p62 = scmp.ne.s32.totalorder %s51, %s52
      %p63 = scmp.eq.s32.totalorder %s43, 0
      %p64 = por %p62, %p63
      %p65 = scmp.ne.s32.totalorder %s51, %s52
      %p66 = scmp.eq.s32.totalorder %s44, 1
      %p67 = por %p65, %p66
      %p69 = scmp.ne.s32.totalorder %s52, %s68
      %p70 = scmp.eq.s32.totalorder %s44, 0
      %p71 = por %p69, %p70
      %s73 = sadd.s32 %s72, 1
      %p76 = scmp.eq.s32.totalorder %s38, 1
      %p77 = scmp.ne.s32.totalorder %s72, %s74
      %p78 = scmp.eq.s32.totalorder %s38, 0
      %p79 = por %p77, %p78
      %p80 = scmp.ne.s32.totalorder %s72, %s74
      %p81 = scmp.eq.s32.totalorder %s43, 1
      %p82 = por %p80, %p81
      %p83 = scmp.ne.s32.totalorder %s74, %s75
      %p84 = scmp.eq.s32.totalorder %s43, 0
      %p85 = por %p83, %p84
      %p86 = scmp.ne.s32.totalorder %s74, %s75
      %p87 = scmp.eq.s32.totalorder %s44, 1
      %p88 = por %p86, %p87
      %p90 = scmp.ne.s32.totalorder %s75, %s89
      %p91 = scmp.eq.s32.totalorder %s44, 0
      %p92 = por %p90, %p91
      %s94 = sadd.s32 %s93, 1
      %p97 = scmp.eq.s32.totalorder %s38, 1
      %p98 = scmp.ne.s32.totalorder %s93, %s95
      %p99 = scmp.eq.s32.totalorder %s38, 0
      %p100 = por %p98, %p99
      %p101 = scmp.ne.s32.totalorder %s93, %s95
      %p102 = scmp.eq.s32.totalorder %s43, 1
      %p103 = por %p101, %p102
      %p104 = scmp.ne.s32.totalorder %s95, %s96
      %p105 = scmp.eq.s32.totalorder %s43, 0
      %p106 = por %p104, %p105
      %p107 = scmp.ne.s32.totalorder %s95, %s96
      %p108 = scmp.eq.s32.totalorder %s44, 1
      %p109 = por %p107, %p108
      %p111 = scmp.ne.s32.totalorder %s96, %s110
      %p112 = scmp.eq.s32.totalorder %s44, 0
      %p113 = por %p111, %p112
      %s115 = sadd.s32 %s114, 1
      %p118 = scmp.eq.s32.totalorder %s38, 1
      %p119 = scmp.ne.s32.totalorder %s114, %s116
      %p120 = scmp.eq.s32.totalorder %s38, 0
      %p121 = por %p119, %p120
      %p122 = scmp.ne.s32.totalorder %s114, %s116
      %p123 = scmp.eq.s32.totalorder %s43, 1
      %p124 = por %p122, %p123
      %p125 = scmp.ne.s32.totalorder %s116, %s117
      %p126 = scmp.eq.s32.totalorder %s43, 0
      %p127 = por %p125, %p126
      %p128 = scmp.ne.s32.totalorder %s116, %s117
      %p129 = scmp.eq.s32.totalorder %s44, 1
      %p130 = por %p128, %p129
      %p132 = scmp.ne.s32.totalorder %s117, %s131
      %p133 = scmp.eq.s32.totalorder %s44, 0
      %p134 = por %p132, %p133
      %s136 = sadd.s32 %s135, 1
      %p139 = scmp.eq.s32.totalorder %s38, 1
      %p140 = scmp.ne.s32.totalorder %s135, %s137
      %p141 = scmp.eq.s32.totalorder %s38, 0
      %p142 = por %p140, %p141
      %p143 = scmp.ne.s32.totalorder %s135, %s137
      %p144 = scmp.eq.s32.totalorder %s43, 1
      %p145 = por %p143, %p144
      %p146 = scmp.ne.s32.totalorder %s137, %s138
      %p147 = scmp.eq.s32.totalorder %s43, 0
      %p148 = por %p146, %p147
      %p149 = scmp.ne.s32.totalorder %s137, %s138
      %p150 = scmp.eq.s32.totalorder %s44, 1
      %p151 = por %p149, %p150
      %p153 = scmp.ne.s32.totalorder %s138, %s152
      %p154 = scmp.eq.s32.totalorder %s44, 0
      %p155 = por %p153, %p154
      %s157 = sadd.s32 %s156, 1
      %p160 = scmp.eq.s32.totalorder %s38, 1
      %p161 = scmp.ne.s32.totalorder %s156, %s158
      %p162 = scmp.eq.s32.totalorder %s38, 0
      %p163 = por %p161, %p162
      %p164 = scmp.ne.s32.totalorder %s156, %s158
      %p165 = scmp.eq.s32.totalorder %s43, 1
      %p166 = por %p164, %p165
      %p167 = scmp.ne.s32.totalorder %s158, %s159
      %p168 = scmp.eq.s32.totalorder %s43, 0
      %p169 = por %p167, %p168
      %p170 = scmp.ne.s32.totalorder %s158, %s159
      %p171 = scmp.eq.s32.totalorder %s44, 1
      %p172 = por %p170, %p171
      %p174 = scmp.ne.s32.totalorder %s159, %s173
      %p175 = scmp.eq.s32.totalorder %s44, 0
      %p176 = por %p174, %p175
      %s178 = sadd.s32 %s177, 1
      %p181 = scmp.eq.s32.totalorder %s38, 1
      %p182 = scmp.ne.s32.totalorder %s177, %s179
      %p183 = scmp.eq.s32.totalorder %s38, 0
      %p184 = por %p182, %p183
      %p185 = scmp.ne.s32.totalorder %s177, %s179
      %p186 = scmp.eq.s32.totalorder %s43, 1
      %p187 = por %p185, %p186
      %p188 = scmp.ne.s32.totalorder %s179, %s180
      %p189 = scmp.eq.s32.totalorder %s43, 0
      %p190 = por %p188, %p189
      %p191 = scmp.ne.s32.totalorder %s179, %s180
      %p192 = scmp.eq.s32.totalorder %s44, 1
      %p193 = por %p191, %p192
      %p195 = scmp.ne.s32.totalorder %s180, %s194
      %p196 = scmp.eq.s32.totalorder %s44, 0
      %p197 = por %p195, %p196
      %s199 = sadd.s32 %s198, 1
      %p202 = scmp.eq.s32.totalorder %s38, 1
      %p203 = scmp.ne.s32.totalorder %s198, %s200
      %p204 = scmp.eq.s32.totalorder %s38, 0
      %p205 = por %p203, %p204
      %p206 = scmp.ne.s32.totalorder %s198, %s200
      %p207 = scmp.eq.s32.totalorder %s43, 1
      %p208 = por %p206, %p207
      %p209 = scmp.ne.s32.totalorder %s200, %s201
      %p210 = scmp.eq.s32.totalorder %s43, 0
      %p211 = por %p209, %p210
      %p212 = scmp.ne.s32.totalorder %s200, %s201
      %p213 = scmp.eq.s32.totalorder %s44, 1
      %p214 = por %p212, %p213
      %p216 = scmp.ne.s32.totalorder %s201, %s215
      %p217 = scmp.eq.s32.totalorder %s44, 0
      %p218 = por %p216, %p217
      %s220 = sadd.s32 %s219, 1
      %p223 = scmp.eq.s32.totalorder %s38, 1
      %p224 = scmp.ne.s32.totalorder %s219, %s221
      %p225 = scmp.eq.s32.totalorder %s38, 0
      %p226 = por %p224, %p225
      %p227 = scmp.ne.s32.totalorder %s219, %s221
      %p228 = scmp.eq.s32.totalorder %s43, 1
      %p229 = por %p227, %p228
      %p230 = scmp.ne.s32.totalorder %s221, %s222
      %p231 = scmp.eq.s32.totalorder %s43, 0
      %p232 = por %p230, %p231
      %p233 = scmp.ne.s32.totalorder %s221, %s222
      %p234 = scmp.eq.s32.totalorder %s44, 1
      %p235 = por %p233, %p234
      %p237 = scmp.ne.s32.totalorder %s222, %s236
      %p238 = scmp.eq.s32.totalorder %s44, 0
      %p239 = por %p237, %p238
      %s241 = sadd.s32 %s240, 1
      %p244 = scmp.eq.s32.totalorder %s38, 1
      %p245 = scmp.ne.s32.totalorder %s240, %s242
      %p246 = scmp.eq.s32.totalorder %s38, 0
      %p247 = por %p245, %p246
      %p248 = scmp.ne.s32.totalorder %s240, %s242
      %p249 = scmp.eq.s32.totalorder %s43, 1
      %p250 = por %p248, %p249
      %p251 = scmp.ne.s32.totalorder %s242, %s243
      %p252 = scmp.eq.s32.totalorder %s43, 0
      %p253 = por %p251, %p252
      %p254 = scmp.ne.s32.totalorder %s242, %s243
      %p255 = scmp.eq.s32.totalorder %s44, 1
      %p256 = por %p254, %p255
      %p258 = scmp.ne.s32.totalorder %s243, %s257
      %p259 = scmp.eq.s32.totalorder %s44, 0
      %p260 = por %p258, %p259
      %s262 = sadd.s32 %s261, 1
      %p265 = scmp.eq.s32.totalorder %s38, 1
      %p266 = scmp.ne.s32.totalorder %s261, %s263
      %p267 = scmp.eq.s32.totalorder %s38, 0
      %p268 = por %p266, %p267
      %p269 = scmp.ne.s32.totalorder %s261, %s263
      %p270 = scmp.eq.s32.totalorder %s43, 1
      %p271 = por %p269, %p270
      %p272 = scmp.ne.s32.totalorder %s263, %s264
      %p273 = scmp.eq.s32.totalorder %s43, 0
      %p274 = por %p272, %p273
      %p275 = scmp.ne.s32.totalorder %s263, %s264
      %p276 = scmp.eq.s32.totalorder %s44, 1
      %p277 = por %p275, %p276
      %p279 = scmp.ne.s32.totalorder %s264, %s278
      %p280 = scmp.eq.s32.totalorder %s44, 0
      %p281 = por %p279, %p280
      %s283 = sadd.s32 %s282, 1
      %p286 = scmp.eq.s32.totalorder %s38, 1
      %p287 = scmp.ne.s32.totalorder %s282, %s284
      %p288 = scmp.eq.s32.totalorder %s38, 0
      %p289 = por %p287, %p288
      %p290 = scmp.ne.s32.totalorder %s282, %s284
      %p291 = scmp.eq.s32.totalorder %s43, 1
      %p292 = por %p290, %p291
      %p293 = scmp.ne.s32.totalorder %s284, %s285
      %p294 = scmp.eq.s32.totalorder %s43, 0
      %p295 = por %p293, %p294
      %p296 = scmp.ne.s32.totalorder %s284, %s285
      %p297 = scmp.eq.s32.totalorder %s44, 1
      %p298 = por %p296, %p297
      %p300 = scmp.ne.s32.totalorder %s285, %s299
      %p301 = scmp.eq.s32.totalorder %s44, 0
      %p302 = por %p300, %p301
      %s304 = sadd.s32 %s303, 1
      %p307 = scmp.eq.s32.totalorder %s38, 1
      %p308 = scmp.ne.s32.totalorder %s303, %s305
      %p309 = scmp.eq.s32.totalorder %s38, 0
      %p310 = por %p308, %p309
      %p311 = scmp.ne.s32.totalorder %s303, %s305
      %p312 = scmp.eq.s32.totalorder %s43, 1
      %p313 = por %p311, %p312
      %p314 = scmp.ne.s32.totalorder %s305, %s306
      %p315 = scmp.eq.s32.totalorder %s43, 0
      %p316 = por %p314, %p315
      %p317 = scmp.ne.s32.totalorder %s305, %s306
      %p318 = scmp.eq.s32.totalorder %s44, 1
      %p319 = por %p317, %p318
      %p321 = scmp.ne.s32.totalorder %s306, %s320
      %p322 = scmp.eq.s32.totalorder %s44, 0
      %p323 = por %p321, %p322
      %s325 = sadd.s32 %s324, 1
      %p328 = scmp.eq.s32.totalorder %s38, 1
      %p329 = scmp.ne.s32.totalorder %s324, %s326
      %p330 = scmp.eq.s32.totalorder %s38, 0
      %p331 = por %p329, %p330
      %p332 = scmp.ne.s32.totalorder %s324, %s326
      %p333 = scmp.eq.s32.totalorder %s43, 1
      %p334 = por %p332, %p333
      %p335 = scmp.ne.s32.totalorder %s326, %s327
      %p336 = scmp.eq.s32.totalorder %s43, 0
      %p337 = por %p335, %p336
      %p338 = scmp.ne.s32.totalorder %s326, %s327
      %p339 = scmp.eq.s32.totalorder %s44, 1
      %p340 = por %p338, %p339
      %p342 = scmp.ne.s32.totalorder %s327, %s341
      %p343 = scmp.eq.s32.totalorder %s44, 0
      %p344 = por %p342, %p343
      %s346 = sadd.s32 %s345, 1
      %p349 = scmp.eq.s32.totalorder %s38, 1
      %p350 = scmp.ne.s32.totalorder %s345, %s347
      %p351 = scmp.eq.s32.totalorder %s38, 0
      %p352 = por %p350, %p351
      %p353 = scmp.ne.s32.totalorder %s345, %s347
      %p354 = scmp.eq.s32.totalorder %s43, 1
      %p355 = por %p353, %p354
      %p356 = scmp.ne.s32.totalorder %s347, %s348
      %p357 = scmp.eq.s32.totalorder %s43, 0
      %p358 = por %p356, %p357
      %p359 = scmp.ne.s32.totalorder %s347, %s348
      %p360 = scmp.eq.s32.totalorder %s44, 1
      %p361 = por %p359, %p360
      %p363 = scmp.ne.s32.totalorder %s348, %s362
      %p364 = scmp.eq.s32.totalorder %s44, 0
      %p365 = por %p363, %p364
      %s367 = sadd.s32 %s366, 1
      %p370 = scmp.eq.s32.totalorder %s38, 1
      %p371 = scmp.ne.s32.totalorder %s366, %s368
      %p372 = scmp.eq.s32.totalorder %s38, 0
      %p373 = por %p371, %p372
      %p374 = scmp.ne.s32.totalorder %s366, %s368
      %p375 = scmp.eq.s32.totalorder %s43, 1
      %p376 = por %p374, %p375
      %p377 = scmp.ne.s32.totalorder %s368, %s369
      %p378 = scmp.eq.s32.totalorder %s43, 0
      %p379 = por %p377, %p378
      %p380 = scmp.ne.s32.totalorder %s368, %s369
      %p381 = scmp.eq.s32.totalorder %s44, 1
      %p382 = por %p380, %p381
      %p384 = scmp.ne.s32.totalorder %s369, %s383
      %p385 = scmp.eq.s32.totalorder %s44, 0
      %p386 = por %p384, %p385
      %s388 = sadd.s32 %s387, 1
      %p391 = scmp.eq.s32.totalorder %s38, 1
      %p392 = scmp.ne.s32.totalorder %s387, %s389
      %p393 = scmp.eq.s32.totalorder %s38, 0
      %p394 = por %p392, %p393
      %p395 = scmp.ne.s32.totalorder %s387, %s389
      %p396 = scmp.eq.s32.totalorder %s43, 1
      %p397 = por %p395, %p396
      %p398 = scmp.ne.s32.totalorder %s389, %s390
      %p399 = scmp.eq.s32.totalorder %s43, 0
      %p400 = por %p398, %p399
      %p401 = scmp.ne.s32.totalorder %s389, %s390
      %p402 = scmp.eq.s32.totalorder %s44, 1
      %p403 = por %p401, %p402
      %p405 = scmp.ne.s32.totalorder %s390, %s404
      %p406 = scmp.eq.s32.totalorder %s44, 0
      %p407 = por %p405, %p406
      %s409 = sadd.s32 %s408, 1
      %p412 = scmp.eq.s32.totalorder %s38, 1
      %p413 = scmp.ne.s32.totalorder %s408, %s410
      %p414 = scmp.eq.s32.totalorder %s38, 0
      %p415 = por %p413, %p414
      %p416 = scmp.ne.s32.totalorder %s408, %s410
      %p417 = scmp.eq.s32.totalorder %s43, 1
      %p418 = por %p416, %p417
      %p419 = scmp.ne.s32.totalorder %s410, %s411
      %p420 = scmp.eq.s32.totalorder %s43, 0
      %p421 = por %p419, %p420
      %p422 = scmp.ne.s32.totalorder %s410, %s411
      %p423 = scmp.eq.s32.totalorder %s44, 1
      %p424 = por %p422, %p423
      %p426 = scmp.ne.s32.totalorder %s411, %s425
      %p427 = scmp.eq.s32.totalorder %s44, 0
      %p428 = por %p426, %p427
      %s430 = sadd.s32 %s429, 1
      %p433 = scmp.eq.s32.totalorder %s38, 1
      %p434 = scmp.ne.s32.totalorder %s429, %s431
      %p435 = scmp.eq.s32.totalorder %s38, 0
      %p436 = por %p434, %p435
      %p437 = scmp.ne.s32.totalorder %s429, %s431
      %p438 = scmp.eq.s32.totalorder %s43, 1
      %p439 = por %p437, %p438
      %p440 = scmp.ne.s32.totalorder %s431, %s432
      %p441 = scmp.eq.s32.totalorder %s43, 0
      %p442 = por %p440, %p441
      %p443 = scmp.ne.s32.totalorder %s431, %s432
      %p444 = scmp.eq.s32.totalorder %s44, 1
      %p445 = por %p443, %p444
      %p447 = scmp.ne.s32.totalorder %s432, %s446
      %p448 = scmp.eq.s32.totalorder %s44, 0
      %p449 = por %p447, %p448
      %s451 = sadd.s32 %s450, 1
      %p454 = scmp.eq.s32.totalorder %s38, 1
      %p455 = scmp.ne.s32.totalorder %s450, %s452
      %p456 = scmp.eq.s32.totalorder %s38, 0
      %p457 = por %p455, %p456
      %p458 = scmp.ne.s32.totalorder %s450, %s452
      %p459 = scmp.eq.s32.totalorder %s43, 1
      %p460 = por %p458, %p459
      %p461 = scmp.ne.s32.totalorder %s452, %s453
      %p462 = scmp.eq.s32.totalorder %s43, 0
      %p463 = por %p461, %p462
      %p464 = scmp.ne.s32.totalorder %s452, %s453
      %p465 = scmp.eq.s32.totalorder %s44, 1
      %p466 = por %p464, %p465
      %p468 = scmp.ne.s32.totalorder %s453, %s467
      %p469 = scmp.eq.s32.totalorder %s44, 0
      %p470 = por %p468, %p469
      %s472 = sadd.s32 %s471, 1
      %p475 = scmp.eq.s32.totalorder %s38, 1
      %p476 = scmp.ne.s32.totalorder %s471, %s473
      %p477 = scmp.eq.s32.totalorder %s38, 0
      %p478 = por %p476, %p477
      %p479 = scmp.ne.s32.totalorder %s471, %s473
      %p480 = scmp.eq.s32.totalorder %s43, 1
      %p481 = por %p479, %p480
      %p482 = scmp.ne.s32.totalorder %s473, %s474
      %p483 = scmp.eq.s32.totalorder %s43, 0
      %p484 = por %p482, %p483
      %p485 = scmp.ne.s32.totalorder %s473, %s474
      %p486 = scmp.eq.s32.totalorder %s44, 1
      %p487 = por %p485, %p486
      %p489 = scmp.ne.s32.totalorder %s474, %s488
      %p490 = scmp.eq.s32.totalorder %s44, 0
      %p491 = por %p489, %p490
      %s492 = ssub.s32 %s38, %s45
      %p493 = scmp.eq.s32.totalorder %s492, 0
      %s495 = sadd.s32 %s494, 1
      %s496 = scalar_select %p493, %s494, %s495
      %p499 = pneg %p493
      %p500 = scmp.eq.s32.totalorder %s38, 1
      %p501 = por %p499, %p500
      %p502 = scmp.ne.s32.totalorder %s494, %s497
      %p503 = scmp.eq.s32.totalorder %s38, 0
      %p504 = por %p502, %p503
      %p505 = scmp.ne.s32.totalorder %s494, %s497
      %p506 = scmp.eq.s32.totalorder %s43, 1
      %p507 = por %p505, %p506
      %p508 = scmp.ne.s32.totalorder %s497, %s498
      %p509 = scmp.eq.s32.totalorder %s43, 0
      %p510 = por %p508, %p509
      %p511 = scmp.ne.s32.totalorder %s497, %s498
      %p512 = scmp.eq.s32.totalorder %s44, 1
      %p513 = por %p511, %p512
      %p515 = scmp.ne.s32.totalorder %s498, %s514
      %p516 = scmp.eq.s32.totalorder %s44, 0
      %p517 = por %p515, %p516
      %p518 = scmp.le.s32.totalorder 1, %s38
      %p519 = scmp.lt.s32.totalorder %s38, 3
      %p520 = pnand %p518, %p519
      %p521 = pneg %p520
      // Predicated region
      $region9: #{tpu_custom_call.1} parent=5 // pred_check
        _
      $region10: #{tpu_custom_call.1} parent=5 // pred_check_branch
        %523 = sbr.rel (%p520) target = $region12
      $region11: #{tpu_custom_call.1} parent=5 // pred_region
        %s524 = ssub.s32 %s38, 1
        // Predicated region
        $region13: #{tpu_custom_call.1} parent=11 // pred_check
          %p525 = pneg %p85
        $region14: #{tpu_custom_call.1} parent=11 // pred_check_branch
          %527 = sbr.rel (%p525) target = $region16
        $region15: #{tpu_custom_call.1} parent=11 // pred_region
          _
        $region16: #{tpu_custom_call.1} parent=11 // pred_fallthru
          _
        // Predicated region
        $region17: #{tpu_custom_call.1} parent=11 // pred_check
          %p528 = pneg %p106
        $region18: #{tpu_custom_call.1} parent=11 // pred_check_branch
          %530 = sbr.rel (%p528) target = $region20
        $region19: #{tpu_custom_call.1} parent=11 // pred_region
          %s532 = ssub.s32 4096, 4096
          %533 = vsyncadd [#allocation6], %s532
          %s534 = sshll.u32 [#allocation5], 4
          %s535 = int_to_ptr.vmem [resolvable:$true] %s534
          %540 = dma.hbm_to_vmem [thread:$0]  %s2, 4096, %s535, [#allocation6], 64, 64, 4
        $region20: #{tpu_custom_call.1} parent=11 // pred_fallthru
          _
        // Predicated region
        $region21: #{tpu_custom_call.1} parent=11 // pred_check
          %p541 = pneg %p127
        $region22: #{tpu_custom_call.1} parent=11 // pred_check_branch
          %543 = sbr.rel (%p541) target = $region24
        $region23: #{tpu_custom_call.1} parent=11 // pred_region
          _
        $region24: #{tpu_custom_call.1} parent=11 // pred_fallthru
          _
        // Predicated region
        $region25: #{tpu_custom_call.1} parent=11 // pred_check
          %p544 = pneg %p148
        $region26: #{tpu_custom_call.1} parent=11 // pred_check_branch
          %546 = sbr.rel (%p544) target = $region28
        $region27: #{tpu_custom_call.1} parent=11 // pred_region
          _
        $region28: #{tpu_custom_call.1} parent=11 // pred_fallthru
          _
        // Predicated region
        $region29: #{tpu_custom_call.1} parent=11 // pred_check
          %p547 = pneg %p169
        $region30: #{tpu_custom_call.1} parent=11 // pred_check_branch
          %549 = sbr.rel (%p547) target = $region32
        $region31: #{tpu_custom_call.1} parent=11 // pred_region
          _
        $region32: #{tpu_custom_call.1} parent=11 // pred_fallthru
          _
        // Predicated region
        $region33: #{tpu_custom_call.1} parent=11 // pred_check
          %p550 = pneg %p190
        $region34: #{tpu_custom_call.1} parent=11 // pred_check_branch
          %552 = sbr.rel (%p550) target = $region36
        $region35: #{tpu_custom_call.1} parent=11 // pred_region
          _
        $region36: #{tpu_custom_call.1} parent=11 // pred_fallthru
          _
        // Predicated region
        $region37: #{tpu_custom_call.1} parent=11 // pred_check
          %p553 = pneg %p211
        $region38: #{tpu_custom_call.1} parent=11 // pred_check_branch
          %555 = sbr.rel (%p553) target = $region40
        $region39: #{tpu_custom_call.1} parent=11 // pred_region
          %s557 = ssub.s32 256, 256
          %558 = vsyncadd [#allocation6], %s557
          %s559 = sshll.u32 [#allocation7], 4
          %s560 = int_to_ptr.vmem [resolvable:$true] %s559
          %565 = dma.hbm_to_vmem [thread:$0]  %s7, 256, %s560, [#allocation6], 64, 64, 4
        $region40: #{tpu_custom_call.1} parent=11 // pred_fallthru
          _
        // Predicated region
        $region41: #{tpu_custom_call.1} parent=11 // pred_check
          %p566 = pneg %p232
        $region42: #{tpu_custom_call.1} parent=11 // pred_check_branch
          %568 = sbr.rel (%p566) target = $region44
        $region43: #{tpu_custom_call.1} parent=11 // pred_region
          %s570 = ssub.s32 256, 256
          %571 = vsyncadd [#allocation9], %s570
          %s572 = sshll.u32 [#allocation8], 4
          %s573 = int_to_ptr.vmem [resolvable:$true] %s572
          %578 = dma.hbm_to_vmem [thread:$0]  %s8, 256, %s573, [#allocation9], 64, 64, 4
        $region44: #{tpu_custom_call.1} parent=11 // pred_fallthru
          _
        // Predicated region
        $region45: #{tpu_custom_call.1} parent=11 // pred_check
          %p579 = pneg %p253
        $region46: #{tpu_custom_call.1} parent=11 // pred_check_branch
          %581 = sbr.rel (%p579) target = $region48
        $region47: #{tpu_custom_call.1} parent=11 // pred_region
          %s583 = ssub.s32 256, 256
          %584 = vsyncadd [#allocation9], %s583
          %s585 = sshll.u32 [#allocation10], 4
          %s586 = int_to_ptr.vmem [resolvable:$true] %s585
          %591 = dma.hbm_to_vmem [thread:$0]  %s9, 256, %s586, [#allocation9], 64, 64, 4
        $region48: #{tpu_custom_call.1} parent=11 // pred_fallthru
          _
        // Predicated region
        $region49: #{tpu_custom_call.1} parent=11 // pred_check
          %p592 = pneg %p274
        $region50: #{tpu_custom_call.1} parent=11 // pred_check_branch
          %594 = sbr.rel (%p592) target = $region52
        $region51: #{tpu_custom_call.1} parent=11 // pred_region
          _
        $region52: #{tpu_custom_call.1} parent=11 // pred_fallthru
          _
        // Predicated region
        $region53: #{tpu_custom_call.1} parent=11 // pred_check
          %p595 = pneg %p295
        $region54: #{tpu_custom_call.1} parent=11 // pred_check_branch
          %597 = sbr.rel (%p595) target = $region56
        $region55: #{tpu_custom_call.1} parent=11 // pred_region
          _
        $region56: #{tpu_custom_call.1} parent=11 // pred_fallthru
          _
        // Predicated region
        $region57: #{tpu_custom_call.1} parent=11 // pred_check
          %p598 = pneg %p316
        $region58: #{tpu_custom_call.1} parent=11 // pred_check_branch
          %600 = sbr.rel (%p598) target = $region60
        $region59: #{tpu_custom_call.1} parent=11 // pred_region
          %s602 = ssub.s32 1024, 1024
          %603 = vsyncadd [#allocation12], %s602
          %s604 = sshll.u32 [#allocation11], 4
          %s605 = int_to_ptr.vmem [resolvable:$true] %s604
          %610 = dma.hbm_to_vmem [thread:$0]  %s12, 1024, %s605, [#allocation12], 64, 64, 4
        $region60: #{tpu_custom_call.1} parent=11 // pred_fallthru
          _
        // Predicated region
        $region61: #{tpu_custom_call.1} parent=11 // pred_check
          %p611 = pneg %p337
        $region62: #{tpu_custom_call.1} parent=11 // pred_check_branch
          %613 = sbr.rel (%p611) target = $region64
        $region63: #{tpu_custom_call.1} parent=11 // pred_region
          %s615 = ssub.s32 1024, 1024
          %616 = vsyncadd [#allocation12], %s615
          %s617 = sshll.u32 [#allocation13], 4
          %s618 = int_to_ptr.vmem [resolvable:$true] %s617
          %623 = dma.hbm_to_vmem [thread:$0]  %s13, 1024, %s618, [#allocation12], 64, 64, 4
        $region64: #{tpu_custom_call.1} parent=11 // pred_fallthru
          _
        // Predicated region
        $region65: #{tpu_custom_call.1} parent=11 // pred_check
          %p624 = pneg %p358
        $region66: #{tpu_custom_call.1} parent=11 // pred_check_branch
          %626 = sbr.rel (%p624) target = $region68
        $region67: #{tpu_custom_call.1} parent=11 // pred_region
          %s628 = ssub.s32 1024, 1024
          %629 = vsyncadd [#allocation15], %s628
          %s630 = sshll.u32 [#allocation14], 4
          %s631 = int_to_ptr.vmem [resolvable:$true] %s630
          %636 = dma.hbm_to_vmem [thread:$0]  %s14, 1024, %s631, [#allocation15], 64, 64, 4
        $region68: #{tpu_custom_call.1} parent=11 // pred_fallthru
          _
        // Predicated region
        $region69: #{tpu_custom_call.1} parent=11 // pred_check
          %p637 = pneg %p379
        $region70: #{tpu_custom_call.1} parent=11 // pred_check_branch
          %639 = sbr.rel (%p637) target = $region72
        $region71: #{tpu_custom_call.1} parent=11 // pred_region
          %s641 = ssub.s32 1024, 1024
          %642 = vsyncadd [#allocation15], %s641
          %s643 = sshll.u32 [#allocation16], 4
          %s644 = int_to_ptr.vmem [resolvable:$true] %s643
          %649 = dma.hbm_to_vmem [thread:$0]  %s15, 1024, %s644, [#allocation15], 64, 64, 4
        $region72: #{tpu_custom_call.1} parent=11 // pred_fallthru
          _
        // Predicated region
        $region73: #{tpu_custom_call.1} parent=11 // pred_check
          %p650 = pneg %p400
        $region74: #{tpu_custom_call.1} parent=11 // pred_check_branch
          %652 = sbr.rel (%p650) target = $region76
        $region75: #{tpu_custom_call.1} parent=11 // pred_region
          %s654 = ssub.s32 1024, 1024
          %655 = vsyncadd [#allocation18], %s654
          %s656 = sshll.u32 [#allocation17], 4
          %s657 = int_to_ptr.vmem [resolvable:$true] %s656
          %662 = dma.hbm_to_vmem [thread:$0]  %s16, 1024, %s657, [#allocation18], 64, 64, 4
        $region76: #{tpu_custom_call.1} parent=11 // pred_fallthru
          _
        // Predicated region
        $region77: #{tpu_custom_call.1} parent=11 // pred_check
          %p663 = pneg %p421
        $region78: #{tpu_custom_call.1} parent=11 // pred_check_branch
          %665 = sbr.rel (%p663) target = $region80
        $region79: #{tpu_custom_call.1} parent=11 // pred_region
          _
        $region80: #{tpu_custom_call.1} parent=11 // pred_fallthru
          _
        // Predicated region
        $region81: #{tpu_custom_call.1} parent=11 // pred_check
          %p666 = pneg %p442
        $region82: #{tpu_custom_call.1} parent=11 // pred_check_branch
          %668 = sbr.rel (%p666) target = $region84
        $region83: #{tpu_custom_call.1} parent=11 // pred_region
          %s670 = ssub.s32 256, 256
          %671 = vsyncadd [#allocation18], %s670
          %s672 = sshll.u32 [#allocation19], 4
          %s673 = int_to_ptr.vmem [resolvable:$true] %s672
          %678 = dma.hbm_to_vmem [thread:$0]  %s18, 256, %s673, [#allocation18], 128, 128, 8
        $region84: #{tpu_custom_call.1} parent=11 // pred_fallthru
          _
        // Predicated region
        $region85: #{tpu_custom_call.1} parent=11 // pred_check
          %p679 = pneg %p463
        $region86: #{tpu_custom_call.1} parent=11 // pred_check_branch
          %681 = sbr.rel (%p679) target = $region88
        $region87: #{tpu_custom_call.1} parent=11 // pred_region
          _
        $region88: #{tpu_custom_call.1} parent=11 // pred_fallthru
          _
        // Predicated region
        $region89: #{tpu_custom_call.1} parent=11 // pred_check
          %p682 = pneg %p484
        $region90: #{tpu_custom_call.1} parent=11 // pred_check_branch
          %684 = sbr.rel (%p682) target = $region92
        $region91: #{tpu_custom_call.1} parent=11 // pred_region
          _
        $region92: #{tpu_custom_call.1} parent=11 // pred_fallthru
          _
      $region12: #{tpu_custom_call.1} parent=5 // pred_fallthru
        _
      %p685 = scmp.lt.s32.totalorder %s38, 2
      // Predicated region
      $region93: #{tpu_custom_call.1} parent=5 // pred_check
        %p686 = pneg %p685
      $region94: #{tpu_custom_call.1} parent=5 // pred_check_branch
        %688 = sbr.rel (%p686) target = $region96
      $region95: #{tpu_custom_call.1} parent=5 // pred_region
        // Predicated region
        $region97: #{tpu_custom_call.1} parent=95 // pred_check
          %p689 = pneg %p58
        $region98: #{tpu_custom_call.1} parent=95 // pred_check_branch
          %691 = sbr.rel (%p689) target = $region100
        $region99: #{tpu_custom_call.1} parent=95 // pred_region
          %s692 = sand.u32 %s48, 1
          %s693 = scalar_lea.sflag [#allocation3], %s692
          %s694 = sand.u32 %s48, 1
          %s695 = smul.addr %s694, 8
          %s696 = scalar_lea.vmem [#allocation2], %s695
          %s698 = ssub.s32 128, 128
          %699 = vsyncadd %s693, %s698
          %s700 = smul.addr %s38, 2
          %s701 = smul.addr %s700, 64
          %s702 = scalar_lea.hbm %s0, %s701
          %s704 = sshll.u32 %s696, 4
          %s705 = int_to_ptr.vmem [resolvable:$true] %s704
          %707 = dma.hbm_to_vmem [thread:$0]  %s702, 128, %s705, %s693
        $region100: #{tpu_custom_call.1} parent=95 // pred_fallthru
          _
      $region96: #{tpu_custom_call.1} parent=5 // pred_fallthru
        _
      %p708 = scmp.le.s32.totalorder 1, %s38
      %p709 = scmp.lt.s32.totalorder %s38, 3
      %p710 = pnand %p708, %p709
      %p711 = pneg %p710
      // Predicated region
      $region101: #{tpu_custom_call.1} parent=5 // pred_check
        _
      $region102: #{tpu_custom_call.1} parent=5 // pred_check_branch
        %713 = sbr.rel (%p710) target = $region104
      $region103: #{tpu_custom_call.1} parent=5 // pred_region
        %s714 = ssub.s32 %s38, 1
        %s715 = sand.u32 %s51, 1
        %s716 = scalar_lea.sflag [#allocation3], %s715
        %s717 = sand.u32 %s51, 1
        %s718 = smul.addr %s717, 8
        %s719 = scalar_lea.vmem [#allocation2], %s718
        // Predicated region
        $region105: #{tpu_custom_call.1} parent=103 // pred_check
          %p720 = pneg %p64
        $region106: #{tpu_custom_call.1} parent=103 // pred_check_branch
          %722 = sbr.rel (%p720) target = $region108
        $region107: #{tpu_custom_call.1} parent=103 // pred_region
          %723 = dma.done %s716, 128
        $region108: #{tpu_custom_call.1} parent=103 // pred_fallthru
          _
        // Predicated region
        $region109: #{tpu_custom_call.1} parent=103 // pred_check
          %p724 = pneg %p106
        $region110: #{tpu_custom_call.1} parent=103 // pred_check_branch
          %726 = sbr.rel (%p724) target = $region112
        $region111: #{tpu_custom_call.1} parent=103 // pred_region
          %727 = dma.done [#allocation6], 4096
        $region112: #{tpu_custom_call.1} parent=103 // pred_fallthru
          _
        // Predicated region
        $region113: #{tpu_custom_call.1} parent=103 // pred_check
          %p728 = pneg %p211
        $region114: #{tpu_custom_call.1} parent=103 // pred_check_branch
          %730 = sbr.rel (%p728) target = $region116
        $region115: #{tpu_custom_call.1} parent=103 // pred_region
          %731 = dma.done [#allocation6], 256
        $region116: #{tpu_custom_call.1} parent=103 // pred_fallthru
          _
        // Predicated region
        $region117: #{tpu_custom_call.1} parent=103 // pred_check
          %p732 = pneg %p232
        $region118: #{tpu_custom_call.1} parent=103 // pred_check_branch
          %734 = sbr.rel (%p732) target = $region120
        $region119: #{tpu_custom_call.1} parent=103 // pred_region
          %735 = dma.done [#allocation9], 256
        $region120: #{tpu_custom_call.1} parent=103 // pred_fallthru
          _
        // Predicated region
        $region121: #{tpu_custom_call.1} parent=103 // pred_check
          %p736 = pneg %p253
        $region122: #{tpu_custom_call.1} parent=103 // pred_check_branch
          %738 = sbr.rel (%p736) target = $region124
        $region123: #{tpu_custom_call.1} parent=103 // pred_region
          %739 = dma.done [#allocation9], 256
        $region124: #{tpu_custom_call.1} parent=103 // pred_fallthru
          _
        // Predicated region
        $region125: #{tpu_custom_call.1} parent=103 // pred_check
          %p740 = pneg %p316
        $region126: #{tpu_custom_call.1} parent=103 // pred_check_branch
          %742 = sbr.rel (%p740) target = $region128
        $region127: #{tpu_custom_call.1} parent=103 // pred_region
          %743 = dma.done [#allocation12], 1024
        $region128: #{tpu_custom_call.1} parent=103 // pred_fallthru
          _
        // Predicated region
        $region129: #{tpu_custom_call.1} parent=103 // pred_check
          %p744 = pneg %p337
        $region130: #{tpu_custom_call.1} parent=103 // pred_check_branch
          %746 = sbr.rel (%p744) target = $region132
        $region131: #{tpu_custom_call.1} parent=103 // pred_region
          %747 = dma.done [#allocation12], 1024
        $region132: #{tpu_custom_call.1} parent=103 // pred_fallthru
          _
        // Predicated region
        $region133: #{tpu_custom_call.1} parent=103 // pred_check
          %p748 = pneg %p358
        $region134: #{tpu_custom_call.1} parent=103 // pred_check_branch
          %750 = sbr.rel (%p748) target = $region136
        $region135: #{tpu_custom_call.1} parent=103 // pred_region
          %751 = dma.done [#allocation15], 1024
        $region136: #{tpu_custom_call.1} parent=103 // pred_fallthru
          _
        // Predicated region
        $region137: #{tpu_custom_call.1} parent=103 // pred_check
          %p752 = pneg %p379
        $region138: #{tpu_custom_call.1} parent=103 // pred_check_branch
          %754 = sbr.rel (%p752) target = $region140
        $region139: #{tpu_custom_call.1} parent=103 // pred_region
          %755 = dma.done [#allocation15], 1024
        $region140: #{tpu_custom_call.1} parent=103 // pred_fallthru
          _
        // Predicated region
        $region141: #{tpu_custom_call.1} parent=103 // pred_check
          %p756 = pneg %p400
        $region142: #{tpu_custom_call.1} parent=103 // pred_check_branch
          %758 = sbr.rel (%p756) target = $region144
        $region143: #{tpu_custom_call.1} parent=103 // pred_region
          %759 = dma.done [#allocation18], 1024
        $region144: #{tpu_custom_call.1} parent=103 // pred_fallthru
          _
        // Predicated region
        $region145: #{tpu_custom_call.1} parent=103 // pred_check
          %p760 = pneg %p442
        $region146: #{tpu_custom_call.1} parent=103 // pred_check_branch
          %762 = sbr.rel (%p760) target = $region148
        $region147: #{tpu_custom_call.1} parent=103 // pred_region
          %763 = dma.done [#allocation18], 256
        $region148: #{tpu_custom_call.1} parent=103 // pred_fallthru
          _
        %s764 = sand.u32 %s51, 1
        %s765 = scalar_lea.sflag [#allocation3], %s764
        %s766 = sand.u32 %s51, 1
        %s767 = smul.addr %s766, 8
        %s768 = scalar_lea.vmem [#allocation2], %s767
        %p769 = pneg %p64
        %p770 = pneg %p61
        %p771 = pneg %p85
        %p772 = pneg %p82
        %p773 = pneg %p106
        %p774 = pneg %p103
        %p775 = pneg %p127
        %p776 = pneg %p124
        %p777 = pneg %p148
        %p778 = pneg %p145
        %p779 = pneg %p169
        %p780 = pneg %p166
        %p781 = pneg %p190
        %p782 = pneg %p187
        %p783 = pneg %p211
        %p784 = pneg %p208
        %p785 = pneg %p232
        %p786 = pneg %p229
        %p787 = pneg %p253
        %p788 = pneg %p250
        %p789 = pneg %p274
        %p790 = pneg %p271
        %p791 = pneg %p295
        %p792 = pneg %p292
        %p793 = pneg %p316
        %p794 = pneg %p313
        %p795 = pneg %p337
        %p796 = pneg %p334
        %p797 = pneg %p358
        %p798 = pneg %p355
        %p799 = pneg %p379
        %p800 = pneg %p376
        %p801 = pneg %p400
        %p802 = pneg %p397
        %p803 = pneg %p421
        %p804 = pneg %p418
        %p805 = pneg %p442
        %p806 = pneg %p439
        %p807 = pneg %p463
        %p808 = pneg %p460
        %p809 = pneg %p484
        %p810 = pneg %p481
        %p811 = pneg %p510
        %p812 = pneg %p507
        %s813 = sand.u32 %s497, 1
        %s814 = scalar_lea.sflag [#allocation4], %s813
        %s815 = sand.u32 %s497, 1
        %s816 = smul.addr %s815, 8
        %s817 = scalar_lea.vmem [#allocation20], %s816
        %v819 = vld [vmem:[%s719] sm:$0xff]
        %v820 = vld [vmem:[%s1] sm:$0xff]
        %v821 = vld [vmem:[%s1 + $0x8] sm:$0xff]
        %v822 = vld [vmem:[%s1 + $0x10] sm:$0xff]
        %v823 = vld [vmem:[%s1 + $0x18] sm:$0xff]
        %v824 = vld [vmem:[%s1 + $0x20] sm:$0xff]
        %v825 = vld [vmem:[%s1 + $0x28] sm:$0xff]
        %v826 = vld [vmem:[%s1 + $0x30] sm:$0xff]
        %v827 = vld [vmem:[%s1 + $0x38] sm:$0xff]
        %v828 = vld [vmem:[%s1 + $0x40] sm:$0xff]
        %v829 = vld [vmem:[%s1 + $0x48] sm:$0xff]
        %v830 = vld [vmem:[%s1 + $0x50] sm:$0xff]
        %v831 = vld [vmem:[%s1 + $0x58] sm:$0xff]
        %v832 = vld [vmem:[%s1 + $0x60] sm:$0xff]
        %v833 = vld [vmem:[%s1 + $0x68] sm:$0xff]
        %v834 = vld [vmem:[%s1 + $0x70] sm:$0xff]
        %v835 = vld [vmem:[%s1 + $0x78] sm:$0xff]
        %v836 = vld [vmem:[%s1 + $0x80] sm:$0xff]
        %v837 = vld [vmem:[%s1 + $0x88] sm:$0xff]
        %v838 = vld [vmem:[%s1 + $0x90] sm:$0xff]
        %v839 = vld [vmem:[%s1 + $0x98] sm:$0xff]
        %v840 = vld [vmem:[%s1 + $0xa0] sm:$0xff]
        %v841 = vld [vmem:[%s1 + $0xa8] sm:$0xff]
        %v842 = vld [vmem:[%s1 + $0xb0] sm:$0xff]
        %v843 = vld [vmem:[%s1 + $0xb8] sm:$0xff]
        %v844 = vld [vmem:[%s1 + $0xc0] sm:$0xff]
        %v845 = vld [vmem:[%s1 + $0xc8] sm:$0xff]
        %v846 = vld [vmem:[%s1 + $0xd0] sm:$0xff]
        %v847 = vld [vmem:[%s1 + $0xd8] sm:$0xff]
        %v848 = vld [vmem:[%s1 + $0xe0] sm:$0xff]
        %v849 = vld [vmem:[%s1 + $0xe8] sm:$0xff]
        %v850 = vld [vmem:[%s1 + $0xf0] sm:$0xff]
        %v851 = vld [vmem:[%s1 + $0xf8] sm:$0xff]
        %v852 = vld [vmem:[%s1 + $0x100] sm:$0xff]
        %v853 = vld [vmem:[%s1 + $0x108] sm:$0xff]
        %v854 = vld [vmem:[%s1 + $0x110] sm:$0xff]
        %v855 = vld [vmem:[%s1 + $0x118] sm:$0xff]
        %v856 = vld [vmem:[%s1 + $0x120] sm:$0xff]
        %v857 = vld [vmem:[%s1 + $0x128] sm:$0xff]
        %v858 = vld [vmem:[%s1 + $0x130] sm:$0xff]
        %v859 = vld [vmem:[%s1 + $0x138] sm:$0xff]
        %v860 = vld [vmem:[%s1 + $0x140] sm:$0xff]
        %v861 = vld [vmem:[%s1 + $0x148] sm:$0xff]
        %v862 = vld [vmem:[%s1 + $0x150] sm:$0xff]
        %v863 = vld [vmem:[%s1 + $0x158] sm:$0xff]
        %v864 = vld [vmem:[%s1 + $0x160] sm:$0xff]
        %v865 = vld [vmem:[%s1 + $0x168] sm:$0xff]
        %v866 = vld [vmem:[%s1 + $0x170] sm:$0xff]
        %v867 = vld [vmem:[%s1 + $0x178] sm:$0xff]
        %v868 = vld [vmem:[%s1 + $0x180] sm:$0xff]
        %v869 = vld [vmem:[%s1 + $0x188] sm:$0xff]
        %v870 = vld [vmem:[%s1 + $0x190] sm:$0xff]
        %v871 = vld [vmem:[%s1 + $0x198] sm:$0xff]
        %v872 = vld [vmem:[%s1 + $0x1a0] sm:$0xff]
        %v873 = vld [vmem:[%s1 + $0x1a8] sm:$0xff]
        %v874 = vld [vmem:[%s1 + $0x1b0] sm:$0xff]
        %v875 = vld [vmem:[%s1 + $0x1b8] sm:$0xff]
        %v876 = vld [vmem:[%s1 + $0x1c0] sm:$0xff]
        %v877 = vld [vmem:[%s1 + $0x1c8] sm:$0xff]
        %v878 = vld [vmem:[%s1 + $0x1d0] sm:$0xff]
        %v879 = vld [vmem:[%s1 + $0x1d8] sm:$0xff]
        %v880 = vld [vmem:[%s1 + $0x1e0] sm:$0xff]
        %v881 = vld [vmem:[%s1 + $0x1e8] sm:$0xff]
        %v882 = vld [vmem:[%s1 + $0x1f0] sm:$0xff]
        %v883 = vld [vmem:[%s1 + $0x1f8] sm:$0xff]
        %v884 = vld [vmem:[%s17] ss:$2 sm:$0xf]
        %v886 = vlaneseq
        %v887 = vshrl.u32 %v886, 7
        %v888 = vsub.s32 0, %v887
        %v889 = vrot.slane %v884, %v888
        %v890 = vlaneseq
        %v891 = vshrl.u32 %v890, 7
        %v892 = vsub.s32 1, %v891
        %v893 = vrot.slane %v884, %v892
        %v894 = vlaneseq
        %v895 = vshrl.u32 %v894, 7
        %v896 = vsub.s32 2, %v895
        %v897 = vrot.slane %v884, %v896
        %v898 = vlaneseq
        %v899 = vshrl.u32 %v898, 7
        %v900 = vsub.s32 3, %v899
        %v901 = vrot.slane %v884, %v900
        %v907 = vunpack.c.l.b16 %v819
        %v908 = vunpack.c.h.b16 %v819
        %v909 = vpack.c.b16 %v907, %v907
        %v910 = vpack.c.b16 %v908, %v908
        %v977 = vunpack.c.l.b16 %v820
        %v978 = vunpack.c.h.b16 %v820
        %v979 = vunpack.c.l.b16 %v821
        %v980 = vunpack.c.h.b16 %v821
        %v981 = vunpack.c.l.b16 %v822
        %v982 = vunpack.c.h.b16 %v822
        %v983 = vunpack.c.l.b16 %v823
        %v984 = vunpack.c.h.b16 %v823
        %v985 = vunpack.c.l.b16 %v824
        %v986 = vunpack.c.h.b16 %v824
        %v987 = vunpack.c.l.b16 %v825
        %v988 = vunpack.c.h.b16 %v825
        %v989 = vunpack.c.l.b16 %v826
        %v990 = vunpack.c.h.b16 %v826
        %v991 = vunpack.c.l.b16 %v827
        %v992 = vunpack.c.h.b16 %v827
        %v993 = vunpack.c.l.b16 %v828
        %v994 = vunpack.c.h.b16 %v828
        %v995 = vunpack.c.l.b16 %v829
        %v996 = vunpack.c.h.b16 %v829
        %v997 = vunpack.c.l.b16 %v830
        %v998 = vunpack.c.h.b16 %v830
        %v999 = vunpack.c.l.b16 %v831
        %v1000 = vunpack.c.h.b16 %v831
        %v1001 = vunpack.c.l.b16 %v832
        %v1002 = vunpack.c.h.b16 %v832
        %v1003 = vunpack.c.l.b16 %v833
        %v1004 = vunpack.c.h.b16 %v833
        %v1005 = vunpack.c.l.b16 %v834
        %v1006 = vunpack.c.h.b16 %v834
        %v1007 = vunpack.c.l.b16 %v835
        %v1008 = vunpack.c.h.b16 %v835
        %v1009 = vunpack.c.l.b16 %v836
        %v1010 = vunpack.c.h.b16 %v836
        %v1011 = vunpack.c.l.b16 %v837
        %v1012 = vunpack.c.h.b16 %v837
        %v1013 = vunpack.c.l.b16 %v838
        %v1014 = vunpack.c.h.b16 %v838
        %v1015 = vunpack.c.l.b16 %v839
        %v1016 = vunpack.c.h.b16 %v839
        %v1017 = vunpack.c.l.b16 %v840
        %v1018 = vunpack.c.h.b16 %v840
        %v1019 = vunpack.c.l.b16 %v841
        %v1020 = vunpack.c.h.b16 %v841
        %v1021 = vunpack.c.l.b16 %v842
        %v1022 = vunpack.c.h.b16 %v842
        %v1023 = vunpack.c.l.b16 %v843
        %v1024 = vunpack.c.h.b16 %v843
        %v1025 = vunpack.c.l.b16 %v844
        %v1026 = vunpack.c.h.b16 %v844
        %v1027 = vunpack.c.l.b16 %v845
        %v1028 = vunpack.c.h.b16 %v845
        %v1029 = vunpack.c.l.b16 %v846
        %v1030 = vunpack.c.h.b16 %v846
        %v1031 = vunpack.c.l.b16 %v847
        %v1032 = vunpack.c.h.b16 %v847
        %v1033 = vunpack.c.l.b16 %v848
        %v1034 = vunpack.c.h.b16 %v848
        %v1035 = vunpack.c.l.b16 %v849
        %v1036 = vunpack.c.h.b16 %v849
        %v1037 = vunpack.c.l.b16 %v850
        %v1038 = vunpack.c.h.b16 %v850
        %v1039 = vunpack.c.l.b16 %v851
        %v1040 = vunpack.c.h.b16 %v851
        %v1041 = vunpack.c.l.b16 %v852
        %v1042 = vunpack.c.h.b16 %v852
        %v1043 = vunpack.c.l.b16 %v853
        %v1044 = vunpack.c.h.b16 %v853
        %v1045 = vunpack.c.l.b16 %v854
        %v1046 = vunpack.c.h.b16 %v854
        %v1047 = vunpack.c.l.b16 %v855
        %v1048 = vunpack.c.h.b16 %v855
        %v1049 = vunpack.c.l.b16 %v856
        %v1050 = vunpack.c.h.b16 %v856
        %v1051 = vunpack.c.l.b16 %v857
        %v1052 = vunpack.c.h.b16 %v857
        %v1053 = vunpack.c.l.b16 %v858
        %v1054 = vunpack.c.h.b16 %v858
        %v1055 = vunpack.c.l.b16 %v859
        %v1056 = vunpack.c.h.b16 %v859
        %v1057 = vunpack.c.l.b16 %v860
        %v1058 = vunpack.c.h.b16 %v860
        %v1059 = vunpack.c.l.b16 %v861
        %v1060 = vunpack.c.h.b16 %v861
        %v1061 = vunpack.c.l.b16 %v862
        %v1062 = vunpack.c.h.b16 %v862
        %v1063 = vunpack.c.l.b16 %v863
        %v1064 = vunpack.c.h.b16 %v863
        %v1065 = vunpack.c.l.b16 %v864
        %v1066 = vunpack.c.h.b16 %v864
        %v1067 = vunpack.c.l.b16 %v865
        %v1068 = vunpack.c.h.b16 %v865
        %v1069 = vunpack.c.l.b16 %v866
        %v1070 = vunpack.c.h.b16 %v866
        %v1071 = vunpack.c.l.b16 %v867
        %v1072 = vunpack.c.h.b16 %v867
        %v1073 = vunpack.c.l.b16 %v868
        %v1074 = vunpack.c.h.b16 %v868
        %v1075 = vunpack.c.l.b16 %v869
        %v1076 = vunpack.c.h.b16 %v869
        %v1077 = vunpack.c.l.b16 %v870
        %v1078 = vunpack.c.h.b16 %v870
        %v1079 = vunpack.c.l.b16 %v871
        %v1080 = vunpack.c.h.b16 %v871
        %v1081 = vunpack.c.l.b16 %v872
        %v1082 = vunpack.c.h.b16 %v872
        %v1083 = vunpack.c.l.b16 %v873
        %v1084 = vunpack.c.h.b16 %v873
        %v1085 = vunpack.c.l.b16 %v874
        %v1086 = vunpack.c.h.b16 %v874
        %v1087 = vunpack.c.l.b16 %v875
        %v1088 = vunpack.c.h.b16 %v875
        %v1089 = vunpack.c.l.b16 %v876
        %v1090 = vunpack.c.h.b16 %v876
        %v1091 = vunpack.c.l.b16 %v877
        %v1092 = vunpack.c.h.b16 %v877
        %v1093 = vunpack.c.l.b16 %v878
        %v1094 = vunpack.c.h.b16 %v878
        %v1095 = vunpack.c.l.b16 %v879
        %v1096 = vunpack.c.h.b16 %v879
        %v1097 = vunpack.c.l.b16 %v880
        %v1098 = vunpack.c.h.b16 %v880
        %v1099 = vunpack.c.l.b16 %v881
        %v1100 = vunpack.c.h.b16 %v881
        %v1101 = vunpack.c.l.b16 %v882
        %v1102 = vunpack.c.h.b16 %v882
        %v1103 = vunpack.c.l.b16 %v883
        %v1104 = vunpack.c.h.b16 %v883
        %v1105 = vpack.c.b16 %v981, %v977
        %v1106 = vpack.c.b16 %v982, %v978
        %v1107 = vpack.c.b16 %v983, %v979
        %v1108 = vpack.c.b16 %v984, %v980
        %v1109 = vpack.c.b16 %v989, %v985
        %v1110 = vpack.c.b16 %v990, %v986
        %v1111 = vpack.c.b16 %v991, %v987
        %v1112 = vpack.c.b16 %v992, %v988
        %v1113 = vpack.c.b16 %v997, %v993
        %v1114 = vpack.c.b16 %v998, %v994
        %v1115 = vpack.c.b16 %v999, %v995
        %v1116 = vpack.c.b16 %v1000, %v996
        %v1117 = vpack.c.b16 %v1005, %v1001
        %v1118 = vpack.c.b16 %v1006, %v1002
        %v1119 = vpack.c.b16 %v1007, %v1003
        %v1120 = vpack.c.b16 %v1008, %v1004
        %v1121 = vpack.c.b16 %v1013, %v1009
        %v1122 = vpack.c.b16 %v1014, %v1010
        %v1123 = vpack.c.b16 %v1015, %v1011
        %v1124 = vpack.c.b16 %v1016, %v1012
        %v1125 = vpack.c.b16 %v1021, %v1017
        %v1126 = vpack.c.b16 %v1022, %v1018
        %v1127 = vpack.c.b16 %v1023, %v1019
        %v1128 = vpack.c.b16 %v1024, %v1020
        %v1129 = vpack.c.b16 %v1029, %v1025
        %v1130 = vpack.c.b16 %v1030, %v1026
        %v1131 = vpack.c.b16 %v1031, %v1027
        %v1132 = vpack.c.b16 %v1032, %v1028
        %v1133 = vpack.c.b16 %v1037, %v1033
        %v1134 = vpack.c.b16 %v1038, %v1034
        %v1135 = vpack.c.b16 %v1039, %v1035
        %v1136 = vpack.c.b16 %v1040, %v1036
        %v1137 = vpack.c.b16 %v1045, %v1041
        %v1138 = vpack.c.b16 %v1046, %v1042
        %v1139 = vpack.c.b16 %v1047, %v1043
        %v1140 = vpack.c.b16 %v1048, %v1044
        %v1141 = vpack.c.b16 %v1053, %v1049
        %v1142 = vpack.c.b16 %v1054, %v1050
        %v1143 = vpack.c.b16 %v1055, %v1051
        %v1144 = vpack.c.b16 %v1056, %v1052
        %v1145 = vpack.c.b16 %v1061, %v1057
        %v1146 = vpack.c.b16 %v1062, %v1058
        %v1147 = vpack.c.b16 %v1063, %v1059
        %v1148 = vpack.c.b16 %v1064, %v1060
        %v1149 = vpack.c.b16 %v1069, %v1065
        %v1150 = vpack.c.b16 %v1070, %v1066
        %v1151 = vpack.c.b16 %v1071, %v1067
        %v1152 = vpack.c.b16 %v1072, %v1068
        %v1153 = vpack.c.b16 %v1077, %v1073
        %v1154 = vpack.c.b16 %v1078, %v1074
        %v1155 = vpack.c.b16 %v1079, %v1075
        %v1156 = vpack.c.b16 %v1080, %v1076
        %v1157 = vpack.c.b16 %v1085, %v1081
        %v1158 = vpack.c.b16 %v1086, %v1082
        %v1159 = vpack.c.b16 %v1087, %v1083
        %v1160 = vpack.c.b16 %v1088, %v1084
        %v1161 = vpack.c.b16 %v1093, %v1089
        %v1162 = vpack.c.b16 %v1094, %v1090
        %v1163 = vpack.c.b16 %v1095, %v1091
        %v1164 = vpack.c.b16 %v1096, %v1092
        %v1165 = vpack.c.b16 %v1101, %v1097
        %v1166 = vpack.c.b16 %v1102, %v1098
        %v1167 = vpack.c.b16 %v1103, %v1099
        %v1168 = vpack.c.b16 %v1104, %v1100
        %1233 = vmatprep.subr.bf16.mxu0 %v1134
        %1234 = vmatpush1.bf16.msra.mxu0 %v1133
        %1235 = vmatprep.subr.bf16.mxu0 %v1130
        %1236 = vmatpush1.bf16.msra.mxu0 %v1129
        %1237 = vmatprep.subr.bf16.mxu0 %v1126
        %1238 = vmatpush1.bf16.msra.mxu0 %v1125
        %1239 = vmatprep.subr.bf16.mxu0 %v1122
        %1240 = vmatpush1.bf16.msra.mxu0 %v1121
        %1241 = vmatprep.subr.bf16.mxu0 %v1118
        %1242 = vmatpush1.bf16.msra.mxu0 %v1117
        %1243 = vmatprep.subr.bf16.mxu0 %v1114
        %1244 = vmatpush1.bf16.msra.mxu0 %v1113
        %1245 = vmatprep.subr.bf16.mxu0 %v1110
        %1246 = vmatpush1.bf16.msra.mxu0 %v1109
        %1247 = vmatprep.subr.bf16.mxu0 %v1106
        %1248 = vmatpush1.bf16.msra.mxu0 %v1105
        %1249 = vmatprep.subr.bf16.mxu0 %v1166
        %1250 = vmatpush2.bf16.msra.mxu0 %v1165
        %1251 = vmatprep.subr.bf16.mxu0 %v1162
        %1252 = vmatpush2.bf16.msra.mxu0 %v1161
        %1253 = vmatprep.subr.bf16.mxu0 %v1158
        %1254 = vmatpush2.bf16.msra.mxu0 %v1157
        %1255 = vmatprep.subr.bf16.mxu0 %v1154
        %1256 = vmatpush2.bf16.msra.mxu0 %v1153
        %1257 = vmatprep.subr.bf16.mxu0 %v1150
        %1258 = vmatpush2.bf16.msra.mxu0 %v1149
        %1259 = vmatprep.subr.bf16.mxu0 %v1146
        %1260 = vmatpush2.bf16.msra.mxu0 %v1145
        %1261 = vmatprep.subr.bf16.mxu0 %v1142
        %1262 = vmatpush2.bf16.msra.mxu0 %v1141
        %1263 = vmatprep.subr.bf16.mxu0 %v1138
        %1264 = vmatpush2.bf16.msra.mxu0 %v1137
        %1265 = vmatprep.mubr.bf16.mxu0 %v910
        %1266 = vmatmul.mubr.bf16.gmra.mxu0 %v909
        %v1267 = vpop.f32.mrf.mxu0
        %v1268 = vadd.f32 %v889, %v1267
        %v1269 = vpop.f32.mrf.mxu0
        %v1270 = vadd.f32 %v893, %v1269
        %v1271 = vpop.f32.mrf.mxu0
        %v1272 = vpop.f32.mrf.mxu0
        %1273 = vdwg.mxu0
        %1274 = vmatprep.subr.bf16.mxu0 %v1136
        %1275 = vmatpush1.bf16.msra.mxu0 %v1135
        %1276 = vmatprep.subr.bf16.mxu0 %v1132
        %1277 = vmatpush1.bf16.msra.mxu0 %v1131
        %1278 = vmatprep.subr.bf16.mxu0 %v1128
        %1279 = vmatpush1.bf16.msra.mxu0 %v1127
        %1280 = vmatprep.subr.bf16.mxu0 %v1124
        %1281 = vmatpush1.bf16.msra.mxu0 %v1123
        %1282 = vmatprep.subr.bf16.mxu0 %v1120
        %1283 = vmatpush1.bf16.msra.mxu0 %v1119
        %1284 = vmatprep.subr.bf16.mxu0 %v1116
        %1285 = vmatpush1.bf16.msra.mxu0 %v1115
        %1286 = vmatprep.subr.bf16.mxu0 %v1112
        %1287 = vmatpush1.bf16.msra.mxu0 %v1111
        %1288 = vmatprep.subr.bf16.mxu0 %v1108
        %1289 = vmatpush1.bf16.msra.mxu0 %v1107
        %1290 = vmatprep.subr.bf16.mxu0 %v1168
        %1291 = vmatpush2.bf16.msra.mxu0 %v1167
        %1292 = vmatprep.subr.bf16.mxu0 %v1164
        %1293 = vmatpush2.bf16.msra.mxu0 %v1163
        %1294 = vmatprep.subr.bf16.mxu0 %v1160
        %1295 = vmatpush2.bf16.msra.mxu0 %v1159
        %1296 = vmatprep.subr.bf16.mxu0 %v1156
        %1297 = vmatpush2.bf16.msra.mxu0 %v1155
        %1298 = vmatprep.subr.bf16.mxu0 %v1152
        %1299 = vmatpush2.bf16.msra.mxu0 %v1151
        %1300 = vmatprep.subr.bf16.mxu0 %v1148
        %1301 = vmatpush2.bf16.msra.mxu0 %v1147
        %1302 = vmatprep.subr.bf16.mxu0 %v1144
        %1303 = vmatpush2.bf16.msra.mxu0 %v1143
        %1304 = vmatprep.subr.bf16.mxu0 %v1140
        %1305 = vmatpush2.bf16.msra.mxu0 %v1139
        %1306 = vmatprep.mubr.bf16.mxu0 %v910
        %1307 = vmatmul.mubr.bf16.gmra.mxu0 %v909
        %v1308 = vpop.f32.mrf.mxu0
        %v1309 = vadd.f32 %v897, %v1308
        %v1310 = vpop.f32.mrf.mxu0
        %v1311 = vadd.f32 %v901, %v1310
        %v1312 = vpop.f32.mrf.mxu0
        %v1313 = vpop.f32.mrf.mxu0
        %1314 = vdwg.mxu0
        %v1315 = vld [vmem:[%s3] sm:$0xf]
        %v1316 = vld [vmem:[%s3 + $0x4] sm:$0xf]
        %v1317 = vld [vmem:[%s3 + $0x8] sm:$0xf]
        %v1318 = vld [vmem:[%s3 + $0xc] sm:$0xf]
        %v1319 = vld [vmem:[%s3 + $0x10] sm:$0xf]
        %v1320 = vld [vmem:[%s3 + $0x14] sm:$0xf]
        %v1321 = vld [vmem:[%s3 + $0x18] sm:$0xf]
        %v1322 = vld [vmem:[%s3 + $0x1c] sm:$0xf]
        %v1323 = vld [vmem:[%s3 + $0x20] sm:$0xf]
        %v1324 = vld [vmem:[%s3 + $0x24] sm:$0xf]
        %v1325 = vld [vmem:[%s3 + $0x28] sm:$0xf]
        %v1326 = vld [vmem:[%s3 + $0x2c] sm:$0xf]
        %v1327 = vld [vmem:[%s3 + $0x30] sm:$0xf]
        %v1328 = vld [vmem:[%s3 + $0x34] sm:$0xf]
        %v1329 = vld [vmem:[%s3 + $0x38] sm:$0xf]
        %v1330 = vld [vmem:[%s3 + $0x3c] sm:$0xf]
        %v1331 = vld [vmem:[%s3 + $0x40] sm:$0xf]
        %v1332 = vld [vmem:[%s3 + $0x44] sm:$0xf]
        %v1333 = vld [vmem:[%s3 + $0x48] sm:$0xf]
        %v1334 = vld [vmem:[%s3 + $0x4c] sm:$0xf]
        %v1335 = vld [vmem:[%s3 + $0x50] sm:$0xf]
        %v1336 = vld [vmem:[%s3 + $0x54] sm:$0xf]
        %v1337 = vld [vmem:[%s3 + $0x58] sm:$0xf]
        %v1338 = vld [vmem:[%s3 + $0x5c] sm:$0xf]
        %v1339 = vld [vmem:[%s3 + $0x60] sm:$0xf]
        %v1340 = vld [vmem:[%s3 + $0x64] sm:$0xf]
        %v1341 = vld [vmem:[%s3 + $0x68] sm:$0xf]
        %v1342 = vld [vmem:[%s3 + $0x6c] sm:$0xf]
        %v1343 = vld [vmem:[%s3 + $0x70] sm:$0xf]
        %v1344 = vld [vmem:[%s3 + $0x74] sm:$0xf]
        %v1345 = vld [vmem:[%s3 + $0x78] sm:$0xf]
        %v1346 = vld [vmem:[%s3 + $0x7c] sm:$0xf]
        %v1347 = vld [vmem:[%s3 + $0x80] sm:$0xf]
        %v1348 = vld [vmem:[%s3 + $0x84] sm:$0xf]
        %v1349 = vld [vmem:[%s3 + $0x88] sm:$0xf]
        %v1350 = vld [vmem:[%s3 + $0x8c] sm:$0xf]
        %v1351 = vld [vmem:[%s3 + $0x90] sm:$0xf]
        %v1352 = vld [vmem:[%s3 + $0x94] sm:$0xf]
        %v1353 = vld [vmem:[%s3 + $0x98] sm:$0xf]
        %v1354 = vld [vmem:[%s3 + $0x9c] sm:$0xf]
        %v1355 = vld [vmem:[%s3 + $0xa0] sm:$0xf]
        %v1356 = vld [vmem:[%s3 + $0xa4] sm:$0xf]
        %v1357 = vld [vmem:[%s3 + $0xa8] sm:$0xf]
        %v1358 = vld [vmem:[%s3 + $0xac] sm:$0xf]
        %v1359 = vld [vmem:[%s3 + $0xb0] sm:$0xf]
        %v1360 = vld [vmem:[%s3 + $0xb4] sm:$0xf]
        %v1361 = vld [vmem:[%s3 + $0xb8] sm:$0xf]
        %v1362 = vld [vmem:[%s3 + $0xbc] sm:$0xf]
        %v1363 = vld [vmem:[%s3 + $0xc0] sm:$0xf]
        %v1364 = vld [vmem:[%s3 + $0xc4] sm:$0xf]
        %v1365 = vld [vmem:[%s3 + $0xc8] sm:$0xf]
        %v1366 = vld [vmem:[%s3 + $0xcc] sm:$0xf]
        %v1367 = vld [vmem:[%s3 + $0xd0] sm:$0xf]
        %v1368 = vld [vmem:[%s3 + $0xd4] sm:$0xf]
        %v1369 = vld [vmem:[%s3 + $0xd8] sm:$0xf]
        %v1370 = vld [vmem:[%s3 + $0xdc] sm:$0xf]
        %v1371 = vld [vmem:[%s3 + $0xe0] sm:$0xf]
        %v1372 = vld [vmem:[%s3 + $0xe4] sm:$0xf]
        %v1373 = vld [vmem:[%s3 + $0xe8] sm:$0xf]
        %v1374 = vld [vmem:[%s3 + $0xec] sm:$0xf]
        %v1375 = vld [vmem:[%s3 + $0xf0] sm:$0xf]
        %v1376 = vld [vmem:[%s3 + $0xf4] sm:$0xf]
        %v1377 = vld [vmem:[%s3 + $0xf8] sm:$0xf]
        %v1378 = vld [vmem:[%s3 + $0xfc] sm:$0xf]
        %v1379 = vld [vmem:[%s4] sm:$0xff]
        %v1380 = vld [vmem:[%s4 + $0x8] sm:$0xff]
        %v1381 = vld [vmem:[%s4 + $0x10] sm:$0xff]
        %v1382 = vld [vmem:[%s4 + $0x18] sm:$0xff]
        %v1383 = vld [vmem:[%s4 + $0x20] sm:$0xff]
        %v1384 = vld [vmem:[%s4 + $0x28] sm:$0xff]
        %v1385 = vld [vmem:[%s4 + $0x30] sm:$0xff]
        %v1386 = vld [vmem:[%s4 + $0x38] sm:$0xff]
        %s1387 = scalar_lea.vmem %s17, 1
        %v1388 = vld [vmem:[%s1387] ss:$2 sm:$0xf]
        %v1389 = vpack.c.bf16 %v1268, %v1268
        %v1390 = vpack.c.bf16 %v1270, %v1270
        %v1391 = vpack.c.bf16 %v1309, %v1309
        %v1392 = vpack.c.bf16 %v1311, %v1311
        %v1393 = vmul.f32 %v1268, %v1268
        %v1394 = vmul.f32 %v1270, %v1270
        %v1395 = vmul.f32 %v1309, %v1309
        %v1396 = vmul.f32 %v1311, %v1311
        %v1397 = vpack.c.bf16 %v1393, %v1393
        %v1398 = vpack.c.bf16 %v1394, %v1394
        %v1399 = vpack.c.bf16 %v1395, %v1395
        %v1400 = vpack.c.bf16 %v1396, %v1396
        %v1465 = vunpack.c.l.b16 %v1315
        %v1466 = vunpack.c.l.b16 %v1316
        %v1467 = vunpack.c.l.b16 %v1317
        %v1468 = vunpack.c.l.b16 %v1318
        %v1469 = vunpack.c.l.b16 %v1319
        %v1470 = vunpack.c.l.b16 %v1320
        %v1471 = vunpack.c.l.b16 %v1321
        %v1472 = vunpack.c.l.b16 %v1322
        %v1473 = vunpack.c.l.b16 %v1323
        %v1474 = vunpack.c.l.b16 %v1324
        %v1475 = vunpack.c.l.b16 %v1325
        %v1476 = vunpack.c.l.b16 %v1326
        %v1477 = vunpack.c.l.b16 %v1327
        %v1478 = vunpack.c.l.b16 %v1328
        %v1479 = vunpack.c.l.b16 %v1329
        %v1480 = vunpack.c.l.b16 %v1330
        %v1481 = vunpack.c.l.b16 %v1331
        %v1482 = vunpack.c.l.b16 %v1332
        %v1483 = vunpack.c.l.b16 %v1333
        %v1484 = vunpack.c.l.b16 %v1334
        %v1485 = vunpack.c.l.b16 %v1335
        %v1486 = vunpack.c.l.b16 %v1336
        %v1487 = vunpack.c.l.b16 %v1337
        %v1488 = vunpack.c.l.b16 %v1338
        %v1489 = vunpack.c.l.b16 %v1339
        %v1490 = vunpack.c.l.b16 %v1340
        %v1491 = vunpack.c.l.b16 %v1341
        %v1492 = vunpack.c.l.b16 %v1342
        %v1493 = vunpack.c.l.b16 %v1343
        %v1494 = vunpack.c.l.b16 %v1344
        %v1495 = vunpack.c.l.b16 %v1345
        %v1496 = vunpack.c.l.b16 %v1346
        %v1497 = vunpack.c.l.b16 %v1347
        %v1498 = vunpack.c.l.b16 %v1348
        %v1499 = vunpack.c.l.b16 %v1349
        %v1500 = vunpack.c.l.b16 %v1350
        %v1501 = vunpack.c.l.b16 %v1351
        %v1502 = vunpack.c.l.b16 %v1352
        %v1503 = vunpack.c.l.b16 %v1353
        %v1504 = vunpack.c.l.b16 %v1354
        %v1505 = vunpack.c.l.b16 %v1355
        %v1506 = vunpack.c.l.b16 %v1356
        %v1507 = vunpack.c.l.b16 %v1357
        %v1508 = vunpack.c.l.b16 %v1358
        %v1509 = vunpack.c.l.b16 %v1359
        %v1510 = vunpack.c.l.b16 %v1360
        %v1511 = vunpack.c.l.b16 %v1361
        %v1512 = vunpack.c.l.b16 %v1362
        %v1513 = vunpack.c.l.b16 %v1363
        %v1514 = vunpack.c.l.b16 %v1364
        %v1515 = vunpack.c.l.b16 %v1365
        %v1516 = vunpack.c.l.b16 %v1366
        %v1517 = vunpack.c.l.b16 %v1367
        %v1518 = vunpack.c.l.b16 %v1368
        %v1519 = vunpack.c.l.b16 %v1369
        %v1520 = vunpack.c.l.b16 %v1370
        %v1521 = vunpack.c.l.b16 %v1371
        %v1522 = vunpack.c.l.b16 %v1372
        %v1523 = vunpack.c.l.b16 %v1373
        %v1524 = vunpack.c.l.b16 %v1374
        %v1525 = vunpack.c.l.b16 %v1375
        %v1526 = vunpack.c.l.b16 %v1376
        %v1527 = vunpack.c.l.b16 %v1377
        %v1528 = vunpack.c.l.b16 %v1378
        %v1529 = vpack.c.b16 %v1466, %v1465
        %v1530 = vpack.c.b16 %v1468, %v1467
        %v1531 = vpack.c.b16 %v1470, %v1469
        %v1532 = vpack.c.b16 %v1472, %v1471
        %v1533 = vpack.c.b16 %v1474, %v1473
        %v1534 = vpack.c.b16 %v1476, %v1475
        %v1535 = vpack.c.b16 %v1478, %v1477
        %v1536 = vpack.c.b16 %v1480, %v1479
        %v1537 = vpack.c.b16 %v1482, %v1481
        %v1538 = vpack.c.b16 %v1484, %v1483
        %v1539 = vpack.c.b16 %v1486, %v1485
        %v1540 = vpack.c.b16 %v1488, %v1487
        %v1541 = vpack.c.b16 %v1490, %v1489
        %v1542 = vpack.c.b16 %v1492, %v1491
        %v1543 = vpack.c.b16 %v1494, %v1493
        %v1544 = vpack.c.b16 %v1496, %v1495
        %v1545 = vpack.c.b16 %v1498, %v1497
        %v1546 = vpack.c.b16 %v1500, %v1499
        %v1547 = vpack.c.b16 %v1502, %v1501
        %v1548 = vpack.c.b16 %v1504, %v1503
        %v1549 = vpack.c.b16 %v1506, %v1505
        %v1550 = vpack.c.b16 %v1508, %v1507
        %v1551 = vpack.c.b16 %v1510, %v1509
        %v1552 = vpack.c.b16 %v1512, %v1511
        %v1553 = vpack.c.b16 %v1514, %v1513
        %v1554 = vpack.c.b16 %v1516, %v1515
        %v1555 = vpack.c.b16 %v1518, %v1517
        %v1556 = vpack.c.b16 %v1520, %v1519
        %v1557 = vpack.c.b16 %v1522, %v1521
        %v1558 = vpack.c.b16 %v1524, %v1523
        %v1559 = vpack.c.b16 %v1526, %v1525
        %v1560 = vpack.c.b16 %v1528, %v1527
        %1593 = vmatprep.subr.bf16.mxu0 0
        %1594 = vmatpush1.bf16.msra.mxu0 %v1536
        %1595 = vmatprep.subr.bf16.mxu0 0
        %1596 = vmatpush1.bf16.msra.mxu0 %v1535
        %1597 = vmatprep.subr.bf16.mxu0 0
        %1598 = vmatpush1.bf16.msra.mxu0 %v1534
        %1599 = vmatprep.subr.bf16.mxu0 0
        %1600 = vmatpush1.bf16.msra.mxu0 %v1533
        %1601 = vmatprep.subr.bf16.mxu0 0
        %1602 = vmatpush1.bf16.msra.mxu0 %v1532
        %1603 = vmatprep.subr.bf16.mxu0 0
        %1604 = vmatpush1.bf16.msra.mxu0 %v1531
        %1605 = vmatprep.subr.bf16.mxu0 0
        %1606 = vmatpush1.bf16.msra.mxu0 %v1530
        %1607 = vmatprep.subr.bf16.mxu0 0
        %1608 = vmatpush1.bf16.msra.mxu0 %v1529
        %1609 = vmatprep.subr.bf16.mxu0 0
        %1610 = vmatpush2.bf16.msra.mxu0 %v1544
        %1611 = vmatprep.subr.bf16.mxu0 0
        %1612 = vmatpush2.bf16.msra.mxu0 %v1543
        %1613 = vmatprep.subr.bf16.mxu0 0
        %1614 = vmatpush2.bf16.msra.mxu0 %v1542
        %1615 = vmatprep.subr.bf16.mxu0 0
        %1616 = vmatpush2.bf16.msra.mxu0 %v1541
        %1617 = vmatprep.subr.bf16.mxu0 0
        %1618 = vmatpush2.bf16.msra.mxu0 %v1540
        %1619 = vmatprep.subr.bf16.mxu0 0
        %1620 = vmatpush2.bf16.msra.mxu0 %v1539
        %1621 = vmatprep.subr.bf16.mxu0 0
        %1622 = vmatpush2.bf16.msra.mxu0 %v1538
        %1623 = vmatprep.subr.bf16.mxu0 0
        %1624 = vmatpush2.bf16.msra.mxu0 %v1537
        %1625 = vmatprep.mubr.bf16.mxu0 %v1390
        %1626 = vmatmul.mubr.bf16.gmra.mxu0 %v1389
        %v1627 = vpop.f32.mrf.mxu0
        %v1628 = vadd.f32 0.0, %v1627
        %v1629 = vpop.f32.mrf.mxu0
        %v1630 = vpop.f32.mrf.mxu0
        %v1631 = vpop.f32.mrf.mxu0
        %1632 = vdwg.mxu0
        %1633 = vmatprep.subr.bf16.mxu0 0
        %1634 = vmatpush1.bf16.msra.mxu0 %v1552
        %1635 = vmatprep.subr.bf16.mxu0 0
        %1636 = vmatpush1.bf16.msra.mxu0 %v1551
        %1637 = vmatprep.subr.bf16.mxu0 0
        %1638 = vmatpush1.bf16.msra.mxu0 %v1550
        %1639 = vmatprep.subr.bf16.mxu0 0
        %1640 = vmatpush1.bf16.msra.mxu0 %v1549
        %1641 = vmatprep.subr.bf16.mxu0 0
        %1642 = vmatpush1.bf16.msra.mxu0 %v1548
        %1643 = vmatprep.subr.bf16.mxu0 0
        %1644 = vmatpush1.bf16.msra.mxu0 %v1547
        %1645 = vmatprep.subr.bf16.mxu0 0
        %1646 = vmatpush1.bf16.msra.mxu0 %v1546
        %1647 = vmatprep.subr.bf16.mxu0 0
        %1648 = vmatpush1.bf16.msra.mxu0 %v1545
        %1649 = vmatprep.subr.bf16.mxu0 0
        %1650 = vmatpush2.bf16.msra.mxu0 %v1560
        %1651 = vmatprep.subr.bf16.mxu0 0
        %1652 = vmatpush2.bf16.msra.mxu0 %v1559
        %1653 = vmatprep.subr.bf16.mxu0 0
        %1654 = vmatpush2.bf16.msra.mxu0 %v1558
        %1655 = vmatprep.subr.bf16.mxu0 0
        %1656 = vmatpush2.bf16.msra.mxu0 %v1557
        %1657 = vmatprep.subr.bf16.mxu0 0
        %1658 = vmatpush2.bf16.msra.mxu0 %v1556
        %1659 = vmatprep.subr.bf16.mxu0 0
        %1660 = vmatpush2.bf16.msra.mxu0 %v1555
        %1661 = vmatprep.subr.bf16.mxu0 0
        %1662 = vmatpush2.bf16.msra.mxu0 %v1554
        %1663 = vmatprep.subr.bf16.mxu0 0
        %1664 = vmatpush2.bf16.msra.mxu0 %v1553
        %1665 = vmatprep.mubr.bf16.mxu0 %v1392
        %1666 = vmatmul.mubr.bf16.gmra.mxu0 %v1391
        %v1667 = vpop.f32.mrf.mxu0
        %v1668 = vadd.f32 %v1628, %v1667
        %v1669 = vpop.f32.mrf.mxu0
        %v1670 = vpop.f32.mrf.mxu0
        %v1671 = vpop.f32.mrf.mxu0
        %1672 = vdwg.mxu0
        %1673 = vmatprep.subr.bf16.mxu0 0
        %1674 = vmatpush1.bf16.msra.mxu0 %v1536
        %1675 = vmatprep.subr.bf16.mxu0 0
        %1676 = vmatpush1.bf16.msra.mxu0 %v1535
        %1677 = vmatprep.subr.bf16.mxu0 0
        %1678 = vmatpush1.bf16.msra.mxu0 %v1534
        %1679 = vmatprep.subr.bf16.mxu0 0
        %1680 = vmatpush1.bf16.msra.mxu0 %v1533
        %1681 = vmatprep.subr.bf16.mxu0 0
        %1682 = vmatpush1.bf16.msra.mxu0 %v1532
        %1683 = vmatprep.subr.bf16.mxu0 0
        %1684 = vmatpush1.bf16.msra.mxu0 %v1531
        %1685 = vmatprep.subr.bf16.mxu0 0
        %1686 = vmatpush1.bf16.msra.mxu0 %v1530
        %1687 = vmatprep.subr.bf16.mxu0 0
        %1688 = vmatpush1.bf16.msra.mxu0 %v1529
        %1689 = vmatprep.subr.bf16.mxu0 0
        %1690 = vmatpush2.bf16.msra.mxu0 %v1544
        %1691 = vmatprep.subr.bf16.mxu0 0
        %1692 = vmatpush2.bf16.msra.mxu0 %v1543
        %1693 = vmatprep.subr.bf16.mxu0 0
        %1694 = vmatpush2.bf16.msra.mxu0 %v1542
        %1695 = vmatprep.subr.bf16.mxu0 0
        %1696 = vmatpush2.bf16.msra.mxu0 %v1541
        %1697 = vmatprep.subr.bf16.mxu0 0
        %1698 = vmatpush2.bf16.msra.mxu0 %v1540
        %1699 = vmatprep.subr.bf16.mxu0 0
        %1700 = vmatpush2.bf16.msra.mxu0 %v1539
        %1701 = vmatprep.subr.bf16.mxu0 0
        %1702 = vmatpush2.bf16.msra.mxu0 %v1538
        %1703 = vmatprep.subr.bf16.mxu0 0
        %1704 = vmatpush2.bf16.msra.mxu0 %v1537
        %1705 = vmatprep.mubr.bf16.mxu0 %v1398
        %1706 = vmatmul.mubr.bf16.gmra.mxu0 %v1397
        %v1707 = vpop.f32.mrf.mxu0
        %v1708 = vadd.f32 0.0, %v1707
        %v1709 = vpop.f32.mrf.mxu0
        %v1710 = vpop.f32.mrf.mxu0
        %v1711 = vpop.f32.mrf.mxu0
        %1712 = vdwg.mxu0
        %1713 = vmatprep.subr.bf16.mxu0 0
        %1714 = vmatpush1.bf16.msra.mxu0 %v1552
        %1715 = vmatprep.subr.bf16.mxu0 0
        %1716 = vmatpush1.bf16.msra.mxu0 %v1551
        %1717 = vmatprep.subr.bf16.mxu0 0
        %1718 = vmatpush1.bf16.msra.mxu0 %v1550
        %1719 = vmatprep.subr.bf16.mxu0 0
        %1720 = vmatpush1.bf16.msra.mxu0 %v1549
        %1721 = vmatprep.subr.bf16.mxu0 0
        %1722 = vmatpush1.bf16.msra.mxu0 %v1548
        %1723 = vmatprep.subr.bf16.mxu0 0
        %1724 = vmatpush1.bf16.msra.mxu0 %v1547
        %1725 = vmatprep.subr.bf16.mxu0 0
        %1726 = vmatpush1.bf16.msra.mxu0 %v1546
        %1727 = vmatprep.subr.bf16.mxu0 0
        %1728 = vmatpush1.bf16.msra.mxu0 %v1545
        %1729 = vmatprep.subr.bf16.mxu0 0
        %1730 = vmatpush2.bf16.msra.mxu0 %v1560
        %1731 = vmatprep.subr.bf16.mxu0 0
        %1732 = vmatpush2.bf16.msra.mxu0 %v1559
        %1733 = vmatprep.subr.bf16.mxu0 0
        %1734 = vmatpush2.bf16.msra.mxu0 %v1558
        %1735 = vmatprep.subr.bf16.mxu0 0
        %1736 = vmatpush2.bf16.msra.mxu0 %v1557
        %1737 = vmatprep.subr.bf16.mxu0 0
        %1738 = vmatpush2.bf16.msra.mxu0 %v1556
        %1739 = vmatprep.subr.bf16.mxu0 0
        %1740 = vmatpush2.bf16.msra.mxu0 %v1555
        %1741 = vmatprep.subr.bf16.mxu0 0
        %1742 = vmatpush2.bf16.msra.mxu0 %v1554
        %1743 = vmatprep.subr.bf16.mxu0 0
        %1744 = vmatpush2.bf16.msra.mxu0 %v1553
        %1745 = vmatprep.mubr.bf16.mxu0 %v1400
        %1746 = vmatmul.mubr.bf16.gmra.mxu0 %v1399
        %v1747 = vpop.f32.mrf.mxu0
        %v1748 = vadd.f32 %v1708, %v1747
        %v1749 = vpop.f32.mrf.mxu0
        %v1750 = vpop.f32.mrf.mxu0
        %v1751 = vpop.f32.mrf.mxu0
        %1752 = vdwg.mxu0
        %v1753 = vmul.f32 %v1668, %v1668
        %v1754 = vsub.f32 %v1748, %v1753
        %v1755 = vmax.f32 %v1754, 0.0
        %v1756 = vadd.f32 %v1755, 1e-05
        %v1757 = vrsqrt.pop %v1756
        %v1758 = vpack.c.bf16 %v1757, %v1757
        %v1767 = vunpack.c.l.b16 %v1379
        %v1768 = vunpack.c.h.b16 %v1379
        %v1769 = vunpack.c.l.b16 %v1380
        %v1770 = vunpack.c.h.b16 %v1380
        %v1771 = vunpack.c.l.b16 %v1381
        %v1772 = vunpack.c.h.b16 %v1381
        %v1773 = vunpack.c.l.b16 %v1382
        %v1774 = vunpack.c.h.b16 %v1382
        %v1775 = vunpack.c.l.b16 %v1383
        %v1776 = vunpack.c.h.b16 %v1383
        %v1777 = vunpack.c.l.b16 %v1384
        %v1778 = vunpack.c.h.b16 %v1384
        %v1779 = vunpack.c.l.b16 %v1385
        %v1780 = vunpack.c.h.b16 %v1385
        %v1781 = vunpack.c.l.b16 %v1386
        %v1782 = vunpack.c.h.b16 %v1386
        %v1783 = vpack.c.b16 %v1771, %v1767
        %v1784 = vpack.c.b16 %v1772, %v1768
        %v1785 = vpack.c.b16 %v1773, %v1769
        %v1786 = vpack.c.b16 %v1774, %v1770
        %v1787 = vpack.c.b16 %v1779, %v1775
        %v1788 = vpack.c.b16 %v1780, %v1776
        %v1789 = vpack.c.b16 %v1781, %v1777
        %v1790 = vpack.c.b16 %v1782, %v1778
        %vm1799 = vcmask 261120
        %v1801 = vsel %vm1799, %v1758, 0
        %1803 = vmatprep.subr.bf16.mxu0 0
        %1804 = vmatpush1.bf16.msra.mxu0 0
        %1805 = vmatprep.subr.bf16.mxu0 0
        %1806 = vmatpush1.bf16.msra.mxu0 0
        %1807 = vmatprep.subr.bf16.mxu0 0
        %1808 = vmatpush1.bf16.msra.mxu0 0
        %1809 = vmatprep.subr.bf16.mxu0 0
        %1810 = vmatpush1.bf16.msra.mxu0 0
        %1811 = vmatprep.subr.bf16.mxu0 0
        %1812 = vmatpush1.bf16.msra.mxu0 0
        %1813 = vmatprep.subr.bf16.mxu0 0
        %1814 = vmatpush1.bf16.msra.mxu0 0
        %1815 = vmatprep.subr.bf16.mxu0 %v1788
        %1816 = vmatpush1.bf16.msra.mxu0 %v1787
        %1817 = vmatprep.subr.bf16.mxu0 %v1784
        %1818 = vmatpush1.bf16.msra.mxu0 %v1783
        %1819 = vmatprep.subr.bf16.mxu0 0
        %1820 = vmatpush2.bf16.msra.mxu0 0
        %1821 = vmatprep.subr.bf16.mxu0 0
        %1822 = vmatpush2.bf16.msra.mxu0 0
        %1823 = vmatprep.subr.bf16.mxu0 0
        %1824 = vmatpush2.bf16.msra.mxu0 0
        %1825 = vmatprep.subr.bf16.mxu0 0
        %1826 = vmatpush2.bf16.msra.mxu0 0
        %1827 = vmatprep.subr.bf16.mxu0 0
        %1828 = vmatpush2.bf16.msra.mxu0 0
        %1829 = vmatprep.subr.bf16.mxu0 0
        %1830 = vmatpush2.bf16.msra.mxu0 0
        %1831 = vmatprep.subr.bf16.mxu0 0
        %1832 = vmatpush2.bf16.msra.mxu0 0
        %1833 = vmatprep.subr.bf16.mxu0 0
        %1834 = vmatpush2.bf16.msra.mxu0 0
        %1835 = vmatprep.mubr.bf16.mxu0 0
        %1836 = vmatmul.mubr.bf16.gmra.mxu0 %v1801
        %v1837 = vpop.f32.mrf.mxu0
        %v1838 = vadd.f32 0.0, %v1837
        %v1839 = vpop.f32.mrf.mxu0
        %v1840 = vadd.f32 0.0, %v1839
        %v1841 = vpop.f32.mrf.mxu0
        %v1842 = vpop.f32.mrf.mxu0
        %1843 = vdwg.mxu0
        %1844 = vmatprep.subr.bf16.mxu0 0
        %1845 = vmatpush1.bf16.msra.mxu0 0
        %1846 = vmatprep.subr.bf16.mxu0 0
        %1847 = vmatpush1.bf16.msra.mxu0 0
        %1848 = vmatprep.subr.bf16.mxu0 0
        %1849 = vmatpush1.bf16.msra.mxu0 0
        %1850 = vmatprep.subr.bf16.mxu0 0
        %1851 = vmatpush1.bf16.msra.mxu0 0
        %1852 = vmatprep.subr.bf16.mxu0 0
        %1853 = vmatpush1.bf16.msra.mxu0 0
        %1854 = vmatprep.subr.bf16.mxu0 0
        %1855 = vmatpush1.bf16.msra.mxu0 0
        %1856 = vmatprep.subr.bf16.mxu0 %v1790
        %1857 = vmatpush1.bf16.msra.mxu0 %v1789
        %1858 = vmatprep.subr.bf16.mxu0 %v1786
        %1859 = vmatpush1.bf16.msra.mxu0 %v1785
        %1860 = vmatprep.subr.bf16.mxu0 0
        %1861 = vmatpush2.bf16.msra.mxu0 0
        %1862 = vmatprep.subr.bf16.mxu0 0
        %1863 = vmatpush2.bf16.msra.mxu0 0
        %1864 = vmatprep.subr.bf16.mxu0 0
        %1865 = vmatpush2.bf16.msra.mxu0 0
        %1866 = vmatprep.subr.bf16.mxu0 0
        %1867 = vmatpush2.bf16.msra.mxu0 0
        %1868 = vmatprep.subr.bf16.mxu0 0
        %1869 = vmatpush2.bf16.msra.mxu0 0
        %1870 = vmatprep.subr.bf16.mxu0 0
        %1871 = vmatpush2.bf16.msra.mxu0 0
        %1872 = vmatprep.subr.bf16.mxu0 0
        %1873 = vmatpush2.bf16.msra.mxu0 0
        %1874 = vmatprep.subr.bf16.mxu0 0
        %1875 = vmatpush2.bf16.msra.mxu0 0
        %1876 = vmatprep.mubr.bf16.mxu0 0
        %1877 = vmatmul.mubr.bf16.gmra.mxu0 %v1801
        %v1878 = vpop.f32.mrf.mxu0
        %v1879 = vadd.f32 0.0, %v1878
        %v1880 = vpop.f32.mrf.mxu0
        %v1881 = vadd.f32 0.0, %v1880
        %v1882 = vpop.f32.mrf.mxu0
        %v1883 = vpop.f32.mrf.mxu0
        %1884 = vdwg.mxu0
        %v1885 = vmul.f32 %v1668, %v1757
        %v1886 = vpack.c.bf16 %v1885, %v1885
        %v1888 = vsel %vm1799, %v1886, 0
        %1890 = vmatprep.subr.bf16.mxu0 0
        %1891 = vmatpush1.bf16.msra.mxu0 0
        %1892 = vmatprep.subr.bf16.mxu0 0
        %1893 = vmatpush1.bf16.msra.mxu0 0
        %1894 = vmatprep.subr.bf16.mxu0 0
        %1895 = vmatpush1.bf16.msra.mxu0 0
        %1896 = vmatprep.subr.bf16.mxu0 0
        %1897 = vmatpush1.bf16.msra.mxu0 0
        %1898 = vmatprep.subr.bf16.mxu0 0
        %1899 = vmatpush1.bf16.msra.mxu0 0
        %1900 = vmatprep.subr.bf16.mxu0 0
        %1901 = vmatpush1.bf16.msra.mxu0 0
        %1902 = vmatprep.subr.bf16.mxu0 %v1788
        %1903 = vmatpush1.bf16.msra.mxu0 %v1787
        %1904 = vmatprep.subr.bf16.mxu0 %v1784
        %1905 = vmatpush1.bf16.msra.mxu0 %v1783
        %1906 = vmatprep.subr.bf16.mxu0 0
        %1907 = vmatpush2.bf16.msra.mxu0 0
        %1908 = vmatprep.subr.bf16.mxu0 0
        %1909 = vmatpush2.bf16.msra.mxu0 0
        %1910 = vmatprep.subr.bf16.mxu0 0
        %1911 = vmatpush2.bf16.msra.mxu0 0
        %1912 = vmatprep.subr.bf16.mxu0 0
        %1913 = vmatpush2.bf16.msra.mxu0 0
        %1914 = vmatprep.subr.bf16.mxu0 0
        %1915 = vmatpush2.bf16.msra.mxu0 0
        %1916 = vmatprep.subr.bf16.mxu0 0
        %1917 = vmatpush2.bf16.msra.mxu0 0
        %1918 = vmatprep.subr.bf16.mxu0 0
        %1919 = vmatpush2.bf16.msra.mxu0 0
        %1920 = vmatprep.subr.bf16.mxu0 0
        %1921 = vmatpush2.bf16.msra.mxu0 0
        %1922 = vmatprep.mubr.bf16.mxu0 0
        %1923 = vmatmul.mubr.bf16.gmra.mxu0 %v1888
        %v1924 = vpop.f32.mrf.mxu0
        %v1925 = vadd.f32 0.0, %v1924
        %v1926 = vpop.f32.mrf.mxu0
        %v1927 = vadd.f32 0.0, %v1926
        %v1928 = vpop.f32.mrf.mxu0
        %v1929 = vpop.f32.mrf.mxu0
        %1930 = vdwg.mxu0
        %1931 = vmatprep.subr.bf16.mxu0 0
        %1932 = vmatpush1.bf16.msra.mxu0 0
        %1933 = vmatprep.subr.bf16.mxu0 0
        %1934 = vmatpush1.bf16.msra.mxu0 0
        %1935 = vmatprep.subr.bf16.mxu0 0
        %1936 = vmatpush1.bf16.msra.mxu0 0
        %1937 = vmatprep.subr.bf16.mxu0 0
        %1938 = vmatpush1.bf16.msra.mxu0 0
        %1939 = vmatprep.subr.bf16.mxu0 0
        %1940 = vmatpush1.bf16.msra.mxu0 0
        %1941 = vmatprep.subr.bf16.mxu0 0
        %1942 = vmatpush1.bf16.msra.mxu0 0
        %1943 = vmatprep.subr.bf16.mxu0 %v1790
        %1944 = vmatpush1.bf16.msra.mxu0 %v1789
        %1945 = vmatprep.subr.bf16.mxu0 %v1786
        %1946 = vmatpush1.bf16.msra.mxu0 %v1785
        %1947 = vmatprep.subr.bf16.mxu0 0
        %1948 = vmatpush2.bf16.msra.mxu0 0
        %1949 = vmatprep.subr.bf16.mxu0 0
        %1950 = vmatpush2.bf16.msra.mxu0 0
        %1951 = vmatprep.subr.bf16.mxu0 0
        %1952 = vmatpush2.bf16.msra.mxu0 0
        %1953 = vmatprep.subr.bf16.mxu0 0
        %1954 = vmatpush2.bf16.msra.mxu0 0
        %1955 = vmatprep.subr.bf16.mxu0 0
        %1956 = vmatpush2.bf16.msra.mxu0 0
        %1957 = vmatprep.subr.bf16.mxu0 0
        %1958 = vmatpush2.bf16.msra.mxu0 0
        %1959 = vmatprep.subr.bf16.mxu0 0
        %1960 = vmatpush2.bf16.msra.mxu0 0
        %1961 = vmatprep.subr.bf16.mxu0 0
        %1962 = vmatpush2.bf16.msra.mxu0 0
        %1963 = vmatprep.mubr.bf16.mxu0 0
        %1964 = vmatmul.mubr.bf16.gmra.mxu0 %v1888
        %v1965 = vpop.f32.mrf.mxu0
        %v1966 = vadd.f32 0.0, %v1965
        %v1967 = vpop.f32.mrf.mxu0
        %v1968 = vadd.f32 0.0, %v1967
        %v1969 = vpop.f32.mrf.mxu0
        %v1970 = vpop.f32.mrf.mxu0
        %1971 = vdwg.mxu0
        %v1973 = vlaneseq
        %v1974 = vshrl.u32 %v1973, 7
        %v1975 = vsub.s32 0, %v1974
        %v1976 = vrot.slane %v1388, %v1975
        %v1977 = vlaneseq
        %v1978 = vshrl.u32 %v1977, 7
        %v1979 = vsub.s32 1, %v1978
        %v1980 = vrot.slane %v1388, %v1979
        %v1981 = vlaneseq
        %v1982 = vshrl.u32 %v1981, 7
        %v1983 = vsub.s32 2, %v1982
        %v1984 = vrot.slane %v1388, %v1983
        %v1985 = vlaneseq
        %v1986 = vshrl.u32 %v1985, 7
        %v1987 = vsub.s32 3, %v1986
        %v1988 = vrot.slane %v1388, %v1987
        %v1993 = vsub.f32 %v1976, %v1925
        %v1994 = vsub.f32 %v1980, %v1927
        %v1995 = vsub.f32 %v1984, %v1966
        %v1996 = vsub.f32 %v1988, %v1968
        %v1997 = vmul.f32 %v1268, %v1838
        %v1998 = vmul.f32 %v1270, %v1840
        %v1999 = vmul.f32 %v1309, %v1879
        %v2000 = vmul.f32 %v1311, %v1881
        %v2001 = vadd.f32 %v1997, %v1993
        %v2002 = vadd.f32 %v1998, %v1994
        %v2003 = vadd.f32 %v1999, %v1995
        %v2004 = vadd.f32 %v2000, %v1996
        %v2005 = vmul.f32 %v2001, 0.5
        %v2006 = vmul.f32 %v2002, 0.5
        %v2007 = vmul.f32 %v2003, 0.5
        %v2008 = vmul.f32 %v2004, 0.5
        %v2009 = vmul.f32 %v2001, %v2001
        %v2010 = vmul.f32 %v2002, %v2002
        %v2011 = vmul.f32 %v2003, %v2003
        %v2012 = vmul.f32 %v2004, %v2004
        %v2013 = vmul.f32 %v2009, %v2001
        %v2014 = vmul.f32 %v2010, %v2002
        %v2015 = vmul.f32 %v2011, %v2003
        %v2016 = vmul.f32 %v2012, %v2004
        %v2017 = vmul.f32 %v2013, 0.044715
        %v2018 = vmul.f32 %v2014, 0.044715
        %v2019 = vmul.f32 %v2015, 0.044715
        %v2020 = vmul.f32 %v2016, 0.044715
        %v2021 = vadd.f32 %v2001, %v2017
        %v2022 = vadd.f32 %v2002, %v2018
        %v2023 = vadd.f32 %v2003, %v2019
        %v2024 = vadd.f32 %v2004, %v2020
        %v2025 = vmul.f32 %v2021, 0.7978846
        %v2026 = vmul.f32 %v2022, 0.7978846
        %v2027 = vmul.f32 %v2023, 0.7978846
        %v2028 = vmul.f32 %v2024, 0.7978846
        %v2029 = vtanh.pop %v2025
        %v2030 = vtanh.pop %v2026
        %v2031 = vtanh.pop %v2027
        %v2032 = vtanh.pop %v2028
        %v2033 = vadd.f32 %v2029, 1.0
        %v2034 = vadd.f32 %v2030, 1.0
        %v2035 = vadd.f32 %v2031, 1.0
        %v2036 = vadd.f32 %v2032, 1.0
        %v2037 = vmul.f32 %v2005, %v2033
        %v2038 = vmul.f32 %v2006, %v2034
        %v2039 = vmul.f32 %v2007, %v2035
        %v2040 = vmul.f32 %v2008, %v2036
        %v2041 = vld [vmem:[#allocation5] sm:$0xf]
        %v2042 = vld [vmem:[#allocation5 + $0x4] sm:$0xf]
        %v2043 = vld [vmem:[#allocation5 + $0x8] sm:$0xf]
        %v2044 = vld [vmem:[#allocation5 + $0xc] sm:$0xf]
        %v2045 = vld [vmem:[#allocation5 + $0x10] sm:$0xf]
        %v2046 = vld [vmem:[#allocation5 + $0x14] sm:$0xf]
        %v2047 = vld [vmem:[#allocation5 + $0x18] sm:$0xf]
        %v2048 = vld [vmem:[#allocation5 + $0x1c] sm:$0xf]
        %v2049 = vld [vmem:[#allocation5 + $0x20] sm:$0xf]
        %v2050 = vld [vmem:[#allocation5 + $0x24] sm:$0xf]
        %v2051 = vld [vmem:[#allocation5 + $0x28] sm:$0xf]
        %v2052 = vld [vmem:[#allocation5 + $0x2c] sm:$0xf]
        %v2053 = vld [vmem:[#allocation5 + $0x30] sm:$0xf]
        %v2054 = vld [vmem:[#allocation5 + $0x34] sm:$0xf]
        %v2055 = vld [vmem:[#allocation5 + $0x38] sm:$0xf]
        %v2056 = vld [vmem:[#allocation5 + $0x3c] sm:$0xf]
        %v2057 = vld [vmem:[#allocation5 + $0x40] sm:$0xf]
        %v2058 = vld [vmem:[#allocation5 + $0x44] sm:$0xf]
        %v2059 = vld [vmem:[#allocation5 + $0x48] sm:$0xf]
        %v2060 = vld [vmem:[#allocation5 + $0x4c] sm:$0xf]
        %v2061 = vld [vmem:[#allocation5 + $0x50] sm:$0xf]
        %v2062 = vld [vmem:[#allocation5 + $0x54] sm:$0xf]
        %v2063 = vld [vmem:[#allocation5 + $0x58] sm:$0xf]
        %v2064 = vld [vmem:[#allocation5 + $0x5c] sm:$0xf]
        %v2065 = vld [vmem:[#allocation5 + $0x60] sm:$0xf]
        %v2066 = vld [vmem:[#allocation5 + $0x64] sm:$0xf]
        %v2067 = vld [vmem:[#allocation5 + $0x68] sm:$0xf]
        %v2068 = vld [vmem:[#allocation5 + $0x6c] sm:$0xf]
        %v2069 = vld [vmem:[#allocation5 + $0x70] sm:$0xf]
        %v2070 = vld [vmem:[#allocation5 + $0x74] sm:$0xf]
        %v2071 = vld [vmem:[#allocation5 + $0x78] sm:$0xf]
        %v2072 = vld [vmem:[#allocation5 + $0x7c] sm:$0xf]
        %v2073 = vld [vmem:[#allocation5 + $0x80] sm:$0xf]
        %v2074 = vld [vmem:[#allocation5 + $0x84] sm:$0xf]
        %v2075 = vld [vmem:[#allocation5 + $0x88] sm:$0xf]
        %v2076 = vld [vmem:[#allocation5 + $0x8c] sm:$0xf]
        %v2077 = vld [vmem:[#allocation5 + $0x90] sm:$0xf]
        %v2078 = vld [vmem:[#allocation5 + $0x94] sm:$0xf]
        %v2079 = vld [vmem:[#allocation5 + $0x98] sm:$0xf]
        %v2080 = vld [vmem:[#allocation5 + $0x9c] sm:$0xf]
        %v2081 = vld [vmem:[#allocation5 + $0xa0] sm:$0xf]
        %v2082 = vld [vmem:[#allocation5 + $0xa4] sm:$0xf]
        %v2083 = vld [vmem:[#allocation5 + $0xa8] sm:$0xf]
        %v2084 = vld [vmem:[#allocation5 + $0xac] sm:$0xf]
        %v2085 = vld [vmem:[#allocation5 + $0xb0] sm:$0xf]
        %v2086 = vld [vmem:[#allocation5 + $0xb4] sm:$0xf]
        %v2087 = vld [vmem:[#allocation5 + $0xb8] sm:$0xf]
        %v2088 = vld [vmem:[#allocation5 + $0xbc] sm:$0xf]
        %v2089 = vld [vmem:[#allocation5 + $0xc0] sm:$0xf]
        %v2090 = vld [vmem:[#allocation5 + $0xc4] sm:$0xf]
        %v2091 = vld [vmem:[#allocation5 + $0xc8] sm:$0xf]
        %v2092 = vld [vmem:[#allocation5 + $0xcc] sm:$0xf]
        %v2093 = vld [vmem:[#allocation5 + $0xd0] sm:$0xf]
        %v2094 = vld [vmem:[#allocation5 + $0xd4] sm:$0xf]
        %v2095 = vld [vmem:[#allocation5 + $0xd8] sm:$0xf]
        %v2096 = vld [vmem:[#allocation5 + $0xdc] sm:$0xf]
        %v2097 = vld [vmem:[#allocation5 + $0xe0] sm:$0xf]
        %v2098 = vld [vmem:[#allocation5 + $0xe4] sm:$0xf]
        %v2099 = vld [vmem:[#allocation5 + $0xe8] sm:$0xf]
        %v2100 = vld [vmem:[#allocation5 + $0xec] sm:$0xf]
        %v2101 = vld [vmem:[#allocation5 + $0xf0] sm:$0xf]
        %v2102 = vld [vmem:[#allocation5 + $0xf4] sm:$0xf]
        %v2103 = vld [vmem:[#allocation5 + $0xf8] sm:$0xf]
        %v2104 = vld [vmem:[#allocation5 + $0xfc] sm:$0xf]
        %v2105 = vld [vmem:[#allocation19] sm:$0x1]
        %v2106 = vpack.c.bf16 %v2037, %v2037
        %v2107 = vpack.c.bf16 %v2038, %v2038
        %v2108 = vpack.c.bf16 %v2039, %v2039
        %v2109 = vpack.c.bf16 %v2040, %v2040
        %v2110 = vlaneseq
        %v2111 = vshrl.u32 %v2110, 7
        %v2112 = vsub.s32 0, %v2111
        %v2113 = vrot.slane %v2105, %v2112
        %v2178 = vunpack.c.l.b16 %v2041
        %v2179 = vunpack.c.l.b16 %v2042
        %v2180 = vunpack.c.l.b16 %v2043
        %v2181 = vunpack.c.l.b16 %v2044
        %v2182 = vunpack.c.l.b16 %v2045
        %v2183 = vunpack.c.l.b16 %v2046
        %v2184 = vunpack.c.l.b16 %v2047
        %v2185 = vunpack.c.l.b16 %v2048
        %v2186 = vunpack.c.l.b16 %v2049
        %v2187 = vunpack.c.l.b16 %v2050
        %v2188 = vunpack.c.l.b16 %v2051
        %v2189 = vunpack.c.l.b16 %v2052
        %v2190 = vunpack.c.l.b16 %v2053
        %v2191 = vunpack.c.l.b16 %v2054
        %v2192 = vunpack.c.l.b16 %v2055
        %v2193 = vunpack.c.l.b16 %v2056
        %v2194 = vunpack.c.l.b16 %v2057
        %v2195 = vunpack.c.l.b16 %v2058
        %v2196 = vunpack.c.l.b16 %v2059
        %v2197 = vunpack.c.l.b16 %v2060
        %v2198 = vunpack.c.l.b16 %v2061
        %v2199 = vunpack.c.l.b16 %v2062
        %v2200 = vunpack.c.l.b16 %v2063
        %v2201 = vunpack.c.l.b16 %v2064
        %v2202 = vunpack.c.l.b16 %v2065
        %v2203 = vunpack.c.l.b16 %v2066
        %v2204 = vunpack.c.l.b16 %v2067
        %v2205 = vunpack.c.l.b16 %v2068
        %v2206 = vunpack.c.l.b16 %v2069
        %v2207 = vunpack.c.l.b16 %v2070
        %v2208 = vunpack.c.l.b16 %v2071
        %v2209 = vunpack.c.l.b16 %v2072
        %v2210 = vunpack.c.l.b16 %v2073
        %v2211 = vunpack.c.l.b16 %v2074
        %v2212 = vunpack.c.l.b16 %v2075
        %v2213 = vunpack.c.l.b16 %v2076
        %v2214 = vunpack.c.l.b16 %v2077
        %v2215 = vunpack.c.l.b16 %v2078
        %v2216 = vunpack.c.l.b16 %v2079
        %v2217 = vunpack.c.l.b16 %v2080
        %v2218 = vunpack.c.l.b16 %v2081
        %v2219 = vunpack.c.l.b16 %v2082
        %v2220 = vunpack.c.l.b16 %v2083
        %v2221 = vunpack.c.l.b16 %v2084
        %v2222 = vunpack.c.l.b16 %v2085
        %v2223 = vunpack.c.l.b16 %v2086
        %v2224 = vunpack.c.l.b16 %v2087
        %v2225 = vunpack.c.l.b16 %v2088
        %v2226 = vunpack.c.l.b16 %v2089
        %v2227 = vunpack.c.l.b16 %v2090
        %v2228 = vunpack.c.l.b16 %v2091
        %v2229 = vunpack.c.l.b16 %v2092
        %v2230 = vunpack.c.l.b16 %v2093
        %v2231 = vunpack.c.l.b16 %v2094
        %v2232 = vunpack.c.l.b16 %v2095
        %v2233 = vunpack.c.l.b16 %v2096
        %v2234 = vunpack.c.l.b16 %v2097
        %v2235 = vunpack.c.l.b16 %v2098
        %v2236 = vunpack.c.l.b16 %v2099
        %v2237 = vunpack.c.l.b16 %v2100
        %v2238 = vunpack.c.l.b16 %v2101
        %v2239 = vunpack.c.l.b16 %v2102
        %v2240 = vunpack.c.l.b16 %v2103
        %v2241 = vunpack.c.l.b16 %v2104
        %v2242 = vpack.c.b16 %v2179, %v2178
        %v2243 = vpack.c.b16 %v2181, %v2180
        %v2244 = vpack.c.b16 %v2183, %v2182
        %v2245 = vpack.c.b16 %v2185, %v2184
        %v2246 = vpack.c.b16 %v2187, %v2186
        %v2247 = vpack.c.b16 %v2189, %v2188
        %v2248 = vpack.c.b16 %v2191, %v2190
        %v2249 = vpack.c.b16 %v2193, %v2192
        %v2250 = vpack.c.b16 %v2195, %v2194
        %v2251 = vpack.c.b16 %v2197, %v2196
        %v2252 = vpack.c.b16 %v2199, %v2198
        %v2253 = vpack.c.b16 %v2201, %v2200
        %v2254 = vpack.c.b16 %v2203, %v2202
        %v2255 = vpack.c.b16 %v2205, %v2204
        %v2256 = vpack.c.b16 %v2207, %v2206
        %v2257 = vpack.c.b16 %v2209, %v2208
        %v2258 = vpack.c.b16 %v2211, %v2210
        %v2259 = vpack.c.b16 %v2213, %v2212
        %v2260 = vpack.c.b16 %v2215, %v2214
        %v2261 = vpack.c.b16 %v2217, %v2216
        %v2262 = vpack.c.b16 %v2219, %v2218
        %v2263 = vpack.c.b16 %v2221, %v2220
        %v2264 = vpack.c.b16 %v2223, %v2222
        %v2265 = vpack.c.b16 %v2225, %v2224
        %v2266 = vpack.c.b16 %v2227, %v2226
        %v2267 = vpack.c.b16 %v2229, %v2228
        %v2268 = vpack.c.b16 %v2231, %v2230
        %v2269 = vpack.c.b16 %v2233, %v2232
        %v2270 = vpack.c.b16 %v2235, %v2234
        %v2271 = vpack.c.b16 %v2237, %v2236
        %v2272 = vpack.c.b16 %v2239, %v2238
        %v2273 = vpack.c.b16 %v2241, %v2240
        %2306 = vmatprep.subr.bf16.mxu0 0
        %2307 = vmatpush1.bf16.msra.mxu0 %v2249
        %2308 = vmatprep.subr.bf16.mxu0 0
        %2309 = vmatpush1.bf16.msra.mxu0 %v2248
        %2310 = vmatprep.subr.bf16.mxu0 0
        %2311 = vmatpush1.bf16.msra.mxu0 %v2247
        %2312 = vmatprep.subr.bf16.mxu0 0
        %2313 = vmatpush1.bf16.msra.mxu0 %v2246
        %2314 = vmatprep.subr.bf16.mxu0 0
        %2315 = vmatpush1.bf16.msra.mxu0 %v2245
        %2316 = vmatprep.subr.bf16.mxu0 0
        %2317 = vmatpush1.bf16.msra.mxu0 %v2244
        %2318 = vmatprep.subr.bf16.mxu0 0
        %2319 = vmatpush1.bf16.msra.mxu0 %v2243
        %2320 = vmatprep.subr.bf16.mxu0 0
        %2321 = vmatpush1.bf16.msra.mxu0 %v2242
        %2322 = vmatprep.subr.bf16.mxu0 0
        %2323 = vmatpush2.bf16.msra.mxu0 %v2257
        %2324 = vmatprep.subr.bf16.mxu0 0
        %2325 = vmatpush2.bf16.msra.mxu0 %v2256
        %2326 = vmatprep.subr.bf16.mxu0 0
        %2327 = vmatpush2.bf16.msra.mxu0 %v2255
        %2328 = vmatprep.subr.bf16.mxu0 0
        %2329 = vmatpush2.bf16.msra.mxu0 %v2254
        %2330 = vmatprep.subr.bf16.mxu0 0
        %2331 = vmatpush2.bf16.msra.mxu0 %v2253
        %2332 = vmatprep.subr.bf16.mxu0 0
        %2333 = vmatpush2.bf16.msra.mxu0 %v2252
        %2334 = vmatprep.subr.bf16.mxu0 0
        %2335 = vmatpush2.bf16.msra.mxu0 %v2251
        %2336 = vmatprep.subr.bf16.mxu0 0
        %2337 = vmatpush2.bf16.msra.mxu0 %v2250
        %2338 = vmatprep.mubr.bf16.mxu0 %v2107
        %2339 = vmatmul.mubr.bf16.gmra.mxu0 %v2106
        %v2340 = vpop.f32.mrf.mxu0
        %v2341 = vadd.f32 %v2113, %v2340
        %v2342 = vpop.f32.mrf.mxu0
        %v2343 = vpop.f32.mrf.mxu0
        %v2344 = vpop.f32.mrf.mxu0
        %2345 = vdwg.mxu0
        %2346 = vmatprep.subr.bf16.mxu0 0
        %2347 = vmatpush1.bf16.msra.mxu0 %v2265
        %2348 = vmatprep.subr.bf16.mxu0 0
        %2349 = vmatpush1.bf16.msra.mxu0 %v2264
        %2350 = vmatprep.subr.bf16.mxu0 0
        %2351 = vmatpush1.bf16.msra.mxu0 %v2263
        %2352 = vmatprep.subr.bf16.mxu0 0
        %2353 = vmatpush1.bf16.msra.mxu0 %v2262
        %2354 = vmatprep.subr.bf16.mxu0 0
        %2355 = vmatpush1.bf16.msra.mxu0 %v2261
        %2356 = vmatprep.subr.bf16.mxu0 0
        %2357 = vmatpush1.bf16.msra.mxu0 %v2260
        %2358 = vmatprep.subr.bf16.mxu0 0
        %2359 = vmatpush1.bf16.msra.mxu0 %v2259
        %2360 = vmatprep.subr.bf16.mxu0 0
        %2361 = vmatpush1.bf16.msra.mxu0 %v2258
        %2362 = vmatprep.subr.bf16.mxu0 0
        %2363 = vmatpush2.bf16.msra.mxu0 %v2273
        %2364 = vmatprep.subr.bf16.mxu0 0
        %2365 = vmatpush2.bf16.msra.mxu0 %v2272
        %2366 = vmatprep.subr.bf16.mxu0 0
        %2367 = vmatpush2.bf16.msra.mxu0 %v2271
        %2368 = vmatprep.subr.bf16.mxu0 0
        %2369 = vmatpush2.bf16.msra.mxu0 %v2270
        %2370 = vmatprep.subr.bf16.mxu0 0
        %2371 = vmatpush2.bf16.msra.mxu0 %v2269
        %2372 = vmatprep.subr.bf16.mxu0 0
        %2373 = vmatpush2.bf16.msra.mxu0 %v2268
        %2374 = vmatprep.subr.bf16.mxu0 0
        %2375 = vmatpush2.bf16.msra.mxu0 %v2267
        %2376 = vmatprep.subr.bf16.mxu0 0
        %2377 = vmatpush2.bf16.msra.mxu0 %v2266
        %2378 = vmatprep.mubr.bf16.mxu0 %v2109
        %2379 = vmatmul.mubr.bf16.gmra.mxu0 %v2108
        %v2380 = vpop.f32.mrf.mxu0
        %v2381 = vadd.f32 %v2341, %v2380
        %v2382 = vpop.f32.mrf.mxu0
        %v2383 = vpop.f32.mrf.mxu0
        %v2384 = vpop.f32.mrf.mxu0
        %2385 = vdwg.mxu0
        %v2386 = vld [vmem:[%s5] sm:$0xf]
        %v2387 = vld [vmem:[%s5 + $0x4] sm:$0xf]
        %v2388 = vld [vmem:[%s5 + $0x8] sm:$0xf]
        %v2389 = vld [vmem:[%s5 + $0xc] sm:$0xf]
        %v2390 = vld [vmem:[%s5 + $0x10] sm:$0xf]
        %v2391 = vld [vmem:[%s5 + $0x14] sm:$0xf]
        %v2392 = vld [vmem:[%s5 + $0x18] sm:$0xf]
        %v2393 = vld [vmem:[%s5 + $0x1c] sm:$0xf]
        %v2394 = vld [vmem:[%s5 + $0x20] sm:$0xf]
        %v2395 = vld [vmem:[%s5 + $0x24] sm:$0xf]
        %v2396 = vld [vmem:[%s5 + $0x28] sm:$0xf]
        %v2397 = vld [vmem:[%s5 + $0x2c] sm:$0xf]
        %v2398 = vld [vmem:[%s5 + $0x30] sm:$0xf]
        %v2399 = vld [vmem:[%s5 + $0x34] sm:$0xf]
        %v2400 = vld [vmem:[%s5 + $0x38] sm:$0xf]
        %v2401 = vld [vmem:[%s5 + $0x3c] sm:$0xf]
        %v2402 = vld [vmem:[#allocation7] sm:$0xf]
        %v2403 = vld [vmem:[#allocation19 + $0x1] sm:$0x1]
        %v2404 = vpack.c.bf16 %v2381, %v2381
        %v2405 = vmul.f32 %v2381, %v2381
        %v2406 = vpack.c.bf16 %v2405, %v2405
        %v2423 = vunpack.c.l.b16 %v2386
        %v2424 = vunpack.c.l.b16 %v2387
        %v2425 = vunpack.c.l.b16 %v2388
        %v2426 = vunpack.c.l.b16 %v2389
        %v2427 = vunpack.c.l.b16 %v2390
        %v2428 = vunpack.c.l.b16 %v2391
        %v2429 = vunpack.c.l.b16 %v2392
        %v2430 = vunpack.c.l.b16 %v2393
        %v2431 = vunpack.c.l.b16 %v2394
        %v2432 = vunpack.c.l.b16 %v2395
        %v2433 = vunpack.c.l.b16 %v2396
        %v2434 = vunpack.c.l.b16 %v2397
        %v2435 = vunpack.c.l.b16 %v2398
        %v2436 = vunpack.c.l.b16 %v2399
        %v2437 = vunpack.c.l.b16 %v2400
        %v2438 = vunpack.c.l.b16 %v2401
        %v2439 = vpack.c.b16 %v2424, %v2423
        %v2440 = vpack.c.b16 %v2426, %v2425
        %v2441 = vpack.c.b16 %v2428, %v2427
        %v2442 = vpack.c.b16 %v2430, %v2429
        %v2443 = vpack.c.b16 %v2432, %v2431
        %v2444 = vpack.c.b16 %v2434, %v2433
        %v2445 = vpack.c.b16 %v2436, %v2435
        %v2446 = vpack.c.b16 %v2438, %v2437
        %2455 = vmatprep.subr.bf16.mxu0 0
        %2456 = vmatpush1.bf16.msra.mxu0 %v2446
        %2457 = vmatprep.subr.bf16.mxu0 0
        %2458 = vmatpush1.bf16.msra.mxu0 %v2445
        %2459 = vmatprep.subr.bf16.mxu0 0
        %2460 = vmatpush1.bf16.msra.mxu0 %v2444
        %2461 = vmatprep.subr.bf16.mxu0 0
        %2462 = vmatpush1.bf16.msra.mxu0 %v2443
        %2463 = vmatprep.subr.bf16.mxu0 0
        %2464 = vmatpush1.bf16.msra.mxu0 %v2442
        %2465 = vmatprep.subr.bf16.mxu0 0
        %2466 = vmatpush1.bf16.msra.mxu0 %v2441
        %2467 = vmatprep.subr.bf16.mxu0 0
        %2468 = vmatpush1.bf16.msra.mxu0 %v2440
        %2469 = vmatprep.subr.bf16.mxu0 0
        %2470 = vmatpush1.bf16.msra.mxu0 %v2439
        %2471 = vmatprep.subr.bf16.mxu0 0
        %2472 = vmatpush2.bf16.msra.mxu0 0
        %2473 = vmatprep.subr.bf16.mxu0 0
        %2474 = vmatpush2.bf16.msra.mxu0 0
        %2475 = vmatprep.subr.bf16.mxu0 0
        %2476 = vmatpush2.bf16.msra.mxu0 0
        %2477 = vmatprep.subr.bf16.mxu0 0
        %2478 = vmatpush2.bf16.msra.mxu0 0
        %2479 = vmatprep.subr.bf16.mxu0 0
        %2480 = vmatpush2.bf16.msra.mxu0 0
        %2481 = vmatprep.subr.bf16.mxu0 0
        %2482 = vmatpush2.bf16.msra.mxu0 0
        %2483 = vmatprep.subr.bf16.mxu0 0
        %2484 = vmatpush2.bf16.msra.mxu0 0
        %2485 = vmatprep.subr.bf16.mxu0 0
        %2486 = vmatpush2.bf16.msra.mxu0 0
        %2487 = vmatprep.mubr.bf16.mxu0 0
        %2488 = vmatmul.mubr.bf16.gmra.mxu0 %v2404
        %v2489 = vpop.f32.mrf.mxu0
        %v2490 = vadd.f32 0.0, %v2489
        %v2491 = vpop.f32.mrf.mxu0
        %v2492 = vpop.f32.mrf.mxu0
        %v2493 = vpop.f32.mrf.mxu0
        %2494 = vdwg.mxu0
        %2495 = vmatprep.subr.bf16.mxu0 0
        %2496 = vmatpush1.bf16.msra.mxu0 %v2446
        %2497 = vmatprep.subr.bf16.mxu0 0
        %2498 = vmatpush1.bf16.msra.mxu0 %v2445
        %2499 = vmatprep.subr.bf16.mxu0 0
        %2500 = vmatpush1.bf16.msra.mxu0 %v2444
        %2501 = vmatprep.subr.bf16.mxu0 0
        %2502 = vmatpush1.bf16.msra.mxu0 %v2443
        %2503 = vmatprep.subr.bf16.mxu0 0
        %2504 = vmatpush1.bf16.msra.mxu0 %v2442
        %2505 = vmatprep.subr.bf16.mxu0 0
        %2506 = vmatpush1.bf16.msra.mxu0 %v2441
        %2507 = vmatprep.subr.bf16.mxu0 0
        %2508 = vmatpush1.bf16.msra.mxu0 %v2440
        %2509 = vmatprep.subr.bf16.mxu0 0
        %2510 = vmatpush1.bf16.msra.mxu0 %v2439
        %2511 = vmatprep.subr.bf16.mxu0 0
        %2512 = vmatpush2.bf16.msra.mxu0 0
        %2513 = vmatprep.subr.bf16.mxu0 0
        %2514 = vmatpush2.bf16.msra.mxu0 0
        %2515 = vmatprep.subr.bf16.mxu0 0
        %2516 = vmatpush2.bf16.msra.mxu0 0
        %2517 = vmatprep.subr.bf16.mxu0 0
        %2518 = vmatpush2.bf16.msra.mxu0 0
        %2519 = vmatprep.subr.bf16.mxu0 0
        %2520 = vmatpush2.bf16.msra.mxu0 0
        %2521 = vmatprep.subr.bf16.mxu0 0
        %2522 = vmatpush2.bf16.msra.mxu0 0
        %2523 = vmatprep.subr.bf16.mxu0 0
        %2524 = vmatpush2.bf16.msra.mxu0 0
        %2525 = vmatprep.subr.bf16.mxu0 0
        %2526 = vmatpush2.bf16.msra.mxu0 0
        %2527 = vmatprep.mubr.bf16.mxu0 0
        %2528 = vmatmul.mubr.bf16.gmra.mxu0 %v2406
        %v2529 = vpop.f32.mrf.mxu0
        %v2530 = vadd.f32 0.0, %v2529
        %v2531 = vpop.f32.mrf.mxu0
        %v2532 = vpop.f32.mrf.mxu0
        %v2533 = vpop.f32.mrf.mxu0
        %2534 = vdwg.mxu0
        %v2535 = vmul.f32 %v2490, %v2490
        %v2536 = vsub.f32 %v2530, %v2535
        %v2537 = vmax.f32 %v2536, 0.0
        %v2538 = vadd.f32 %v2537, 1e-05
        %v2539 = vrsqrt.pop %v2538
        %v2540 = vpack.c.bf16 %v2539, %v2539
        %vm2541 = vcmask 64512
        %v2543 = vsel %vm2541, %v2540, 0
        %vm2545 = vcmask 1043456
        %v2547 = vsel %vm2545, %v2402, 0
        %2549 = vmatprep.subr.bf16.mxu0 0
        %2550 = vmatpush1.bf16.msra.mxu0 0
        %2551 = vmatprep.subr.bf16.mxu0 0
        %2552 = vmatpush1.bf16.msra.mxu0 0
        %2553 = vmatprep.subr.bf16.mxu0 0
        %2554 = vmatpush1.bf16.msra.mxu0 0
        %2555 = vmatprep.subr.bf16.mxu0 0
        %2556 = vmatpush1.bf16.msra.mxu0 0
        %2557 = vmatprep.subr.bf16.mxu0 0
        %2558 = vmatpush1.bf16.msra.mxu0 0
        %2559 = vmatprep.subr.bf16.mxu0 0
        %2560 = vmatpush1.bf16.msra.mxu0 0
        %2561 = vmatprep.subr.bf16.mxu0 0
        %2562 = vmatpush1.bf16.msra.mxu0 0
        %2563 = vmatprep.subr.bf16.mxu0 0
        %2564 = vmatpush1.bf16.msra.mxu0 %v2547
        %2565 = vmatprep.subr.bf16.mxu0 0
        %2566 = vmatpush2.bf16.msra.mxu0 0
        %2567 = vmatprep.subr.bf16.mxu0 0
        %2568 = vmatpush2.bf16.msra.mxu0 0
        %2569 = vmatprep.subr.bf16.mxu0 0
        %2570 = vmatpush2.bf16.msra.mxu0 0
        %2571 = vmatprep.subr.bf16.mxu0 0
        %2572 = vmatpush2.bf16.msra.mxu0 0
        %2573 = vmatprep.subr.bf16.mxu0 0
        %2574 = vmatpush2.bf16.msra.mxu0 0
        %2575 = vmatprep.subr.bf16.mxu0 0
        %2576 = vmatpush2.bf16.msra.mxu0 0
        %2577 = vmatprep.subr.bf16.mxu0 0
        %2578 = vmatpush2.bf16.msra.mxu0 0
        %2579 = vmatprep.subr.bf16.mxu0 0
        %2580 = vmatpush2.bf16.msra.mxu0 0
        %2581 = vmatprep.mubr.bf16.mxu0 0
        %2582 = vmatmul.mubr.bf16.gmra.mxu0 %v2543
        %v2583 = vpop.f32.mrf.mxu0
        %v2584 = vadd.f32 0.0, %v2583
        %v2585 = vpop.f32.mrf.mxu0
        %v2586 = vpop.f32.mrf.mxu0
        %v2587 = vpop.f32.mrf.mxu0
        %2588 = vdwg.mxu0
        %v2589 = vmul.f32 %v2490, %v2539
        %v2590 = vpack.c.bf16 %v2589, %v2589
        %v2592 = vsel %vm2541, %v2590, 0
        %2594 = vmatprep.subr.bf16.mxu0 0
        %2595 = vmatpush1.bf16.msra.mxu0 0
        %2596 = vmatprep.subr.bf16.mxu0 0
        %2597 = vmatpush1.bf16.msra.mxu0 0
        %2598 = vmatprep.subr.bf16.mxu0 0
        %2599 = vmatpush1.bf16.msra.mxu0 0
        %2600 = vmatprep.subr.bf16.mxu0 0
        %2601 = vmatpush1.bf16.msra.mxu0 0
        %2602 = vmatprep.subr.bf16.mxu0 0
        %2603 = vmatpush1.bf16.msra.mxu0 0
        %2604 = vmatprep.subr.bf16.mxu0 0
        %2605 = vmatpush1.bf16.msra.mxu0 0
        %2606 = vmatprep.subr.bf16.mxu0 0
        %2607 = vmatpush1.bf16.msra.mxu0 0
        %2608 = vmatprep.subr.bf16.mxu0 0
        %2609 = vmatpush1.bf16.msra.mxu0 %v2547
        %2610 = vmatprep.subr.bf16.mxu0 0
        %2611 = vmatpush2.bf16.msra.mxu0 0
        %2612 = vmatprep.subr.bf16.mxu0 0
        %2613 = vmatpush2.bf16.msra.mxu0 0
        %2614 = vmatprep.subr.bf16.mxu0 0
        %2615 = vmatpush2.bf16.msra.mxu0 0
        %2616 = vmatprep.subr.bf16.mxu0 0
        %2617 = vmatpush2.bf16.msra.mxu0 0
        %2618 = vmatprep.subr.bf16.mxu0 0
        %2619 = vmatpush2.bf16.msra.mxu0 0
        %2620 = vmatprep.subr.bf16.mxu0 0
        %2621 = vmatpush2.bf16.msra.mxu0 0
        %2622 = vmatprep.subr.bf16.mxu0 0
        %2623 = vmatpush2.bf16.msra.mxu0 0
        %2624 = vmatprep.subr.bf16.mxu0 0
        %2625 = vmatpush2.bf16.msra.mxu0 0
        %2626 = vmatprep.mubr.bf16.mxu0 0
        %2627 = vmatmul.mubr.bf16.gmra.mxu0 %v2592
        %v2628 = vpop.f32.mrf.mxu0
        %v2629 = vadd.f32 0.0, %v2628
        %v2630 = vpop.f32.mrf.mxu0
        %v2631 = vpop.f32.mrf.mxu0
        %v2632 = vpop.f32.mrf.mxu0
        %2633 = vdwg.mxu0
        %v2634 = vlaneseq
        %v2635 = vshrl.u32 %v2634, 7
        %v2636 = vsub.s32 0, %v2635
        %v2637 = vrot.slane %v2403, %v2636
        %v2638 = vsub.f32 %v2637, %v2629
        %v2639 = vmul.f32 %v2381, %v2584
        %v2640 = vadd.f32 %v2639, %v2638
        %v2641 = vmul.f32 %v2640, 0.5
        %v2642 = vmul.f32 %v2640, %v2640
        %v2643 = vmul.f32 %v2642, %v2640
        %v2644 = vmul.f32 %v2643, 0.044715
        %v2645 = vadd.f32 %v2640, %v2644
        %v2646 = vmul.f32 %v2645, 0.7978846
        %v2647 = vtanh.pop %v2646
        %v2648 = vadd.f32 %v2647, 1.0
        %v2649 = vmul.f32 %v2641, %v2648
        %v2650 = vld [vmem:[%s11] sm:$0xf]
        %v2651 = vld [vmem:[%s11 + $0x4] sm:$0xf]
        %v2652 = vld [vmem:[%s11 + $0x8] sm:$0xf]
        %v2653 = vld [vmem:[%s11 + $0xc] sm:$0xf]
        %v2654 = vld [vmem:[%s11 + $0x10] sm:$0xf]
        %v2655 = vld [vmem:[%s11 + $0x14] sm:$0xf]
        %v2656 = vld [vmem:[%s11 + $0x18] sm:$0xf]
        %v2657 = vld [vmem:[%s11 + $0x1c] sm:$0xf]
        %v2658 = vld [vmem:[%s11 + $0x20] sm:$0xf]
        %v2659 = vld [vmem:[%s11 + $0x24] sm:$0xf]
        %v2660 = vld [vmem:[%s11 + $0x28] sm:$0xf]
        %v2661 = vld [vmem:[%s11 + $0x2c] sm:$0xf]
        %v2662 = vld [vmem:[%s11 + $0x30] sm:$0xf]
        %v2663 = vld [vmem:[%s11 + $0x34] sm:$0xf]
        %v2664 = vld [vmem:[%s11 + $0x38] sm:$0xf]
        %v2665 = vld [vmem:[%s11 + $0x3c] sm:$0xf]
        %v2666 = vld [vmem:[%s19] sm:$0x1]
        %v2667 = vpack.c.bf16 %v2649, %v2649
        %v2668 = vlaneseq
        %v2669 = vshrl.u32 %v2668, 7
        %v2670 = vsub.s32 0, %v2669
        %v2671 = vrot.slane %v2666, %v2670
        %v2688 = vunpack.c.l.b16 %v2650
        %v2689 = vunpack.c.l.b16 %v2651
        %v2690 = vunpack.c.l.b16 %v2652
        %v2691 = vunpack.c.l.b16 %v2653
        %v2692 = vunpack.c.l.b16 %v2654
        %v2693 = vunpack.c.l.b16 %v2655
        %v2694 = vunpack.c.l.b16 %v2656
        %v2695 = vunpack.c.l.b16 %v2657
        %v2696 = vunpack.c.l.b16 %v2658
        %v2697 = vunpack.c.l.b16 %v2659
        %v2698 = vunpack.c.l.b16 %v2660
        %v2699 = vunpack.c.l.b16 %v2661
        %v2700 = vunpack.c.l.b16 %v2662
        %v2701 = vunpack.c.l.b16 %v2663
        %v2702 = vunpack.c.l.b16 %v2664
        %v2703 = vunpack.c.l.b16 %v2665
        %v2704 = vpack.c.b16 %v2689, %v2688
        %v2705 = vpack.c.b16 %v2691, %v2690
        %v2706 = vpack.c.b16 %v2693, %v2692
        %v2707 = vpack.c.b16 %v2695, %v2694
        %v2708 = vpack.c.b16 %v2697, %v2696
        %v2709 = vpack.c.b16 %v2699, %v2698
        %v2710 = vpack.c.b16 %v2701, %v2700
        %v2711 = vpack.c.b16 %v2703, %v2702
        %2720 = vmatprep.subr.bf16.mxu0 0
        %2721 = vmatpush1.bf16.msra.mxu0 %v2711
        %2722 = vmatprep.subr.bf16.mxu0 0
        %2723 = vmatpush1.bf16.msra.mxu0 %v2710
        %2724 = vmatprep.subr.bf16.mxu0 0
        %2725 = vmatpush1.bf16.msra.mxu0 %v2709
        %2726 = vmatprep.subr.bf16.mxu0 0
        %2727 = vmatpush1.bf16.msra.mxu0 %v2708
        %2728 = vmatprep.subr.bf16.mxu0 0
        %2729 = vmatpush1.bf16.msra.mxu0 %v2707
        %2730 = vmatprep.subr.bf16.mxu0 0
        %2731 = vmatpush1.bf16.msra.mxu0 %v2706
        %2732 = vmatprep.subr.bf16.mxu0 0
        %2733 = vmatpush1.bf16.msra.mxu0 %v2705
        %2734 = vmatprep.subr.bf16.mxu0 0
        %2735 = vmatpush1.bf16.msra.mxu0 %v2704
        %2736 = vmatprep.subr.bf16.mxu0 0
        %2737 = vmatpush2.bf16.msra.mxu0 0
        %2738 = vmatprep.subr.bf16.mxu0 0
        %2739 = vmatpush2.bf16.msra.mxu0 0
        %2740 = vmatprep.subr.bf16.mxu0 0
        %2741 = vmatpush2.bf16.msra.mxu0 0
        %2742 = vmatprep.subr.bf16.mxu0 0
        %2743 = vmatpush2.bf16.msra.mxu0 0
        %2744 = vmatprep.subr.bf16.mxu0 0
        %2745 = vmatpush2.bf16.msra.mxu0 0
        %2746 = vmatprep.subr.bf16.mxu0 0
        %2747 = vmatpush2.bf16.msra.mxu0 0
        %2748 = vmatprep.subr.bf16.mxu0 0
        %2749 = vmatpush2.bf16.msra.mxu0 0
        %2750 = vmatprep.subr.bf16.mxu0 0
        %2751 = vmatpush2.bf16.msra.mxu0 0
        %2752 = vmatprep.mubr.bf16.mxu0 0
        %2753 = vmatmul.mubr.bf16.gmra.mxu0 %v2667
        %v2754 = vpop.f32.mrf.mxu0
        %v2755 = vadd.f32 %v2671, %v2754
        %v2756 = vpop.f32.mrf.mxu0
        %v2757 = vpop.f32.mrf.mxu0
        %v2758 = vpop.f32.mrf.mxu0
        %2759 = vdwg.mxu0
        %v2760 = vld [vmem:[%s6] sm:$0xf]
        %v2761 = vld [vmem:[%s6 + $0x4] sm:$0xf]
        %v2762 = vld [vmem:[%s6 + $0x8] sm:$0xf]
        %v2763 = vld [vmem:[%s6 + $0xc] sm:$0xf]
        %v2764 = vld [vmem:[#allocation8] sm:$0xf]
        %v2765 = vld [vmem:[%s19 + $0x1] sm:$0x1]
        %v2766 = vpack.c.bf16 %v2755, %v2755
        %v2767 = vmul.f32 %v2755, %v2755
        %v2768 = vpack.c.bf16 %v2767, %v2767
        %v2773 = vunpack.c.l.b16 %v2760
        %v2774 = vunpack.c.l.b16 %v2761
        %v2775 = vunpack.c.l.b16 %v2762
        %v2776 = vunpack.c.l.b16 %v2763
        %v2777 = vpack.c.b16 %v2774, %v2773
        %v2778 = vpack.c.b16 %v2776, %v2775
        %v2782 = vsel %vm1799, %v2766, 0
        %2784 = vmatprep.subr.bf16.mxu0 0
        %2785 = vmatpush1.bf16.msra.mxu0 0
        %2786 = vmatprep.subr.bf16.mxu0 0
        %2787 = vmatpush1.bf16.msra.mxu0 0
        %2788 = vmatprep.subr.bf16.mxu0 0
        %2789 = vmatpush1.bf16.msra.mxu0 0
        %2790 = vmatprep.subr.bf16.mxu0 0
        %2791 = vmatpush1.bf16.msra.mxu0 0
        %2792 = vmatprep.subr.bf16.mxu0 0
        %2793 = vmatpush1.bf16.msra.mxu0 0
        %2794 = vmatprep.subr.bf16.mxu0 0
        %2795 = vmatpush1.bf16.msra.mxu0 0
        %2796 = vmatprep.subr.bf16.mxu0 0
        %2797 = vmatpush1.bf16.msra.mxu0 %v2778
        %2798 = vmatprep.subr.bf16.mxu0 0
        %2799 = vmatpush1.bf16.msra.mxu0 %v2777
        %2800 = vmatprep.subr.bf16.mxu0 0
        %2801 = vmatpush2.bf16.msra.mxu0 0
        %2802 = vmatprep.subr.bf16.mxu0 0
        %2803 = vmatpush2.bf16.msra.mxu0 0
        %2804 = vmatprep.subr.bf16.mxu0 0
        %2805 = vmatpush2.bf16.msra.mxu0 0
        %2806 = vmatprep.subr.bf16.mxu0 0
        %2807 = vmatpush2.bf16.msra.mxu0 0
        %2808 = vmatprep.subr.bf16.mxu0 0
        %2809 = vmatpush2.bf16.msra.mxu0 0
        %2810 = vmatprep.subr.bf16.mxu0 0
        %2811 = vmatpush2.bf16.msra.mxu0 0
        %2812 = vmatprep.subr.bf16.mxu0 0
        %2813 = vmatpush2.bf16.msra.mxu0 0
        %2814 = vmatprep.subr.bf16.mxu0 0
        %2815 = vmatpush2.bf16.msra.mxu0 0
        %2816 = vmatprep.mubr.bf16.mxu0 0
        %2817 = vmatmul.mubr.bf16.gmra.mxu0 %v2782
        %v2818 = vpop.f32.mrf.mxu0
        %v2819 = vadd.f32 0.0, %v2818
        %v2820 = vpop.f32.mrf.mxu0
        %v2821 = vpop.f32.mrf.mxu0
        %v2822 = vpop.f32.mrf.mxu0
        %2823 = vdwg.mxu0
        %v2825 = vsel %vm1799, %v2768, 0
        %2827 = vmatprep.subr.bf16.mxu0 0
        %2828 = vmatpush1.bf16.msra.mxu0 0
        %2829 = vmatprep.subr.bf16.mxu0 0
        %2830 = vmatpush1.bf16.msra.mxu0 0
        %2831 = vmatprep.subr.bf16.mxu0 0
        %2832 = vmatpush1.bf16.msra.mxu0 0
        %2833 = vmatprep.subr.bf16.mxu0 0
        %2834 = vmatpush1.bf16.msra.mxu0 0
        %2835 = vmatprep.subr.bf16.mxu0 0
        %2836 = vmatpush1.bf16.msra.mxu0 0
        %2837 = vmatprep.subr.bf16.mxu0 0
        %2838 = vmatpush1.bf16.msra.mxu0 0
        %2839 = vmatprep.subr.bf16.mxu0 0
        %2840 = vmatpush1.bf16.msra.mxu0 %v2778
        %2841 = vmatprep.subr.bf16.mxu0 0
        %2842 = vmatpush1.bf16.msra.mxu0 %v2777
        %2843 = vmatprep.subr.bf16.mxu0 0
        %2844 = vmatpush2.bf16.msra.mxu0 0
        %2845 = vmatprep.subr.bf16.mxu0 0
        %2846 = vmatpush2.bf16.msra.mxu0 0
        %2847 = vmatprep.subr.bf16.mxu0 0
        %2848 = vmatpush2.bf16.msra.mxu0 0
        %2849 = vmatprep.subr.bf16.mxu0 0
        %2850 = vmatpush2.bf16.msra.mxu0 0
        %2851 = vmatprep.subr.bf16.mxu0 0
        %2852 = vmatpush2.bf16.msra.mxu0 0
        %2853 = vmatprep.subr.bf16.mxu0 0
        %2854 = vmatpush2.bf16.msra.mxu0 0
        %2855 = vmatprep.subr.bf16.mxu0 0
        %2856 = vmatpush2.bf16.msra.mxu0 0
        %2857 = vmatprep.subr.bf16.mxu0 0
        %2858 = vmatpush2.bf16.msra.mxu0 0
        %2859 = vmatprep.mubr.bf16.mxu0 0
        %2860 = vmatmul.mubr.bf16.gmra.mxu0 %v2825
        %v2861 = vpop.f32.mrf.mxu0
        %v2862 = vadd.f32 0.0, %v2861
        %v2863 = vpop.f32.mrf.mxu0
        %v2864 = vpop.f32.mrf.mxu0
        %v2865 = vpop.f32.mrf.mxu0
        %2866 = vdwg.mxu0
        %v2867 = vmul.f32 %v2819, %v2819
        %v2868 = vsub.f32 %v2862, %v2867
        %v2869 = vmax.f32 %v2868, 0.0
        %v2870 = vadd.f32 %v2869, 1e-05
        %v2871 = vrsqrt.pop %v2870
        %v2872 = vpack.c.bf16 %v2871, %v2871
        %v2874 = vsel %vm2541, %v2872, 0
        %v2877 = vsel %vm2545, %v2764, 0
        %2879 = vmatprep.subr.bf16.mxu0 0
        %2880 = vmatpush1.bf16.msra.mxu0 0
        %2881 = vmatprep.subr.bf16.mxu0 0
        %2882 = vmatpush1.bf16.msra.mxu0 0
        %2883 = vmatprep.subr.bf16.mxu0 0
        %2884 = vmatpush1.bf16.msra.mxu0 0
        %2885 = vmatprep.subr.bf16.mxu0 0
        %2886 = vmatpush1.bf16.msra.mxu0 0
        %2887 = vmatprep.subr.bf16.mxu0 0
        %2888 = vmatpush1.bf16.msra.mxu0 0
        %2889 = vmatprep.subr.bf16.mxu0 0
        %2890 = vmatpush1.bf16.msra.mxu0 0
        %2891 = vmatprep.subr.bf16.mxu0 0
        %2892 = vmatpush1.bf16.msra.mxu0 0
        %2893 = vmatprep.subr.bf16.mxu0 0
        %2894 = vmatpush1.bf16.msra.mxu0 %v2877
        %2895 = vmatprep.subr.bf16.mxu0 0
        %2896 = vmatpush2.bf16.msra.mxu0 0
        %2897 = vmatprep.subr.bf16.mxu0 0
        %2898 = vmatpush2.bf16.msra.mxu0 0
        %2899 = vmatprep.subr.bf16.mxu0 0
        %2900 = vmatpush2.bf16.msra.mxu0 0
        %2901 = vmatprep.subr.bf16.mxu0 0
        %2902 = vmatpush2.bf16.msra.mxu0 0
        %2903 = vmatprep.subr.bf16.mxu0 0
        %2904 = vmatpush2.bf16.msra.mxu0 0
        %2905 = vmatprep.subr.bf16.mxu0 0
        %2906 = vmatpush2.bf16.msra.mxu0 0
        %2907 = vmatprep.subr.bf16.mxu0 0
        %2908 = vmatpush2.bf16.msra.mxu0 0
        %2909 = vmatprep.subr.bf16.mxu0 0
        %2910 = vmatpush2.bf16.msra.mxu0 0
        %2911 = vmatprep.mubr.bf16.mxu0 0
        %2912 = vmatmul.mubr.bf16.gmra.mxu0 %v2874
        %v2913 = vpop.f32.mrf.mxu0
        %v2914 = vadd.f32 0.0, %v2913
        %v2915 = vpop.f32.mrf.mxu0
        %v2916 = vpop.f32.mrf.mxu0
        %v2917 = vpop.f32.mrf.mxu0
        %2918 = vdwg.mxu0
        %v2919 = vmul.f32 %v2819, %v2871
        %v2920 = vpack.c.bf16 %v2919, %v2919
        %v2922 = vsel %vm2541, %v2920, 0
        %2924 = vmatprep.subr.bf16.mxu0 0
        %2925 = vmatpush1.bf16.msra.mxu0 0
        %2926 = vmatprep.subr.bf16.mxu0 0
        %2927 = vmatpush1.bf16.msra.mxu0 0
        %2928 = vmatprep.subr.bf16.mxu0 0
        %2929 = vmatpush1.bf16.msra.mxu0 0
        %2930 = vmatprep.subr.bf16.mxu0 0
        %2931 = vmatpush1.bf16.msra.mxu0 0
        %2932 = vmatprep.subr.bf16.mxu0 0
        %2933 = vmatpush1.bf16.msra.mxu0 0
        %2934 = vmatprep.subr.bf16.mxu0 0
        %2935 = vmatpush1.bf16.msra.mxu0 0
        %2936 = vmatprep.subr.bf16.mxu0 0
        %2937 = vmatpush1.bf16.msra.mxu0 0
        %2938 = vmatprep.subr.bf16.mxu0 0
        %2939 = vmatpush1.bf16.msra.mxu0 %v2877
        %2940 = vmatprep.subr.bf16.mxu0 0
        %2941 = vmatpush2.bf16.msra.mxu0 0
        %2942 = vmatprep.subr.bf16.mxu0 0
        %2943 = vmatpush2.bf16.msra.mxu0 0
        %2944 = vmatprep.subr.bf16.mxu0 0
        %2945 = vmatpush2.bf16.msra.mxu0 0
        %2946 = vmatprep.subr.bf16.mxu0 0
        %2947 = vmatpush2.bf16.msra.mxu0 0
        %2948 = vmatprep.subr.bf16.mxu0 0
        %2949 = vmatpush2.bf16.msra.mxu0 0
        %2950 = vmatprep.subr.bf16.mxu0 0
        %2951 = vmatpush2.bf16.msra.mxu0 0
        %2952 = vmatprep.subr.bf16.mxu0 0
        %2953 = vmatpush2.bf16.msra.mxu0 0
        %2954 = vmatprep.subr.bf16.mxu0 0
        %2955 = vmatpush2.bf16.msra.mxu0 0
        %2956 = vmatprep.mubr.bf16.mxu0 0
        %2957 = vmatmul.mubr.bf16.gmra.mxu0 %v2922
        %v2958 = vpop.f32.mrf.mxu0
        %v2959 = vadd.f32 0.0, %v2958
        %v2960 = vpop.f32.mrf.mxu0
        %v2961 = vpop.f32.mrf.mxu0
        %v2962 = vpop.f32.mrf.mxu0
        %2963 = vdwg.mxu0
        %v2964 = vlaneseq
        %v2965 = vshrl.u32 %v2964, 7
        %v2966 = vsub.s32 0, %v2965
        %v2967 = vrot.slane %v2765, %v2966
        %v2968 = vsub.f32 %v2967, %v2959
        %v2969 = vmul.f32 %v2755, %v2914
        %v2970 = vadd.f32 %v2969, %v2968
        %v2971 = vmul.f32 %v2970, 0.5
        %v2972 = vmul.f32 %v2970, %v2970
        %v2973 = vmul.f32 %v2972, %v2970
        %v2974 = vmul.f32 %v2973, 0.044715
        %v2975 = vadd.f32 %v2970, %v2974
        %v2976 = vmul.f32 %v2975, 0.7978846
        %v2977 = vtanh.pop %v2976
        %v2978 = vadd.f32 %v2977, 1.0
        %v2979 = vmul.f32 %v2971, %v2978
        %v2980 = vld [vmem:[#allocation11] sm:$0xf]
        %v2981 = vld [vmem:[#allocation11 + $0x4] sm:$0xf]
        %v2982 = vld [vmem:[#allocation11 + $0x8] sm:$0xf]
        %v2983 = vld [vmem:[#allocation11 + $0xc] sm:$0xf]
        %v2984 = vld [vmem:[%s19 + $0x2] sm:$0x1]
        %v2985 = vpack.c.bf16 %v2979, %v2979
        %v2986 = vlaneseq
        %v2987 = vshrl.u32 %v2986, 7
        %v2988 = vsub.s32 0, %v2987
        %v2989 = vrot.slane %v2984, %v2988
        %v2994 = vunpack.c.l.b16 %v2980
        %v2995 = vunpack.c.l.b16 %v2981
        %v2996 = vunpack.c.l.b16 %v2982
        %v2997 = vunpack.c.l.b16 %v2983
        %v2998 = vpack.c.b16 %v2995, %v2994
        %v2999 = vpack.c.b16 %v2997, %v2996
        %v3003 = vsel %vm1799, %v2985, 0
        %3005 = vmatprep.subr.bf16.mxu0 0
        %3006 = vmatpush1.bf16.msra.mxu0 0
        %3007 = vmatprep.subr.bf16.mxu0 0
        %3008 = vmatpush1.bf16.msra.mxu0 0
        %3009 = vmatprep.subr.bf16.mxu0 0
        %3010 = vmatpush1.bf16.msra.mxu0 0
        %3011 = vmatprep.subr.bf16.mxu0 0
        %3012 = vmatpush1.bf16.msra.mxu0 0
        %3013 = vmatprep.subr.bf16.mxu0 0
        %3014 = vmatpush1.bf16.msra.mxu0 0
        %3015 = vmatprep.subr.bf16.mxu0 0
        %3016 = vmatpush1.bf16.msra.mxu0 0
        %3017 = vmatprep.subr.bf16.mxu0 0
        %3018 = vmatpush1.bf16.msra.mxu0 %v2999
        %3019 = vmatprep.subr.bf16.mxu0 0
        %3020 = vmatpush1.bf16.msra.mxu0 %v2998
        %3021 = vmatprep.subr.bf16.mxu0 0
        %3022 = vmatpush2.bf16.msra.mxu0 0
        %3023 = vmatprep.subr.bf16.mxu0 0
        %3024 = vmatpush2.bf16.msra.mxu0 0
        %3025 = vmatprep.subr.bf16.mxu0 0
        %3026 = vmatpush2.bf16.msra.mxu0 0
        %3027 = vmatprep.subr.bf16.mxu0 0
        %3028 = vmatpush2.bf16.msra.mxu0 0
        %3029 = vmatprep.subr.bf16.mxu0 0
        %3030 = vmatpush2.bf16.msra.mxu0 0
        %3031 = vmatprep.subr.bf16.mxu0 0
        %3032 = vmatpush2.bf16.msra.mxu0 0
        %3033 = vmatprep.subr.bf16.mxu0 0
        %3034 = vmatpush2.bf16.msra.mxu0 0
        %3035 = vmatprep.subr.bf16.mxu0 0
        %3036 = vmatpush2.bf16.msra.mxu0 0
        %3037 = vmatprep.mubr.bf16.mxu0 0
        %3038 = vmatmul.mubr.bf16.gmra.mxu0 %v3003
        %v3039 = vpop.f32.mrf.mxu0
        %v3040 = vadd.f32 %v2989, %v3039
        %v3041 = vpop.f32.mrf.mxu0
        %v3042 = vpop.f32.mrf.mxu0
        %v3043 = vpop.f32.mrf.mxu0
        %3044 = vdwg.mxu0
        %v3045 = vld [vmem:[#allocation10] sm:$0xf]
        %v3046 = vld [vmem:[%s19 + $0x3] sm:$0x1]
        %v3047 = vpack.c.bf16 %v3040, %v3040
        %v3048 = vmul.f32 %v3040, %v3040
        %v3049 = vpack.c.bf16 %v3048, %v3048
        %v3051 = vsel %vm1799, %v3047, 0
        %3053 = vmatprep.subr.bf16.mxu0 0
        %3054 = vmatpush1.bf16.msra.mxu0 0
        %3055 = vmatprep.subr.bf16.mxu0 0
        %3056 = vmatpush1.bf16.msra.mxu0 0
        %3057 = vmatprep.subr.bf16.mxu0 0
        %3058 = vmatpush1.bf16.msra.mxu0 0
        %3059 = vmatprep.subr.bf16.mxu0 0
        %3060 = vmatpush1.bf16.msra.mxu0 0
        %3061 = vmatprep.subr.bf16.mxu0 0
        %3062 = vmatpush1.bf16.msra.mxu0 0
        %3063 = vmatprep.subr.bf16.mxu0 0
        %3064 = vmatpush1.bf16.msra.mxu0 0
        %3065 = vmatprep.subr.bf16.mxu0 0
        %3066 = vmatpush1.bf16.msra.mxu0 %v2778
        %3067 = vmatprep.subr.bf16.mxu0 0
        %3068 = vmatpush1.bf16.msra.mxu0 %v2777
        %3069 = vmatprep.subr.bf16.mxu0 0
        %3070 = vmatpush2.bf16.msra.mxu0 0
        %3071 = vmatprep.subr.bf16.mxu0 0
        %3072 = vmatpush2.bf16.msra.mxu0 0
        %3073 = vmatprep.subr.bf16.mxu0 0
        %3074 = vmatpush2.bf16.msra.mxu0 0
        %3075 = vmatprep.subr.bf16.mxu0 0
        %3076 = vmatpush2.bf16.msra.mxu0 0
        %3077 = vmatprep.subr.bf16.mxu0 0
        %3078 = vmatpush2.bf16.msra.mxu0 0
        %3079 = vmatprep.subr.bf16.mxu0 0
        %3080 = vmatpush2.bf16.msra.mxu0 0
        %3081 = vmatprep.subr.bf16.mxu0 0
        %3082 = vmatpush2.bf16.msra.mxu0 0
        %3083 = vmatprep.subr.bf16.mxu0 0
        %3084 = vmatpush2.bf16.msra.mxu0 0
        %3085 = vmatprep.mubr.bf16.mxu0 0
        %3086 = vmatmul.mubr.bf16.gmra.mxu0 %v3051
        %v3087 = vpop.f32.mrf.mxu0
        %v3088 = vadd.f32 0.0, %v3087
        %v3089 = vpop.f32.mrf.mxu0
        %v3090 = vpop.f32.mrf.mxu0
        %v3091 = vpop.f32.mrf.mxu0
        %3092 = vdwg.mxu0
        %v3094 = vsel %vm1799, %v3049, 0
        %3096 = vmatprep.subr.bf16.mxu0 0
        %3097 = vmatpush1.bf16.msra.mxu0 0
        %3098 = vmatprep.subr.bf16.mxu0 0
        %3099 = vmatpush1.bf16.msra.mxu0 0
        %3100 = vmatprep.subr.bf16.mxu0 0
        %3101 = vmatpush1.bf16.msra.mxu0 0
        %3102 = vmatprep.subr.bf16.mxu0 0
        %3103 = vmatpush1.bf16.msra.mxu0 0
        %3104 = vmatprep.subr.bf16.mxu0 0
        %3105 = vmatpush1.bf16.msra.mxu0 0
        %3106 = vmatprep.subr.bf16.mxu0 0
        %3107 = vmatpush1.bf16.msra.mxu0 0
        %3108 = vmatprep.subr.bf16.mxu0 0
        %3109 = vmatpush1.bf16.msra.mxu0 %v2778
        %3110 = vmatprep.subr.bf16.mxu0 0
        %3111 = vmatpush1.bf16.msra.mxu0 %v2777
        %3112 = vmatprep.subr.bf16.mxu0 0
        %3113 = vmatpush2.bf16.msra.mxu0 0
        %3114 = vmatprep.subr.bf16.mxu0 0
        %3115 = vmatpush2.bf16.msra.mxu0 0
        %3116 = vmatprep.subr.bf16.mxu0 0
        %3117 = vmatpush2.bf16.msra.mxu0 0
        %3118 = vmatprep.subr.bf16.mxu0 0
        %3119 = vmatpush2.bf16.msra.mxu0 0
        %3120 = vmatprep.subr.bf16.mxu0 0
        %3121 = vmatpush2.bf16.msra.mxu0 0
        %3122 = vmatprep.subr.bf16.mxu0 0
        %3123 = vmatpush2.bf16.msra.mxu0 0
        %3124 = vmatprep.subr.bf16.mxu0 0
        %3125 = vmatpush2.bf16.msra.mxu0 0
        %3126 = vmatprep.subr.bf16.mxu0 0
        %3127 = vmatpush2.bf16.msra.mxu0 0
        %3128 = vmatprep.mubr.bf16.mxu0 0
        %3129 = vmatmul.mubr.bf16.gmra.mxu0 %v3094
        %v3130 = vpop.f32.mrf.mxu0
        %v3131 = vadd.f32 0.0, %v3130
        %v3132 = vpop.f32.mrf.mxu0
        %v3133 = vpop.f32.mrf.mxu0
        %v3134 = vpop.f32.mrf.mxu0
        %3135 = vdwg.mxu0
        %v3136 = vmul.f32 %v3088, %v3088
        %v3137 = vsub.f32 %v3131, %v3136
        %v3138 = vmax.f32 %v3137, 0.0
        %v3139 = vadd.f32 %v3138, 1e-05
        %v3140 = vrsqrt.pop %v3139
        %v3141 = vpack.c.bf16 %v3140, %v3140
        %v3143 = vsel %vm2541, %v3141, 0
        %v3146 = vsel %vm2545, %v3045, 0
        %3148 = vmatprep.subr.bf16.mxu0 0
        %3149 = vmatpush1.bf16.msra.mxu0 0
        %3150 = vmatprep.subr.bf16.mxu0 0
        %3151 = vmatpush1.bf16.msra.mxu0 0
        %3152 = vmatprep.subr.bf16.mxu0 0
        %3153 = vmatpush1.bf16.msra.mxu0 0
        %3154 = vmatprep.subr.bf16.mxu0 0
        %3155 = vmatpush1.bf16.msra.mxu0 0
        %3156 = vmatprep.subr.bf16.mxu0 0
        %3157 = vmatpush1.bf16.msra.mxu0 0
        %3158 = vmatprep.subr.bf16.mxu0 0
        %3159 = vmatpush1.bf16.msra.mxu0 0
        %3160 = vmatprep.subr.bf16.mxu0 0
        %3161 = vmatpush1.bf16.msra.mxu0 0
        %3162 = vmatprep.subr.bf16.mxu0 0
        %3163 = vmatpush1.bf16.msra.mxu0 %v3146
        %3164 = vmatprep.subr.bf16.mxu0 0
        %3165 = vmatpush2.bf16.msra.mxu0 0
        %3166 = vmatprep.subr.bf16.mxu0 0
        %3167 = vmatpush2.bf16.msra.mxu0 0
        %3168 = vmatprep.subr.bf16.mxu0 0
        %3169 = vmatpush2.bf16.msra.mxu0 0
        %3170 = vmatprep.subr.bf16.mxu0 0
        %3171 = vmatpush2.bf16.msra.mxu0 0
        %3172 = vmatprep.subr.bf16.mxu0 0
        %3173 = vmatpush2.bf16.msra.mxu0 0
        %3174 = vmatprep.subr.bf16.mxu0 0
        %3175 = vmatpush2.bf16.msra.mxu0 0
        %3176 = vmatprep.subr.bf16.mxu0 0
        %3177 = vmatpush2.bf16.msra.mxu0 0
        %3178 = vmatprep.subr.bf16.mxu0 0
        %3179 = vmatpush2.bf16.msra.mxu0 0
        %3180 = vmatprep.mubr.bf16.mxu0 0
        %3181 = vmatmul.mubr.bf16.gmra.mxu0 %v3143
        %v3182 = vpop.f32.mrf.mxu0
        %v3183 = vadd.f32 0.0, %v3182
        %v3184 = vpop.f32.mrf.mxu0
        %v3185 = vpop.f32.mrf.mxu0
        %v3186 = vpop.f32.mrf.mxu0
        %3187 = vdwg.mxu0
        %v3188 = vmul.f32 %v3088, %v3140
        %v3189 = vpack.c.bf16 %v3188, %v3188
        %v3191 = vsel %vm2541, %v3189, 0
        %3193 = vmatprep.subr.bf16.mxu0 0
        %3194 = vmatpush1.bf16.msra.mxu0 0
        %3195 = vmatprep.subr.bf16.mxu0 0
        %3196 = vmatpush1.bf16.msra.mxu0 0
        %3197 = vmatprep.subr.bf16.mxu0 0
        %3198 = vmatpush1.bf16.msra.mxu0 0
        %3199 = vmatprep.subr.bf16.mxu0 0
        %3200 = vmatpush1.bf16.msra.mxu0 0
        %3201 = vmatprep.subr.bf16.mxu0 0
        %3202 = vmatpush1.bf16.msra.mxu0 0
        %3203 = vmatprep.subr.bf16.mxu0 0
        %3204 = vmatpush1.bf16.msra.mxu0 0
        %3205 = vmatprep.subr.bf16.mxu0 0
        %3206 = vmatpush1.bf16.msra.mxu0 0
        %3207 = vmatprep.subr.bf16.mxu0 0
        %3208 = vmatpush1.bf16.msra.mxu0 %v3146
        %3209 = vmatprep.subr.bf16.mxu0 0
        %3210 = vmatpush2.bf16.msra.mxu0 0
        %3211 = vmatprep.subr.bf16.mxu0 0
        %3212 = vmatpush2.bf16.msra.mxu0 0
        %3213 = vmatprep.subr.bf16.mxu0 0
        %3214 = vmatpush2.bf16.msra.mxu0 0
        %3215 = vmatprep.subr.bf16.mxu0 0
        %3216 = vmatpush2.bf16.msra.mxu0 0
        %3217 = vmatprep.subr.bf16.mxu0 0
        %3218 = vmatpush2.bf16.msra.mxu0 0
        %3219 = vmatprep.subr.bf16.mxu0 0
        %3220 = vmatpush2.bf16.msra.mxu0 0
        %3221 = vmatprep.subr.bf16.mxu0 0
        %3222 = vmatpush2.bf16.msra.mxu0 0
        %3223 = vmatprep.subr.bf16.mxu0 0
        %3224 = vmatpush2.bf16.msra.mxu0 0
        %3225 = vmatprep.mubr.bf16.mxu0 0
        %3226 = vmatmul.mubr.bf16.gmra.mxu0 %v3191
        %v3227 = vpop.f32.mrf.mxu0
        %v3228 = vadd.f32 0.0, %v3227
        %v3229 = vpop.f32.mrf.mxu0
        %v3230 = vpop.f32.mrf.mxu0
        %v3231 = vpop.f32.mrf.mxu0
        %3232 = vdwg.mxu0
        %v3233 = vlaneseq
        %v3234 = vshrl.u32 %v3233, 7
        %v3235 = vsub.s32 0, %v3234
        %v3236 = vrot.slane %v3046, %v3235
        %v3237 = vsub.f32 %v3236, %v3228
        %v3238 = vmul.f32 %v3040, %v3183
        %v3239 = vadd.f32 %v3238, %v3237
        %v3240 = vmul.f32 %v3239, 0.5
        %v3241 = vmul.f32 %v3239, %v3239
        %v3242 = vmul.f32 %v3241, %v3239
        %v3243 = vmul.f32 %v3242, 0.044715
        %v3244 = vadd.f32 %v3239, %v3243
        %v3245 = vmul.f32 %v3244, 0.7978846
        %v3246 = vtanh.pop %v3245
        %v3247 = vadd.f32 %v3246, 1.0
        %v3248 = vmul.f32 %v3240, %v3247
        %v3249 = vld [vmem:[#allocation13] sm:$0xf]
        %v3250 = vld [vmem:[#allocation13 + $0x4] sm:$0xf]
        %v3251 = vld [vmem:[#allocation13 + $0x8] sm:$0xf]
        %v3252 = vld [vmem:[#allocation13 + $0xc] sm:$0xf]
        %v3253 = vld [vmem:[%s19 + $0x4] sm:$0x1]
        %v3254 = vpack.c.bf16 %v3248, %v3248
        %v3255 = vlaneseq
        %v3256 = vshrl.u32 %v3255, 7
        %v3257 = vsub.s32 0, %v3256
        %v3258 = vrot.slane %v3253, %v3257
        %v3263 = vunpack.c.l.b16 %v3249
        %v3264 = vunpack.c.l.b16 %v3250
        %v3265 = vunpack.c.l.b16 %v3251
        %v3266 = vunpack.c.l.b16 %v3252
        %v3267 = vpack.c.b16 %v3264, %v3263
        %v3268 = vpack.c.b16 %v3266, %v3265
        %v3272 = vsel %vm1799, %v3254, 0
        %3274 = vmatprep.subr.bf16.mxu0 0
        %3275 = vmatpush1.bf16.msra.mxu0 0
        %3276 = vmatprep.subr.bf16.mxu0 0
        %3277 = vmatpush1.bf16.msra.mxu0 0
        %3278 = vmatprep.subr.bf16.mxu0 0
        %3279 = vmatpush1.bf16.msra.mxu0 0
        %3280 = vmatprep.subr.bf16.mxu0 0
        %3281 = vmatpush1.bf16.msra.mxu0 0
        %3282 = vmatprep.subr.bf16.mxu0 0
        %3283 = vmatpush1.bf16.msra.mxu0 0
        %3284 = vmatprep.subr.bf16.mxu0 0
        %3285 = vmatpush1.bf16.msra.mxu0 0
        %3286 = vmatprep.subr.bf16.mxu0 0
        %3287 = vmatpush1.bf16.msra.mxu0 %v3268
        %3288 = vmatprep.subr.bf16.mxu0 0
        %3289 = vmatpush1.bf16.msra.mxu0 %v3267
        %3290 = vmatprep.subr.bf16.mxu0 0
        %3291 = vmatpush2.bf16.msra.mxu0 0
        %3292 = vmatprep.subr.bf16.mxu0 0
        %3293 = vmatpush2.bf16.msra.mxu0 0
        %3294 = vmatprep.subr.bf16.mxu0 0
        %3295 = vmatpush2.bf16.msra.mxu0 0
        %3296 = vmatprep.subr.bf16.mxu0 0
        %3297 = vmatpush2.bf16.msra.mxu0 0
        %3298 = vmatprep.subr.bf16.mxu0 0
        %3299 = vmatpush2.bf16.msra.mxu0 0
        %3300 = vmatprep.subr.bf16.mxu0 0
        %3301 = vmatpush2.bf16.msra.mxu0 0
        %3302 = vmatprep.subr.bf16.mxu0 0
        %3303 = vmatpush2.bf16.msra.mxu0 0
        %3304 = vmatprep.subr.bf16.mxu0 0
        %3305 = vmatpush2.bf16.msra.mxu0 0
        %3306 = vmatprep.mubr.bf16.mxu0 0
        %3307 = vmatmul.mubr.bf16.gmra.mxu0 %v3272
        %v3308 = vpop.f32.mrf.mxu0
        %v3309 = vadd.f32 %v3258, %v3308
        %v3310 = vpop.f32.mrf.mxu0
        %v3311 = vpop.f32.mrf.mxu0
        %v3312 = vpop.f32.mrf.mxu0
        %3313 = vdwg.mxu0
        %v3314 = vld [vmem:[%s10] sm:$0xf]
        %v3315 = vld [vmem:[%s19 + $0x5] sm:$0x1]
        %v3316 = vpack.c.bf16 %v3309, %v3309
        %v3317 = vmul.f32 %v3309, %v3309
        %v3318 = vpack.c.bf16 %v3317, %v3317
        %v3320 = vsel %vm1799, %v3316, 0
        %3322 = vmatprep.subr.bf16.mxu0 0
        %3323 = vmatpush1.bf16.msra.mxu0 0
        %3324 = vmatprep.subr.bf16.mxu0 0
        %3325 = vmatpush1.bf16.msra.mxu0 0
        %3326 = vmatprep.subr.bf16.mxu0 0
        %3327 = vmatpush1.bf16.msra.mxu0 0
        %3328 = vmatprep.subr.bf16.mxu0 0
        %3329 = vmatpush1.bf16.msra.mxu0 0
        %3330 = vmatprep.subr.bf16.mxu0 0
        %3331 = vmatpush1.bf16.msra.mxu0 0
        %3332 = vmatprep.subr.bf16.mxu0 0
        %3333 = vmatpush1.bf16.msra.mxu0 0
        %3334 = vmatprep.subr.bf16.mxu0 0
        %3335 = vmatpush1.bf16.msra.mxu0 %v2778
        %3336 = vmatprep.subr.bf16.mxu0 0
        %3337 = vmatpush1.bf16.msra.mxu0 %v2777
        %3338 = vmatprep.subr.bf16.mxu0 0
        %3339 = vmatpush2.bf16.msra.mxu0 0
        %3340 = vmatprep.subr.bf16.mxu0 0
        %3341 = vmatpush2.bf16.msra.mxu0 0
        %3342 = vmatprep.subr.bf16.mxu0 0
        %3343 = vmatpush2.bf16.msra.mxu0 0
        %3344 = vmatprep.subr.bf16.mxu0 0
        %3345 = vmatpush2.bf16.msra.mxu0 0
        %3346 = vmatprep.subr.bf16.mxu0 0
        %3347 = vmatpush2.bf16.msra.mxu0 0
        %3348 = vmatprep.subr.bf16.mxu0 0
        %3349 = vmatpush2.bf16.msra.mxu0 0
        %3350 = vmatprep.subr.bf16.mxu0 0
        %3351 = vmatpush2.bf16.msra.mxu0 0
        %3352 = vmatprep.subr.bf16.mxu0 0
        %3353 = vmatpush2.bf16.msra.mxu0 0
        %3354 = vmatprep.mubr.bf16.mxu0 0
        %3355 = vmatmul.mubr.bf16.gmra.mxu0 %v3320
        %v3356 = vpop.f32.mrf.mxu0
        %v3357 = vadd.f32 0.0, %v3356
        %v3358 = vpop.f32.mrf.mxu0
        %v3359 = vpop.f32.mrf.mxu0
        %v3360 = vpop.f32.mrf.mxu0
        %3361 = vdwg.mxu0
        %v3363 = vsel %vm1799, %v3318, 0
        %3365 = vmatprep.subr.bf16.mxu0 0
        %3366 = vmatpush1.bf16.msra.mxu0 0
        %3367 = vmatprep.subr.bf16.mxu0 0
        %3368 = vmatpush1.bf16.msra.mxu0 0
        %3369 = vmatprep.subr.bf16.mxu0 0
        %3370 = vmatpush1.bf16.msra.mxu0 0
        %3371 = vmatprep.subr.bf16.mxu0 0
        %3372 = vmatpush1.bf16.msra.mxu0 0
        %3373 = vmatprep.subr.bf16.mxu0 0
        %3374 = vmatpush1.bf16.msra.mxu0 0
        %3375 = vmatprep.subr.bf16.mxu0 0
        %3376 = vmatpush1.bf16.msra.mxu0 0
        %3377 = vmatprep.subr.bf16.mxu0 0
        %3378 = vmatpush1.bf16.msra.mxu0 %v2778
        %3379 = vmatprep.subr.bf16.mxu0 0
        %3380 = vmatpush1.bf16.msra.mxu0 %v2777
        %3381 = vmatprep.subr.bf16.mxu0 0
        %3382 = vmatpush2.bf16.msra.mxu0 0
        %3383 = vmatprep.subr.bf16.mxu0 0
        %3384 = vmatpush2.bf16.msra.mxu0 0
        %3385 = vmatprep.subr.bf16.mxu0 0
        %3386 = vmatpush2.bf16.msra.mxu0 0
        %3387 = vmatprep.subr.bf16.mxu0 0
        %3388 = vmatpush2.bf16.msra.mxu0 0
        %3389 = vmatprep.subr.bf16.mxu0 0
        %3390 = vmatpush2.bf16.msra.mxu0 0
        %3391 = vmatprep.subr.bf16.mxu0 0
        %3392 = vmatpush2.bf16.msra.mxu0 0
        %3393 = vmatprep.subr.bf16.mxu0 0
        %3394 = vmatpush2.bf16.msra.mxu0 0
        %3395 = vmatprep.subr.bf16.mxu0 0
        %3396 = vmatpush2.bf16.msra.mxu0 0
        %3397 = vmatprep.mubr.bf16.mxu0 0
        %3398 = vmatmul.mubr.bf16.gmra.mxu0 %v3363
        %v3399 = vpop.f32.mrf.mxu0
        %v3400 = vadd.f32 0.0, %v3399
        %v3401 = vpop.f32.mrf.mxu0
        %v3402 = vpop.f32.mrf.mxu0
        %v3403 = vpop.f32.mrf.mxu0
        %3404 = vdwg.mxu0
        %v3405 = vmul.f32 %v3357, %v3357
        %v3406 = vsub.f32 %v3400, %v3405
        %v3407 = vmax.f32 %v3406, 0.0
        %v3408 = vadd.f32 %v3407, 1e-05
        %v3409 = vrsqrt.pop %v3408
        %v3410 = vpack.c.bf16 %v3409, %v3409
        %v3412 = vsel %vm2541, %v3410, 0
        %v3415 = vsel %vm2545, %v3314, 0
        %3417 = vmatprep.subr.bf16.mxu0 0
        %3418 = vmatpush1.bf16.msra.mxu0 0
        %3419 = vmatprep.subr.bf16.mxu0 0
        %3420 = vmatpush1.bf16.msra.mxu0 0
        %3421 = vmatprep.subr.bf16.mxu0 0
        %3422 = vmatpush1.bf16.msra.mxu0 0
        %3423 = vmatprep.subr.bf16.mxu0 0
        %3424 = vmatpush1.bf16.msra.mxu0 0
        %3425 = vmatprep.subr.bf16.mxu0 0
        %3426 = vmatpush1.bf16.msra.mxu0 0
        %3427 = vmatprep.subr.bf16.mxu0 0
        %3428 = vmatpush1.bf16.msra.mxu0 0
        %3429 = vmatprep.subr.bf16.mxu0 0
        %3430 = vmatpush1.bf16.msra.mxu0 0
        %3431 = vmatprep.subr.bf16.mxu0 0
        %3432 = vmatpush1.bf16.msra.mxu0 %v3415
        %3433 = vmatprep.subr.bf16.mxu0 0
        %3434 = vmatpush2.bf16.msra.mxu0 0
        %3435 = vmatprep.subr.bf16.mxu0 0
        %3436 = vmatpush2.bf16.msra.mxu0 0
        %3437 = vmatprep.subr.bf16.mxu0 0
        %3438 = vmatpush2.bf16.msra.mxu0 0
        %3439 = vmatprep.subr.bf16.mxu0 0
        %3440 = vmatpush2.bf16.msra.mxu0 0
        %3441 = vmatprep.subr.bf16.mxu0 0
        %3442 = vmatpush2.bf16.msra.mxu0 0
        %3443 = vmatprep.subr.bf16.mxu0 0
        %3444 = vmatpush2.bf16.msra.mxu0 0
        %3445 = vmatprep.subr.bf16.mxu0 0
        %3446 = vmatpush2.bf16.msra.mxu0 0
        %3447 = vmatprep.subr.bf16.mxu0 0
        %3448 = vmatpush2.bf16.msra.mxu0 0
        %3449 = vmatprep.mubr.bf16.mxu0 0
        %3450 = vmatmul.mubr.bf16.gmra.mxu0 %v3412
        %v3451 = vpop.f32.mrf.mxu0
        %v3452 = vadd.f32 0.0, %v3451
        %v3453 = vpop.f32.mrf.mxu0
        %v3454 = vpop.f32.mrf.mxu0
        %v3455 = vpop.f32.mrf.mxu0
        %3456 = vdwg.mxu0
        %v3457 = vmul.f32 %v3357, %v3409
        %v3458 = vpack.c.bf16 %v3457, %v3457
        %v3460 = vsel %vm2541, %v3458, 0
        %3462 = vmatprep.subr.bf16.mxu0 0
        %3463 = vmatpush1.bf16.msra.mxu0 0
        %3464 = vmatprep.subr.bf16.mxu0 0
        %3465 = vmatpush1.bf16.msra.mxu0 0
        %3466 = vmatprep.subr.bf16.mxu0 0
        %3467 = vmatpush1.bf16.msra.mxu0 0
        %3468 = vmatprep.subr.bf16.mxu0 0
        %3469 = vmatpush1.bf16.msra.mxu0 0
        %3470 = vmatprep.subr.bf16.mxu0 0
        %3471 = vmatpush1.bf16.msra.mxu0 0
        %3472 = vmatprep.subr.bf16.mxu0 0
        %3473 = vmatpush1.bf16.msra.mxu0 0
        %3474 = vmatprep.subr.bf16.mxu0 0
        %3475 = vmatpush1.bf16.msra.mxu0 0
        %3476 = vmatprep.subr.bf16.mxu0 0
        %3477 = vmatpush1.bf16.msra.mxu0 %v3415
        %3478 = vmatprep.subr.bf16.mxu0 0
        %3479 = vmatpush2.bf16.msra.mxu0 0
        %3480 = vmatprep.subr.bf16.mxu0 0
        %3481 = vmatpush2.bf16.msra.mxu0 0
        %3482 = vmatprep.subr.bf16.mxu0 0
        %3483 = vmatpush2.bf16.msra.mxu0 0
        %3484 = vmatprep.subr.bf16.mxu0 0
        %3485 = vmatpush2.bf16.msra.mxu0 0
        %3486 = vmatprep.subr.bf16.mxu0 0
        %3487 = vmatpush2.bf16.msra.mxu0 0
        %3488 = vmatprep.subr.bf16.mxu0 0
        %3489 = vmatpush2.bf16.msra.mxu0 0
        %3490 = vmatprep.subr.bf16.mxu0 0
        %3491 = vmatpush2.bf16.msra.mxu0 0
        %3492 = vmatprep.subr.bf16.mxu0 0
        %3493 = vmatpush2.bf16.msra.mxu0 0
        %3494 = vmatprep.mubr.bf16.mxu0 0
        %3495 = vmatmul.mubr.bf16.gmra.mxu0 %v3460
        %v3496 = vpop.f32.mrf.mxu0
        %v3497 = vadd.f32 0.0, %v3496
        %v3498 = vpop.f32.mrf.mxu0
        %v3499 = vpop.f32.mrf.mxu0
        %v3500 = vpop.f32.mrf.mxu0
        %3501 = vdwg.mxu0
        %v3502 = vlaneseq
        %v3503 = vshrl.u32 %v3502, 7
        %v3504 = vsub.s32 0, %v3503
        %v3505 = vrot.slane %v3315, %v3504
        %v3506 = vsub.f32 %v3505, %v3497
        %v3507 = vmul.f32 %v3309, %v3452
        %v3508 = vadd.f32 %v3507, %v3506
        %v3509 = vmul.f32 %v3508, 0.5
        %v3510 = vmul.f32 %v3508, %v3508
        %v3511 = vmul.f32 %v3510, %v3508
        %v3512 = vmul.f32 %v3511, 0.044715
        %v3513 = vadd.f32 %v3508, %v3512
        %v3514 = vmul.f32 %v3513, 0.7978846
        %v3515 = vtanh.pop %v3514
        %v3516 = vadd.f32 %v3515, 1.0
        %v3517 = vmul.f32 %v3509, %v3516
        %v3518 = vld [vmem:[#allocation14] sm:$0xf]
        %v3519 = vld [vmem:[#allocation14 + $0x4] sm:$0xf]
        %v3520 = vld [vmem:[#allocation14 + $0x8] sm:$0xf]
        %v3521 = vld [vmem:[#allocation14 + $0xc] sm:$0xf]
        %v3522 = vld [vmem:[#allocation19 + $0x5] sm:$0x1]
        %v3523 = vpack.c.bf16 %v3517, %v3517
        %v3524 = vlaneseq
        %v3525 = vshrl.u32 %v3524, 7
        %v3526 = vsub.s32 0, %v3525
        %v3527 = vrot.slane %v3522, %v3526
        %v3532 = vunpack.c.l.b16 %v3518
        %v3533 = vunpack.c.l.b16 %v3519
        %v3534 = vunpack.c.l.b16 %v3520
        %v3535 = vunpack.c.l.b16 %v3521
        %v3536 = vpack.c.b16 %v3533, %v3532
        %v3537 = vpack.c.b16 %v3535, %v3534
        %v3541 = vsel %vm1799, %v3523, 0
        %3543 = vmatprep.subr.bf16.mxu0 0
        %3544 = vmatpush1.bf16.msra.mxu0 0
        %3545 = vmatprep.subr.bf16.mxu0 0
        %3546 = vmatpush1.bf16.msra.mxu0 0
        %3547 = vmatprep.subr.bf16.mxu0 0
        %3548 = vmatpush1.bf16.msra.mxu0 0
        %3549 = vmatprep.subr.bf16.mxu0 0
        %3550 = vmatpush1.bf16.msra.mxu0 0
        %3551 = vmatprep.subr.bf16.mxu0 0
        %3552 = vmatpush1.bf16.msra.mxu0 0
        %3553 = vmatprep.subr.bf16.mxu0 0
        %3554 = vmatpush1.bf16.msra.mxu0 0
        %3555 = vmatprep.subr.bf16.mxu0 0
        %3556 = vmatpush1.bf16.msra.mxu0 %v3537
        %3557 = vmatprep.subr.bf16.mxu0 0
        %3558 = vmatpush1.bf16.msra.mxu0 %v3536
        %3559 = vmatprep.subr.bf16.mxu0 0
        %3560 = vmatpush2.bf16.msra.mxu0 0
        %3561 = vmatprep.subr.bf16.mxu0 0
        %3562 = vmatpush2.bf16.msra.mxu0 0
        %3563 = vmatprep.subr.bf16.mxu0 0
        %3564 = vmatpush2.bf16.msra.mxu0 0
        %3565 = vmatprep.subr.bf16.mxu0 0
        %3566 = vmatpush2.bf16.msra.mxu0 0
        %3567 = vmatprep.subr.bf16.mxu0 0
        %3568 = vmatpush2.bf16.msra.mxu0 0
        %3569 = vmatprep.subr.bf16.mxu0 0
        %3570 = vmatpush2.bf16.msra.mxu0 0
        %3571 = vmatprep.subr.bf16.mxu0 0
        %3572 = vmatpush2.bf16.msra.mxu0 0
        %3573 = vmatprep.subr.bf16.mxu0 0
        %3574 = vmatpush2.bf16.msra.mxu0 0
        %3575 = vmatprep.mubr.bf16.mxu0 0
        %3576 = vmatmul.mubr.bf16.gmra.mxu0 %v3541
        %v3577 = vpop.f32.mrf.mxu0
        %v3578 = vadd.f32 %v3527, %v3577
        %v3579 = vpop.f32.mrf.mxu0
        %v3580 = vpop.f32.mrf.mxu0
        %v3581 = vpop.f32.mrf.mxu0
        %3582 = vdwg.mxu0
        %v3583 = vadd.f32 %v2381, %v3578
        %s3584 = scalar_lea.vmem [#allocation7], 4
        %v3585 = vld [vmem:[%s3584] sm:$0xf]
        %v3586 = vld [vmem:[#allocation19 + $0x2] sm:$0x1]
        %v3587 = vpack.c.bf16 %v3583, %v3583
        %v3588 = vmul.f32 %v3583, %v3583
        %v3589 = vpack.c.bf16 %v3588, %v3588
        %3590 = vmatprep.subr.bf16.mxu0 0
        %3591 = vmatpush1.bf16.msra.mxu0 %v2446
        %3592 = vmatprep.subr.bf16.mxu0 0
        %3593 = vmatpush1.bf16.msra.mxu0 %v2445
        %3594 = vmatprep.subr.bf16.mxu0 0
        %3595 = vmatpush1.bf16.msra.mxu0 %v2444
        %3596 = vmatprep.subr.bf16.mxu0 0
        %3597 = vmatpush1.bf16.msra.mxu0 %v2443
        %3598 = vmatprep.subr.bf16.mxu0 0
        %3599 = vmatpush1.bf16.msra.mxu0 %v2442
        %3600 = vmatprep.subr.bf16.mxu0 0
        %3601 = vmatpush1.bf16.msra.mxu0 %v2441
        %3602 = vmatprep.subr.bf16.mxu0 0
        %3603 = vmatpush1.bf16.msra.mxu0 %v2440
        %3604 = vmatprep.subr.bf16.mxu0 0
        %3605 = vmatpush1.bf16.msra.mxu0 %v2439
        %3606 = vmatprep.subr.bf16.mxu0 0
        %3607 = vmatpush2.bf16.msra.mxu0 0
        %3608 = vmatprep.subr.bf16.mxu0 0
        %3609 = vmatpush2.bf16.msra.mxu0 0
        %3610 = vmatprep.subr.bf16.mxu0 0
        %3611 = vmatpush2.bf16.msra.mxu0 0
        %3612 = vmatprep.subr.bf16.mxu0 0
        %3613 = vmatpush2.bf16.msra.mxu0 0
        %3614 = vmatprep.subr.bf16.mxu0 0
        %3615 = vmatpush2.bf16.msra.mxu0 0
        %3616 = vmatprep.subr.bf16.mxu0 0
        %3617 = vmatpush2.bf16.msra.mxu0 0
        %3618 = vmatprep.subr.bf16.mxu0 0
        %3619 = vmatpush2.bf16.msra.mxu0 0
        %3620 = vmatprep.subr.bf16.mxu0 0
        %3621 = vmatpush2.bf16.msra.mxu0 0
        %3622 = vmatprep.mubr.bf16.mxu0 0
        %3623 = vmatmul.mubr.bf16.gmra.mxu0 %v3587
        %v3624 = vpop.f32.mrf.mxu0
        %v3625 = vadd.f32 0.0, %v3624
        %v3626 = vpop.f32.mrf.mxu0
        %v3627 = vpop.f32.mrf.mxu0
        %v3628 = vpop.f32.mrf.mxu0
        %3629 = vdwg.mxu0
        %3630 = vmatprep.subr.bf16.mxu0 0
        %3631 = vmatpush1.bf16.msra.mxu0 %v2446
        %3632 = vmatprep.subr.bf16.mxu0 0
        %3633 = vmatpush1.bf16.msra.mxu0 %v2445
        %3634 = vmatprep.subr.bf16.mxu0 0
        %3635 = vmatpush1.bf16.msra.mxu0 %v2444
        %3636 = vmatprep.subr.bf16.mxu0 0
        %3637 = vmatpush1.bf16.msra.mxu0 %v2443
        %3638 = vmatprep.subr.bf16.mxu0 0
        %3639 = vmatpush1.bf16.msra.mxu0 %v2442
        %3640 = vmatprep.subr.bf16.mxu0 0
        %3641 = vmatpush1.bf16.msra.mxu0 %v2441
        %3642 = vmatprep.subr.bf16.mxu0 0
        %3643 = vmatpush1.bf16.msra.mxu0 %v2440
        %3644 = vmatprep.subr.bf16.mxu0 0
        %3645 = vmatpush1.bf16.msra.mxu0 %v2439
        %3646 = vmatprep.subr.bf16.mxu0 0
        %3647 = vmatpush2.bf16.msra.mxu0 0
        %3648 = vmatprep.subr.bf16.mxu0 0
        %3649 = vmatpush2.bf16.msra.mxu0 0
        %3650 = vmatprep.subr.bf16.mxu0 0
        %3651 = vmatpush2.bf16.msra.mxu0 0
        %3652 = vmatprep.subr.bf16.mxu0 0
        %3653 = vmatpush2.bf16.msra.mxu0 0
        %3654 = vmatprep.subr.bf16.mxu0 0
        %3655 = vmatpush2.bf16.msra.mxu0 0
        %3656 = vmatprep.subr.bf16.mxu0 0
        %3657 = vmatpush2.bf16.msra.mxu0 0
        %3658 = vmatprep.subr.bf16.mxu0 0
        %3659 = vmatpush2.bf16.msra.mxu0 0
        %3660 = vmatprep.subr.bf16.mxu0 0
        %3661 = vmatpush2.bf16.msra.mxu0 0
        %3662 = vmatprep.mubr.bf16.mxu0 0
        %3663 = vmatmul.mubr.bf16.gmra.mxu0 %v3589
        %v3664 = vpop.f32.mrf.mxu0
        %v3665 = vadd.f32 0.0, %v3664
        %v3666 = vpop.f32.mrf.mxu0
        %v3667 = vpop.f32.mrf.mxu0
        %v3668 = vpop.f32.mrf.mxu0
        %3669 = vdwg.mxu0
        %v3670 = vmul.f32 %v3625, %v3625
        %v3671 = vsub.f32 %v3665, %v3670
        %v3672 = vmax.f32 %v3671, 0.0
        %v3673 = vadd.f32 %v3672, 1e-05
        %v3674 = vrsqrt.pop %v3673
        %v3675 = vpack.c.bf16 %v3674, %v3674
        %v3677 = vsel %vm2541, %v3675, 0
        %v3680 = vsel %vm2545, %v3585, 0
        %3682 = vmatprep.subr.bf16.mxu0 0
        %3683 = vmatpush1.bf16.msra.mxu0 0
        %3684 = vmatprep.subr.bf16.mxu0 0
        %3685 = vmatpush1.bf16.msra.mxu0 0
        %3686 = vmatprep.subr.bf16.mxu0 0
        %3687 = vmatpush1.bf16.msra.mxu0 0
        %3688 = vmatprep.subr.bf16.mxu0 0
        %3689 = vmatpush1.bf16.msra.mxu0 0
        %3690 = vmatprep.subr.bf16.mxu0 0
        %3691 = vmatpush1.bf16.msra.mxu0 0
        %3692 = vmatprep.subr.bf16.mxu0 0
        %3693 = vmatpush1.bf16.msra.mxu0 0
        %3694 = vmatprep.subr.bf16.mxu0 0
        %3695 = vmatpush1.bf16.msra.mxu0 0
        %3696 = vmatprep.subr.bf16.mxu0 0
        %3697 = vmatpush1.bf16.msra.mxu0 %v3680
        %3698 = vmatprep.subr.bf16.mxu0 0
        %3699 = vmatpush2.bf16.msra.mxu0 0
        %3700 = vmatprep.subr.bf16.mxu0 0
        %3701 = vmatpush2.bf16.msra.mxu0 0
        %3702 = vmatprep.subr.bf16.mxu0 0
        %3703 = vmatpush2.bf16.msra.mxu0 0
        %3704 = vmatprep.subr.bf16.mxu0 0
        %3705 = vmatpush2.bf16.msra.mxu0 0
        %3706 = vmatprep.subr.bf16.mxu0 0
        %3707 = vmatpush2.bf16.msra.mxu0 0
        %3708 = vmatprep.subr.bf16.mxu0 0
        %3709 = vmatpush2.bf16.msra.mxu0 0
        %3710 = vmatprep.subr.bf16.mxu0 0
        %3711 = vmatpush2.bf16.msra.mxu0 0
        %3712 = vmatprep.subr.bf16.mxu0 0
        %3713 = vmatpush2.bf16.msra.mxu0 0
        %3714 = vmatprep.mubr.bf16.mxu0 0
        %3715 = vmatmul.mubr.bf16.gmra.mxu0 %v3677
        %v3716 = vpop.f32.mrf.mxu0
        %v3717 = vadd.f32 0.0, %v3716
        %v3718 = vpop.f32.mrf.mxu0
        %v3719 = vpop.f32.mrf.mxu0
        %v3720 = vpop.f32.mrf.mxu0
        %3721 = vdwg.mxu0
        %v3722 = vmul.f32 %v3625, %v3674
        %v3723 = vpack.c.bf16 %v3722, %v3722
        %v3725 = vsel %vm2541, %v3723, 0
        %3727 = vmatprep.subr.bf16.mxu0 0
        %3728 = vmatpush1.bf16.msra.mxu0 0
        %3729 = vmatprep.subr.bf16.mxu0 0
        %3730 = vmatpush1.bf16.msra.mxu0 0
        %3731 = vmatprep.subr.bf16.mxu0 0
        %3732 = vmatpush1.bf16.msra.mxu0 0
        %3733 = vmatprep.subr.bf16.mxu0 0
        %3734 = vmatpush1.bf16.msra.mxu0 0
        %3735 = vmatprep.subr.bf16.mxu0 0
        %3736 = vmatpush1.bf16.msra.mxu0 0
        %3737 = vmatprep.subr.bf16.mxu0 0
        %3738 = vmatpush1.bf16.msra.mxu0 0
        %3739 = vmatprep.subr.bf16.mxu0 0
        %3740 = vmatpush1.bf16.msra.mxu0 0
        %3741 = vmatprep.subr.bf16.mxu0 0
        %3742 = vmatpush1.bf16.msra.mxu0 %v3680
        %3743 = vmatprep.subr.bf16.mxu0 0
        %3744 = vmatpush2.bf16.msra.mxu0 0
        %3745 = vmatprep.subr.bf16.mxu0 0
        %3746 = vmatpush2.bf16.msra.mxu0 0
        %3747 = vmatprep.subr.bf16.mxu0 0
        %3748 = vmatpush2.bf16.msra.mxu0 0
        %3749 = vmatprep.subr.bf16.mxu0 0
        %3750 = vmatpush2.bf16.msra.mxu0 0
        %3751 = vmatprep.subr.bf16.mxu0 0
        %3752 = vmatpush2.bf16.msra.mxu0 0
        %3753 = vmatprep.subr.bf16.mxu0 0
        %3754 = vmatpush2.bf16.msra.mxu0 0
        %3755 = vmatprep.subr.bf16.mxu0 0
        %3756 = vmatpush2.bf16.msra.mxu0 0
        %3757 = vmatprep.subr.bf16.mxu0 0
        %3758 = vmatpush2.bf16.msra.mxu0 0
        %3759 = vmatprep.mubr.bf16.mxu0 0
        %3760 = vmatmul.mubr.bf16.gmra.mxu0 %v3725
        %v3761 = vpop.f32.mrf.mxu0
        %v3762 = vadd.f32 0.0, %v3761
        %v3763 = vpop.f32.mrf.mxu0
        %v3764 = vpop.f32.mrf.mxu0
        %v3765 = vpop.f32.mrf.mxu0
        %3766 = vdwg.mxu0
        %v3767 = vlaneseq
        %v3768 = vshrl.u32 %v3767, 7
        %v3769 = vsub.s32 0, %v3768
        %v3770 = vrot.slane %v3586, %v3769
        %v3771 = vsub.f32 %v3770, %v3762
        %v3772 = vmul.f32 %v3583, %v3717
        %v3773 = vadd.f32 %v3772, %v3771
        %v3774 = vmul.f32 %v3773, 0.5
        %v3775 = vmul.f32 %v3773, %v3773
        %v3776 = vmul.f32 %v3775, %v3773
        %v3777 = vmul.f32 %v3776, 0.044715
        %v3778 = vadd.f32 %v3773, %v3777
        %v3779 = vmul.f32 %v3778, 0.7978846
        %v3780 = vtanh.pop %v3779
        %v3781 = vadd.f32 %v3780, 1.0
        %v3782 = vmul.f32 %v3774, %v3781
        %s3783 = scalar_lea.vmem %s11, 64
        %v3784 = vld [vmem:[%s3783] sm:$0xf]
        %v3785 = vld [vmem:[%s3783 + $0x4] sm:$0xf]
        %v3786 = vld [vmem:[%s3783 + $0x8] sm:$0xf]
        %v3787 = vld [vmem:[%s3783 + $0xc] sm:$0xf]
        %v3788 = vld [vmem:[%s3783 + $0x10] sm:$0xf]
        %v3789 = vld [vmem:[%s3783 + $0x14] sm:$0xf]
        %v3790 = vld [vmem:[%s3783 + $0x18] sm:$0xf]
        %v3791 = vld [vmem:[%s3783 + $0x1c] sm:$0xf]
        %v3792 = vld [vmem:[%s3783 + $0x20] sm:$0xf]
        %v3793 = vld [vmem:[%s3783 + $0x24] sm:$0xf]
        %v3794 = vld [vmem:[%s3783 + $0x28] sm:$0xf]
        %v3795 = vld [vmem:[%s3783 + $0x2c] sm:$0xf]
        %v3796 = vld [vmem:[%s3783 + $0x30] sm:$0xf]
        %v3797 = vld [vmem:[%s3783 + $0x34] sm:$0xf]
        %v3798 = vld [vmem:[%s3783 + $0x38] sm:$0xf]
        %v3799 = vld [vmem:[%s3783 + $0x3c] sm:$0xf]
        %v3800 = vld [vmem:[%s19 + $0x6] sm:$0x1]
        %v3801 = vpack.c.bf16 %v3782, %v3782
        %v3802 = vlaneseq
        %v3803 = vshrl.u32 %v3802, 7
        %v3804 = vsub.s32 0, %v3803
        %v3805 = vrot.slane %v3800, %v3804
        %v3822 = vunpack.c.l.b16 %v3784
        %v3823 = vunpack.c.l.b16 %v3785
        %v3824 = vunpack.c.l.b16 %v3786
        %v3825 = vunpack.c.l.b16 %v3787
        %v3826 = vunpack.c.l.b16 %v3788
        %v3827 = vunpack.c.l.b16 %v3789
        %v3828 = vunpack.c.l.b16 %v3790
        %v3829 = vunpack.c.l.b16 %v3791
        %v3830 = vunpack.c.l.b16 %v3792
        %v3831 = vunpack.c.l.b16 %v3793
        %v3832 = vunpack.c.l.b16 %v3794
        %v3833 = vunpack.c.l.b16 %v3795
        %v3834 = vunpack.c.l.b16 %v3796
        %v3835 = vunpack.c.l.b16 %v3797
        %v3836 = vunpack.c.l.b16 %v3798
        %v3837 = vunpack.c.l.b16 %v3799
        %v3838 = vpack.c.b16 %v3823, %v3822
        %v3839 = vpack.c.b16 %v3825, %v3824
        %v3840 = vpack.c.b16 %v3827, %v3826
        %v3841 = vpack.c.b16 %v3829, %v3828
        %v3842 = vpack.c.b16 %v3831, %v3830
        %v3843 = vpack.c.b16 %v3833, %v3832
        %v3844 = vpack.c.b16 %v3835, %v3834
        %v3845 = vpack.c.b16 %v3837, %v3836
        %3854 = vmatprep.subr.bf16.mxu0 0
        %3855 = vmatpush1.bf16.msra.mxu0 %v3845
        %3856 = vmatprep.subr.bf16.mxu0 0
        %3857 = vmatpush1.bf16.msra.mxu0 %v3844
        %3858 = vmatprep.subr.bf16.mxu0 0
        %3859 = vmatpush1.bf16.msra.mxu0 %v3843
        %3860 = vmatprep.subr.bf16.mxu0 0
        %3861 = vmatpush1.bf16.msra.mxu0 %v3842
        %3862 = vmatprep.subr.bf16.mxu0 0
        %3863 = vmatpush1.bf16.msra.mxu0 %v3841
        %3864 = vmatprep.subr.bf16.mxu0 0
        %3865 = vmatpush1.bf16.msra.mxu0 %v3840
        %3866 = vmatprep.subr.bf16.mxu0 0
        %3867 = vmatpush1.bf16.msra.mxu0 %v3839
        %3868 = vmatprep.subr.bf16.mxu0 0
        %3869 = vmatpush1.bf16.msra.mxu0 %v3838
        %3870 = vmatprep.subr.bf16.mxu0 0
        %3871 = vmatpush2.bf16.msra.mxu0 0
        %3872 = vmatprep.subr.bf16.mxu0 0
        %3873 = vmatpush2.bf16.msra.mxu0 0
        %3874 = vmatprep.subr.bf16.mxu0 0
        %3875 = vmatpush2.bf16.msra.mxu0 0
        %3876 = vmatprep.subr.bf16.mxu0 0
        %3877 = vmatpush2.bf16.msra.mxu0 0
        %3878 = vmatprep.subr.bf16.mxu0 0
        %3879 = vmatpush2.bf16.msra.mxu0 0
        %3880 = vmatprep.subr.bf16.mxu0 0
        %3881 = vmatpush2.bf16.msra.mxu0 0
        %3882 = vmatprep.subr.bf16.mxu0 0
        %3883 = vmatpush2.bf16.msra.mxu0 0
        %3884 = vmatprep.subr.bf16.mxu0 0
        %3885 = vmatpush2.bf16.msra.mxu0 0
        %3886 = vmatprep.mubr.bf16.mxu0 0
        %3887 = vmatmul.mubr.bf16.gmra.mxu0 %v3801
        %v3888 = vpop.f32.mrf.mxu0
        %v3889 = vadd.f32 %v3805, %v3888
        %v3890 = vpop.f32.mrf.mxu0
        %v3891 = vpop.f32.mrf.mxu0
        %v3892 = vpop.f32.mrf.mxu0
        %3893 = vdwg.mxu0
        %s3894 = scalar_lea.vmem [#allocation8], 4
        %v3895 = vld [vmem:[%s3894] sm:$0xf]
        %v3896 = vld [vmem:[%s19 + $0x7] sm:$0x1]
        %v3897 = vpack.c.bf16 %v3889, %v3889
        %v3898 = vmul.f32 %v3889, %v3889
        %v3899 = vpack.c.bf16 %v3898, %v3898
        %v3901 = vsel %vm1799, %v3897, 0
        %3903 = vmatprep.subr.bf16.mxu0 0
        %3904 = vmatpush1.bf16.msra.mxu0 0
        %3905 = vmatprep.subr.bf16.mxu0 0
        %3906 = vmatpush1.bf16.msra.mxu0 0
        %3907 = vmatprep.subr.bf16.mxu0 0
        %3908 = vmatpush1.bf16.msra.mxu0 0
        %3909 = vmatprep.subr.bf16.mxu0 0
        %3910 = vmatpush1.bf16.msra.mxu0 0
        %3911 = vmatprep.subr.bf16.mxu0 0
        %3912 = vmatpush1.bf16.msra.mxu0 0
        %3913 = vmatprep.subr.bf16.mxu0 0
        %3914 = vmatpush1.bf16.msra.mxu0 0
        %3915 = vmatprep.subr.bf16.mxu0 0
        %3916 = vmatpush1.bf16.msra.mxu0 %v2778
        %3917 = vmatprep.subr.bf16.mxu0 0
        %3918 = vmatpush1.bf16.msra.mxu0 %v2777
        %3919 = vmatprep.subr.bf16.mxu0 0
        %3920 = vmatpush2.bf16.msra.mxu0 0
        %3921 = vmatprep.subr.bf16.mxu0 0
        %3922 = vmatpush2.bf16.msra.mxu0 0
        %3923 = vmatprep.subr.bf16.mxu0 0
        %3924 = vmatpush2.bf16.msra.mxu0 0
        %3925 = vmatprep.subr.bf16.mxu0 0
        %3926 = vmatpush2.bf16.msra.mxu0 0
        %3927 = vmatprep.subr.bf16.mxu0 0
        %3928 = vmatpush2.bf16.msra.mxu0 0
        %3929 = vmatprep.subr.bf16.mxu0 0
        %3930 = vmatpush2.bf16.msra.mxu0 0
        %3931 = vmatprep.subr.bf16.mxu0 0
        %3932 = vmatpush2.bf16.msra.mxu0 0
        %3933 = vmatprep.subr.bf16.mxu0 0
        %3934 = vmatpush2.bf16.msra.mxu0 0
        %3935 = vmatprep.mubr.bf16.mxu0 0
        %3936 = vmatmul.mubr.bf16.gmra.mxu0 %v3901
        %v3937 = vpop.f32.mrf.mxu0
        %v3938 = vadd.f32 0.0, %v3937
        %v3939 = vpop.f32.mrf.mxu0
        %v3940 = vpop.f32.mrf.mxu0
        %v3941 = vpop.f32.mrf.mxu0
        %3942 = vdwg.mxu0
        %v3944 = vsel %vm1799, %v3899, 0
        %3946 = vmatprep.subr.bf16.mxu0 0
        %3947 = vmatpush1.bf16.msra.mxu0 0
        %3948 = vmatprep.subr.bf16.mxu0 0
        %3949 = vmatpush1.bf16.msra.mxu0 0
        %3950 = vmatprep.subr.bf16.mxu0 0
        %3951 = vmatpush1.bf16.msra.mxu0 0
        %3952 = vmatprep.subr.bf16.mxu0 0
        %3953 = vmatpush1.bf16.msra.mxu0 0
        %3954 = vmatprep.subr.bf16.mxu0 0
        %3955 = vmatpush1.bf16.msra.mxu0 0
        %3956 = vmatprep.subr.bf16.mxu0 0
        %3957 = vmatpush1.bf16.msra.mxu0 0
        %3958 = vmatprep.subr.bf16.mxu0 0
        %3959 = vmatpush1.bf16.msra.mxu0 %v2778
        %3960 = vmatprep.subr.bf16.mxu0 0
        %3961 = vmatpush1.bf16.msra.mxu0 %v2777
        %3962 = vmatprep.subr.bf16.mxu0 0
        %3963 = vmatpush2.bf16.msra.mxu0 0
        %3964 = vmatprep.subr.bf16.mxu0 0
        %3965 = vmatpush2.bf16.msra.mxu0 0
        %3966 = vmatprep.subr.bf16.mxu0 0
        %3967 = vmatpush2.bf16.msra.mxu0 0
        %3968 = vmatprep.subr.bf16.mxu0 0
        %3969 = vmatpush2.bf16.msra.mxu0 0
        %3970 = vmatprep.subr.bf16.mxu0 0
        %3971 = vmatpush2.bf16.msra.mxu0 0
        %3972 = vmatprep.subr.bf16.mxu0 0
        %3973 = vmatpush2.bf16.msra.mxu0 0
        %3974 = vmatprep.subr.bf16.mxu0 0
        %3975 = vmatpush2.bf16.msra.mxu0 0
        %3976 = vmatprep.subr.bf16.mxu0 0
        %3977 = vmatpush2.bf16.msra.mxu0 0
        %3978 = vmatprep.mubr.bf16.mxu0 0
        %3979 = vmatmul.mubr.bf16.gmra.mxu0 %v3944
        %v3980 = vpop.f32.mrf.mxu0
        %v3981 = vadd.f32 0.0, %v3980
        %v3982 = vpop.f32.mrf.mxu0
        %v3983 = vpop.f32.mrf.mxu0
        %v3984 = vpop.f32.mrf.mxu0
        %3985 = vdwg.mxu0
        %v3986 = vmul.f32 %v3938, %v3938
        %v3987 = vsub.f32 %v3981, %v3986
        %v3988 = vmax.f32 %v3987, 0.0
        %v3989 = vadd.f32 %v3988, 1e-05
        %v3990 = vrsqrt.pop %v3989
        %v3991 = vpack.c.bf16 %v3990, %v3990
        %v3993 = vsel %vm2541, %v3991, 0
        %v3996 = vsel %vm2545, %v3895, 0
        %3998 = vmatprep.subr.bf16.mxu0 0
        %3999 = vmatpush1.bf16.msra.mxu0 0
        %4000 = vmatprep.subr.bf16.mxu0 0
        %4001 = vmatpush1.bf16.msra.mxu0 0
        %4002 = vmatprep.subr.bf16.mxu0 0
        %4003 = vmatpush1.bf16.msra.mxu0 0
        %4004 = vmatprep.subr.bf16.mxu0 0
        %4005 = vmatpush1.bf16.msra.mxu0 0
        %4006 = vmatprep.subr.bf16.mxu0 0
        %4007 = vmatpush1.bf16.msra.mxu0 0
        %4008 = vmatprep.subr.bf16.mxu0 0
        %4009 = vmatpush1.bf16.msra.mxu0 0
        %4010 = vmatprep.subr.bf16.mxu0 0
        %4011 = vmatpush1.bf16.msra.mxu0 0
        %4012 = vmatprep.subr.bf16.mxu0 0
        %4013 = vmatpush1.bf16.msra.mxu0 %v3996
        %4014 = vmatprep.subr.bf16.mxu0 0
        %4015 = vmatpush2.bf16.msra.mxu0 0
        %4016 = vmatprep.subr.bf16.mxu0 0
        %4017 = vmatpush2.bf16.msra.mxu0 0
        %4018 = vmatprep.subr.bf16.mxu0 0
        %4019 = vmatpush2.bf16.msra.mxu0 0
        %4020 = vmatprep.subr.bf16.mxu0 0
        %4021 = vmatpush2.bf16.msra.mxu0 0
        %4022 = vmatprep.subr.bf16.mxu0 0
        %4023 = vmatpush2.bf16.msra.mxu0 0
        %4024 = vmatprep.subr.bf16.mxu0 0
        %4025 = vmatpush2.bf16.msra.mxu0 0
        %4026 = vmatprep.subr.bf16.mxu0 0
        %4027 = vmatpush2.bf16.msra.mxu0 0
        %4028 = vmatprep.subr.bf16.mxu0 0
        %4029 = vmatpush2.bf16.msra.mxu0 0
        %4030 = vmatprep.mubr.bf16.mxu0 0
        %4031 = vmatmul.mubr.bf16.gmra.mxu0 %v3993
        %v4032 = vpop.f32.mrf.mxu0
        %v4033 = vadd.f32 0.0, %v4032
        %v4034 = vpop.f32.mrf.mxu0
        %v4035 = vpop.f32.mrf.mxu0
        %v4036 = vpop.f32.mrf.mxu0
        %4037 = vdwg.mxu0
        %v4038 = vmul.f32 %v3938, %v3990
        %v4039 = vpack.c.bf16 %v4038, %v4038
        %v4041 = vsel %vm2541, %v4039, 0
        %4043 = vmatprep.subr.bf16.mxu0 0
        %4044 = vmatpush1.bf16.msra.mxu0 0
        %4045 = vmatprep.subr.bf16.mxu0 0
        %4046 = vmatpush1.bf16.msra.mxu0 0
        %4047 = vmatprep.subr.bf16.mxu0 0
        %4048 = vmatpush1.bf16.msra.mxu0 0
        %4049 = vmatprep.subr.bf16.mxu0 0
        %4050 = vmatpush1.bf16.msra.mxu0 0
        %4051 = vmatprep.subr.bf16.mxu0 0
        %4052 = vmatpush1.bf16.msra.mxu0 0
        %4053 = vmatprep.subr.bf16.mxu0 0
        %4054 = vmatpush1.bf16.msra.mxu0 0
        %4055 = vmatprep.subr.bf16.mxu0 0
        %4056 = vmatpush1.bf16.msra.mxu0 0
        %4057 = vmatprep.subr.bf16.mxu0 0
        %4058 = vmatpush1.bf16.msra.mxu0 %v3996
        %4059 = vmatprep.subr.bf16.mxu0 0
        %4060 = vmatpush2.bf16.msra.mxu0 0
        %4061 = vmatprep.subr.bf16.mxu0 0
        %4062 = vmatpush2.bf16.msra.mxu0 0
        %4063 = vmatprep.subr.bf16.mxu0 0
        %4064 = vmatpush2.bf16.msra.mxu0 0
        %4065 = vmatprep.subr.bf16.mxu0 0
        %4066 = vmatpush2.bf16.msra.mxu0 0
        %4067 = vmatprep.subr.bf16.mxu0 0
        %4068 = vmatpush2.bf16.msra.mxu0 0
        %4069 = vmatprep.subr.bf16.mxu0 0
        %4070 = vmatpush2.bf16.msra.mxu0 0
        %4071 = vmatprep.subr.bf16.mxu0 0
        %4072 = vmatpush2.bf16.msra.mxu0 0
        %4073 = vmatprep.subr.bf16.mxu0 0
        %4074 = vmatpush2.bf16.msra.mxu0 0
        %4075 = vmatprep.mubr.bf16.mxu0 0
        %4076 = vmatmul.mubr.bf16.gmra.mxu0 %v4041
        %v4077 = vpop.f32.mrf.mxu0
        %v4078 = vadd.f32 0.0, %v4077
        %v4079 = vpop.f32.mrf.mxu0
        %v4080 = vpop.f32.mrf.mxu0
        %v4081 = vpop.f32.mrf.mxu0
        %4082 = vdwg.mxu0
        %v4083 = vlaneseq
        %v4084 = vshrl.u32 %v4083, 7
        %v4085 = vsub.s32 0, %v4084
        %v4086 = vrot.slane %v3896, %v4085
        %v4087 = vsub.f32 %v4086, %v4078
        %v4088 = vmul.f32 %v3889, %v4033
        %v4089 = vadd.f32 %v4088, %v4087
        %v4090 = vmul.f32 %v4089, 0.5
        %v4091 = vmul.f32 %v4089, %v4089
        %v4092 = vmul.f32 %v4091, %v4089
        %v4093 = vmul.f32 %v4092, 0.044715
        %v4094 = vadd.f32 %v4089, %v4093
        %v4095 = vmul.f32 %v4094, 0.7978846
        %v4096 = vtanh.pop %v4095
        %v4097 = vadd.f32 %v4096, 1.0
        %v4098 = vmul.f32 %v4090, %v4097
        %s4099 = scalar_lea.vmem [#allocation11], 16
        %v4100 = vld [vmem:[%s4099] sm:$0xf]
        %v4101 = vld [vmem:[%s4099 + $0x4] sm:$0xf]
        %v4102 = vld [vmem:[%s4099 + $0x8] sm:$0xf]
        %v4103 = vld [vmem:[%s4099 + $0xc] sm:$0xf]
        %v4104 = vld [vmem:[%s19 + $0x8] sm:$0x1]
        %v4105 = vpack.c.bf16 %v4098, %v4098
        %v4106 = vlaneseq
        %v4107 = vshrl.u32 %v4106, 7
        %v4108 = vsub.s32 0, %v4107
        %v4109 = vrot.slane %v4104, %v4108
        %v4114 = vunpack.c.l.b16 %v4100
        %v4115 = vunpack.c.l.b16 %v4101
        %v4116 = vunpack.c.l.b16 %v4102
        %v4117 = vunpack.c.l.b16 %v4103
        %v4118 = vpack.c.b16 %v4115, %v4114
        %v4119 = vpack.c.b16 %v4117, %v4116
        %v4123 = vsel %vm1799, %v4105, 0
        %4125 = vmatprep.subr.bf16.mxu0 0
        %4126 = vmatpush1.bf16.msra.mxu0 0
        %4127 = vmatprep.subr.bf16.mxu0 0
        %4128 = vmatpush1.bf16.msra.mxu0 0
        %4129 = vmatprep.subr.bf16.mxu0 0
        %4130 = vmatpush1.bf16.msra.mxu0 0
        %4131 = vmatprep.subr.bf16.mxu0 0
        %4132 = vmatpush1.bf16.msra.mxu0 0
        %4133 = vmatprep.subr.bf16.mxu0 0
        %4134 = vmatpush1.bf16.msra.mxu0 0
        %4135 = vmatprep.subr.bf16.mxu0 0
        %4136 = vmatpush1.bf16.msra.mxu0 0
        %4137 = vmatprep.subr.bf16.mxu0 0
        %4138 = vmatpush1.bf16.msra.mxu0 %v4119
        %4139 = vmatprep.subr.bf16.mxu0 0
        %4140 = vmatpush1.bf16.msra.mxu0 %v4118
        %4141 = vmatprep.subr.bf16.mxu0 0
        %4142 = vmatpush2.bf16.msra.mxu0 0
        %4143 = vmatprep.subr.bf16.mxu0 0
        %4144 = vmatpush2.bf16.msra.mxu0 0
        %4145 = vmatprep.subr.bf16.mxu0 0
        %4146 = vmatpush2.bf16.msra.mxu0 0
        %4147 = vmatprep.subr.bf16.mxu0 0
        %4148 = vmatpush2.bf16.msra.mxu0 0
        %4149 = vmatprep.subr.bf16.mxu0 0
        %4150 = vmatpush2.bf16.msra.mxu0 0
        %4151 = vmatprep.subr.bf16.mxu0 0
        %4152 = vmatpush2.bf16.msra.mxu0 0
        %4153 = vmatprep.subr.bf16.mxu0 0
        %4154 = vmatpush2.bf16.msra.mxu0 0
        %4155 = vmatprep.subr.bf16.mxu0 0
        %4156 = vmatpush2.bf16.msra.mxu0 0
        %4157 = vmatprep.mubr.bf16.mxu0 0
        %4158 = vmatmul.mubr.bf16.gmra.mxu0 %v4123
        %v4159 = vpop.f32.mrf.mxu0
        %v4160 = vadd.f32 %v4109, %v4159
        %v4161 = vpop.f32.mrf.mxu0
        %v4162 = vpop.f32.mrf.mxu0
        %v4163 = vpop.f32.mrf.mxu0
        %4164 = vdwg.mxu0
        %s4165 = scalar_lea.vmem [#allocation10], 4
        %v4166 = vld [vmem:[%s4165] sm:$0xf]
        %v4167 = vld [vmem:[%s19 + $0x9] sm:$0x1]
        %v4168 = vpack.c.bf16 %v4160, %v4160
        %v4169 = vmul.f32 %v4160, %v4160
        %v4170 = vpack.c.bf16 %v4169, %v4169
        %v4172 = vsel %vm1799, %v4168, 0
        %4174 = vmatprep.subr.bf16.mxu0 0
        %4175 = vmatpush1.bf16.msra.mxu0 0
        %4176 = vmatprep.subr.bf16.mxu0 0
        %4177 = vmatpush1.bf16.msra.mxu0 0
        %4178 = vmatprep.subr.bf16.mxu0 0
        %4179 = vmatpush1.bf16.msra.mxu0 0
        %4180 = vmatprep.subr.bf16.mxu0 0
        %4181 = vmatpush1.bf16.msra.mxu0 0
        %4182 = vmatprep.subr.bf16.mxu0 0
        %4183 = vmatpush1.bf16.msra.mxu0 0
        %4184 = vmatprep.subr.bf16.mxu0 0
        %4185 = vmatpush1.bf16.msra.mxu0 0
        %4186 = vmatprep.subr.bf16.mxu0 0
        %4187 = vmatpush1.bf16.msra.mxu0 %v2778
        %4188 = vmatprep.subr.bf16.mxu0 0
        %4189 = vmatpush1.bf16.msra.mxu0 %v2777
        %4190 = vmatprep.subr.bf16.mxu0 0
        %4191 = vmatpush2.bf16.msra.mxu0 0
        %4192 = vmatprep.subr.bf16.mxu0 0
        %4193 = vmatpush2.bf16.msra.mxu0 0
        %4194 = vmatprep.subr.bf16.mxu0 0
        %4195 = vmatpush2.bf16.msra.mxu0 0
        %4196 = vmatprep.subr.bf16.mxu0 0
        %4197 = vmatpush2.bf16.msra.mxu0 0
        %4198 = vmatprep.subr.bf16.mxu0 0
        %4199 = vmatpush2.bf16.msra.mxu0 0
        %4200 = vmatprep.subr.bf16.mxu0 0
        %4201 = vmatpush2.bf16.msra.mxu0 0
        %4202 = vmatprep.subr.bf16.mxu0 0
        %4203 = vmatpush2.bf16.msra.mxu0 0
        %4204 = vmatprep.subr.bf16.mxu0 0
        %4205 = vmatpush2.bf16.msra.mxu0 0
        %4206 = vmatprep.mubr.bf16.mxu0 0
        %4207 = vmatmul.mubr.bf16.gmra.mxu0 %v4172
        %v4208 = vpop.f32.mrf.mxu0
        %v4209 = vadd.f32 0.0, %v4208
        %v4210 = vpop.f32.mrf.mxu0
        %v4211 = vpop.f32.mrf.mxu0
        %v4212 = vpop.f32.mrf.mxu0
        %4213 = vdwg.mxu0
        %v4215 = vsel %vm1799, %v4170, 0
        %4217 = vmatprep.subr.bf16.mxu0 0
        %4218 = vmatpush1.bf16.msra.mxu0 0
        %4219 = vmatprep.subr.bf16.mxu0 0
        %4220 = vmatpush1.bf16.msra.mxu0 0
        %4221 = vmatprep.subr.bf16.mxu0 0
        %4222 = vmatpush1.bf16.msra.mxu0 0
        %4223 = vmatprep.subr.bf16.mxu0 0
        %4224 = vmatpush1.bf16.msra.mxu0 0
        %4225 = vmatprep.subr.bf16.mxu0 0
        %4226 = vmatpush1.bf16.msra.mxu0 0
        %4227 = vmatprep.subr.bf16.mxu0 0
        %4228 = vmatpush1.bf16.msra.mxu0 0
        %4229 = vmatprep.subr.bf16.mxu0 0
        %4230 = vmatpush1.bf16.msra.mxu0 %v2778
        %4231 = vmatprep.subr.bf16.mxu0 0
        %4232 = vmatpush1.bf16.msra.mxu0 %v2777
        %4233 = vmatprep.subr.bf16.mxu0 0
        %4234 = vmatpush2.bf16.msra.mxu0 0
        %4235 = vmatprep.subr.bf16.mxu0 0
        %4236 = vmatpush2.bf16.msra.mxu0 0
        %4237 = vmatprep.subr.bf16.mxu0 0
        %4238 = vmatpush2.bf16.msra.mxu0 0
        %4239 = vmatprep.subr.bf16.mxu0 0
        %4240 = vmatpush2.bf16.msra.mxu0 0
        %4241 = vmatprep.subr.bf16.mxu0 0
        %4242 = vmatpush2.bf16.msra.mxu0 0
        %4243 = vmatprep.subr.bf16.mxu0 0
        %4244 = vmatpush2.bf16.msra.mxu0 0
        %4245 = vmatprep.subr.bf16.mxu0 0
        %4246 = vmatpush2.bf16.msra.mxu0 0
        %4247 = vmatprep.subr.bf16.mxu0 0
        %4248 = vmatpush2.bf16.msra.mxu0 0
        %4249 = vmatprep.mubr.bf16.mxu0 0
        %4250 = vmatmul.mubr.bf16.gmra.mxu0 %v4215
        %v4251 = vpop.f32.mrf.mxu0
        %v4252 = vadd.f32 0.0, %v4251
        %v4253 = vpop.f32.mrf.mxu0
        %v4254 = vpop.f32.mrf.mxu0
        %v4255 = vpop.f32.mrf.mxu0
        %4256 = vdwg.mxu0
        %v4257 = vmul.f32 %v4209, %v4209
        %v4258 = vsub.f32 %v4252, %v4257
        %v4259 = vmax.f32 %v4258, 0.0
        %v4260 = vadd.f32 %v4259, 1e-05
        %v4261 = vrsqrt.pop %v4260
        %v4262 = vpack.c.bf16 %v4261, %v4261
        %v4264 = vsel %vm2541, %v4262, 0
        %v4267 = vsel %vm2545, %v4166, 0
        %4269 = vmatprep.subr.bf16.mxu0 0
        %4270 = vmatpush1.bf16.msra.mxu0 0
        %4271 = vmatprep.subr.bf16.mxu0 0
        %4272 = vmatpush1.bf16.msra.mxu0 0
        %4273 = vmatprep.subr.bf16.mxu0 0
        %4274 = vmatpush1.bf16.msra.mxu0 0
        %4275 = vmatprep.subr.bf16.mxu0 0
        %4276 = vmatpush1.bf16.msra.mxu0 0
        %4277 = vmatprep.subr.bf16.mxu0 0
        %4278 = vmatpush1.bf16.msra.mxu0 0
        %4279 = vmatprep.subr.bf16.mxu0 0
        %4280 = vmatpush1.bf16.msra.mxu0 0
        %4281 = vmatprep.subr.bf16.mxu0 0
        %4282 = vmatpush1.bf16.msra.mxu0 0
        %4283 = vmatprep.subr.bf16.mxu0 0
        %4284 = vmatpush1.bf16.msra.mxu0 %v4267
        %4285 = vmatprep.subr.bf16.mxu0 0
        %4286 = vmatpush2.bf16.msra.mxu0 0
        %4287 = vmatprep.subr.bf16.mxu0 0
        %4288 = vmatpush2.bf16.msra.mxu0 0
        %4289 = vmatprep.subr.bf16.mxu0 0
        %4290 = vmatpush2.bf16.msra.mxu0 0
        %4291 = vmatprep.subr.bf16.mxu0 0
        %4292 = vmatpush2.bf16.msra.mxu0 0
        %4293 = vmatprep.subr.bf16.mxu0 0
        %4294 = vmatpush2.bf16.msra.mxu0 0
        %4295 = vmatprep.subr.bf16.mxu0 0
        %4296 = vmatpush2.bf16.msra.mxu0 0
        %4297 = vmatprep.subr.bf16.mxu0 0
        %4298 = vmatpush2.bf16.msra.mxu0 0
        %4299 = vmatprep.subr.bf16.mxu0 0
        %4300 = vmatpush2.bf16.msra.mxu0 0
        %4301 = vmatprep.mubr.bf16.mxu0 0
        %4302 = vmatmul.mubr.bf16.gmra.mxu0 %v4264
        %v4303 = vpop.f32.mrf.mxu0
        %v4304 = vadd.f32 0.0, %v4303
        %v4305 = vpop.f32.mrf.mxu0
        %v4306 = vpop.f32.mrf.mxu0
        %v4307 = vpop.f32.mrf.mxu0
        %4308 = vdwg.mxu0
        %v4309 = vmul.f32 %v4209, %v4261
        %v4310 = vpack.c.bf16 %v4309, %v4309
        %v4312 = vsel %vm2541, %v4310, 0
        %4314 = vmatprep.subr.bf16.mxu0 0
        %4315 = vmatpush1.bf16.msra.mxu0 0
        %4316 = vmatprep.subr.bf16.mxu0 0
        %4317 = vmatpush1.bf16.msra.mxu0 0
        %4318 = vmatprep.subr.bf16.mxu0 0
        %4319 = vmatpush1.bf16.msra.mxu0 0
        %4320 = vmatprep.subr.bf16.mxu0 0
        %4321 = vmatpush1.bf16.msra.mxu0 0
        %4322 = vmatprep.subr.bf16.mxu0 0
        %4323 = vmatpush1.bf16.msra.mxu0 0
        %4324 = vmatprep.subr.bf16.mxu0 0
        %4325 = vmatpush1.bf16.msra.mxu0 0
        %4326 = vmatprep.subr.bf16.mxu0 0
        %4327 = vmatpush1.bf16.msra.mxu0 0
        %4328 = vmatprep.subr.bf16.mxu0 0
        %4329 = vmatpush1.bf16.msra.mxu0 %v4267
        %4330 = vmatprep.subr.bf16.mxu0 0
        %4331 = vmatpush2.bf16.msra.mxu0 0
        %4332 = vmatprep.subr.bf16.mxu0 0
        %4333 = vmatpush2.bf16.msra.mxu0 0
        %4334 = vmatprep.subr.bf16.mxu0 0
        %4335 = vmatpush2.bf16.msra.mxu0 0
        %4336 = vmatprep.subr.bf16.mxu0 0
        %4337 = vmatpush2.bf16.msra.mxu0 0
        %4338 = vmatprep.subr.bf16.mxu0 0
        %4339 = vmatpush2.bf16.msra.mxu0 0
        %4340 = vmatprep.subr.bf16.mxu0 0
        %4341 = vmatpush2.bf16.msra.mxu0 0
        %4342 = vmatprep.subr.bf16.mxu0 0
        %4343 = vmatpush2.bf16.msra.mxu0 0
        %4344 = vmatprep.subr.bf16.mxu0 0
        %4345 = vmatpush2.bf16.msra.mxu0 0
        %4346 = vmatprep.mubr.bf16.mxu0 0
        %4347 = vmatmul.mubr.bf16.gmra.mxu0 %v4312
        %v4348 = vpop.f32.mrf.mxu0
        %v4349 = vadd.f32 0.0, %v4348
        %v4350 = vpop.f32.mrf.mxu0
        %v4351 = vpop.f32.mrf.mxu0
        %v4352 = vpop.f32.mrf.mxu0
        %4353 = vdwg.mxu0
        %v4354 = vlaneseq
        %v4355 = vshrl.u32 %v4354, 7
        %v4356 = vsub.s32 0, %v4355
        %v4357 = vrot.slane %v4167, %v4356
        %v4358 = vsub.f32 %v4357, %v4349
        %v4359 = vmul.f32 %v4160, %v4304
        %v4360 = vadd.f32 %v4359, %v4358
        %v4361 = vmul.f32 %v4360, 0.5
        %v4362 = vmul.f32 %v4360, %v4360
        %v4363 = vmul.f32 %v4362, %v4360
        %v4364 = vmul.f32 %v4363, 0.044715
        %v4365 = vadd.f32 %v4360, %v4364
        %v4366 = vmul.f32 %v4365, 0.7978846
        %v4367 = vtanh.pop %v4366
        %v4368 = vadd.f32 %v4367, 1.0
        %v4369 = vmul.f32 %v4361, %v4368
        %s4370 = scalar_lea.vmem [#allocation13], 16
        %v4371 = vld [vmem:[%s4370] sm:$0xf]
        %v4372 = vld [vmem:[%s4370 + $0x4] sm:$0xf]
        %v4373 = vld [vmem:[%s4370 + $0x8] sm:$0xf]
        %v4374 = vld [vmem:[%s4370 + $0xc] sm:$0xf]
        %v4375 = vld [vmem:[%s19 + $0xa] sm:$0x1]
        %v4376 = vpack.c.bf16 %v4369, %v4369
        %v4377 = vlaneseq
        %v4378 = vshrl.u32 %v4377, 7
        %v4379 = vsub.s32 0, %v4378
        %v4380 = vrot.slane %v4375, %v4379
        %v4385 = vunpack.c.l.b16 %v4371
        %v4386 = vunpack.c.l.b16 %v4372
        %v4387 = vunpack.c.l.b16 %v4373
        %v4388 = vunpack.c.l.b16 %v4374
        %v4389 = vpack.c.b16 %v4386, %v4385
        %v4390 = vpack.c.b16 %v4388, %v4387
        %v4394 = vsel %vm1799, %v4376, 0
        %4396 = vmatprep.subr.bf16.mxu0 0
        %4397 = vmatpush1.bf16.msra.mxu0 0
        %4398 = vmatprep.subr.bf16.mxu0 0
        %4399 = vmatpush1.bf16.msra.mxu0 0
        %4400 = vmatprep.subr.bf16.mxu0 0
        %4401 = vmatpush1.bf16.msra.mxu0 0
        %4402 = vmatprep.subr.bf16.mxu0 0
        %4403 = vmatpush1.bf16.msra.mxu0 0
        %4404 = vmatprep.subr.bf16.mxu0 0
        %4405 = vmatpush1.bf16.msra.mxu0 0
        %4406 = vmatprep.subr.bf16.mxu0 0
        %4407 = vmatpush1.bf16.msra.mxu0 0
        %4408 = vmatprep.subr.bf16.mxu0 0
        %4409 = vmatpush1.bf16.msra.mxu0 %v4390
        %4410 = vmatprep.subr.bf16.mxu0 0
        %4411 = vmatpush1.bf16.msra.mxu0 %v4389
        %4412 = vmatprep.subr.bf16.mxu0 0
        %4413 = vmatpush2.bf16.msra.mxu0 0
        %4414 = vmatprep.subr.bf16.mxu0 0
        %4415 = vmatpush2.bf16.msra.mxu0 0
        %4416 = vmatprep.subr.bf16.mxu0 0
        %4417 = vmatpush2.bf16.msra.mxu0 0
        %4418 = vmatprep.subr.bf16.mxu0 0
        %4419 = vmatpush2.bf16.msra.mxu0 0
        %4420 = vmatprep.subr.bf16.mxu0 0
        %4421 = vmatpush2.bf16.msra.mxu0 0
        %4422 = vmatprep.subr.bf16.mxu0 0
        %4423 = vmatpush2.bf16.msra.mxu0 0
        %4424 = vmatprep.subr.bf16.mxu0 0
        %4425 = vmatpush2.bf16.msra.mxu0 0
        %4426 = vmatprep.subr.bf16.mxu0 0
        %4427 = vmatpush2.bf16.msra.mxu0 0
        %4428 = vmatprep.mubr.bf16.mxu0 0
        %4429 = vmatmul.mubr.bf16.gmra.mxu0 %v4394
        %v4430 = vpop.f32.mrf.mxu0
        %v4431 = vadd.f32 %v4380, %v4430
        %v4432 = vpop.f32.mrf.mxu0
        %v4433 = vpop.f32.mrf.mxu0
        %v4434 = vpop.f32.mrf.mxu0
        %4435 = vdwg.mxu0
        %s4436 = scalar_lea.vmem %s10, 4
        %v4437 = vld [vmem:[%s4436] sm:$0xf]
        %v4438 = vld [vmem:[%s19 + $0xb] sm:$0x1]
        %v4439 = vpack.c.bf16 %v4431, %v4431
        %v4440 = vmul.f32 %v4431, %v4431
        %v4441 = vpack.c.bf16 %v4440, %v4440
        %v4443 = vsel %vm1799, %v4439, 0
        %4445 = vmatprep.subr.bf16.mxu0 0
        %4446 = vmatpush1.bf16.msra.mxu0 0
        %4447 = vmatprep.subr.bf16.mxu0 0
        %4448 = vmatpush1.bf16.msra.mxu0 0
        %4449 = vmatprep.subr.bf16.mxu0 0
        %4450 = vmatpush1.bf16.msra.mxu0 0
        %4451 = vmatprep.subr.bf16.mxu0 0
        %4452 = vmatpush1.bf16.msra.mxu0 0
        %4453 = vmatprep.subr.bf16.mxu0 0
        %4454 = vmatpush1.bf16.msra.mxu0 0
        %4455 = vmatprep.subr.bf16.mxu0 0
        %4456 = vmatpush1.bf16.msra.mxu0 0
        %4457 = vmatprep.subr.bf16.mxu0 0
        %4458 = vmatpush1.bf16.msra.mxu0 %v2778
        %4459 = vmatprep.subr.bf16.mxu0 0
        %4460 = vmatpush1.bf16.msra.mxu0 %v2777
        %4461 = vmatprep.subr.bf16.mxu0 0
        %4462 = vmatpush2.bf16.msra.mxu0 0
        %4463 = vmatprep.subr.bf16.mxu0 0
        %4464 = vmatpush2.bf16.msra.mxu0 0
        %4465 = vmatprep.subr.bf16.mxu0 0
        %4466 = vmatpush2.bf16.msra.mxu0 0
        %4467 = vmatprep.subr.bf16.mxu0 0
        %4468 = vmatpush2.bf16.msra.mxu0 0
        %4469 = vmatprep.subr.bf16.mxu0 0
        %4470 = vmatpush2.bf16.msra.mxu0 0
        %4471 = vmatprep.subr.bf16.mxu0 0
        %4472 = vmatpush2.bf16.msra.mxu0 0
        %4473 = vmatprep.subr.bf16.mxu0 0
        %4474 = vmatpush2.bf16.msra.mxu0 0
        %4475 = vmatprep.subr.bf16.mxu0 0
        %4476 = vmatpush2.bf16.msra.mxu0 0
        %4477 = vmatprep.mubr.bf16.mxu0 0
        %4478 = vmatmul.mubr.bf16.gmra.mxu0 %v4443
        %v4479 = vpop.f32.mrf.mxu0
        %v4480 = vadd.f32 0.0, %v4479
        %v4481 = vpop.f32.mrf.mxu0
        %v4482 = vpop.f32.mrf.mxu0
        %v4483 = vpop.f32.mrf.mxu0
        %4484 = vdwg.mxu0
        %v4486 = vsel %vm1799, %v4441, 0
        %4488 = vmatprep.subr.bf16.mxu0 0
        %4489 = vmatpush1.bf16.msra.mxu0 0
        %4490 = vmatprep.subr.bf16.mxu0 0
        %4491 = vmatpush1.bf16.msra.mxu0 0
        %4492 = vmatprep.subr.bf16.mxu0 0
        %4493 = vmatpush1.bf16.msra.mxu0 0
        %4494 = vmatprep.subr.bf16.mxu0 0
        %4495 = vmatpush1.bf16.msra.mxu0 0
        %4496 = vmatprep.subr.bf16.mxu0 0
        %4497 = vmatpush1.bf16.msra.mxu0 0
        %4498 = vmatprep.subr.bf16.mxu0 0
        %4499 = vmatpush1.bf16.msra.mxu0 0
        %4500 = vmatprep.subr.bf16.mxu0 0
        %4501 = vmatpush1.bf16.msra.mxu0 %v2778
        %4502 = vmatprep.subr.bf16.mxu0 0
        %4503 = vmatpush1.bf16.msra.mxu0 %v2777
        %4504 = vmatprep.subr.bf16.mxu0 0
        %4505 = vmatpush2.bf16.msra.mxu0 0
        %4506 = vmatprep.subr.bf16.mxu0 0
        %4507 = vmatpush2.bf16.msra.mxu0 0
        %4508 = vmatprep.subr.bf16.mxu0 0
        %4509 = vmatpush2.bf16.msra.mxu0 0
        %4510 = vmatprep.subr.bf16.mxu0 0
        %4511 = vmatpush2.bf16.msra.mxu0 0
        %4512 = vmatprep.subr.bf16.mxu0 0
        %4513 = vmatpush2.bf16.msra.mxu0 0
        %4514 = vmatprep.subr.bf16.mxu0 0
        %4515 = vmatpush2.bf16.msra.mxu0 0
        %4516 = vmatprep.subr.bf16.mxu0 0
        %4517 = vmatpush2.bf16.msra.mxu0 0
        %4518 = vmatprep.subr.bf16.mxu0 0
        %4519 = vmatpush2.bf16.msra.mxu0 0
        %4520 = vmatprep.mubr.bf16.mxu0 0
        %4521 = vmatmul.mubr.bf16.gmra.mxu0 %v4486
        %v4522 = vpop.f32.mrf.mxu0
        %v4523 = vadd.f32 0.0, %v4522
        %v4524 = vpop.f32.mrf.mxu0
        %v4525 = vpop.f32.mrf.mxu0
        %v4526 = vpop.f32.mrf.mxu0
        %4527 = vdwg.mxu0
        %v4528 = vmul.f32 %v4480, %v4480
        %v4529 = vsub.f32 %v4523, %v4528
        %v4530 = vmax.f32 %v4529, 0.0
        %v4531 = vadd.f32 %v4530, 1e-05
        %v4532 = vrsqrt.pop %v4531
        %v4533 = vpack.c.bf16 %v4532, %v4532
        %v4535 = vsel %vm2541, %v4533, 0
        %v4538 = vsel %vm2545, %v4437, 0
        %4540 = vmatprep.subr.bf16.mxu0 0
        %4541 = vmatpush1.bf16.msra.mxu0 0
        %4542 = vmatprep.subr.bf16.mxu0 0
        %4543 = vmatpush1.bf16.msra.mxu0 0
        %4544 = vmatprep.subr.bf16.mxu0 0
        %4545 = vmatpush1.bf16.msra.mxu0 0
        %4546 = vmatprep.subr.bf16.mxu0 0
        %4547 = vmatpush1.bf16.msra.mxu0 0
        %4548 = vmatprep.subr.bf16.mxu0 0
        %4549 = vmatpush1.bf16.msra.mxu0 0
        %4550 = vmatprep.subr.bf16.mxu0 0
        %4551 = vmatpush1.bf16.msra.mxu0 0
        %4552 = vmatprep.subr.bf16.mxu0 0
        %4553 = vmatpush1.bf16.msra.mxu0 0
        %4554 = vmatprep.subr.bf16.mxu0 0
        %4555 = vmatpush1.bf16.msra.mxu0 %v4538
        %4556 = vmatprep.subr.bf16.mxu0 0
        %4557 = vmatpush2.bf16.msra.mxu0 0
        %4558 = vmatprep.subr.bf16.mxu0 0
        %4559 = vmatpush2.bf16.msra.mxu0 0
        %4560 = vmatprep.subr.bf16.mxu0 0
        %4561 = vmatpush2.bf16.msra.mxu0 0
        %4562 = vmatprep.subr.bf16.mxu0 0
        %4563 = vmatpush2.bf16.msra.mxu0 0
        %4564 = vmatprep.subr.bf16.mxu0 0
        %4565 = vmatpush2.bf16.msra.mxu0 0
        %4566 = vmatprep.subr.bf16.mxu0 0
        %4567 = vmatpush2.bf16.msra.mxu0 0
        %4568 = vmatprep.subr.bf16.mxu0 0
        %4569 = vmatpush2.bf16.msra.mxu0 0
        %4570 = vmatprep.subr.bf16.mxu0 0
        %4571 = vmatpush2.bf16.msra.mxu0 0
        %4572 = vmatprep.mubr.bf16.mxu0 0
        %4573 = vmatmul.mubr.bf16.gmra.mxu0 %v4535
        %v4574 = vpop.f32.mrf.mxu0
        %v4575 = vadd.f32 0.0, %v4574
        %v4576 = vpop.f32.mrf.mxu0
        %v4577 = vpop.f32.mrf.mxu0
        %v4578 = vpop.f32.mrf.mxu0
        %4579 = vdwg.mxu0
        %v4580 = vmul.f32 %v4480, %v4532
        %v4581 = vpack.c.bf16 %v4580, %v4580
        %v4583 = vsel %vm2541, %v4581, 0
        %4585 = vmatprep.subr.bf16.mxu0 0
        %4586 = vmatpush1.bf16.msra.mxu0 0
        %4587 = vmatprep.subr.bf16.mxu0 0
        %4588 = vmatpush1.bf16.msra.mxu0 0
        %4589 = vmatprep.subr.bf16.mxu0 0
        %4590 = vmatpush1.bf16.msra.mxu0 0
        %4591 = vmatprep.subr.bf16.mxu0 0
        %4592 = vmatpush1.bf16.msra.mxu0 0
        %4593 = vmatprep.subr.bf16.mxu0 0
        %4594 = vmatpush1.bf16.msra.mxu0 0
        %4595 = vmatprep.subr.bf16.mxu0 0
        %4596 = vmatpush1.bf16.msra.mxu0 0
        %4597 = vmatprep.subr.bf16.mxu0 0
        %4598 = vmatpush1.bf16.msra.mxu0 0
        %4599 = vmatprep.subr.bf16.mxu0 0
        %4600 = vmatpush1.bf16.msra.mxu0 %v4538
        %4601 = vmatprep.subr.bf16.mxu0 0
        %4602 = vmatpush2.bf16.msra.mxu0 0
        %4603 = vmatprep.subr.bf16.mxu0 0
        %4604 = vmatpush2.bf16.msra.mxu0 0
        %4605 = vmatprep.subr.bf16.mxu0 0
        %4606 = vmatpush2.bf16.msra.mxu0 0
        %4607 = vmatprep.subr.bf16.mxu0 0
        %4608 = vmatpush2.bf16.msra.mxu0 0
        %4609 = vmatprep.subr.bf16.mxu0 0
        %4610 = vmatpush2.bf16.msra.mxu0 0
        %4611 = vmatprep.subr.bf16.mxu0 0
        %4612 = vmatpush2.bf16.msra.mxu0 0
        %4613 = vmatprep.subr.bf16.mxu0 0
        %4614 = vmatpush2.bf16.msra.mxu0 0
        %4615 = vmatprep.subr.bf16.mxu0 0
        %4616 = vmatpush2.bf16.msra.mxu0 0
        %4617 = vmatprep.mubr.bf16.mxu0 0
        %4618 = vmatmul.mubr.bf16.gmra.mxu0 %v4583
        %v4619 = vpop.f32.mrf.mxu0
        %v4620 = vadd.f32 0.0, %v4619
        %v4621 = vpop.f32.mrf.mxu0
        %v4622 = vpop.f32.mrf.mxu0
        %v4623 = vpop.f32.mrf.mxu0
        %4624 = vdwg.mxu0
        %v4625 = vlaneseq
        %v4626 = vshrl.u32 %v4625, 7
        %v4627 = vsub.s32 0, %v4626
        %v4628 = vrot.slane %v4438, %v4627
        %v4629 = vsub.f32 %v4628, %v4620
        %v4630 = vmul.f32 %v4431, %v4575
        %v4631 = vadd.f32 %v4630, %v4629
        %v4632 = vmul.f32 %v4631, 0.5
        %v4633 = vmul.f32 %v4631, %v4631
        %v4634 = vmul.f32 %v4633, %v4631
        %v4635 = vmul.f32 %v4634, 0.044715
        %v4636 = vadd.f32 %v4631, %v4635
        %v4637 = vmul.f32 %v4636, 0.7978846
        %v4638 = vtanh.pop %v4637
        %v4639 = vadd.f32 %v4638, 1.0
        %v4640 = vmul.f32 %v4632, %v4639
        %s4641 = scalar_lea.vmem [#allocation14], 16
        %v4642 = vld [vmem:[%s4641] sm:$0xf]
        %v4643 = vld [vmem:[%s4641 + $0x4] sm:$0xf]
        %v4644 = vld [vmem:[%s4641 + $0x8] sm:$0xf]
        %v4645 = vld [vmem:[%s4641 + $0xc] sm:$0xf]
        %v4646 = vld [vmem:[#allocation19 + $0x6] sm:$0x1]
        %v4647 = vpack.c.bf16 %v4640, %v4640
        %v4648 = vlaneseq
        %v4649 = vshrl.u32 %v4648, 7
        %v4650 = vsub.s32 0, %v4649
        %v4651 = vrot.slane %v4646, %v4650
        %v4656 = vunpack.c.l.b16 %v4642
        %v4657 = vunpack.c.l.b16 %v4643
        %v4658 = vunpack.c.l.b16 %v4644
        %v4659 = vunpack.c.l.b16 %v4645
        %v4660 = vpack.c.b16 %v4657, %v4656
        %v4661 = vpack.c.b16 %v4659, %v4658
        %v4665 = vsel %vm1799, %v4647, 0
        %4667 = vmatprep.subr.bf16.mxu0 0
        %4668 = vmatpush1.bf16.msra.mxu0 0
        %4669 = vmatprep.subr.bf16.mxu0 0
        %4670 = vmatpush1.bf16.msra.mxu0 0
        %4671 = vmatprep.subr.bf16.mxu0 0
        %4672 = vmatpush1.bf16.msra.mxu0 0
        %4673 = vmatprep.subr.bf16.mxu0 0
        %4674 = vmatpush1.bf16.msra.mxu0 0
        %4675 = vmatprep.subr.bf16.mxu0 0
        %4676 = vmatpush1.bf16.msra.mxu0 0
        %4677 = vmatprep.subr.bf16.mxu0 0
        %4678 = vmatpush1.bf16.msra.mxu0 0
        %4679 = vmatprep.subr.bf16.mxu0 0
        %4680 = vmatpush1.bf16.msra.mxu0 %v4661
        %4681 = vmatprep.subr.bf16.mxu0 0
        %4682 = vmatpush1.bf16.msra.mxu0 %v4660
        %4683 = vmatprep.subr.bf16.mxu0 0
        %4684 = vmatpush2.bf16.msra.mxu0 0
        %4685 = vmatprep.subr.bf16.mxu0 0
        %4686 = vmatpush2.bf16.msra.mxu0 0
        %4687 = vmatprep.subr.bf16.mxu0 0
        %4688 = vmatpush2.bf16.msra.mxu0 0
        %4689 = vmatprep.subr.bf16.mxu0 0
        %4690 = vmatpush2.bf16.msra.mxu0 0
        %4691 = vmatprep.subr.bf16.mxu0 0
        %4692 = vmatpush2.bf16.msra.mxu0 0
        %4693 = vmatprep.subr.bf16.mxu0 0
        %4694 = vmatpush2.bf16.msra.mxu0 0
        %4695 = vmatprep.subr.bf16.mxu0 0
        %4696 = vmatpush2.bf16.msra.mxu0 0
        %4697 = vmatprep.subr.bf16.mxu0 0
        %4698 = vmatpush2.bf16.msra.mxu0 0
        %4699 = vmatprep.mubr.bf16.mxu0 0
        %4700 = vmatmul.mubr.bf16.gmra.mxu0 %v4665
        %v4701 = vpop.f32.mrf.mxu0
        %v4702 = vadd.f32 %v4651, %v4701
        %v4703 = vpop.f32.mrf.mxu0
        %v4704 = vpop.f32.mrf.mxu0
        %v4705 = vpop.f32.mrf.mxu0
        %4706 = vdwg.mxu0
        %v4707 = vadd.f32 %v3583, %v4702
        %s4708 = scalar_lea.vmem [#allocation7], 8
        %v4709 = vld [vmem:[%s4708] sm:$0xf]
        %v4710 = vld [vmem:[#allocation19 + $0x3] sm:$0x1]
        %v4711 = vpack.c.bf16 %v4707, %v4707
        %v4712 = vmul.f32 %v4707, %v4707
        %v4713 = vpack.c.bf16 %v4712, %v4712
        %4714 = vmatprep.subr.bf16.mxu0 0
        %4715 = vmatpush1.bf16.msra.mxu0 %v2446
        %4716 = vmatprep.subr.bf16.mxu0 0
        %4717 = vmatpush1.bf16.msra.mxu0 %v2445
        %4718 = vmatprep.subr.bf16.mxu0 0
        %4719 = vmatpush1.bf16.msra.mxu0 %v2444
        %4720 = vmatprep.subr.bf16.mxu0 0
        %4721 = vmatpush1.bf16.msra.mxu0 %v2443
        %4722 = vmatprep.subr.bf16.mxu0 0
        %4723 = vmatpush1.bf16.msra.mxu0 %v2442
        %4724 = vmatprep.subr.bf16.mxu0 0
        %4725 = vmatpush1.bf16.msra.mxu0 %v2441
        %4726 = vmatprep.subr.bf16.mxu0 0
        %4727 = vmatpush1.bf16.msra.mxu0 %v2440
        %4728 = vmatprep.subr.bf16.mxu0 0
        %4729 = vmatpush1.bf16.msra.mxu0 %v2439
        %4730 = vmatprep.subr.bf16.mxu0 0
        %4731 = vmatpush2.bf16.msra.mxu0 0
        %4732 = vmatprep.subr.bf16.mxu0 0
        %4733 = vmatpush2.bf16.msra.mxu0 0
        %4734 = vmatprep.subr.bf16.mxu0 0
        %4735 = vmatpush2.bf16.msra.mxu0 0
        %4736 = vmatprep.subr.bf16.mxu0 0
        %4737 = vmatpush2.bf16.msra.mxu0 0
        %4738 = vmatprep.subr.bf16.mxu0 0
        %4739 = vmatpush2.bf16.msra.mxu0 0
        %4740 = vmatprep.subr.bf16.mxu0 0
        %4741 = vmatpush2.bf16.msra.mxu0 0
        %4742 = vmatprep.subr.bf16.mxu0 0
        %4743 = vmatpush2.bf16.msra.mxu0 0
        %4744 = vmatprep.subr.bf16.mxu0 0
        %4745 = vmatpush2.bf16.msra.mxu0 0
        %4746 = vmatprep.mubr.bf16.mxu0 0
        %4747 = vmatmul.mubr.bf16.gmra.mxu0 %v4711
        %v4748 = vpop.f32.mrf.mxu0
        %v4749 = vadd.f32 0.0, %v4748
        %v4750 = vpop.f32.mrf.mxu0
        %v4751 = vpop.f32.mrf.mxu0
        %v4752 = vpop.f32.mrf.mxu0
        %4753 = vdwg.mxu0
        %4754 = vmatprep.subr.bf16.mxu0 0
        %4755 = vmatpush1.bf16.msra.mxu0 %v2446
        %4756 = vmatprep.subr.bf16.mxu0 0
        %4757 = vmatpush1.bf16.msra.mxu0 %v2445
        %4758 = vmatprep.subr.bf16.mxu0 0
        %4759 = vmatpush1.bf16.msra.mxu0 %v2444
        %4760 = vmatprep.subr.bf16.mxu0 0
        %4761 = vmatpush1.bf16.msra.mxu0 %v2443
        %4762 = vmatprep.subr.bf16.mxu0 0
        %4763 = vmatpush1.bf16.msra.mxu0 %v2442
        %4764 = vmatprep.subr.bf16.mxu0 0
        %4765 = vmatpush1.bf16.msra.mxu0 %v2441
        %4766 = vmatprep.subr.bf16.mxu0 0
        %4767 = vmatpush1.bf16.msra.mxu0 %v2440
        %4768 = vmatprep.subr.bf16.mxu0 0
        %4769 = vmatpush1.bf16.msra.mxu0 %v2439
        %4770 = vmatprep.subr.bf16.mxu0 0
        %4771 = vmatpush2.bf16.msra.mxu0 0
        %4772 = vmatprep.subr.bf16.mxu0 0
        %4773 = vmatpush2.bf16.msra.mxu0 0
        %4774 = vmatprep.subr.bf16.mxu0 0
        %4775 = vmatpush2.bf16.msra.mxu0 0
        %4776 = vmatprep.subr.bf16.mxu0 0
        %4777 = vmatpush2.bf16.msra.mxu0 0
        %4778 = vmatprep.subr.bf16.mxu0 0
        %4779 = vmatpush2.bf16.msra.mxu0 0
        %4780 = vmatprep.subr.bf16.mxu0 0
        %4781 = vmatpush2.bf16.msra.mxu0 0
        %4782 = vmatprep.subr.bf16.mxu0 0
        %4783 = vmatpush2.bf16.msra.mxu0 0
        %4784 = vmatprep.subr.bf16.mxu0 0
        %4785 = vmatpush2.bf16.msra.mxu0 0
        %4786 = vmatprep.mubr.bf16.mxu0 0
        %4787 = vmatmul.mubr.bf16.gmra.mxu0 %v4713
        %v4788 = vpop.f32.mrf.mxu0
        %v4789 = vadd.f32 0.0, %v4788
        %v4790 = vpop.f32.mrf.mxu0
        %v4791 = vpop.f32.mrf.mxu0
        %v4792 = vpop.f32.mrf.mxu0
        %4793 = vdwg.mxu0
        %v4794 = vmul.f32 %v4749, %v4749
        %v4795 = vsub.f32 %v4789, %v4794
        %v4796 = vmax.f32 %v4795, 0.0
        %v4797 = vadd.f32 %v4796, 1e-05
        %v4798 = vrsqrt.pop %v4797
        %v4799 = vpack.c.bf16 %v4798, %v4798
        %v4801 = vsel %vm2541, %v4799, 0
        %v4804 = vsel %vm2545, %v4709, 0
        %4806 = vmatprep.subr.bf16.mxu0 0
        %4807 = vmatpush1.bf16.msra.mxu0 0
        %4808 = vmatprep.subr.bf16.mxu0 0
        %4809 = vmatpush1.bf16.msra.mxu0 0
        %4810 = vmatprep.subr.bf16.mxu0 0
        %4811 = vmatpush1.bf16.msra.mxu0 0
        %4812 = vmatprep.subr.bf16.mxu0 0
        %4813 = vmatpush1.bf16.msra.mxu0 0
        %4814 = vmatprep.subr.bf16.mxu0 0
        %4815 = vmatpush1.bf16.msra.mxu0 0
        %4816 = vmatprep.subr.bf16.mxu0 0
        %4817 = vmatpush1.bf16.msra.mxu0 0
        %4818 = vmatprep.subr.bf16.mxu0 0
        %4819 = vmatpush1.bf16.msra.mxu0 0
        %4820 = vmatprep.subr.bf16.mxu0 0
        %4821 = vmatpush1.bf16.msra.mxu0 %v4804
        %4822 = vmatprep.subr.bf16.mxu0 0
        %4823 = vmatpush2.bf16.msra.mxu0 0
        %4824 = vmatprep.subr.bf16.mxu0 0
        %4825 = vmatpush2.bf16.msra.mxu0 0
        %4826 = vmatprep.subr.bf16.mxu0 0
        %4827 = vmatpush2.bf16.msra.mxu0 0
        %4828 = vmatprep.subr.bf16.mxu0 0
        %4829 = vmatpush2.bf16.msra.mxu0 0
        %4830 = vmatprep.subr.bf16.mxu0 0
        %4831 = vmatpush2.bf16.msra.mxu0 0
        %4832 = vmatprep.subr.bf16.mxu0 0
        %4833 = vmatpush2.bf16.msra.mxu0 0
        %4834 = vmatprep.subr.bf16.mxu0 0
        %4835 = vmatpush2.bf16.msra.mxu0 0
        %4836 = vmatprep.subr.bf16.mxu0 0
        %4837 = vmatpush2.bf16.msra.mxu0 0
        %4838 = vmatprep.mubr.bf16.mxu0 0
        %4839 = vmatmul.mubr.bf16.gmra.mxu0 %v4801
        %v4840 = vpop.f32.mrf.mxu0
        %v4841 = vadd.f32 0.0, %v4840
        %v4842 = vpop.f32.mrf.mxu0
        %v4843 = vpop.f32.mrf.mxu0
        %v4844 = vpop.f32.mrf.mxu0
        %4845 = vdwg.mxu0
        %v4846 = vmul.f32 %v4749, %v4798
        %v4847 = vpack.c.bf16 %v4846, %v4846
        %v4849 = vsel %vm2541, %v4847, 0
        %4851 = vmatprep.subr.bf16.mxu0 0
        %4852 = vmatpush1.bf16.msra.mxu0 0
        %4853 = vmatprep.subr.bf16.mxu0 0
        %4854 = vmatpush1.bf16.msra.mxu0 0
        %4855 = vmatprep.subr.bf16.mxu0 0
        %4856 = vmatpush1.bf16.msra.mxu0 0
        %4857 = vmatprep.subr.bf16.mxu0 0
        %4858 = vmatpush1.bf16.msra.mxu0 0
        %4859 = vmatprep.subr.bf16.mxu0 0
        %4860 = vmatpush1.bf16.msra.mxu0 0
        %4861 = vmatprep.subr.bf16.mxu0 0
        %4862 = vmatpush1.bf16.msra.mxu0 0
        %4863 = vmatprep.subr.bf16.mxu0 0
        %4864 = vmatpush1.bf16.msra.mxu0 0
        %4865 = vmatprep.subr.bf16.mxu0 0
        %4866 = vmatpush1.bf16.msra.mxu0 %v4804
        %4867 = vmatprep.subr.bf16.mxu0 0
        %4868 = vmatpush2.bf16.msra.mxu0 0
        %4869 = vmatprep.subr.bf16.mxu0 0
        %4870 = vmatpush2.bf16.msra.mxu0 0
        %4871 = vmatprep.subr.bf16.mxu0 0
        %4872 = vmatpush2.bf16.msra.mxu0 0
        %4873 = vmatprep.subr.bf16.mxu0 0
        %4874 = vmatpush2.bf16.msra.mxu0 0
        %4875 = vmatprep.subr.bf16.mxu0 0
        %4876 = vmatpush2.bf16.msra.mxu0 0
        %4877 = vmatprep.subr.bf16.mxu0 0
        %4878 = vmatpush2.bf16.msra.mxu0 0
        %4879 = vmatprep.subr.bf16.mxu0 0
        %4880 = vmatpush2.bf16.msra.mxu0 0
        %4881 = vmatprep.subr.bf16.mxu0 0
        %4882 = vmatpush2.bf16.msra.mxu0 0
        %4883 = vmatprep.mubr.bf16.mxu0 0
        %4884 = vmatmul.mubr.bf16.gmra.mxu0 %v4849
        %v4885 = vpop.f32.mrf.mxu0
        %v4886 = vadd.f32 0.0, %v4885
        %v4887 = vpop.f32.mrf.mxu0
        %v4888 = vpop.f32.mrf.mxu0
        %v4889 = vpop.f32.mrf.mxu0
        %4890 = vdwg.mxu0
        %v4891 = vlaneseq
        %v4892 = vshrl.u32 %v4891, 7
        %v4893 = vsub.s32 0, %v4892
        %v4894 = vrot.slane %v4710, %v4893
        %v4895 = vsub.f32 %v4894, %v4886
        %v4896 = vmul.f32 %v4707, %v4841
        %v4897 = vadd.f32 %v4896, %v4895
        %v4898 = vmul.f32 %v4897, 0.5
        %v4899 = vmul.f32 %v4897, %v4897
        %v4900 = vmul.f32 %v4899, %v4897
        %v4901 = vmul.f32 %v4900, 0.044715
        %v4902 = vadd.f32 %v4897, %v4901
        %v4903 = vmul.f32 %v4902, 0.7978846
        %v4904 = vtanh.pop %v4903
        %v4905 = vadd.f32 %v4904, 1.0
        %v4906 = vmul.f32 %v4898, %v4905
        %s4907 = scalar_lea.vmem %s11, 128
        %v4908 = vld [vmem:[%s4907] sm:$0xf]
        %v4909 = vld [vmem:[%s4907 + $0x4] sm:$0xf]
        %v4910 = vld [vmem:[%s4907 + $0x8] sm:$0xf]
        %v4911 = vld [vmem:[%s4907 + $0xc] sm:$0xf]
        %v4912 = vld [vmem:[%s4907 + $0x10] sm:$0xf]
        %v4913 = vld [vmem:[%s4907 + $0x14] sm:$0xf]
        %v4914 = vld [vmem:[%s4907 + $0x18] sm:$0xf]
        %v4915 = vld [vmem:[%s4907 + $0x1c] sm:$0xf]
        %v4916 = vld [vmem:[%s4907 + $0x20] sm:$0xf]
        %v4917 = vld [vmem:[%s4907 + $0x24] sm:$0xf]
        %v4918 = vld [vmem:[%s4907 + $0x28] sm:$0xf]
        %v4919 = vld [vmem:[%s4907 + $0x2c] sm:$0xf]
        %v4920 = vld [vmem:[%s4907 + $0x30] sm:$0xf]
        %v4921 = vld [vmem:[%s4907 + $0x34] sm:$0xf]
        %v4922 = vld [vmem:[%s4907 + $0x38] sm:$0xf]
        %v4923 = vld [vmem:[%s4907 + $0x3c] sm:$0xf]
        %v4924 = vld [vmem:[%s19 + $0xc] sm:$0x1]
        %v4925 = vpack.c.bf16 %v4906, %v4906
        %v4926 = vlaneseq
        %v4927 = vshrl.u32 %v4926, 7
        %v4928 = vsub.s32 0, %v4927
        %v4929 = vrot.slane %v4924, %v4928
        %v4946 = vunpack.c.l.b16 %v4908
        %v4947 = vunpack.c.l.b16 %v4909
        %v4948 = vunpack.c.l.b16 %v4910
        %v4949 = vunpack.c.l.b16 %v4911
        %v4950 = vunpack.c.l.b16 %v4912
        %v4951 = vunpack.c.l.b16 %v4913
        %v4952 = vunpack.c.l.b16 %v4914
        %v4953 = vunpack.c.l.b16 %v4915
        %v4954 = vunpack.c.l.b16 %v4916
        %v4955 = vunpack.c.l.b16 %v4917
        %v4956 = vunpack.c.l.b16 %v4918
        %v4957 = vunpack.c.l.b16 %v4919
        %v4958 = vunpack.c.l.b16 %v4920
        %v4959 = vunpack.c.l.b16 %v4921
        %v4960 = vunpack.c.l.b16 %v4922
        %v4961 = vunpack.c.l.b16 %v4923
        %v4962 = vpack.c.b16 %v4947, %v4946
        %v4963 = vpack.c.b16 %v4949, %v4948
        %v4964 = vpack.c.b16 %v4951, %v4950
        %v4965 = vpack.c.b16 %v4953, %v4952
        %v4966 = vpack.c.b16 %v4955, %v4954
        %v4967 = vpack.c.b16 %v4957, %v4956
        %v4968 = vpack.c.b16 %v4959, %v4958
        %v4969 = vpack.c.b16 %v4961, %v4960
        %4978 = vmatprep.subr.bf16.mxu0 0
        %4979 = vmatpush1.bf16.msra.mxu0 %v4969
        %4980 = vmatprep.subr.bf16.mxu0 0
        %4981 = vmatpush1.bf16.msra.mxu0 %v4968
        %4982 = vmatprep.subr.bf16.mxu0 0
        %4983 = vmatpush1.bf16.msra.mxu0 %v4967
        %4984 = vmatprep.subr.bf16.mxu0 0
        %4985 = vmatpush1.bf16.msra.mxu0 %v4966
        %4986 = vmatprep.subr.bf16.mxu0 0
        %4987 = vmatpush1.bf16.msra.mxu0 %v4965
        %4988 = vmatprep.subr.bf16.mxu0 0
        %4989 = vmatpush1.bf16.msra.mxu0 %v4964
        %4990 = vmatprep.subr.bf16.mxu0 0
        %4991 = vmatpush1.bf16.msra.mxu0 %v4963
        %4992 = vmatprep.subr.bf16.mxu0 0
        %4993 = vmatpush1.bf16.msra.mxu0 %v4962
        %4994 = vmatprep.subr.bf16.mxu0 0
        %4995 = vmatpush2.bf16.msra.mxu0 0
        %4996 = vmatprep.subr.bf16.mxu0 0
        %4997 = vmatpush2.bf16.msra.mxu0 0
        %4998 = vmatprep.subr.bf16.mxu0 0
        %4999 = vmatpush2.bf16.msra.mxu0 0
        %5000 = vmatprep.subr.bf16.mxu0 0
        %5001 = vmatpush2.bf16.msra.mxu0 0
        %5002 = vmatprep.subr.bf16.mxu0 0
        %5003 = vmatpush2.bf16.msra.mxu0 0
        %5004 = vmatprep.subr.bf16.mxu0 0
        %5005 = vmatpush2.bf16.msra.mxu0 0
        %5006 = vmatprep.subr.bf16.mxu0 0
        %5007 = vmatpush2.bf16.msra.mxu0 0
        %5008 = vmatprep.subr.bf16.mxu0 0
        %5009 = vmatpush2.bf16.msra.mxu0 0
        %5010 = vmatprep.mubr.bf16.mxu0 0
        %5011 = vmatmul.mubr.bf16.gmra.mxu0 %v4925
        %v5012 = vpop.f32.mrf.mxu0
        %v5013 = vadd.f32 %v4929, %v5012
        %v5014 = vpop.f32.mrf.mxu0
        %v5015 = vpop.f32.mrf.mxu0
        %v5016 = vpop.f32.mrf.mxu0
        %5017 = vdwg.mxu0
        %s5018 = scalar_lea.vmem [#allocation8], 8
        %v5019 = vld [vmem:[%s5018] sm:$0xf]
        %v5020 = vld [vmem:[%s19 + $0xd] sm:$0x1]
        %v5021 = vpack.c.bf16 %v5013, %v5013
        %v5022 = vmul.f32 %v5013, %v5013
        %v5023 = vpack.c.bf16 %v5022, %v5022
        %v5025 = vsel %vm1799, %v5021, 0
        %5027 = vmatprep.subr.bf16.mxu0 0
        %5028 = vmatpush1.bf16.msra.mxu0 0
        %5029 = vmatprep.subr.bf16.mxu0 0
        %5030 = vmatpush1.bf16.msra.mxu0 0
        %5031 = vmatprep.subr.bf16.mxu0 0
        %5032 = vmatpush1.bf16.msra.mxu0 0
        %5033 = vmatprep.subr.bf16.mxu0 0
        %5034 = vmatpush1.bf16.msra.mxu0 0
        %5035 = vmatprep.subr.bf16.mxu0 0
        %5036 = vmatpush1.bf16.msra.mxu0 0
        %5037 = vmatprep.subr.bf16.mxu0 0
        %5038 = vmatpush1.bf16.msra.mxu0 0
        %5039 = vmatprep.subr.bf16.mxu0 0
        %5040 = vmatpush1.bf16.msra.mxu0 %v2778
        %5041 = vmatprep.subr.bf16.mxu0 0
        %5042 = vmatpush1.bf16.msra.mxu0 %v2777
        %5043 = vmatprep.subr.bf16.mxu0 0
        %5044 = vmatpush2.bf16.msra.mxu0 0
        %5045 = vmatprep.subr.bf16.mxu0 0
        %5046 = vmatpush2.bf16.msra.mxu0 0
        %5047 = vmatprep.subr.bf16.mxu0 0
        %5048 = vmatpush2.bf16.msra.mxu0 0
        %5049 = vmatprep.subr.bf16.mxu0 0
        %5050 = vmatpush2.bf16.msra.mxu0 0
        %5051 = vmatprep.subr.bf16.mxu0 0
        %5052 = vmatpush2.bf16.msra.mxu0 0
        %5053 = vmatprep.subr.bf16.mxu0 0
        %5054 = vmatpush2.bf16.msra.mxu0 0
        %5055 = vmatprep.subr.bf16.mxu0 0
        %5056 = vmatpush2.bf16.msra.mxu0 0
        %5057 = vmatprep.subr.bf16.mxu0 0
        %5058 = vmatpush2.bf16.msra.mxu0 0
        %5059 = vmatprep.mubr.bf16.mxu0 0
        %5060 = vmatmul.mubr.bf16.gmra.mxu0 %v5025
        %v5061 = vpop.f32.mrf.mxu0
        %v5062 = vadd.f32 0.0, %v5061
        %v5063 = vpop.f32.mrf.mxu0
        %v5064 = vpop.f32.mrf.mxu0
        %v5065 = vpop.f32.mrf.mxu0
        %5066 = vdwg.mxu0
        %v5068 = vsel %vm1799, %v5023, 0
        %5070 = vmatprep.subr.bf16.mxu0 0
        %5071 = vmatpush1.bf16.msra.mxu0 0
        %5072 = vmatprep.subr.bf16.mxu0 0
        %5073 = vmatpush1.bf16.msra.mxu0 0
        %5074 = vmatprep.subr.bf16.mxu0 0
        %5075 = vmatpush1.bf16.msra.mxu0 0
        %5076 = vmatprep.subr.bf16.mxu0 0
        %5077 = vmatpush1.bf16.msra.mxu0 0
        %5078 = vmatprep.subr.bf16.mxu0 0
        %5079 = vmatpush1.bf16.msra.mxu0 0
        %5080 = vmatprep.subr.bf16.mxu0 0
        %5081 = vmatpush1.bf16.msra.mxu0 0
        %5082 = vmatprep.subr.bf16.mxu0 0
        %5083 = vmatpush1.bf16.msra.mxu0 %v2778
        %5084 = vmatprep.subr.bf16.mxu0 0
        %5085 = vmatpush1.bf16.msra.mxu0 %v2777
        %5086 = vmatprep.subr.bf16.mxu0 0
        %5087 = vmatpush2.bf16.msra.mxu0 0
        %5088 = vmatprep.subr.bf16.mxu0 0
        %5089 = vmatpush2.bf16.msra.mxu0 0
        %5090 = vmatprep.subr.bf16.mxu0 0
        %5091 = vmatpush2.bf16.msra.mxu0 0
        %5092 = vmatprep.subr.bf16.mxu0 0
        %5093 = vmatpush2.bf16.msra.mxu0 0
        %5094 = vmatprep.subr.bf16.mxu0 0
        %5095 = vmatpush2.bf16.msra.mxu0 0
        %5096 = vmatprep.subr.bf16.mxu0 0
        %5097 = vmatpush2.bf16.msra.mxu0 0
        %5098 = vmatprep.subr.bf16.mxu0 0
        %5099 = vmatpush2.bf16.msra.mxu0 0
        %5100 = vmatprep.subr.bf16.mxu0 0
        %5101 = vmatpush2.bf16.msra.mxu0 0
        %5102 = vmatprep.mubr.bf16.mxu0 0
        %5103 = vmatmul.mubr.bf16.gmra.mxu0 %v5068
        %v5104 = vpop.f32.mrf.mxu0
        %v5105 = vadd.f32 0.0, %v5104
        %v5106 = vpop.f32.mrf.mxu0
        %v5107 = vpop.f32.mrf.mxu0
        %v5108 = vpop.f32.mrf.mxu0
        %5109 = vdwg.mxu0
        %v5110 = vmul.f32 %v5062, %v5062
        %v5111 = vsub.f32 %v5105, %v5110
        %v5112 = vmax.f32 %v5111, 0.0
        %v5113 = vadd.f32 %v5112, 1e-05
        %v5114 = vrsqrt.pop %v5113
        %v5115 = vpack.c.bf16 %v5114, %v5114
        %v5117 = vsel %vm2541, %v5115, 0
        %v5120 = vsel %vm2545, %v5019, 0
        %5122 = vmatprep.subr.bf16.mxu0 0
        %5123 = vmatpush1.bf16.msra.mxu0 0
        %5124 = vmatprep.subr.bf16.mxu0 0
        %5125 = vmatpush1.bf16.msra.mxu0 0
        %5126 = vmatprep.subr.bf16.mxu0 0
        %5127 = vmatpush1.bf16.msra.mxu0 0
        %5128 = vmatprep.subr.bf16.mxu0 0
        %5129 = vmatpush1.bf16.msra.mxu0 0
        %5130 = vmatprep.subr.bf16.mxu0 0
        %5131 = vmatpush1.bf16.msra.mxu0 0
        %5132 = vmatprep.subr.bf16.mxu0 0
        %5133 = vmatpush1.bf16.msra.mxu0 0
        %5134 = vmatprep.subr.bf16.mxu0 0
        %5135 = vmatpush1.bf16.msra.mxu0 0
        %5136 = vmatprep.subr.bf16.mxu0 0
        %5137 = vmatpush1.bf16.msra.mxu0 %v5120
        %5138 = vmatprep.subr.bf16.mxu0 0
        %5139 = vmatpush2.bf16.msra.mxu0 0
        %5140 = vmatprep.subr.bf16.mxu0 0
        %5141 = vmatpush2.bf16.msra.mxu0 0
        %5142 = vmatprep.subr.bf16.mxu0 0
        %5143 = vmatpush2.bf16.msra.mxu0 0
        %5144 = vmatprep.subr.bf16.mxu0 0
        %5145 = vmatpush2.bf16.msra.mxu0 0
        %5146 = vmatprep.subr.bf16.mxu0 0
        %5147 = vmatpush2.bf16.msra.mxu0 0
        %5148 = vmatprep.subr.bf16.mxu0 0
        %5149 = vmatpush2.bf16.msra.mxu0 0
        %5150 = vmatprep.subr.bf16.mxu0 0
        %5151 = vmatpush2.bf16.msra.mxu0 0
        %5152 = vmatprep.subr.bf16.mxu0 0
        %5153 = vmatpush2.bf16.msra.mxu0 0
        %5154 = vmatprep.mubr.bf16.mxu0 0
        %5155 = vmatmul.mubr.bf16.gmra.mxu0 %v5117
        %v5156 = vpop.f32.mrf.mxu0
        %v5157 = vadd.f32 0.0, %v5156
        %v5158 = vpop.f32.mrf.mxu0
        %v5159 = vpop.f32.mrf.mxu0
        %v5160 = vpop.f32.mrf.mxu0
        %5161 = vdwg.mxu0
        %v5162 = vmul.f32 %v5062, %v5114
        %v5163 = vpack.c.bf16 %v5162, %v5162
        %v5165 = vsel %vm2541, %v5163, 0
        %5167 = vmatprep.subr.bf16.mxu0 0
        %5168 = vmatpush1.bf16.msra.mxu0 0
        %5169 = vmatprep.subr.bf16.mxu0 0
        %5170 = vmatpush1.bf16.msra.mxu0 0
        %5171 = vmatprep.subr.bf16.mxu0 0
        %5172 = vmatpush1.bf16.msra.mxu0 0
        %5173 = vmatprep.subr.bf16.mxu0 0
        %5174 = vmatpush1.bf16.msra.mxu0 0
        %5175 = vmatprep.subr.bf16.mxu0 0
        %5176 = vmatpush1.bf16.msra.mxu0 0
        %5177 = vmatprep.subr.bf16.mxu0 0
        %5178 = vmatpush1.bf16.msra.mxu0 0
        %5179 = vmatprep.subr.bf16.mxu0 0
        %5180 = vmatpush1.bf16.msra.mxu0 0
        %5181 = vmatprep.subr.bf16.mxu0 0
        %5182 = vmatpush1.bf16.msra.mxu0 %v5120
        %5183 = vmatprep.subr.bf16.mxu0 0
        %5184 = vmatpush2.bf16.msra.mxu0 0
        %5185 = vmatprep.subr.bf16.mxu0 0
        %5186 = vmatpush2.bf16.msra.mxu0 0
        %5187 = vmatprep.subr.bf16.mxu0 0
        %5188 = vmatpush2.bf16.msra.mxu0 0
        %5189 = vmatprep.subr.bf16.mxu0 0
        %5190 = vmatpush2.bf16.msra.mxu0 0
        %5191 = vmatprep.subr.bf16.mxu0 0
        %5192 = vmatpush2.bf16.msra.mxu0 0
        %5193 = vmatprep.subr.bf16.mxu0 0
        %5194 = vmatpush2.bf16.msra.mxu0 0
        %5195 = vmatprep.subr.bf16.mxu0 0
        %5196 = vmatpush2.bf16.msra.mxu0 0
        %5197 = vmatprep.subr.bf16.mxu0 0
        %5198 = vmatpush2.bf16.msra.mxu0 0
        %5199 = vmatprep.mubr.bf16.mxu0 0
        %5200 = vmatmul.mubr.bf16.gmra.mxu0 %v5165
        %v5201 = vpop.f32.mrf.mxu0
        %v5202 = vadd.f32 0.0, %v5201
        %v5203 = vpop.f32.mrf.mxu0
        %v5204 = vpop.f32.mrf.mxu0
        %v5205 = vpop.f32.mrf.mxu0
        %5206 = vdwg.mxu0
        %v5207 = vlaneseq
        %v5208 = vshrl.u32 %v5207, 7
        %v5209 = vsub.s32 0, %v5208
        %v5210 = vrot.slane %v5020, %v5209
        %v5211 = vsub.f32 %v5210, %v5202
        %v5212 = vmul.f32 %v5013, %v5157
        %v5213 = vadd.f32 %v5212, %v5211
        %v5214 = vmul.f32 %v5213, 0.5
        %v5215 = vmul.f32 %v5213, %v5213
        %v5216 = vmul.f32 %v5215, %v5213
        %v5217 = vmul.f32 %v5216, 0.044715
        %v5218 = vadd.f32 %v5213, %v5217
        %v5219 = vmul.f32 %v5218, 0.7978846
        %v5220 = vtanh.pop %v5219
        %v5221 = vadd.f32 %v5220, 1.0
        %v5222 = vmul.f32 %v5214, %v5221
        %s5223 = scalar_lea.vmem [#allocation11], 32
        %v5224 = vld [vmem:[%s5223] sm:$0xf]
        %v5225 = vld [vmem:[%s5223 + $0x4] sm:$0xf]
        %v5226 = vld [vmem:[%s5223 + $0x8] sm:$0xf]
        %v5227 = vld [vmem:[%s5223 + $0xc] sm:$0xf]
        %v5228 = vld [vmem:[%s19 + $0xe] sm:$0x1]
        %v5229 = vpack.c.bf16 %v5222, %v5222
        %v5230 = vlaneseq
        %v5231 = vshrl.u32 %v5230, 7
        %v5232 = vsub.s32 0, %v5231
        %v5233 = vrot.slane %v5228, %v5232
        %v5238 = vunpack.c.l.b16 %v5224
        %v5239 = vunpack.c.l.b16 %v5225
        %v5240 = vunpack.c.l.b16 %v5226
        %v5241 = vunpack.c.l.b16 %v5227
        %v5242 = vpack.c.b16 %v5239, %v5238
        %v5243 = vpack.c.b16 %v5241, %v5240
        %v5247 = vsel %vm1799, %v5229, 0
        %5249 = vmatprep.subr.bf16.mxu0 0
        %5250 = vmatpush1.bf16.msra.mxu0 0
        %5251 = vmatprep.subr.bf16.mxu0 0
        %5252 = vmatpush1.bf16.msra.mxu0 0
        %5253 = vmatprep.subr.bf16.mxu0 0
        %5254 = vmatpush1.bf16.msra.mxu0 0
        %5255 = vmatprep.subr.bf16.mxu0 0
        %5256 = vmatpush1.bf16.msra.mxu0 0
        %5257 = vmatprep.subr.bf16.mxu0 0
        %5258 = vmatpush1.bf16.msra.mxu0 0
        %5259 = vmatprep.subr.bf16.mxu0 0
        %5260 = vmatpush1.bf16.msra.mxu0 0
        %5261 = vmatprep.subr.bf16.mxu0 0
        %5262 = vmatpush1.bf16.msra.mxu0 %v5243
        %5263 = vmatprep.subr.bf16.mxu0 0
        %5264 = vmatpush1.bf16.msra.mxu0 %v5242
        %5265 = vmatprep.subr.bf16.mxu0 0
        %5266 = vmatpush2.bf16.msra.mxu0 0
        %5267 = vmatprep.subr.bf16.mxu0 0
        %5268 = vmatpush2.bf16.msra.mxu0 0
        %5269 = vmatprep.subr.bf16.mxu0 0
        %5270 = vmatpush2.bf16.msra.mxu0 0
        %5271 = vmatprep.subr.bf16.mxu0 0
        %5272 = vmatpush2.bf16.msra.mxu0 0
        %5273 = vmatprep.subr.bf16.mxu0 0
        %5274 = vmatpush2.bf16.msra.mxu0 0
        %5275 = vmatprep.subr.bf16.mxu0 0
        %5276 = vmatpush2.bf16.msra.mxu0 0
        %5277 = vmatprep.subr.bf16.mxu0 0
        %5278 = vmatpush2.bf16.msra.mxu0 0
        %5279 = vmatprep.subr.bf16.mxu0 0
        %5280 = vmatpush2.bf16.msra.mxu0 0
        %5281 = vmatprep.mubr.bf16.mxu0 0
        %5282 = vmatmul.mubr.bf16.gmra.mxu0 %v5247
        %v5283 = vpop.f32.mrf.mxu0
        %v5284 = vadd.f32 %v5233, %v5283
        %v5285 = vpop.f32.mrf.mxu0
        %v5286 = vpop.f32.mrf.mxu0
        %v5287 = vpop.f32.mrf.mxu0
        %5288 = vdwg.mxu0
        %s5289 = scalar_lea.vmem [#allocation10], 8
        %v5290 = vld [vmem:[%s5289] sm:$0xf]
        %v5291 = vld [vmem:[%s19 + $0xf] sm:$0x1]
        %v5292 = vpack.c.bf16 %v5284, %v5284
        %v5293 = vmul.f32 %v5284, %v5284
        %v5294 = vpack.c.bf16 %v5293, %v5293
        %v5296 = vsel %vm1799, %v5292, 0
        %5298 = vmatprep.subr.bf16.mxu0 0
        %5299 = vmatpush1.bf16.msra.mxu0 0
        %5300 = vmatprep.subr.bf16.mxu0 0
        %5301 = vmatpush1.bf16.msra.mxu0 0
        %5302 = vmatprep.subr.bf16.mxu0 0
        %5303 = vmatpush1.bf16.msra.mxu0 0
        %5304 = vmatprep.subr.bf16.mxu0 0
        %5305 = vmatpush1.bf16.msra.mxu0 0
        %5306 = vmatprep.subr.bf16.mxu0 0
        %5307 = vmatpush1.bf16.msra.mxu0 0
        %5308 = vmatprep.subr.bf16.mxu0 0
        %5309 = vmatpush1.bf16.msra.mxu0 0
        %5310 = vmatprep.subr.bf16.mxu0 0
        %5311 = vmatpush1.bf16.msra.mxu0 %v2778
        %5312 = vmatprep.subr.bf16.mxu0 0
        %5313 = vmatpush1.bf16.msra.mxu0 %v2777
        %5314 = vmatprep.subr.bf16.mxu0 0
        %5315 = vmatpush2.bf16.msra.mxu0 0
        %5316 = vmatprep.subr.bf16.mxu0 0
        %5317 = vmatpush2.bf16.msra.mxu0 0
        %5318 = vmatprep.subr.bf16.mxu0 0
        %5319 = vmatpush2.bf16.msra.mxu0 0
        %5320 = vmatprep.subr.bf16.mxu0 0
        %5321 = vmatpush2.bf16.msra.mxu0 0
        %5322 = vmatprep.subr.bf16.mxu0 0
        %5323 = vmatpush2.bf16.msra.mxu0 0
        %5324 = vmatprep.subr.bf16.mxu0 0
        %5325 = vmatpush2.bf16.msra.mxu0 0
        %5326 = vmatprep.subr.bf16.mxu0 0
        %5327 = vmatpush2.bf16.msra.mxu0 0
        %5328 = vmatprep.subr.bf16.mxu0 0
        %5329 = vmatpush2.bf16.msra.mxu0 0
        %5330 = vmatprep.mubr.bf16.mxu0 0
        %5331 = vmatmul.mubr.bf16.gmra.mxu0 %v5296
        %v5332 = vpop.f32.mrf.mxu0
        %v5333 = vadd.f32 0.0, %v5332
        %v5334 = vpop.f32.mrf.mxu0
        %v5335 = vpop.f32.mrf.mxu0
        %v5336 = vpop.f32.mrf.mxu0
        %5337 = vdwg.mxu0
        %v5339 = vsel %vm1799, %v5294, 0
        %5341 = vmatprep.subr.bf16.mxu0 0
        %5342 = vmatpush1.bf16.msra.mxu0 0
        %5343 = vmatprep.subr.bf16.mxu0 0
        %5344 = vmatpush1.bf16.msra.mxu0 0
        %5345 = vmatprep.subr.bf16.mxu0 0
        %5346 = vmatpush1.bf16.msra.mxu0 0
        %5347 = vmatprep.subr.bf16.mxu0 0
        %5348 = vmatpush1.bf16.msra.mxu0 0
        %5349 = vmatprep.subr.bf16.mxu0 0
        %5350 = vmatpush1.bf16.msra.mxu0 0
        %5351 = vmatprep.subr.bf16.mxu0 0
        %5352 = vmatpush1.bf16.msra.mxu0 0
        %5353 = vmatprep.subr.bf16.mxu0 0
        %5354 = vmatpush1.bf16.msra.mxu0 %v2778
        %5355 = vmatprep.subr.bf16.mxu0 0
        %5356 = vmatpush1.bf16.msra.mxu0 %v2777
        %5357 = vmatprep.subr.bf16.mxu0 0
        %5358 = vmatpush2.bf16.msra.mxu0 0
        %5359 = vmatprep.subr.bf16.mxu0 0
        %5360 = vmatpush2.bf16.msra.mxu0 0
        %5361 = vmatprep.subr.bf16.mxu0 0
        %5362 = vmatpush2.bf16.msra.mxu0 0
        %5363 = vmatprep.subr.bf16.mxu0 0
        %5364 = vmatpush2.bf16.msra.mxu0 0
        %5365 = vmatprep.subr.bf16.mxu0 0
        %5366 = vmatpush2.bf16.msra.mxu0 0
        %5367 = vmatprep.subr.bf16.mxu0 0
        %5368 = vmatpush2.bf16.msra.mxu0 0
        %5369 = vmatprep.subr.bf16.mxu0 0
        %5370 = vmatpush2.bf16.msra.mxu0 0
        %5371 = vmatprep.subr.bf16.mxu0 0
        %5372 = vmatpush2.bf16.msra.mxu0 0
        %5373 = vmatprep.mubr.bf16.mxu0 0
        %5374 = vmatmul.mubr.bf16.gmra.mxu0 %v5339
        %v5375 = vpop.f32.mrf.mxu0
        %v5376 = vadd.f32 0.0, %v5375
        %v5377 = vpop.f32.mrf.mxu0
        %v5378 = vpop.f32.mrf.mxu0
        %v5379 = vpop.f32.mrf.mxu0
        %5380 = vdwg.mxu0
        %v5381 = vmul.f32 %v5333, %v5333
        %v5382 = vsub.f32 %v5376, %v5381
        %v5383 = vmax.f32 %v5382, 0.0
        %v5384 = vadd.f32 %v5383, 1e-05
        %v5385 = vrsqrt.pop %v5384
        %v5386 = vpack.c.bf16 %v5385, %v5385
        %v5388 = vsel %vm2541, %v5386, 0
        %v5391 = vsel %vm2545, %v5290, 0
        %5393 = vmatprep.subr.bf16.mxu0 0
        %5394 = vmatpush1.bf16.msra.mxu0 0
        %5395 = vmatprep.subr.bf16.mxu0 0
        %5396 = vmatpush1.bf16.msra.mxu0 0
        %5397 = vmatprep.subr.bf16.mxu0 0
        %5398 = vmatpush1.bf16.msra.mxu0 0
        %5399 = vmatprep.subr.bf16.mxu0 0
        %5400 = vmatpush1.bf16.msra.mxu0 0
        %5401 = vmatprep.subr.bf16.mxu0 0
        %5402 = vmatpush1.bf16.msra.mxu0 0
        %5403 = vmatprep.subr.bf16.mxu0 0
        %5404 = vmatpush1.bf16.msra.mxu0 0
        %5405 = vmatprep.subr.bf16.mxu0 0
        %5406 = vmatpush1.bf16.msra.mxu0 0
        %5407 = vmatprep.subr.bf16.mxu0 0
        %5408 = vmatpush1.bf16.msra.mxu0 %v5391
        %5409 = vmatprep.subr.bf16.mxu0 0
        %5410 = vmatpush2.bf16.msra.mxu0 0
        %5411 = vmatprep.subr.bf16.mxu0 0
        %5412 = vmatpush2.bf16.msra.mxu0 0
        %5413 = vmatprep.subr.bf16.mxu0 0
        %5414 = vmatpush2.bf16.msra.mxu0 0
        %5415 = vmatprep.subr.bf16.mxu0 0
        %5416 = vmatpush2.bf16.msra.mxu0 0
        %5417 = vmatprep.subr.bf16.mxu0 0
        %5418 = vmatpush2.bf16.msra.mxu0 0
        %5419 = vmatprep.subr.bf16.mxu0 0
        %5420 = vmatpush2.bf16.msra.mxu0 0
        %5421 = vmatprep.subr.bf16.mxu0 0
        %5422 = vmatpush2.bf16.msra.mxu0 0
        %5423 = vmatprep.subr.bf16.mxu0 0
        %5424 = vmatpush2.bf16.msra.mxu0 0
        %5425 = vmatprep.mubr.bf16.mxu0 0
        %5426 = vmatmul.mubr.bf16.gmra.mxu0 %v5388
        %v5427 = vpop.f32.mrf.mxu0
        %v5428 = vadd.f32 0.0, %v5427
        %v5429 = vpop.f32.mrf.mxu0
        %v5430 = vpop.f32.mrf.mxu0
        %v5431 = vpop.f32.mrf.mxu0
        %5432 = vdwg.mxu0
        %v5433 = vmul.f32 %v5333, %v5385
        %v5434 = vpack.c.bf16 %v5433, %v5433
        %v5436 = vsel %vm2541, %v5434, 0
        %5438 = vmatprep.subr.bf16.mxu0 0
        %5439 = vmatpush1.bf16.msra.mxu0 0
        %5440 = vmatprep.subr.bf16.mxu0 0
        %5441 = vmatpush1.bf16.msra.mxu0 0
        %5442 = vmatprep.subr.bf16.mxu0 0
        %5443 = vmatpush1.bf16.msra.mxu0 0
        %5444 = vmatprep.subr.bf16.mxu0 0
        %5445 = vmatpush1.bf16.msra.mxu0 0
        %5446 = vmatprep.subr.bf16.mxu0 0
        %5447 = vmatpush1.bf16.msra.mxu0 0
        %5448 = vmatprep.subr.bf16.mxu0 0
        %5449 = vmatpush1.bf16.msra.mxu0 0
        %5450 = vmatprep.subr.bf16.mxu0 0
        %5451 = vmatpush1.bf16.msra.mxu0 0
        %5452 = vmatprep.subr.bf16.mxu0 0
        %5453 = vmatpush1.bf16.msra.mxu0 %v5391
        %5454 = vmatprep.subr.bf16.mxu0 0
        %5455 = vmatpush2.bf16.msra.mxu0 0
        %5456 = vmatprep.subr.bf16.mxu0 0
        %5457 = vmatpush2.bf16.msra.mxu0 0
        %5458 = vmatprep.subr.bf16.mxu0 0
        %5459 = vmatpush2.bf16.msra.mxu0 0
        %5460 = vmatprep.subr.bf16.mxu0 0
        %5461 = vmatpush2.bf16.msra.mxu0 0
        %5462 = vmatprep.subr.bf16.mxu0 0
        %5463 = vmatpush2.bf16.msra.mxu0 0
        %5464 = vmatprep.subr.bf16.mxu0 0
        %5465 = vmatpush2.bf16.msra.mxu0 0
        %5466 = vmatprep.subr.bf16.mxu0 0
        %5467 = vmatpush2.bf16.msra.mxu0 0
        %5468 = vmatprep.subr.bf16.mxu0 0
        %5469 = vmatpush2.bf16.msra.mxu0 0
        %5470 = vmatprep.mubr.bf16.mxu0 0
        %5471 = vmatmul.mubr.bf16.gmra.mxu0 %v5436
        %v5472 = vpop.f32.mrf.mxu0
        %v5473 = vadd.f32 0.0, %v5472
        %v5474 = vpop.f32.mrf.mxu0
        %v5475 = vpop.f32.mrf.mxu0
        %v5476 = vpop.f32.mrf.mxu0
        %5477 = vdwg.mxu0
        %v5478 = vlaneseq
        %v5479 = vshrl.u32 %v5478, 7
        %v5480 = vsub.s32 0, %v5479
        %v5481 = vrot.slane %v5291, %v5480
        %v5482 = vsub.f32 %v5481, %v5473
        %v5483 = vmul.f32 %v5284, %v5428
        %v5484 = vadd.f32 %v5483, %v5482
        %v5485 = vmul.f32 %v5484, 0.5
        %v5486 = vmul.f32 %v5484, %v5484
        %v5487 = vmul.f32 %v5486, %v5484
        %v5488 = vmul.f32 %v5487, 0.044715
        %v5489 = vadd.f32 %v5484, %v5488
        %v5490 = vmul.f32 %v5489, 0.7978846
        %v5491 = vtanh.pop %v5490
        %v5492 = vadd.f32 %v5491, 1.0
        %v5493 = vmul.f32 %v5485, %v5492
        %s5494 = scalar_lea.vmem [#allocation13], 32
        %v5495 = vld [vmem:[%s5494] sm:$0xf]
        %v5496 = vld [vmem:[%s5494 + $0x4] sm:$0xf]
        %v5497 = vld [vmem:[%s5494 + $0x8] sm:$0xf]
        %v5498 = vld [vmem:[%s5494 + $0xc] sm:$0xf]
        %v5499 = vld [vmem:[%s19 + $0x10] sm:$0x1]
        %v5500 = vpack.c.bf16 %v5493, %v5493
        %v5501 = vlaneseq
        %v5502 = vshrl.u32 %v5501, 7
        %v5503 = vsub.s32 0, %v5502
        %v5504 = vrot.slane %v5499, %v5503
        %v5509 = vunpack.c.l.b16 %v5495
        %v5510 = vunpack.c.l.b16 %v5496
        %v5511 = vunpack.c.l.b16 %v5497
        %v5512 = vunpack.c.l.b16 %v5498
        %v5513 = vpack.c.b16 %v5510, %v5509
        %v5514 = vpack.c.b16 %v5512, %v5511
        %v5518 = vsel %vm1799, %v5500, 0
        %5520 = vmatprep.subr.bf16.mxu0 0
        %5521 = vmatpush1.bf16.msra.mxu0 0
        %5522 = vmatprep.subr.bf16.mxu0 0
        %5523 = vmatpush1.bf16.msra.mxu0 0
        %5524 = vmatprep.subr.bf16.mxu0 0
        %5525 = vmatpush1.bf16.msra.mxu0 0
        %5526 = vmatprep.subr.bf16.mxu0 0
        %5527 = vmatpush1.bf16.msra.mxu0 0
        %5528 = vmatprep.subr.bf16.mxu0 0
        %5529 = vmatpush1.bf16.msra.mxu0 0
        %5530 = vmatprep.subr.bf16.mxu0 0
        %5531 = vmatpush1.bf16.msra.mxu0 0
        %5532 = vmatprep.subr.bf16.mxu0 0
        %5533 = vmatpush1.bf16.msra.mxu0 %v5514
        %5534 = vmatprep.subr.bf16.mxu0 0
        %5535 = vmatpush1.bf16.msra.mxu0 %v5513
        %5536 = vmatprep.subr.bf16.mxu0 0
        %5537 = vmatpush2.bf16.msra.mxu0 0
        %5538 = vmatprep.subr.bf16.mxu0 0
        %5539 = vmatpush2.bf16.msra.mxu0 0
        %5540 = vmatprep.subr.bf16.mxu0 0
        %5541 = vmatpush2.bf16.msra.mxu0 0
        %5542 = vmatprep.subr.bf16.mxu0 0
        %5543 = vmatpush2.bf16.msra.mxu0 0
        %5544 = vmatprep.subr.bf16.mxu0 0
        %5545 = vmatpush2.bf16.msra.mxu0 0
        %5546 = vmatprep.subr.bf16.mxu0 0
        %5547 = vmatpush2.bf16.msra.mxu0 0
        %5548 = vmatprep.subr.bf16.mxu0 0
        %5549 = vmatpush2.bf16.msra.mxu0 0
        %5550 = vmatprep.subr.bf16.mxu0 0
        %5551 = vmatpush2.bf16.msra.mxu0 0
        %5552 = vmatprep.mubr.bf16.mxu0 0
        %5553 = vmatmul.mubr.bf16.gmra.mxu0 %v5518
        %v5554 = vpop.f32.mrf.mxu0
        %v5555 = vadd.f32 %v5504, %v5554
        %v5556 = vpop.f32.mrf.mxu0
        %v5557 = vpop.f32.mrf.mxu0
        %v5558 = vpop.f32.mrf.mxu0
        %5559 = vdwg.mxu0
        %s5560 = scalar_lea.vmem %s10, 8
        %v5561 = vld [vmem:[%s5560] sm:$0xf]
        %v5562 = vld [vmem:[%s19 + $0x11] sm:$0x1]
        %v5563 = vpack.c.bf16 %v5555, %v5555
        %v5564 = vmul.f32 %v5555, %v5555
        %v5565 = vpack.c.bf16 %v5564, %v5564
        %v5567 = vsel %vm1799, %v5563, 0
        %5569 = vmatprep.subr.bf16.mxu0 0
        %5570 = vmatpush1.bf16.msra.mxu0 0
        %5571 = vmatprep.subr.bf16.mxu0 0
        %5572 = vmatpush1.bf16.msra.mxu0 0
        %5573 = vmatprep.subr.bf16.mxu0 0
        %5574 = vmatpush1.bf16.msra.mxu0 0
        %5575 = vmatprep.subr.bf16.mxu0 0
        %5576 = vmatpush1.bf16.msra.mxu0 0
        %5577 = vmatprep.subr.bf16.mxu0 0
        %5578 = vmatpush1.bf16.msra.mxu0 0
        %5579 = vmatprep.subr.bf16.mxu0 0
        %5580 = vmatpush1.bf16.msra.mxu0 0
        %5581 = vmatprep.subr.bf16.mxu0 0
        %5582 = vmatpush1.bf16.msra.mxu0 %v2778
        %5583 = vmatprep.subr.bf16.mxu0 0
        %5584 = vmatpush1.bf16.msra.mxu0 %v2777
        %5585 = vmatprep.subr.bf16.mxu0 0
        %5586 = vmatpush2.bf16.msra.mxu0 0
        %5587 = vmatprep.subr.bf16.mxu0 0
        %5588 = vmatpush2.bf16.msra.mxu0 0
        %5589 = vmatprep.subr.bf16.mxu0 0
        %5590 = vmatpush2.bf16.msra.mxu0 0
        %5591 = vmatprep.subr.bf16.mxu0 0
        %5592 = vmatpush2.bf16.msra.mxu0 0
        %5593 = vmatprep.subr.bf16.mxu0 0
        %5594 = vmatpush2.bf16.msra.mxu0 0
        %5595 = vmatprep.subr.bf16.mxu0 0
        %5596 = vmatpush2.bf16.msra.mxu0 0
        %5597 = vmatprep.subr.bf16.mxu0 0
        %5598 = vmatpush2.bf16.msra.mxu0 0
        %5599 = vmatprep.subr.bf16.mxu0 0
        %5600 = vmatpush2.bf16.msra.mxu0 0
        %5601 = vmatprep.mubr.bf16.mxu0 0
        %5602 = vmatmul.mubr.bf16.gmra.mxu0 %v5567
        %v5603 = vpop.f32.mrf.mxu0
        %v5604 = vadd.f32 0.0, %v5603
        %v5605 = vpop.f32.mrf.mxu0
        %v5606 = vpop.f32.mrf.mxu0
        %v5607 = vpop.f32.mrf.mxu0
        %5608 = vdwg.mxu0
        %v5610 = vsel %vm1799, %v5565, 0
        %5612 = vmatprep.subr.bf16.mxu0 0
        %5613 = vmatpush1.bf16.msra.mxu0 0
        %5614 = vmatprep.subr.bf16.mxu0 0
        %5615 = vmatpush1.bf16.msra.mxu0 0
        %5616 = vmatprep.subr.bf16.mxu0 0
        %5617 = vmatpush1.bf16.msra.mxu0 0
        %5618 = vmatprep.subr.bf16.mxu0 0
        %5619 = vmatpush1.bf16.msra.mxu0 0
        %5620 = vmatprep.subr.bf16.mxu0 0
        %5621 = vmatpush1.bf16.msra.mxu0 0
        %5622 = vmatprep.subr.bf16.mxu0 0
        %5623 = vmatpush1.bf16.msra.mxu0 0
        %5624 = vmatprep.subr.bf16.mxu0 0
        %5625 = vmatpush1.bf16.msra.mxu0 %v2778
        %5626 = vmatprep.subr.bf16.mxu0 0
        %5627 = vmatpush1.bf16.msra.mxu0 %v2777
        %5628 = vmatprep.subr.bf16.mxu0 0
        %5629 = vmatpush2.bf16.msra.mxu0 0
        %5630 = vmatprep.subr.bf16.mxu0 0
        %5631 = vmatpush2.bf16.msra.mxu0 0
        %5632 = vmatprep.subr.bf16.mxu0 0
        %5633 = vmatpush2.bf16.msra.mxu0 0
        %5634 = vmatprep.subr.bf16.mxu0 0
        %5635 = vmatpush2.bf16.msra.mxu0 0
        %5636 = vmatprep.subr.bf16.mxu0 0
        %5637 = vmatpush2.bf16.msra.mxu0 0
        %5638 = vmatprep.subr.bf16.mxu0 0
        %5639 = vmatpush2.bf16.msra.mxu0 0
        %5640 = vmatprep.subr.bf16.mxu0 0
        %5641 = vmatpush2.bf16.msra.mxu0 0
        %5642 = vmatprep.subr.bf16.mxu0 0
        %5643 = vmatpush2.bf16.msra.mxu0 0
        %5644 = vmatprep.mubr.bf16.mxu0 0
        %5645 = vmatmul.mubr.bf16.gmra.mxu0 %v5610
        %v5646 = vpop.f32.mrf.mxu0
        %v5647 = vadd.f32 0.0, %v5646
        %v5648 = vpop.f32.mrf.mxu0
        %v5649 = vpop.f32.mrf.mxu0
        %v5650 = vpop.f32.mrf.mxu0
        %5651 = vdwg.mxu0
        %v5652 = vmul.f32 %v5604, %v5604
        %v5653 = vsub.f32 %v5647, %v5652
        %v5654 = vmax.f32 %v5653, 0.0
        %v5655 = vadd.f32 %v5654, 1e-05
        %v5656 = vrsqrt.pop %v5655
        %v5657 = vpack.c.bf16 %v5656, %v5656
        %v5659 = vsel %vm2541, %v5657, 0
        %v5662 = vsel %vm2545, %v5561, 0
        %5664 = vmatprep.subr.bf16.mxu0 0
        %5665 = vmatpush1.bf16.msra.mxu0 0
        %5666 = vmatprep.subr.bf16.mxu0 0
        %5667 = vmatpush1.bf16.msra.mxu0 0
        %5668 = vmatprep.subr.bf16.mxu0 0
        %5669 = vmatpush1.bf16.msra.mxu0 0
        %5670 = vmatprep.subr.bf16.mxu0 0
        %5671 = vmatpush1.bf16.msra.mxu0 0
        %5672 = vmatprep.subr.bf16.mxu0 0
        %5673 = vmatpush1.bf16.msra.mxu0 0
        %5674 = vmatprep.subr.bf16.mxu0 0
        %5675 = vmatpush1.bf16.msra.mxu0 0
        %5676 = vmatprep.subr.bf16.mxu0 0
        %5677 = vmatpush1.bf16.msra.mxu0 0
        %5678 = vmatprep.subr.bf16.mxu0 0
        %5679 = vmatpush1.bf16.msra.mxu0 %v5662
        %5680 = vmatprep.subr.bf16.mxu0 0
        %5681 = vmatpush2.bf16.msra.mxu0 0
        %5682 = vmatprep.subr.bf16.mxu0 0
        %5683 = vmatpush2.bf16.msra.mxu0 0
        %5684 = vmatprep.subr.bf16.mxu0 0
        %5685 = vmatpush2.bf16.msra.mxu0 0
        %5686 = vmatprep.subr.bf16.mxu0 0
        %5687 = vmatpush2.bf16.msra.mxu0 0
        %5688 = vmatprep.subr.bf16.mxu0 0
        %5689 = vmatpush2.bf16.msra.mxu0 0
        %5690 = vmatprep.subr.bf16.mxu0 0
        %5691 = vmatpush2.bf16.msra.mxu0 0
        %5692 = vmatprep.subr.bf16.mxu0 0
        %5693 = vmatpush2.bf16.msra.mxu0 0
        %5694 = vmatprep.subr.bf16.mxu0 0
        %5695 = vmatpush2.bf16.msra.mxu0 0
        %5696 = vmatprep.mubr.bf16.mxu0 0
        %5697 = vmatmul.mubr.bf16.gmra.mxu0 %v5659
        %v5698 = vpop.f32.mrf.mxu0
        %v5699 = vadd.f32 0.0, %v5698
        %v5700 = vpop.f32.mrf.mxu0
        %v5701 = vpop.f32.mrf.mxu0
        %v5702 = vpop.f32.mrf.mxu0
        %5703 = vdwg.mxu0
        %v5704 = vmul.f32 %v5604, %v5656
        %v5705 = vpack.c.bf16 %v5704, %v5704
        %v5707 = vsel %vm2541, %v5705, 0
        %5709 = vmatprep.subr.bf16.mxu0 0
        %5710 = vmatpush1.bf16.msra.mxu0 0
        %5711 = vmatprep.subr.bf16.mxu0 0
        %5712 = vmatpush1.bf16.msra.mxu0 0
        %5713 = vmatprep.subr.bf16.mxu0 0
        %5714 = vmatpush1.bf16.msra.mxu0 0
        %5715 = vmatprep.subr.bf16.mxu0 0
        %5716 = vmatpush1.bf16.msra.mxu0 0
        %5717 = vmatprep.subr.bf16.mxu0 0
        %5718 = vmatpush1.bf16.msra.mxu0 0
        %5719 = vmatprep.subr.bf16.mxu0 0
        %5720 = vmatpush1.bf16.msra.mxu0 0
        %5721 = vmatprep.subr.bf16.mxu0 0
        %5722 = vmatpush1.bf16.msra.mxu0 0
        %5723 = vmatprep.subr.bf16.mxu0 0
        %5724 = vmatpush1.bf16.msra.mxu0 %v5662
        %5725 = vmatprep.subr.bf16.mxu0 0
        %5726 = vmatpush2.bf16.msra.mxu0 0
        %5727 = vmatprep.subr.bf16.mxu0 0
        %5728 = vmatpush2.bf16.msra.mxu0 0
        %5729 = vmatprep.subr.bf16.mxu0 0
        %5730 = vmatpush2.bf16.msra.mxu0 0
        %5731 = vmatprep.subr.bf16.mxu0 0
        %5732 = vmatpush2.bf16.msra.mxu0 0
        %5733 = vmatprep.subr.bf16.mxu0 0
        %5734 = vmatpush2.bf16.msra.mxu0 0
        %5735 = vmatprep.subr.bf16.mxu0 0
        %5736 = vmatpush2.bf16.msra.mxu0 0
        %5737 = vmatprep.subr.bf16.mxu0 0
        %5738 = vmatpush2.bf16.msra.mxu0 0
        %5739 = vmatprep.subr.bf16.mxu0 0
        %5740 = vmatpush2.bf16.msra.mxu0 0
        %5741 = vmatprep.mubr.bf16.mxu0 0
        %5742 = vmatmul.mubr.bf16.gmra.mxu0 %v5707
        %v5743 = vpop.f32.mrf.mxu0
        %v5744 = vadd.f32 0.0, %v5743
        %v5745 = vpop.f32.mrf.mxu0
        %v5746 = vpop.f32.mrf.mxu0
        %v5747 = vpop.f32.mrf.mxu0
        %5748 = vdwg.mxu0
        %v5749 = vlaneseq
        %v5750 = vshrl.u32 %v5749, 7
        %v5751 = vsub.s32 0, %v5750
        %v5752 = vrot.slane %v5562, %v5751
        %v5753 = vsub.f32 %v5752, %v5744
        %v5754 = vmul.f32 %v5555, %v5699
        %v5755 = vadd.f32 %v5754, %v5753
        %v5756 = vmul.f32 %v5755, 0.5
        %v5757 = vmul.f32 %v5755, %v5755
        %v5758 = vmul.f32 %v5757, %v5755
        %v5759 = vmul.f32 %v5758, 0.044715
        %v5760 = vadd.f32 %v5755, %v5759
        %v5761 = vmul.f32 %v5760, 0.7978846
        %v5762 = vtanh.pop %v5761
        %v5763 = vadd.f32 %v5762, 1.0
        %v5764 = vmul.f32 %v5756, %v5763
        %s5765 = scalar_lea.vmem [#allocation14], 32
        %v5766 = vld [vmem:[%s5765] sm:$0xf]
        %v5767 = vld [vmem:[%s5765 + $0x4] sm:$0xf]
        %v5768 = vld [vmem:[%s5765 + $0x8] sm:$0xf]
        %v5769 = vld [vmem:[%s5765 + $0xc] sm:$0xf]
        %v5770 = vld [vmem:[#allocation19 + $0x7] sm:$0x1]
        %v5771 = vpack.c.bf16 %v5764, %v5764
        %v5772 = vlaneseq
        %v5773 = vshrl.u32 %v5772, 7
        %v5774 = vsub.s32 0, %v5773
        %v5775 = vrot.slane %v5770, %v5774
        %v5780 = vunpack.c.l.b16 %v5766
        %v5781 = vunpack.c.l.b16 %v5767
        %v5782 = vunpack.c.l.b16 %v5768
        %v5783 = vunpack.c.l.b16 %v5769
        %v5784 = vpack.c.b16 %v5781, %v5780
        %v5785 = vpack.c.b16 %v5783, %v5782
        %v5789 = vsel %vm1799, %v5771, 0
        %5791 = vmatprep.subr.bf16.mxu0 0
        %5792 = vmatpush1.bf16.msra.mxu0 0
        %5793 = vmatprep.subr.bf16.mxu0 0
        %5794 = vmatpush1.bf16.msra.mxu0 0
        %5795 = vmatprep.subr.bf16.mxu0 0
        %5796 = vmatpush1.bf16.msra.mxu0 0
        %5797 = vmatprep.subr.bf16.mxu0 0
        %5798 = vmatpush1.bf16.msra.mxu0 0
        %5799 = vmatprep.subr.bf16.mxu0 0
        %5800 = vmatpush1.bf16.msra.mxu0 0
        %5801 = vmatprep.subr.bf16.mxu0 0
        %5802 = vmatpush1.bf16.msra.mxu0 0
        %5803 = vmatprep.subr.bf16.mxu0 0
        %5804 = vmatpush1.bf16.msra.mxu0 %v5785
        %5805 = vmatprep.subr.bf16.mxu0 0
        %5806 = vmatpush1.bf16.msra.mxu0 %v5784
        %5807 = vmatprep.subr.bf16.mxu0 0
        %5808 = vmatpush2.bf16.msra.mxu0 0
        %5809 = vmatprep.subr.bf16.mxu0 0
        %5810 = vmatpush2.bf16.msra.mxu0 0
        %5811 = vmatprep.subr.bf16.mxu0 0
        %5812 = vmatpush2.bf16.msra.mxu0 0
        %5813 = vmatprep.subr.bf16.mxu0 0
        %5814 = vmatpush2.bf16.msra.mxu0 0
        %5815 = vmatprep.subr.bf16.mxu0 0
        %5816 = vmatpush2.bf16.msra.mxu0 0
        %5817 = vmatprep.subr.bf16.mxu0 0
        %5818 = vmatpush2.bf16.msra.mxu0 0
        %5819 = vmatprep.subr.bf16.mxu0 0
        %5820 = vmatpush2.bf16.msra.mxu0 0
        %5821 = vmatprep.subr.bf16.mxu0 0
        %5822 = vmatpush2.bf16.msra.mxu0 0
        %5823 = vmatprep.mubr.bf16.mxu0 0
        %5824 = vmatmul.mubr.bf16.gmra.mxu0 %v5789
        %v5825 = vpop.f32.mrf.mxu0
        %v5826 = vadd.f32 %v5775, %v5825
        %v5827 = vpop.f32.mrf.mxu0
        %v5828 = vpop.f32.mrf.mxu0
        %v5829 = vpop.f32.mrf.mxu0
        %5830 = vdwg.mxu0
        %v5831 = vadd.f32 %v4707, %v5826
        %s5832 = scalar_lea.vmem [#allocation7], 12
        %v5833 = vld [vmem:[%s5832] sm:$0xf]
        %v5834 = vld [vmem:[#allocation19 + $0x4] sm:$0x1]
        %v5835 = vpack.c.bf16 %v5831, %v5831
        %v5836 = vmul.f32 %v5831, %v5831
        %v5837 = vpack.c.bf16 %v5836, %v5836
        %5838 = vmatprep.subr.bf16.mxu0 0
        %5839 = vmatpush1.bf16.msra.mxu0 %v2446
        %5840 = vmatprep.subr.bf16.mxu0 0
        %5841 = vmatpush1.bf16.msra.mxu0 %v2445
        %5842 = vmatprep.subr.bf16.mxu0 0
        %5843 = vmatpush1.bf16.msra.mxu0 %v2444
        %5844 = vmatprep.subr.bf16.mxu0 0
        %5845 = vmatpush1.bf16.msra.mxu0 %v2443
        %5846 = vmatprep.subr.bf16.mxu0 0
        %5847 = vmatpush1.bf16.msra.mxu0 %v2442
        %5848 = vmatprep.subr.bf16.mxu0 0
        %5849 = vmatpush1.bf16.msra.mxu0 %v2441
        %5850 = vmatprep.subr.bf16.mxu0 0
        %5851 = vmatpush1.bf16.msra.mxu0 %v2440
        %5852 = vmatprep.subr.bf16.mxu0 0
        %5853 = vmatpush1.bf16.msra.mxu0 %v2439
        %5854 = vmatprep.subr.bf16.mxu0 0
        %5855 = vmatpush2.bf16.msra.mxu0 0
        %5856 = vmatprep.subr.bf16.mxu0 0
        %5857 = vmatpush2.bf16.msra.mxu0 0
        %5858 = vmatprep.subr.bf16.mxu0 0
        %5859 = vmatpush2.bf16.msra.mxu0 0
        %5860 = vmatprep.subr.bf16.mxu0 0
        %5861 = vmatpush2.bf16.msra.mxu0 0
        %5862 = vmatprep.subr.bf16.mxu0 0
        %5863 = vmatpush2.bf16.msra.mxu0 0
        %5864 = vmatprep.subr.bf16.mxu0 0
        %5865 = vmatpush2.bf16.msra.mxu0 0
        %5866 = vmatprep.subr.bf16.mxu0 0
        %5867 = vmatpush2.bf16.msra.mxu0 0
        %5868 = vmatprep.subr.bf16.mxu0 0
        %5869 = vmatpush2.bf16.msra.mxu0 0
        %5870 = vmatprep.mubr.bf16.mxu0 0
        %5871 = vmatmul.mubr.bf16.gmra.mxu0 %v5835
        %v5872 = vpop.f32.mrf.mxu0
        %v5873 = vadd.f32 0.0, %v5872
        %v5874 = vpop.f32.mrf.mxu0
        %v5875 = vpop.f32.mrf.mxu0
        %v5876 = vpop.f32.mrf.mxu0
        %5877 = vdwg.mxu0
        %5878 = vmatprep.subr.bf16.mxu0 0
        %5879 = vmatpush1.bf16.msra.mxu0 %v2446
        %5880 = vmatprep.subr.bf16.mxu0 0
        %5881 = vmatpush1.bf16.msra.mxu0 %v2445
        %5882 = vmatprep.subr.bf16.mxu0 0
        %5883 = vmatpush1.bf16.msra.mxu0 %v2444
        %5884 = vmatprep.subr.bf16.mxu0 0
        %5885 = vmatpush1.bf16.msra.mxu0 %v2443
        %5886 = vmatprep.subr.bf16.mxu0 0
        %5887 = vmatpush1.bf16.msra.mxu0 %v2442
        %5888 = vmatprep.subr.bf16.mxu0 0
        %5889 = vmatpush1.bf16.msra.mxu0 %v2441
        %5890 = vmatprep.subr.bf16.mxu0 0
        %5891 = vmatpush1.bf16.msra.mxu0 %v2440
        %5892 = vmatprep.subr.bf16.mxu0 0
        %5893 = vmatpush1.bf16.msra.mxu0 %v2439
        %5894 = vmatprep.subr.bf16.mxu0 0
        %5895 = vmatpush2.bf16.msra.mxu0 0
        %5896 = vmatprep.subr.bf16.mxu0 0
        %5897 = vmatpush2.bf16.msra.mxu0 0
        %5898 = vmatprep.subr.bf16.mxu0 0
        %5899 = vmatpush2.bf16.msra.mxu0 0
        %5900 = vmatprep.subr.bf16.mxu0 0
        %5901 = vmatpush2.bf16.msra.mxu0 0
        %5902 = vmatprep.subr.bf16.mxu0 0
        %5903 = vmatpush2.bf16.msra.mxu0 0
        %5904 = vmatprep.subr.bf16.mxu0 0
        %5905 = vmatpush2.bf16.msra.mxu0 0
        %5906 = vmatprep.subr.bf16.mxu0 0
        %5907 = vmatpush2.bf16.msra.mxu0 0
        %5908 = vmatprep.subr.bf16.mxu0 0
        %5909 = vmatpush2.bf16.msra.mxu0 0
        %5910 = vmatprep.mubr.bf16.mxu0 0
        %5911 = vmatmul.mubr.bf16.gmra.mxu0 %v5837
        %v5912 = vpop.f32.mrf.mxu0
        %v5913 = vadd.f32 0.0, %v5912
        %v5914 = vpop.f32.mrf.mxu0
        %v5915 = vpop.f32.mrf.mxu0
        %v5916 = vpop.f32.mrf.mxu0
        %5917 = vdwg.mxu0
        %v5918 = vmul.f32 %v5873, %v5873
        %v5919 = vsub.f32 %v5913, %v5918
        %v5920 = vmax.f32 %v5919, 0.0
        %v5921 = vadd.f32 %v5920, 1e-05
        %v5922 = vrsqrt.pop %v5921
        %v5923 = vpack.c.bf16 %v5922, %v5922
        %v5925 = vsel %vm2541, %v5923, 0
        %v5928 = vsel %vm2545, %v5833, 0
        %5930 = vmatprep.subr.bf16.mxu0 0
        %5931 = vmatpush1.bf16.msra.mxu0 0
        %5932 = vmatprep.subr.bf16.mxu0 0
        %5933 = vmatpush1.bf16.msra.mxu0 0
        %5934 = vmatprep.subr.bf16.mxu0 0
        %5935 = vmatpush1.bf16.msra.mxu0 0
        %5936 = vmatprep.subr.bf16.mxu0 0
        %5937 = vmatpush1.bf16.msra.mxu0 0
        %5938 = vmatprep.subr.bf16.mxu0 0
        %5939 = vmatpush1.bf16.msra.mxu0 0
        %5940 = vmatprep.subr.bf16.mxu0 0
        %5941 = vmatpush1.bf16.msra.mxu0 0
        %5942 = vmatprep.subr.bf16.mxu0 0
        %5943 = vmatpush1.bf16.msra.mxu0 0
        %5944 = vmatprep.subr.bf16.mxu0 0
        %5945 = vmatpush1.bf16.msra.mxu0 %v5928
        %5946 = vmatprep.subr.bf16.mxu0 0
        %5947 = vmatpush2.bf16.msra.mxu0 0
        %5948 = vmatprep.subr.bf16.mxu0 0
        %5949 = vmatpush2.bf16.msra.mxu0 0
        %5950 = vmatprep.subr.bf16.mxu0 0
        %5951 = vmatpush2.bf16.msra.mxu0 0
        %5952 = vmatprep.subr.bf16.mxu0 0
        %5953 = vmatpush2.bf16.msra.mxu0 0
        %5954 = vmatprep.subr.bf16.mxu0 0
        %5955 = vmatpush2.bf16.msra.mxu0 0
        %5956 = vmatprep.subr.bf16.mxu0 0
        %5957 = vmatpush2.bf16.msra.mxu0 0
        %5958 = vmatprep.subr.bf16.mxu0 0
        %5959 = vmatpush2.bf16.msra.mxu0 0
        %5960 = vmatprep.subr.bf16.mxu0 0
        %5961 = vmatpush2.bf16.msra.mxu0 0
        %5962 = vmatprep.mubr.bf16.mxu0 0
        %5963 = vmatmul.mubr.bf16.gmra.mxu0 %v5925
        %v5964 = vpop.f32.mrf.mxu0
        %v5965 = vadd.f32 0.0, %v5964
        %v5966 = vpop.f32.mrf.mxu0
        %v5967 = vpop.f32.mrf.mxu0
        %v5968 = vpop.f32.mrf.mxu0
        %5969 = vdwg.mxu0
        %v5970 = vmul.f32 %v5873, %v5922
        %v5971 = vpack.c.bf16 %v5970, %v5970
        %v5973 = vsel %vm2541, %v5971, 0
        %5975 = vmatprep.subr.bf16.mxu0 0
        %5976 = vmatpush1.bf16.msra.mxu0 0
        %5977 = vmatprep.subr.bf16.mxu0 0
        %5978 = vmatpush1.bf16.msra.mxu0 0
        %5979 = vmatprep.subr.bf16.mxu0 0
        %5980 = vmatpush1.bf16.msra.mxu0 0
        %5981 = vmatprep.subr.bf16.mxu0 0
        %5982 = vmatpush1.bf16.msra.mxu0 0
        %5983 = vmatprep.subr.bf16.mxu0 0
        %5984 = vmatpush1.bf16.msra.mxu0 0
        %5985 = vmatprep.subr.bf16.mxu0 0
        %5986 = vmatpush1.bf16.msra.mxu0 0
        %5987 = vmatprep.subr.bf16.mxu0 0
        %5988 = vmatpush1.bf16.msra.mxu0 0
        %5989 = vmatprep.subr.bf16.mxu0 0
        %5990 = vmatpush1.bf16.msra.mxu0 %v5928
        %5991 = vmatprep.subr.bf16.mxu0 0
        %5992 = vmatpush2.bf16.msra.mxu0 0
        %5993 = vmatprep.subr.bf16.mxu0 0
        %5994 = vmatpush2.bf16.msra.mxu0 0
        %5995 = vmatprep.subr.bf16.mxu0 0
        %5996 = vmatpush2.bf16.msra.mxu0 0
        %5997 = vmatprep.subr.bf16.mxu0 0
        %5998 = vmatpush2.bf16.msra.mxu0 0
        %5999 = vmatprep.subr.bf16.mxu0 0
        %6000 = vmatpush2.bf16.msra.mxu0 0
        %6001 = vmatprep.subr.bf16.mxu0 0
        %6002 = vmatpush2.bf16.msra.mxu0 0
        %6003 = vmatprep.subr.bf16.mxu0 0
        %6004 = vmatpush2.bf16.msra.mxu0 0
        %6005 = vmatprep.subr.bf16.mxu0 0
        %6006 = vmatpush2.bf16.msra.mxu0 0
        %6007 = vmatprep.mubr.bf16.mxu0 0
        %6008 = vmatmul.mubr.bf16.gmra.mxu0 %v5973
        %v6009 = vpop.f32.mrf.mxu0
        %v6010 = vadd.f32 0.0, %v6009
        %v6011 = vpop.f32.mrf.mxu0
        %v6012 = vpop.f32.mrf.mxu0
        %v6013 = vpop.f32.mrf.mxu0
        %6014 = vdwg.mxu0
        %v6015 = vlaneseq
        %v6016 = vshrl.u32 %v6015, 7
        %v6017 = vsub.s32 0, %v6016
        %v6018 = vrot.slane %v5834, %v6017
        %v6019 = vsub.f32 %v6018, %v6010
        %v6020 = vmul.f32 %v5831, %v5965
        %v6021 = vadd.f32 %v6020, %v6019
        %v6022 = vmul.f32 %v6021, 0.5
        %v6023 = vmul.f32 %v6021, %v6021
        %v6024 = vmul.f32 %v6023, %v6021
        %v6025 = vmul.f32 %v6024, 0.044715
        %v6026 = vadd.f32 %v6021, %v6025
        %v6027 = vmul.f32 %v6026, 0.7978846
        %v6028 = vtanh.pop %v6027
        %v6029 = vadd.f32 %v6028, 1.0
        %v6030 = vmul.f32 %v6022, %v6029
        %s6031 = scalar_lea.vmem %s11, 192
        %v6032 = vld [vmem:[%s6031] sm:$0xf]
        %v6033 = vld [vmem:[%s6031 + $0x4] sm:$0xf]
        %v6034 = vld [vmem:[%s6031 + $0x8] sm:$0xf]
        %v6035 = vld [vmem:[%s6031 + $0xc] sm:$0xf]
        %v6036 = vld [vmem:[%s6031 + $0x10] sm:$0xf]
        %v6037 = vld [vmem:[%s6031 + $0x14] sm:$0xf]
        %v6038 = vld [vmem:[%s6031 + $0x18] sm:$0xf]
        %v6039 = vld [vmem:[%s6031 + $0x1c] sm:$0xf]
        %v6040 = vld [vmem:[%s6031 + $0x20] sm:$0xf]
        %v6041 = vld [vmem:[%s6031 + $0x24] sm:$0xf]
        %v6042 = vld [vmem:[%s6031 + $0x28] sm:$0xf]
        %v6043 = vld [vmem:[%s6031 + $0x2c] sm:$0xf]
        %v6044 = vld [vmem:[%s6031 + $0x30] sm:$0xf]
        %v6045 = vld [vmem:[%s6031 + $0x34] sm:$0xf]
        %v6046 = vld [vmem:[%s6031 + $0x38] sm:$0xf]
        %v6047 = vld [vmem:[%s6031 + $0x3c] sm:$0xf]
        %v6048 = vld [vmem:[%s19 + $0x12] sm:$0x1]
        %v6049 = vpack.c.bf16 %v6030, %v6030
        %v6050 = vlaneseq
        %v6051 = vshrl.u32 %v6050, 7
        %v6052 = vsub.s32 0, %v6051
        %v6053 = vrot.slane %v6048, %v6052
        %v6070 = vunpack.c.l.b16 %v6032
        %v6071 = vunpack.c.l.b16 %v6033
        %v6072 = vunpack.c.l.b16 %v6034
        %v6073 = vunpack.c.l.b16 %v6035
        %v6074 = vunpack.c.l.b16 %v6036
        %v6075 = vunpack.c.l.b16 %v6037
        %v6076 = vunpack.c.l.b16 %v6038
        %v6077 = vunpack.c.l.b16 %v6039
        %v6078 = vunpack.c.l.b16 %v6040
        %v6079 = vunpack.c.l.b16 %v6041
        %v6080 = vunpack.c.l.b16 %v6042
        %v6081 = vunpack.c.l.b16 %v6043
        %v6082 = vunpack.c.l.b16 %v6044
        %v6083 = vunpack.c.l.b16 %v6045
        %v6084 = vunpack.c.l.b16 %v6046
        %v6085 = vunpack.c.l.b16 %v6047
        %v6086 = vpack.c.b16 %v6071, %v6070
        %v6087 = vpack.c.b16 %v6073, %v6072
        %v6088 = vpack.c.b16 %v6075, %v6074
        %v6089 = vpack.c.b16 %v6077, %v6076
        %v6090 = vpack.c.b16 %v6079, %v6078
        %v6091 = vpack.c.b16 %v6081, %v6080
        %v6092 = vpack.c.b16 %v6083, %v6082
        %v6093 = vpack.c.b16 %v6085, %v6084
        %6102 = vmatprep.subr.bf16.mxu0 0
        %6103 = vmatpush1.bf16.msra.mxu0 %v6093
        %6104 = vmatprep.subr.bf16.mxu0 0
        %6105 = vmatpush1.bf16.msra.mxu0 %v6092
        %6106 = vmatprep.subr.bf16.mxu0 0
        %6107 = vmatpush1.bf16.msra.mxu0 %v6091
        %6108 = vmatprep.subr.bf16.mxu0 0
        %6109 = vmatpush1.bf16.msra.mxu0 %v6090
        %6110 = vmatprep.subr.bf16.mxu0 0
        %6111 = vmatpush1.bf16.msra.mxu0 %v6089
        %6112 = vmatprep.subr.bf16.mxu0 0
        %6113 = vmatpush1.bf16.msra.mxu0 %v6088
        %6114 = vmatprep.subr.bf16.mxu0 0
        %6115 = vmatpush1.bf16.msra.mxu0 %v6087
        %6116 = vmatprep.subr.bf16.mxu0 0
        %6117 = vmatpush1.bf16.msra.mxu0 %v6086
        %6118 = vmatprep.subr.bf16.mxu0 0
        %6119 = vmatpush2.bf16.msra.mxu0 0
        %6120 = vmatprep.subr.bf16.mxu0 0
        %6121 = vmatpush2.bf16.msra.mxu0 0
        %6122 = vmatprep.subr.bf16.mxu0 0
        %6123 = vmatpush2.bf16.msra.mxu0 0
        %6124 = vmatprep.subr.bf16.mxu0 0
        %6125 = vmatpush2.bf16.msra.mxu0 0
        %6126 = vmatprep.subr.bf16.mxu0 0
        %6127 = vmatpush2.bf16.msra.mxu0 0
        %6128 = vmatprep.subr.bf16.mxu0 0
        %6129 = vmatpush2.bf16.msra.mxu0 0
        %6130 = vmatprep.subr.bf16.mxu0 0
        %6131 = vmatpush2.bf16.msra.mxu0 0
        %6132 = vmatprep.subr.bf16.mxu0 0
        %6133 = vmatpush2.bf16.msra.mxu0 0
        %6134 = vmatprep.mubr.bf16.mxu0 0
        %6135 = vmatmul.mubr.bf16.gmra.mxu0 %v6049
        %v6136 = vpop.f32.mrf.mxu0
        %v6137 = vadd.f32 %v6053, %v6136
        %v6138 = vpop.f32.mrf.mxu0
        %v6139 = vpop.f32.mrf.mxu0
        %v6140 = vpop.f32.mrf.mxu0
        %6141 = vdwg.mxu0
        %s6142 = scalar_lea.vmem [#allocation8], 12
        %v6143 = vld [vmem:[%s6142] sm:$0xf]
        %v6144 = vld [vmem:[%s19 + $0x13] sm:$0x1]
        %v6145 = vpack.c.bf16 %v6137, %v6137
        %v6146 = vmul.f32 %v6137, %v6137
        %v6147 = vpack.c.bf16 %v6146, %v6146
        %v6149 = vsel %vm1799, %v6145, 0
        %6151 = vmatprep.subr.bf16.mxu0 0
        %6152 = vmatpush1.bf16.msra.mxu0 0
        %6153 = vmatprep.subr.bf16.mxu0 0
        %6154 = vmatpush1.bf16.msra.mxu0 0
        %6155 = vmatprep.subr.bf16.mxu0 0
        %6156 = vmatpush1.bf16.msra.mxu0 0
        %6157 = vmatprep.subr.bf16.mxu0 0
        %6158 = vmatpush1.bf16.msra.mxu0 0
        %6159 = vmatprep.subr.bf16.mxu0 0
        %6160 = vmatpush1.bf16.msra.mxu0 0
        %6161 = vmatprep.subr.bf16.mxu0 0
        %6162 = vmatpush1.bf16.msra.mxu0 0
        %6163 = vmatprep.subr.bf16.mxu0 0
        %6164 = vmatpush1.bf16.msra.mxu0 %v2778
        %6165 = vmatprep.subr.bf16.mxu0 0
        %6166 = vmatpush1.bf16.msra.mxu0 %v2777
        %6167 = vmatprep.subr.bf16.mxu0 0
        %6168 = vmatpush2.bf16.msra.mxu0 0
        %6169 = vmatprep.subr.bf16.mxu0 0
        %6170 = vmatpush2.bf16.msra.mxu0 0
        %6171 = vmatprep.subr.bf16.mxu0 0
        %6172 = vmatpush2.bf16.msra.mxu0 0
        %6173 = vmatprep.subr.bf16.mxu0 0
        %6174 = vmatpush2.bf16.msra.mxu0 0
        %6175 = vmatprep.subr.bf16.mxu0 0
        %6176 = vmatpush2.bf16.msra.mxu0 0
        %6177 = vmatprep.subr.bf16.mxu0 0
        %6178 = vmatpush2.bf16.msra.mxu0 0
        %6179 = vmatprep.subr.bf16.mxu0 0
        %6180 = vmatpush2.bf16.msra.mxu0 0
        %6181 = vmatprep.subr.bf16.mxu0 0
        %6182 = vmatpush2.bf16.msra.mxu0 0
        %6183 = vmatprep.mubr.bf16.mxu0 0
        %6184 = vmatmul.mubr.bf16.gmra.mxu0 %v6149
        %v6185 = vpop.f32.mrf.mxu0
        %v6186 = vadd.f32 0.0, %v6185
        %v6187 = vpop.f32.mrf.mxu0
        %v6188 = vpop.f32.mrf.mxu0
        %v6189 = vpop.f32.mrf.mxu0
        %6190 = vdwg.mxu0
        %v6192 = vsel %vm1799, %v6147, 0
        %6194 = vmatprep.subr.bf16.mxu0 0
        %6195 = vmatpush1.bf16.msra.mxu0 0
        %6196 = vmatprep.subr.bf16.mxu0 0
        %6197 = vmatpush1.bf16.msra.mxu0 0
        %6198 = vmatprep.subr.bf16.mxu0 0
        %6199 = vmatpush1.bf16.msra.mxu0 0
        %6200 = vmatprep.subr.bf16.mxu0 0
        %6201 = vmatpush1.bf16.msra.mxu0 0
        %6202 = vmatprep.subr.bf16.mxu0 0
        %6203 = vmatpush1.bf16.msra.mxu0 0
        %6204 = vmatprep.subr.bf16.mxu0 0
        %6205 = vmatpush1.bf16.msra.mxu0 0
        %6206 = vmatprep.subr.bf16.mxu0 0
        %6207 = vmatpush1.bf16.msra.mxu0 %v2778
        %6208 = vmatprep.subr.bf16.mxu0 0
        %6209 = vmatpush1.bf16.msra.mxu0 %v2777
        %6210 = vmatprep.subr.bf16.mxu0 0
        %6211 = vmatpush2.bf16.msra.mxu0 0
        %6212 = vmatprep.subr.bf16.mxu0 0
        %6213 = vmatpush2.bf16.msra.mxu0 0
        %6214 = vmatprep.subr.bf16.mxu0 0
        %6215 = vmatpush2.bf16.msra.mxu0 0
        %6216 = vmatprep.subr.bf16.mxu0 0
        %6217 = vmatpush2.bf16.msra.mxu0 0
        %6218 = vmatprep.subr.bf16.mxu0 0
        %6219 = vmatpush2.bf16.msra.mxu0 0
        %6220 = vmatprep.subr.bf16.mxu0 0
        %6221 = vmatpush2.bf16.msra.mxu0 0
        %6222 = vmatprep.subr.bf16.mxu0 0
        %6223 = vmatpush2.bf16.msra.mxu0 0
        %6224 = vmatprep.subr.bf16.mxu0 0
        %6225 = vmatpush2.bf16.msra.mxu0 0
        %6226 = vmatprep.mubr.bf16.mxu0 0
        %6227 = vmatmul.mubr.bf16.gmra.mxu0 %v6192
        %v6228 = vpop.f32.mrf.mxu0
        %v6229 = vadd.f32 0.0, %v6228
        %v6230 = vpop.f32.mrf.mxu0
        %v6231 = vpop.f32.mrf.mxu0
        %v6232 = vpop.f32.mrf.mxu0
        %6233 = vdwg.mxu0
        %v6234 = vmul.f32 %v6186, %v6186
        %v6235 = vsub.f32 %v6229, %v6234
        %v6236 = vmax.f32 %v6235, 0.0
        %v6237 = vadd.f32 %v6236, 1e-05
        %v6238 = vrsqrt.pop %v6237
        %v6239 = vpack.c.bf16 %v6238, %v6238
        %v6241 = vsel %vm2541, %v6239, 0
        %v6244 = vsel %vm2545, %v6143, 0
        %6246 = vmatprep.subr.bf16.mxu0 0
        %6247 = vmatpush1.bf16.msra.mxu0 0
        %6248 = vmatprep.subr.bf16.mxu0 0
        %6249 = vmatpush1.bf16.msra.mxu0 0
        %6250 = vmatprep.subr.bf16.mxu0 0
        %6251 = vmatpush1.bf16.msra.mxu0 0
        %6252 = vmatprep.subr.bf16.mxu0 0
        %6253 = vmatpush1.bf16.msra.mxu0 0
        %6254 = vmatprep.subr.bf16.mxu0 0
        %6255 = vmatpush1.bf16.msra.mxu0 0
        %6256 = vmatprep.subr.bf16.mxu0 0
        %6257 = vmatpush1.bf16.msra.mxu0 0
        %6258 = vmatprep.subr.bf16.mxu0 0
        %6259 = vmatpush1.bf16.msra.mxu0 0
        %6260 = vmatprep.subr.bf16.mxu0 0
        %6261 = vmatpush1.bf16.msra.mxu0 %v6244
        %6262 = vmatprep.subr.bf16.mxu0 0
        %6263 = vmatpush2.bf16.msra.mxu0 0
        %6264 = vmatprep.subr.bf16.mxu0 0
        %6265 = vmatpush2.bf16.msra.mxu0 0
        %6266 = vmatprep.subr.bf16.mxu0 0
        %6267 = vmatpush2.bf16.msra.mxu0 0
        %6268 = vmatprep.subr.bf16.mxu0 0
        %6269 = vmatpush2.bf16.msra.mxu0 0
        %6270 = vmatprep.subr.bf16.mxu0 0
        %6271 = vmatpush2.bf16.msra.mxu0 0
        %6272 = vmatprep.subr.bf16.mxu0 0
        %6273 = vmatpush2.bf16.msra.mxu0 0
        %6274 = vmatprep.subr.bf16.mxu0 0
        %6275 = vmatpush2.bf16.msra.mxu0 0
        %6276 = vmatprep.subr.bf16.mxu0 0
        %6277 = vmatpush2.bf16.msra.mxu0 0
        %6278 = vmatprep.mubr.bf16.mxu0 0
        %6279 = vmatmul.mubr.bf16.gmra.mxu0 %v6241
        %v6280 = vpop.f32.mrf.mxu0
        %v6281 = vadd.f32 0.0, %v6280
        %v6282 = vpop.f32.mrf.mxu0
        %v6283 = vpop.f32.mrf.mxu0
        %v6284 = vpop.f32.mrf.mxu0
        %6285 = vdwg.mxu0
        %v6286 = vmul.f32 %v6186, %v6238
        %v6287 = vpack.c.bf16 %v6286, %v6286
        %v6289 = vsel %vm2541, %v6287, 0
        %6291 = vmatprep.subr.bf16.mxu0 0
        %6292 = vmatpush1.bf16.msra.mxu0 0
        %6293 = vmatprep.subr.bf16.mxu0 0
        %6294 = vmatpush1.bf16.msra.mxu0 0
        %6295 = vmatprep.subr.bf16.mxu0 0
        %6296 = vmatpush1.bf16.msra.mxu0 0
        %6297 = vmatprep.subr.bf16.mxu0 0
        %6298 = vmatpush1.bf16.msra.mxu0 0
        %6299 = vmatprep.subr.bf16.mxu0 0
        %6300 = vmatpush1.bf16.msra.mxu0 0
        %6301 = vmatprep.subr.bf16.mxu0 0
        %6302 = vmatpush1.bf16.msra.mxu0 0
        %6303 = vmatprep.subr.bf16.mxu0 0
        %6304 = vmatpush1.bf16.msra.mxu0 0
        %6305 = vmatprep.subr.bf16.mxu0 0
        %6306 = vmatpush1.bf16.msra.mxu0 %v6244
        %6307 = vmatprep.subr.bf16.mxu0 0
        %6308 = vmatpush2.bf16.msra.mxu0 0
        %6309 = vmatprep.subr.bf16.mxu0 0
        %6310 = vmatpush2.bf16.msra.mxu0 0
        %6311 = vmatprep.subr.bf16.mxu0 0
        %6312 = vmatpush2.bf16.msra.mxu0 0
        %6313 = vmatprep.subr.bf16.mxu0 0
        %6314 = vmatpush2.bf16.msra.mxu0 0
        %6315 = vmatprep.subr.bf16.mxu0 0
        %6316 = vmatpush2.bf16.msra.mxu0 0
        %6317 = vmatprep.subr.bf16.mxu0 0
        %6318 = vmatpush2.bf16.msra.mxu0 0
        %6319 = vmatprep.subr.bf16.mxu0 0
        %6320 = vmatpush2.bf16.msra.mxu0 0
        %6321 = vmatprep.subr.bf16.mxu0 0
        %6322 = vmatpush2.bf16.msra.mxu0 0
        %6323 = vmatprep.mubr.bf16.mxu0 0
        %6324 = vmatmul.mubr.bf16.gmra.mxu0 %v6289
        %v6325 = vpop.f32.mrf.mxu0
        %v6326 = vadd.f32 0.0, %v6325
        %v6327 = vpop.f32.mrf.mxu0
        %v6328 = vpop.f32.mrf.mxu0
        %v6329 = vpop.f32.mrf.mxu0
        %6330 = vdwg.mxu0
        %v6331 = vlaneseq
        %v6332 = vshrl.u32 %v6331, 7
        %v6333 = vsub.s32 0, %v6332
        %v6334 = vrot.slane %v6144, %v6333
        %v6335 = vsub.f32 %v6334, %v6326
        %v6336 = vmul.f32 %v6137, %v6281
        %v6337 = vadd.f32 %v6336, %v6335
        %v6338 = vmul.f32 %v6337, 0.5
        %v6339 = vmul.f32 %v6337, %v6337
        %v6340 = vmul.f32 %v6339, %v6337
        %v6341 = vmul.f32 %v6340, 0.044715
        %v6342 = vadd.f32 %v6337, %v6341
        %v6343 = vmul.f32 %v6342, 0.7978846
        %v6344 = vtanh.pop %v6343
        %v6345 = vadd.f32 %v6344, 1.0
        %v6346 = vmul.f32 %v6338, %v6345
        %s6347 = scalar_lea.vmem [#allocation11], 48
        %v6348 = vld [vmem:[%s6347] sm:$0xf]
        %v6349 = vld [vmem:[%s6347 + $0x4] sm:$0xf]
        %v6350 = vld [vmem:[%s6347 + $0x8] sm:$0xf]
        %v6351 = vld [vmem:[%s6347 + $0xc] sm:$0xf]
        %v6352 = vld [vmem:[%s19 + $0x14] sm:$0x1]
        %v6353 = vpack.c.bf16 %v6346, %v6346
        %v6354 = vlaneseq
        %v6355 = vshrl.u32 %v6354, 7
        %v6356 = vsub.s32 0, %v6355
        %v6357 = vrot.slane %v6352, %v6356
        %v6362 = vunpack.c.l.b16 %v6348
        %v6363 = vunpack.c.l.b16 %v6349
        %v6364 = vunpack.c.l.b16 %v6350
        %v6365 = vunpack.c.l.b16 %v6351
        %v6366 = vpack.c.b16 %v6363, %v6362
        %v6367 = vpack.c.b16 %v6365, %v6364
        %v6371 = vsel %vm1799, %v6353, 0
        %6373 = vmatprep.subr.bf16.mxu0 0
        %6374 = vmatpush1.bf16.msra.mxu0 0
        %6375 = vmatprep.subr.bf16.mxu0 0
        %6376 = vmatpush1.bf16.msra.mxu0 0
        %6377 = vmatprep.subr.bf16.mxu0 0
        %6378 = vmatpush1.bf16.msra.mxu0 0
        %6379 = vmatprep.subr.bf16.mxu0 0
        %6380 = vmatpush1.bf16.msra.mxu0 0
        %6381 = vmatprep.subr.bf16.mxu0 0
        %6382 = vmatpush1.bf16.msra.mxu0 0
        %6383 = vmatprep.subr.bf16.mxu0 0
        %6384 = vmatpush1.bf16.msra.mxu0 0
        %6385 = vmatprep.subr.bf16.mxu0 0
        %6386 = vmatpush1.bf16.msra.mxu0 %v6367
        %6387 = vmatprep.subr.bf16.mxu0 0
        %6388 = vmatpush1.bf16.msra.mxu0 %v6366
        %6389 = vmatprep.subr.bf16.mxu0 0
        %6390 = vmatpush2.bf16.msra.mxu0 0
        %6391 = vmatprep.subr.bf16.mxu0 0
        %6392 = vmatpush2.bf16.msra.mxu0 0
        %6393 = vmatprep.subr.bf16.mxu0 0
        %6394 = vmatpush2.bf16.msra.mxu0 0
        %6395 = vmatprep.subr.bf16.mxu0 0
        %6396 = vmatpush2.bf16.msra.mxu0 0
        %6397 = vmatprep.subr.bf16.mxu0 0
        %6398 = vmatpush2.bf16.msra.mxu0 0
        %6399 = vmatprep.subr.bf16.mxu0 0
        %6400 = vmatpush2.bf16.msra.mxu0 0
        %6401 = vmatprep.subr.bf16.mxu0 0
        %6402 = vmatpush2.bf16.msra.mxu0 0
        %6403 = vmatprep.subr.bf16.mxu0 0
        %6404 = vmatpush2.bf16.msra.mxu0 0
        %6405 = vmatprep.mubr.bf16.mxu0 0
        %6406 = vmatmul.mubr.bf16.gmra.mxu0 %v6371
        %v6407 = vpop.f32.mrf.mxu0
        %v6408 = vadd.f32 %v6357, %v6407
        %v6409 = vpop.f32.mrf.mxu0
        %v6410 = vpop.f32.mrf.mxu0
        %v6411 = vpop.f32.mrf.mxu0
        %6412 = vdwg.mxu0
        %s6413 = scalar_lea.vmem [#allocation10], 12
        %v6414 = vld [vmem:[%s6413] sm:$0xf]
        %v6415 = vld [vmem:[%s19 + $0x15] sm:$0x1]
        %v6416 = vpack.c.bf16 %v6408, %v6408
        %v6417 = vmul.f32 %v6408, %v6408
        %v6418 = vpack.c.bf16 %v6417, %v6417
        %v6420 = vsel %vm1799, %v6416, 0
        %6422 = vmatprep.subr.bf16.mxu0 0
        %6423 = vmatpush1.bf16.msra.mxu0 0
        %6424 = vmatprep.subr.bf16.mxu0 0
        %6425 = vmatpush1.bf16.msra.mxu0 0
        %6426 = vmatprep.subr.bf16.mxu0 0
        %6427 = vmatpush1.bf16.msra.mxu0 0
        %6428 = vmatprep.subr.bf16.mxu0 0
        %6429 = vmatpush1.bf16.msra.mxu0 0
        %6430 = vmatprep.subr.bf16.mxu0 0
        %6431 = vmatpush1.bf16.msra.mxu0 0
        %6432 = vmatprep.subr.bf16.mxu0 0
        %6433 = vmatpush1.bf16.msra.mxu0 0
        %6434 = vmatprep.subr.bf16.mxu0 0
        %6435 = vmatpush1.bf16.msra.mxu0 %v2778
        %6436 = vmatprep.subr.bf16.mxu0 0
        %6437 = vmatpush1.bf16.msra.mxu0 %v2777
        %6438 = vmatprep.subr.bf16.mxu0 0
        %6439 = vmatpush2.bf16.msra.mxu0 0
        %6440 = vmatprep.subr.bf16.mxu0 0
        %6441 = vmatpush2.bf16.msra.mxu0 0
        %6442 = vmatprep.subr.bf16.mxu0 0
        %6443 = vmatpush2.bf16.msra.mxu0 0
        %6444 = vmatprep.subr.bf16.mxu0 0
        %6445 = vmatpush2.bf16.msra.mxu0 0
        %6446 = vmatprep.subr.bf16.mxu0 0
        %6447 = vmatpush2.bf16.msra.mxu0 0
        %6448 = vmatprep.subr.bf16.mxu0 0
        %6449 = vmatpush2.bf16.msra.mxu0 0
        %6450 = vmatprep.subr.bf16.mxu0 0
        %6451 = vmatpush2.bf16.msra.mxu0 0
        %6452 = vmatprep.subr.bf16.mxu0 0
        %6453 = vmatpush2.bf16.msra.mxu0 0
        %6454 = vmatprep.mubr.bf16.mxu0 0
        %6455 = vmatmul.mubr.bf16.gmra.mxu0 %v6420
        %v6456 = vpop.f32.mrf.mxu0
        %v6457 = vadd.f32 0.0, %v6456
        %v6458 = vpop.f32.mrf.mxu0
        %v6459 = vpop.f32.mrf.mxu0
        %v6460 = vpop.f32.mrf.mxu0
        %6461 = vdwg.mxu0
        %v6463 = vsel %vm1799, %v6418, 0
        %6465 = vmatprep.subr.bf16.mxu0 0
        %6466 = vmatpush1.bf16.msra.mxu0 0
        %6467 = vmatprep.subr.bf16.mxu0 0
        %6468 = vmatpush1.bf16.msra.mxu0 0
        %6469 = vmatprep.subr.bf16.mxu0 0
        %6470 = vmatpush1.bf16.msra.mxu0 0
        %6471 = vmatprep.subr.bf16.mxu0 0
        %6472 = vmatpush1.bf16.msra.mxu0 0
        %6473 = vmatprep.subr.bf16.mxu0 0
        %6474 = vmatpush1.bf16.msra.mxu0 0
        %6475 = vmatprep.subr.bf16.mxu0 0
        %6476 = vmatpush1.bf16.msra.mxu0 0
        %6477 = vmatprep.subr.bf16.mxu0 0
        %6478 = vmatpush1.bf16.msra.mxu0 %v2778
        %6479 = vmatprep.subr.bf16.mxu0 0
        %6480 = vmatpush1.bf16.msra.mxu0 %v2777
        %6481 = vmatprep.subr.bf16.mxu0 0
        %6482 = vmatpush2.bf16.msra.mxu0 0
        %6483 = vmatprep.subr.bf16.mxu0 0
        %6484 = vmatpush2.bf16.msra.mxu0 0
        %6485 = vmatprep.subr.bf16.mxu0 0
        %6486 = vmatpush2.bf16.msra.mxu0 0
        %6487 = vmatprep.subr.bf16.mxu0 0
        %6488 = vmatpush2.bf16.msra.mxu0 0
        %6489 = vmatprep.subr.bf16.mxu0 0
        %6490 = vmatpush2.bf16.msra.mxu0 0
        %6491 = vmatprep.subr.bf16.mxu0 0
        %6492 = vmatpush2.bf16.msra.mxu0 0
        %6493 = vmatprep.subr.bf16.mxu0 0
        %6494 = vmatpush2.bf16.msra.mxu0 0
        %6495 = vmatprep.subr.bf16.mxu0 0
        %6496 = vmatpush2.bf16.msra.mxu0 0
        %6497 = vmatprep.mubr.bf16.mxu0 0
        %6498 = vmatmul.mubr.bf16.gmra.mxu0 %v6463
        %v6499 = vpop.f32.mrf.mxu0
        %v6500 = vadd.f32 0.0, %v6499
        %v6501 = vpop.f32.mrf.mxu0
        %v6502 = vpop.f32.mrf.mxu0
        %v6503 = vpop.f32.mrf.mxu0
        %6504 = vdwg.mxu0
        %v6505 = vmul.f32 %v6457, %v6457
        %v6506 = vsub.f32 %v6500, %v6505
        %v6507 = vmax.f32 %v6506, 0.0
        %v6508 = vadd.f32 %v6507, 1e-05
        %v6509 = vrsqrt.pop %v6508
        %v6510 = vpack.c.bf16 %v6509, %v6509
        %v6512 = vsel %vm2541, %v6510, 0
        %v6515 = vsel %vm2545, %v6414, 0
        %6517 = vmatprep.subr.bf16.mxu0 0
        %6518 = vmatpush1.bf16.msra.mxu0 0
        %6519 = vmatprep.subr.bf16.mxu0 0
        %6520 = vmatpush1.bf16.msra.mxu0 0
        %6521 = vmatprep.subr.bf16.mxu0 0
        %6522 = vmatpush1.bf16.msra.mxu0 0
        %6523 = vmatprep.subr.bf16.mxu0 0
        %6524 = vmatpush1.bf16.msra.mxu0 0
        %6525 = vmatprep.subr.bf16.mxu0 0
        %6526 = vmatpush1.bf16.msra.mxu0 0
        %6527 = vmatprep.subr.bf16.mxu0 0
        %6528 = vmatpush1.bf16.msra.mxu0 0
        %6529 = vmatprep.subr.bf16.mxu0 0
        %6530 = vmatpush1.bf16.msra.mxu0 0
        %6531 = vmatprep.subr.bf16.mxu0 0
        %6532 = vmatpush1.bf16.msra.mxu0 %v6515
        %6533 = vmatprep.subr.bf16.mxu0 0
        %6534 = vmatpush2.bf16.msra.mxu0 0
        %6535 = vmatprep.subr.bf16.mxu0 0
        %6536 = vmatpush2.bf16.msra.mxu0 0
        %6537 = vmatprep.subr.bf16.mxu0 0
        %6538 = vmatpush2.bf16.msra.mxu0 0
        %6539 = vmatprep.subr.bf16.mxu0 0
        %6540 = vmatpush2.bf16.msra.mxu0 0
        %6541 = vmatprep.subr.bf16.mxu0 0
        %6542 = vmatpush2.bf16.msra.mxu0 0
        %6543 = vmatprep.subr.bf16.mxu0 0
        %6544 = vmatpush2.bf16.msra.mxu0 0
        %6545 = vmatprep.subr.bf16.mxu0 0
        %6546 = vmatpush2.bf16.msra.mxu0 0
        %6547 = vmatprep.subr.bf16.mxu0 0
        %6548 = vmatpush2.bf16.msra.mxu0 0
        %6549 = vmatprep.mubr.bf16.mxu0 0
        %6550 = vmatmul.mubr.bf16.gmra.mxu0 %v6512
        %v6551 = vpop.f32.mrf.mxu0
        %v6552 = vadd.f32 0.0, %v6551
        %v6553 = vpop.f32.mrf.mxu0
        %v6554 = vpop.f32.mrf.mxu0
        %v6555 = vpop.f32.mrf.mxu0
        %6556 = vdwg.mxu0
        %v6557 = vmul.f32 %v6457, %v6509
        %v6558 = vpack.c.bf16 %v6557, %v6557
        %v6560 = vsel %vm2541, %v6558, 0
        %6562 = vmatprep.subr.bf16.mxu0 0
        %6563 = vmatpush1.bf16.msra.mxu0 0
        %6564 = vmatprep.subr.bf16.mxu0 0
        %6565 = vmatpush1.bf16.msra.mxu0 0
        %6566 = vmatprep.subr.bf16.mxu0 0
        %6567 = vmatpush1.bf16.msra.mxu0 0
        %6568 = vmatprep.subr.bf16.mxu0 0
        %6569 = vmatpush1.bf16.msra.mxu0 0
        %6570 = vmatprep.subr.bf16.mxu0 0
        %6571 = vmatpush1.bf16.msra.mxu0 0
        %6572 = vmatprep.subr.bf16.mxu0 0
        %6573 = vmatpush1.bf16.msra.mxu0 0
        %6574 = vmatprep.subr.bf16.mxu0 0
        %6575 = vmatpush1.bf16.msra.mxu0 0
        %6576 = vmatprep.subr.bf16.mxu0 0
        %6577 = vmatpush1.bf16.msra.mxu0 %v6515
        %6578 = vmatprep.subr.bf16.mxu0 0
        %6579 = vmatpush2.bf16.msra.mxu0 0
        %6580 = vmatprep.subr.bf16.mxu0 0
        %6581 = vmatpush2.bf16.msra.mxu0 0
        %6582 = vmatprep.subr.bf16.mxu0 0
        %6583 = vmatpush2.bf16.msra.mxu0 0
        %6584 = vmatprep.subr.bf16.mxu0 0
        %6585 = vmatpush2.bf16.msra.mxu0 0
        %6586 = vmatprep.subr.bf16.mxu0 0
        %6587 = vmatpush2.bf16.msra.mxu0 0
        %6588 = vmatprep.subr.bf16.mxu0 0
        %6589 = vmatpush2.bf16.msra.mxu0 0
        %6590 = vmatprep.subr.bf16.mxu0 0
        %6591 = vmatpush2.bf16.msra.mxu0 0
        %6592 = vmatprep.subr.bf16.mxu0 0
        %6593 = vmatpush2.bf16.msra.mxu0 0
        %6594 = vmatprep.mubr.bf16.mxu0 0
        %6595 = vmatmul.mubr.bf16.gmra.mxu0 %v6560
        %v6596 = vpop.f32.mrf.mxu0
        %v6597 = vadd.f32 0.0, %v6596
        %v6598 = vpop.f32.mrf.mxu0
        %v6599 = vpop.f32.mrf.mxu0
        %v6600 = vpop.f32.mrf.mxu0
        %6601 = vdwg.mxu0
        %v6602 = vlaneseq
        %v6603 = vshrl.u32 %v6602, 7
        %v6604 = vsub.s32 0, %v6603
        %v6605 = vrot.slane %v6415, %v6604
        %v6606 = vsub.f32 %v6605, %v6597
        %v6607 = vmul.f32 %v6408, %v6552
        %v6608 = vadd.f32 %v6607, %v6606
        %v6609 = vmul.f32 %v6608, 0.5
        %v6610 = vmul.f32 %v6608, %v6608
        %v6611 = vmul.f32 %v6610, %v6608
        %v6612 = vmul.f32 %v6611, 0.044715
        %v6613 = vadd.f32 %v6608, %v6612
        %v6614 = vmul.f32 %v6613, 0.7978846
        %v6615 = vtanh.pop %v6614
        %v6616 = vadd.f32 %v6615, 1.0
        %v6617 = vmul.f32 %v6609, %v6616
        %s6618 = scalar_lea.vmem [#allocation13], 48
        %v6619 = vld [vmem:[%s6618] sm:$0xf]
        %v6620 = vld [vmem:[%s6618 + $0x4] sm:$0xf]
        %v6621 = vld [vmem:[%s6618 + $0x8] sm:$0xf]
        %v6622 = vld [vmem:[%s6618 + $0xc] sm:$0xf]
        %v6623 = vld [vmem:[%s19 + $0x16] sm:$0x1]
        %v6624 = vpack.c.bf16 %v6617, %v6617
        %v6625 = vlaneseq
        %v6626 = vshrl.u32 %v6625, 7
        %v6627 = vsub.s32 0, %v6626
        %v6628 = vrot.slane %v6623, %v6627
        %v6633 = vunpack.c.l.b16 %v6619
        %v6634 = vunpack.c.l.b16 %v6620
        %v6635 = vunpack.c.l.b16 %v6621
        %v6636 = vunpack.c.l.b16 %v6622
        %v6637 = vpack.c.b16 %v6634, %v6633
        %v6638 = vpack.c.b16 %v6636, %v6635
        %v6642 = vsel %vm1799, %v6624, 0
        %6644 = vmatprep.subr.bf16.mxu0 0
        %6645 = vmatpush1.bf16.msra.mxu0 0
        %6646 = vmatprep.subr.bf16.mxu0 0
        %6647 = vmatpush1.bf16.msra.mxu0 0
        %6648 = vmatprep.subr.bf16.mxu0 0
        %6649 = vmatpush1.bf16.msra.mxu0 0
        %6650 = vmatprep.subr.bf16.mxu0 0
        %6651 = vmatpush1.bf16.msra.mxu0 0
        %6652 = vmatprep.subr.bf16.mxu0 0
        %6653 = vmatpush1.bf16.msra.mxu0 0
        %6654 = vmatprep.subr.bf16.mxu0 0
        %6655 = vmatpush1.bf16.msra.mxu0 0
        %6656 = vmatprep.subr.bf16.mxu0 0
        %6657 = vmatpush1.bf16.msra.mxu0 %v6638
        %6658 = vmatprep.subr.bf16.mxu0 0
        %6659 = vmatpush1.bf16.msra.mxu0 %v6637
        %6660 = vmatprep.subr.bf16.mxu0 0
        %6661 = vmatpush2.bf16.msra.mxu0 0
        %6662 = vmatprep.subr.bf16.mxu0 0
        %6663 = vmatpush2.bf16.msra.mxu0 0
        %6664 = vmatprep.subr.bf16.mxu0 0
        %6665 = vmatpush2.bf16.msra.mxu0 0
        %6666 = vmatprep.subr.bf16.mxu0 0
        %6667 = vmatpush2.bf16.msra.mxu0 0
        %6668 = vmatprep.subr.bf16.mxu0 0
        %6669 = vmatpush2.bf16.msra.mxu0 0
        %6670 = vmatprep.subr.bf16.mxu0 0
        %6671 = vmatpush2.bf16.msra.mxu0 0
        %6672 = vmatprep.subr.bf16.mxu0 0
        %6673 = vmatpush2.bf16.msra.mxu0 0
        %6674 = vmatprep.subr.bf16.mxu0 0
        %6675 = vmatpush2.bf16.msra.mxu0 0
        %6676 = vmatprep.mubr.bf16.mxu0 0
        %6677 = vmatmul.mubr.bf16.gmra.mxu0 %v6642
        %v6678 = vpop.f32.mrf.mxu0
        %v6679 = vadd.f32 %v6628, %v6678
        %v6680 = vpop.f32.mrf.mxu0
        %v6681 = vpop.f32.mrf.mxu0
        %v6682 = vpop.f32.mrf.mxu0
        %6683 = vdwg.mxu0
        %s6684 = scalar_lea.vmem %s10, 12
        %v6685 = vld [vmem:[%s6684] sm:$0xf]
        %v6686 = vld [vmem:[%s19 + $0x17] sm:$0x1]
        %v6687 = vpack.c.bf16 %v6679, %v6679
        %v6688 = vmul.f32 %v6679, %v6679
        %v6689 = vpack.c.bf16 %v6688, %v6688
        %v6691 = vsel %vm1799, %v6687, 0
        %6693 = vmatprep.subr.bf16.mxu0 0
        %6694 = vmatpush1.bf16.msra.mxu0 0
        %6695 = vmatprep.subr.bf16.mxu0 0
        %6696 = vmatpush1.bf16.msra.mxu0 0
        %6697 = vmatprep.subr.bf16.mxu0 0
        %6698 = vmatpush1.bf16.msra.mxu0 0
        %6699 = vmatprep.subr.bf16.mxu0 0
        %6700 = vmatpush1.bf16.msra.mxu0 0
        %6701 = vmatprep.subr.bf16.mxu0 0
        %6702 = vmatpush1.bf16.msra.mxu0 0
        %6703 = vmatprep.subr.bf16.mxu0 0
        %6704 = vmatpush1.bf16.msra.mxu0 0
        %6705 = vmatprep.subr.bf16.mxu0 0
        %6706 = vmatpush1.bf16.msra.mxu0 %v2778
        %6707 = vmatprep.subr.bf16.mxu0 0
        %6708 = vmatpush1.bf16.msra.mxu0 %v2777
        %6709 = vmatprep.subr.bf16.mxu0 0
        %6710 = vmatpush2.bf16.msra.mxu0 0
        %6711 = vmatprep.subr.bf16.mxu0 0
        %6712 = vmatpush2.bf16.msra.mxu0 0
        %6713 = vmatprep.subr.bf16.mxu0 0
        %6714 = vmatpush2.bf16.msra.mxu0 0
        %6715 = vmatprep.subr.bf16.mxu0 0
        %6716 = vmatpush2.bf16.msra.mxu0 0
        %6717 = vmatprep.subr.bf16.mxu0 0
        %6718 = vmatpush2.bf16.msra.mxu0 0
        %6719 = vmatprep.subr.bf16.mxu0 0
        %6720 = vmatpush2.bf16.msra.mxu0 0
        %6721 = vmatprep.subr.bf16.mxu0 0
        %6722 = vmatpush2.bf16.msra.mxu0 0
        %6723 = vmatprep.subr.bf16.mxu0 0
        %6724 = vmatpush2.bf16.msra.mxu0 0
        %6725 = vmatprep.mubr.bf16.mxu0 0
        %6726 = vmatmul.mubr.bf16.gmra.mxu0 %v6691
        %v6727 = vpop.f32.mrf.mxu0
        %v6728 = vadd.f32 0.0, %v6727
        %v6729 = vpop.f32.mrf.mxu0
        %v6730 = vpop.f32.mrf.mxu0
        %v6731 = vpop.f32.mrf.mxu0
        %6732 = vdwg.mxu0
        %v6734 = vsel %vm1799, %v6689, 0
        %6736 = vmatprep.subr.bf16.mxu0 0
        %6737 = vmatpush1.bf16.msra.mxu0 0
        %6738 = vmatprep.subr.bf16.mxu0 0
        %6739 = vmatpush1.bf16.msra.mxu0 0
        %6740 = vmatprep.subr.bf16.mxu0 0
        %6741 = vmatpush1.bf16.msra.mxu0 0
        %6742 = vmatprep.subr.bf16.mxu0 0
        %6743 = vmatpush1.bf16.msra.mxu0 0
        %6744 = vmatprep.subr.bf16.mxu0 0
        %6745 = vmatpush1.bf16.msra.mxu0 0
        %6746 = vmatprep.subr.bf16.mxu0 0
        %6747 = vmatpush1.bf16.msra.mxu0 0
        %6748 = vmatprep.subr.bf16.mxu0 0
        %6749 = vmatpush1.bf16.msra.mxu0 %v2778
        %6750 = vmatprep.subr.bf16.mxu0 0
        %6751 = vmatpush1.bf16.msra.mxu0 %v2777
        %6752 = vmatprep.subr.bf16.mxu0 0
        %6753 = vmatpush2.bf16.msra.mxu0 0
        %6754 = vmatprep.subr.bf16.mxu0 0
        %6755 = vmatpush2.bf16.msra.mxu0 0
        %6756 = vmatprep.subr.bf16.mxu0 0
        %6757 = vmatpush2.bf16.msra.mxu0 0
        %6758 = vmatprep.subr.bf16.mxu0 0
        %6759 = vmatpush2.bf16.msra.mxu0 0
        %6760 = vmatprep.subr.bf16.mxu0 0
        %6761 = vmatpush2.bf16.msra.mxu0 0
        %6762 = vmatprep.subr.bf16.mxu0 0
        %6763 = vmatpush2.bf16.msra.mxu0 0
        %6764 = vmatprep.subr.bf16.mxu0 0
        %6765 = vmatpush2.bf16.msra.mxu0 0
        %6766 = vmatprep.subr.bf16.mxu0 0
        %6767 = vmatpush2.bf16.msra.mxu0 0
        %6768 = vmatprep.mubr.bf16.mxu0 0
        %6769 = vmatmul.mubr.bf16.gmra.mxu0 %v6734
        %v6770 = vpop.f32.mrf.mxu0
        %v6771 = vadd.f32 0.0, %v6770
        %v6772 = vpop.f32.mrf.mxu0
        %v6773 = vpop.f32.mrf.mxu0
        %v6774 = vpop.f32.mrf.mxu0
        %6775 = vdwg.mxu0
        %v6776 = vmul.f32 %v6728, %v6728
        %v6777 = vsub.f32 %v6771, %v6776
        %v6778 = vmax.f32 %v6777, 0.0
        %v6779 = vadd.f32 %v6778, 1e-05
        %v6780 = vrsqrt.pop %v6779
        %v6781 = vpack.c.bf16 %v6780, %v6780
        %v6783 = vsel %vm2541, %v6781, 0
        %v6786 = vsel %vm2545, %v6685, 0
        %6788 = vmatprep.subr.bf16.mxu0 0
        %6789 = vmatpush1.bf16.msra.mxu0 0
        %6790 = vmatprep.subr.bf16.mxu0 0
        %6791 = vmatpush1.bf16.msra.mxu0 0
        %6792 = vmatprep.subr.bf16.mxu0 0
        %6793 = vmatpush1.bf16.msra.mxu0 0
        %6794 = vmatprep.subr.bf16.mxu0 0
        %6795 = vmatpush1.bf16.msra.mxu0 0
        %6796 = vmatprep.subr.bf16.mxu0 0
        %6797 = vmatpush1.bf16.msra.mxu0 0
        %6798 = vmatprep.subr.bf16.mxu0 0
        %6799 = vmatpush1.bf16.msra.mxu0 0
        %6800 = vmatprep.subr.bf16.mxu0 0
        %6801 = vmatpush1.bf16.msra.mxu0 0
        %6802 = vmatprep.subr.bf16.mxu0 0
        %6803 = vmatpush1.bf16.msra.mxu0 %v6786
        %6804 = vmatprep.subr.bf16.mxu0 0
        %6805 = vmatpush2.bf16.msra.mxu0 0
        %6806 = vmatprep.subr.bf16.mxu0 0
        %6807 = vmatpush2.bf16.msra.mxu0 0
        %6808 = vmatprep.subr.bf16.mxu0 0
        %6809 = vmatpush2.bf16.msra.mxu0 0
        %6810 = vmatprep.subr.bf16.mxu0 0
        %6811 = vmatpush2.bf16.msra.mxu0 0
        %6812 = vmatprep.subr.bf16.mxu0 0
        %6813 = vmatpush2.bf16.msra.mxu0 0
        %6814 = vmatprep.subr.bf16.mxu0 0
        %6815 = vmatpush2.bf16.msra.mxu0 0
        %6816 = vmatprep.subr.bf16.mxu0 0
        %6817 = vmatpush2.bf16.msra.mxu0 0
        %6818 = vmatprep.subr.bf16.mxu0 0
        %6819 = vmatpush2.bf16.msra.mxu0 0
        %6820 = vmatprep.mubr.bf16.mxu0 0
        %6821 = vmatmul.mubr.bf16.gmra.mxu0 %v6783
        %v6822 = vpop.f32.mrf.mxu0
        %v6823 = vadd.f32 0.0, %v6822
        %v6824 = vpop.f32.mrf.mxu0
        %v6825 = vpop.f32.mrf.mxu0
        %v6826 = vpop.f32.mrf.mxu0
        %6827 = vdwg.mxu0
        %v6828 = vmul.f32 %v6728, %v6780
        %v6829 = vpack.c.bf16 %v6828, %v6828
        %v6831 = vsel %vm2541, %v6829, 0
        %6833 = vmatprep.subr.bf16.mxu0 0
        %6834 = vmatpush1.bf16.msra.mxu0 0
        %6835 = vmatprep.subr.bf16.mxu0 0
        %6836 = vmatpush1.bf16.msra.mxu0 0
        %6837 = vmatprep.subr.bf16.mxu0 0
        %6838 = vmatpush1.bf16.msra.mxu0 0
        %6839 = vmatprep.subr.bf16.mxu0 0
        %6840 = vmatpush1.bf16.msra.mxu0 0
        %6841 = vmatprep.subr.bf16.mxu0 0
        %6842 = vmatpush1.bf16.msra.mxu0 0
        %6843 = vmatprep.subr.bf16.mxu0 0
        %6844 = vmatpush1.bf16.msra.mxu0 0
        %6845 = vmatprep.subr.bf16.mxu0 0
        %6846 = vmatpush1.bf16.msra.mxu0 0
        %6847 = vmatprep.subr.bf16.mxu0 0
        %6848 = vmatpush1.bf16.msra.mxu0 %v6786
        %6849 = vmatprep.subr.bf16.mxu0 0
        %6850 = vmatpush2.bf16.msra.mxu0 0
        %6851 = vmatprep.subr.bf16.mxu0 0
        %6852 = vmatpush2.bf16.msra.mxu0 0
        %6853 = vmatprep.subr.bf16.mxu0 0
        %6854 = vmatpush2.bf16.msra.mxu0 0
        %6855 = vmatprep.subr.bf16.mxu0 0
        %6856 = vmatpush2.bf16.msra.mxu0 0
        %6857 = vmatprep.subr.bf16.mxu0 0
        %6858 = vmatpush2.bf16.msra.mxu0 0
        %6859 = vmatprep.subr.bf16.mxu0 0
        %6860 = vmatpush2.bf16.msra.mxu0 0
        %6861 = vmatprep.subr.bf16.mxu0 0
        %6862 = vmatpush2.bf16.msra.mxu0 0
        %6863 = vmatprep.subr.bf16.mxu0 0
        %6864 = vmatpush2.bf16.msra.mxu0 0
        %6865 = vmatprep.mubr.bf16.mxu0 0
        %6866 = vmatmul.mubr.bf16.gmra.mxu0 %v6831
        %v6867 = vpop.f32.mrf.mxu0
        %v6868 = vadd.f32 0.0, %v6867
        %v6869 = vpop.f32.mrf.mxu0
        %v6870 = vpop.f32.mrf.mxu0
        %v6871 = vpop.f32.mrf.mxu0
        %6872 = vdwg.mxu0
        %v6873 = vlaneseq
        %v6874 = vshrl.u32 %v6873, 7
        %v6875 = vsub.s32 0, %v6874
        %v6876 = vrot.slane %v6686, %v6875
        %v6877 = vsub.f32 %v6876, %v6868
        %v6878 = vmul.f32 %v6679, %v6823
        %v6879 = vadd.f32 %v6878, %v6877
        %v6880 = vmul.f32 %v6879, 0.5
        %v6881 = vmul.f32 %v6879, %v6879
        %v6882 = vmul.f32 %v6881, %v6879
        %v6883 = vmul.f32 %v6882, 0.044715
        %v6884 = vadd.f32 %v6879, %v6883
        %v6885 = vmul.f32 %v6884, 0.7978846
        %v6886 = vtanh.pop %v6885
        %v6887 = vadd.f32 %v6886, 1.0
        %v6888 = vmul.f32 %v6880, %v6887
        %s6889 = scalar_lea.vmem [#allocation14], 48
        %v6890 = vld [vmem:[%s6889] sm:$0xf]
        %v6891 = vld [vmem:[%s6889 + $0x4] sm:$0xf]
        %v6892 = vld [vmem:[%s6889 + $0x8] sm:$0xf]
        %v6893 = vld [vmem:[%s6889 + $0xc] sm:$0xf]
        %v6894 = vld [vmem:[#allocation19 + $0x8] sm:$0x1]
        %v6895 = vpack.c.bf16 %v6888, %v6888
        %v6896 = vlaneseq
        %v6897 = vshrl.u32 %v6896, 7
        %v6898 = vsub.s32 0, %v6897
        %v6899 = vrot.slane %v6894, %v6898
        %v6904 = vunpack.c.l.b16 %v6890
        %v6905 = vunpack.c.l.b16 %v6891
        %v6906 = vunpack.c.l.b16 %v6892
        %v6907 = vunpack.c.l.b16 %v6893
        %v6908 = vpack.c.b16 %v6905, %v6904
        %v6909 = vpack.c.b16 %v6907, %v6906
        %v6913 = vsel %vm1799, %v6895, 0
        %6915 = vmatprep.subr.bf16.mxu0 0
        %6916 = vmatpush1.bf16.msra.mxu0 0
        %6917 = vmatprep.subr.bf16.mxu0 0
        %6918 = vmatpush1.bf16.msra.mxu0 0
        %6919 = vmatprep.subr.bf16.mxu0 0
        %6920 = vmatpush1.bf16.msra.mxu0 0
        %6921 = vmatprep.subr.bf16.mxu0 0
        %6922 = vmatpush1.bf16.msra.mxu0 0
        %6923 = vmatprep.subr.bf16.mxu0 0
        %6924 = vmatpush1.bf16.msra.mxu0 0
        %6925 = vmatprep.subr.bf16.mxu0 0
        %6926 = vmatpush1.bf16.msra.mxu0 0
        %6927 = vmatprep.subr.bf16.mxu0 0
        %6928 = vmatpush1.bf16.msra.mxu0 %v6909
        %6929 = vmatprep.subr.bf16.mxu0 0
        %6930 = vmatpush1.bf16.msra.mxu0 %v6908
        %6931 = vmatprep.subr.bf16.mxu0 0
        %6932 = vmatpush2.bf16.msra.mxu0 0
        %6933 = vmatprep.subr.bf16.mxu0 0
        %6934 = vmatpush2.bf16.msra.mxu0 0
        %6935 = vmatprep.subr.bf16.mxu0 0
        %6936 = vmatpush2.bf16.msra.mxu0 0
        %6937 = vmatprep.subr.bf16.mxu0 0
        %6938 = vmatpush2.bf16.msra.mxu0 0
        %6939 = vmatprep.subr.bf16.mxu0 0
        %6940 = vmatpush2.bf16.msra.mxu0 0
        %6941 = vmatprep.subr.bf16.mxu0 0
        %6942 = vmatpush2.bf16.msra.mxu0 0
        %6943 = vmatprep.subr.bf16.mxu0 0
        %6944 = vmatpush2.bf16.msra.mxu0 0
        %6945 = vmatprep.subr.bf16.mxu0 0
        %6946 = vmatpush2.bf16.msra.mxu0 0
        %6947 = vmatprep.mubr.bf16.mxu0 0
        %6948 = vmatmul.mubr.bf16.gmra.mxu0 %v6913
        %v6949 = vpop.f32.mrf.mxu0
        %v6950 = vadd.f32 %v6899, %v6949
        %v6951 = vpop.f32.mrf.mxu0
        %v6952 = vpop.f32.mrf.mxu0
        %v6953 = vpop.f32.mrf.mxu0
        %6954 = vdwg.mxu0
        %v6955 = vadd.f32 %v5831, %v6950
        %v6956 = vld [vmem:[#allocation19 + $0x9] sm:$0x1]
        %v6957 = vlaneseq
        %v6958 = vshrl.u32 %v6957, 7
        %v6959 = vsub.s32 0, %v6958
        %v6960 = vrot.slane %v6956, %v6959
        %v6961 = vmul.f32 %v6955, %v6960
        %v6962 = vld [vmem:[#allocation19 + $0xa] sm:$0x1]
        %v6963 = vlaneseq
        %v6964 = vshrl.u32 %v6963, 7
        %v6965 = vsub.s32 0, %v6964
        %v6966 = vrot.slane %v6962, %v6965
        %v6967 = vadd.f32 %v6961, %v6966
        %v6968 = vmul.f32 %v6967, 0.5
        %v6969 = vmul.f32 %v6967, %v6967
        %v6970 = vmul.f32 %v6969, %v6967
        %v6971 = vmul.f32 %v6970, 0.044715
        %v6972 = vadd.f32 %v6967, %v6971
        %v6973 = vmul.f32 %v6972, 0.7978846
        %v6974 = vtanh.pop %v6973
        %v6975 = vadd.f32 %v6974, 1.0
        %v6976 = vmul.f32 %v6968, %v6975
        %v6977 = vld [vmem:[#allocation16] sm:$0xf]
        %v6978 = vld [vmem:[#allocation16 + $0x4] sm:$0xf]
        %v6979 = vld [vmem:[#allocation16 + $0x8] sm:$0xf]
        %v6980 = vld [vmem:[#allocation16 + $0xc] sm:$0xf]
        %v6981 = vld [vmem:[#allocation16 + $0x10] sm:$0xf]
        %v6982 = vld [vmem:[#allocation16 + $0x14] sm:$0xf]
        %v6983 = vld [vmem:[#allocation16 + $0x18] sm:$0xf]
        %v6984 = vld [vmem:[#allocation16 + $0x1c] sm:$0xf]
        %v6985 = vld [vmem:[#allocation16 + $0x20] sm:$0xf]
        %v6986 = vld [vmem:[#allocation16 + $0x24] sm:$0xf]
        %v6987 = vld [vmem:[#allocation16 + $0x28] sm:$0xf]
        %v6988 = vld [vmem:[#allocation16 + $0x2c] sm:$0xf]
        %v6989 = vld [vmem:[#allocation16 + $0x30] sm:$0xf]
        %v6990 = vld [vmem:[#allocation16 + $0x34] sm:$0xf]
        %v6991 = vld [vmem:[#allocation16 + $0x38] sm:$0xf]
        %v6992 = vld [vmem:[#allocation16 + $0x3c] sm:$0xf]
        %v6993 = vld [vmem:[%s20] sm:$0x1]
        %v6994 = vpack.c.bf16 %v6976, %v6976
        %v6995 = vlaneseq
        %v6996 = vshrl.u32 %v6995, 7
        %v6997 = vsub.s32 0, %v6996
        %v6998 = vrot.slane %v6993, %v6997
        %v7015 = vunpack.c.l.b16 %v6977
        %v7016 = vunpack.c.l.b16 %v6978
        %v7017 = vunpack.c.l.b16 %v6979
        %v7018 = vunpack.c.l.b16 %v6980
        %v7019 = vunpack.c.l.b16 %v6981
        %v7020 = vunpack.c.l.b16 %v6982
        %v7021 = vunpack.c.l.b16 %v6983
        %v7022 = vunpack.c.l.b16 %v6984
        %v7023 = vunpack.c.l.b16 %v6985
        %v7024 = vunpack.c.l.b16 %v6986
        %v7025 = vunpack.c.l.b16 %v6987
        %v7026 = vunpack.c.l.b16 %v6988
        %v7027 = vunpack.c.l.b16 %v6989
        %v7028 = vunpack.c.l.b16 %v6990
        %v7029 = vunpack.c.l.b16 %v6991
        %v7030 = vunpack.c.l.b16 %v6992
        %v7031 = vpack.c.b16 %v7016, %v7015
        %v7032 = vpack.c.b16 %v7018, %v7017
        %v7033 = vpack.c.b16 %v7020, %v7019
        %v7034 = vpack.c.b16 %v7022, %v7021
        %v7035 = vpack.c.b16 %v7024, %v7023
        %v7036 = vpack.c.b16 %v7026, %v7025
        %v7037 = vpack.c.b16 %v7028, %v7027
        %v7038 = vpack.c.b16 %v7030, %v7029
        %7047 = vmatprep.subr.bf16.mxu0 0
        %7048 = vmatpush1.bf16.msra.mxu0 %v7038
        %7049 = vmatprep.subr.bf16.mxu0 0
        %7050 = vmatpush1.bf16.msra.mxu0 %v7037
        %7051 = vmatprep.subr.bf16.mxu0 0
        %7052 = vmatpush1.bf16.msra.mxu0 %v7036
        %7053 = vmatprep.subr.bf16.mxu0 0
        %7054 = vmatpush1.bf16.msra.mxu0 %v7035
        %7055 = vmatprep.subr.bf16.mxu0 0
        %7056 = vmatpush1.bf16.msra.mxu0 %v7034
        %7057 = vmatprep.subr.bf16.mxu0 0
        %7058 = vmatpush1.bf16.msra.mxu0 %v7033
        %7059 = vmatprep.subr.bf16.mxu0 0
        %7060 = vmatpush1.bf16.msra.mxu0 %v7032
        %7061 = vmatprep.subr.bf16.mxu0 0
        %7062 = vmatpush1.bf16.msra.mxu0 %v7031
        %7063 = vmatprep.subr.bf16.mxu0 0
        %7064 = vmatpush2.bf16.msra.mxu0 0
        %7065 = vmatprep.subr.bf16.mxu0 0
        %7066 = vmatpush2.bf16.msra.mxu0 0
        %7067 = vmatprep.subr.bf16.mxu0 0
        %7068 = vmatpush2.bf16.msra.mxu0 0
        %7069 = vmatprep.subr.bf16.mxu0 0
        %7070 = vmatpush2.bf16.msra.mxu0 0
        %7071 = vmatprep.subr.bf16.mxu0 0
        %7072 = vmatpush2.bf16.msra.mxu0 0
        %7073 = vmatprep.subr.bf16.mxu0 0
        %7074 = vmatpush2.bf16.msra.mxu0 0
        %7075 = vmatprep.subr.bf16.mxu0 0
        %7076 = vmatpush2.bf16.msra.mxu0 0
        %7077 = vmatprep.subr.bf16.mxu0 0
        %7078 = vmatpush2.bf16.msra.mxu0 0
        %7079 = vmatprep.mubr.bf16.mxu0 0
        %7080 = vmatmul.mubr.bf16.gmra.mxu0 %v6994
        %v7081 = vpop.f32.mrf.mxu0
        %v7082 = vadd.f32 %v6998, %v7081
        %v7083 = vpop.f32.mrf.mxu0
        %v7084 = vpop.f32.mrf.mxu0
        %v7085 = vpop.f32.mrf.mxu0
        %7086 = vdwg.mxu0
        %7087 = vadd.xlane.f32.xlu0 %v7082
        %v7088 = vpop.xlane.xlu0 %7087
        %v7089 = vrcp.pop 128.0
        %v7090 = vmul.f32 %v7088, %v7089
        %v7091 = vmul.f32 %v7082, %v7082
        %7092 = vadd.xlane.f32.xlu0 %v7091
        %v7093 = vpop.xlane.xlu0 %7092
        %v7094 = vmul.f32 %v7093, %v7089
        %v7095 = vmul.f32 %v7090, %v7090
        %v7096 = vsub.f32 %v7094, %v7095
        %v7097 = vmax.f32 %v7096, 0.0
        %v7098 = vsub.f32 %v7082, %v7090
        %v7099 = vld [vmem:[%s20 + $0x1] sm:$0x1]
        %v7100 = vadd.f32 %v7097, 1e-05
        %v7101 = vrsqrt.pop %v7100
        %v7102 = vlaneseq
        %v7103 = vshrl.u32 %v7102, 7
        %v7104 = vsub.s32 0, %v7103
        %v7105 = vrot.slane %v7099, %v7104
        %v7106 = vmul.f32 %v7105, %v7101
        %v7107 = vmul.f32 %v7098, %v7106
        %v7108 = vld [vmem:[%s20 + $0x2] sm:$0x1]
        %v7109 = vlaneseq
        %v7110 = vshrl.u32 %v7109, 7
        %v7111 = vsub.s32 0, %v7110
        %v7112 = vrot.slane %v7108, %v7111
        %v7113 = vadd.f32 %v7107, %v7112
        %v7114 = vmul.f32 %v7113, 0.5
        %v7115 = vmul.f32 %v7113, %v7113
        %v7116 = vmul.f32 %v7115, %v7113
        %v7117 = vmul.f32 %v7116, 0.044715
        %v7118 = vadd.f32 %v7113, %v7117
        %v7119 = vmul.f32 %v7118, 0.7978846
        %v7120 = vtanh.pop %v7119
        %v7121 = vadd.f32 %v7120, 1.0
        %v7122 = vmul.f32 %v7114, %v7121
        %v7123 = vld [vmem:[#allocation17] sm:$0xf]
        %v7124 = vld [vmem:[#allocation17 + $0x4] sm:$0xf]
        %v7125 = vld [vmem:[#allocation17 + $0x8] sm:$0xf]
        %v7126 = vld [vmem:[#allocation17 + $0xc] sm:$0xf]
        %v7127 = vld [vmem:[#allocation17 + $0x10] sm:$0xf]
        %v7128 = vld [vmem:[#allocation17 + $0x14] sm:$0xf]
        %v7129 = vld [vmem:[#allocation17 + $0x18] sm:$0xf]
        %v7130 = vld [vmem:[#allocation17 + $0x1c] sm:$0xf]
        %v7131 = vld [vmem:[#allocation17 + $0x20] sm:$0xf]
        %v7132 = vld [vmem:[#allocation17 + $0x24] sm:$0xf]
        %v7133 = vld [vmem:[#allocation17 + $0x28] sm:$0xf]
        %v7134 = vld [vmem:[#allocation17 + $0x2c] sm:$0xf]
        %v7135 = vld [vmem:[#allocation17 + $0x30] sm:$0xf]
        %v7136 = vld [vmem:[#allocation17 + $0x34] sm:$0xf]
        %v7137 = vld [vmem:[#allocation17 + $0x38] sm:$0xf]
        %v7138 = vld [vmem:[#allocation17 + $0x3c] sm:$0xf]
        %v7139 = vld [vmem:[%s20 + $0x3] sm:$0x1]
        %v7140 = vpack.c.bf16 %v7122, %v7122
        %v7141 = vlaneseq
        %v7142 = vshrl.u32 %v7141, 7
        %v7143 = vsub.s32 0, %v7142
        %v7144 = vrot.slane %v7139, %v7143
        %v7161 = vunpack.c.l.b16 %v7123
        %v7162 = vunpack.c.l.b16 %v7124
        %v7163 = vunpack.c.l.b16 %v7125
        %v7164 = vunpack.c.l.b16 %v7126
        %v7165 = vunpack.c.l.b16 %v7127
        %v7166 = vunpack.c.l.b16 %v7128
        %v7167 = vunpack.c.l.b16 %v7129
        %v7168 = vunpack.c.l.b16 %v7130
        %v7169 = vunpack.c.l.b16 %v7131
        %v7170 = vunpack.c.l.b16 %v7132
        %v7171 = vunpack.c.l.b16 %v7133
        %v7172 = vunpack.c.l.b16 %v7134
        %v7173 = vunpack.c.l.b16 %v7135
        %v7174 = vunpack.c.l.b16 %v7136
        %v7175 = vunpack.c.l.b16 %v7137
        %v7176 = vunpack.c.l.b16 %v7138
        %v7177 = vpack.c.b16 %v7162, %v7161
        %v7178 = vpack.c.b16 %v7164, %v7163
        %v7179 = vpack.c.b16 %v7166, %v7165
        %v7180 = vpack.c.b16 %v7168, %v7167
        %v7181 = vpack.c.b16 %v7170, %v7169
        %v7182 = vpack.c.b16 %v7172, %v7171
        %v7183 = vpack.c.b16 %v7174, %v7173
        %v7184 = vpack.c.b16 %v7176, %v7175
        %7193 = vmatprep.subr.bf16.mxu0 0
        %7194 = vmatpush1.bf16.msra.mxu0 %v7184
        %7195 = vmatprep.subr.bf16.mxu0 0
        %7196 = vmatpush1.bf16.msra.mxu0 %v7183
        %7197 = vmatprep.subr.bf16.mxu0 0
        %7198 = vmatpush1.bf16.msra.mxu0 %v7182
        %7199 = vmatprep.subr.bf16.mxu0 0
        %7200 = vmatpush1.bf16.msra.mxu0 %v7181
        %7201 = vmatprep.subr.bf16.mxu0 0
        %7202 = vmatpush1.bf16.msra.mxu0 %v7180
        %7203 = vmatprep.subr.bf16.mxu0 0
        %7204 = vmatpush1.bf16.msra.mxu0 %v7179
        %7205 = vmatprep.subr.bf16.mxu0 0
        %7206 = vmatpush1.bf16.msra.mxu0 %v7178
        %7207 = vmatprep.subr.bf16.mxu0 0
        %7208 = vmatpush1.bf16.msra.mxu0 %v7177
        %7209 = vmatprep.subr.bf16.mxu0 0
        %7210 = vmatpush2.bf16.msra.mxu0 0
        %7211 = vmatprep.subr.bf16.mxu0 0
        %7212 = vmatpush2.bf16.msra.mxu0 0
        %7213 = vmatprep.subr.bf16.mxu0 0
        %7214 = vmatpush2.bf16.msra.mxu0 0
        %7215 = vmatprep.subr.bf16.mxu0 0
        %7216 = vmatpush2.bf16.msra.mxu0 0
        %7217 = vmatprep.subr.bf16.mxu0 0
        %7218 = vmatpush2.bf16.msra.mxu0 0
        %7219 = vmatprep.subr.bf16.mxu0 0
        %7220 = vmatpush2.bf16.msra.mxu0 0
        %7221 = vmatprep.subr.bf16.mxu0 0
        %7222 = vmatpush2.bf16.msra.mxu0 0
        %7223 = vmatprep.subr.bf16.mxu0 0
        %7224 = vmatpush2.bf16.msra.mxu0 0
        %7225 = vmatprep.mubr.bf16.mxu0 0
        %7226 = vmatmul.mubr.bf16.gmra.mxu0 %v7140
        %v7227 = vpop.f32.mrf.mxu0
        %v7228 = vadd.f32 %v7144, %v7227
        %v7229 = vpop.f32.mrf.mxu0
        %v7230 = vpop.f32.mrf.mxu0
        %v7231 = vpop.f32.mrf.mxu0
        %7232 = vdwg.mxu0
        %v7233 = vadd.f32 %v7082, %v7228
        %7234 = vst [vmem:[%s817] sm:$0xff] %v7233
        %s7235 = sand.u32 %s497, 1
        %s7236 = scalar_lea.sflag [#allocation4], %s7235
        %s7237 = sand.u32 %s497, 1
        %s7238 = smul.addr %s7237, 8
        %s7239 = scalar_lea.vmem [#allocation20], %s7238
        // Predicated region
        $region149: #{tpu_custom_call.1} parent=103 // pred_check
          %p7240 = pneg %p507
        $region150: #{tpu_custom_call.1} parent=103 // pred_check_branch
          %7242 = sbr.rel (%p7240) target = $region152
        $region151: #{tpu_custom_call.1} parent=103 // pred_region
          %s7244 = ssub.s32 128, 128
          %7245 = vsyncadd %s7236, %s7244
          %s7246 = smul.addr %s43, 128
          %s7247 = scalar_lea.hbm %s21, %s7246
          %s7249 = sshll.u32 %s7239, 4
          %s7250 = int_to_ptr.vmem [resolvable:$true] %s7249
          %7252 = dma.vmem_to_hbm [thread:$0]  %s7250, 128, %s7247, %s7236
        $region152: #{tpu_custom_call.1} parent=103 // pred_fallthru
          _
      $region104: #{tpu_custom_call.1} parent=5 // pred_fallthru
        _
      %p7253 = scmp.le.s32.totalorder 2, %s38
      // Predicated region
      $region153: #{tpu_custom_call.1} parent=5 // pred_check
        %p7254 = pneg %p7253
      $region154: #{tpu_custom_call.1} parent=5 // pred_check_branch
        %7256 = sbr.rel (%p7254) target = $region156
      $region155: #{tpu_custom_call.1} parent=5 // pred_region
        %s7257 = ssub.s32 %s38, 2
        // Predicated region
        $region157: #{tpu_custom_call.1} parent=155 // pred_check
          %p7258 = pneg %p513
        $region158: #{tpu_custom_call.1} parent=155 // pred_check_branch
          %7260 = sbr.rel (%p7258) target = $region160
        $region159: #{tpu_custom_call.1} parent=155 // pred_region
          %s7261 = sand.u32 %s498, 1
          %s7262 = scalar_lea.sflag [#allocation4], %s7261
          %s7263 = sand.u32 %s498, 1
          %s7264 = smul.addr %s7263, 8
          %s7265 = scalar_lea.vmem [#allocation20], %s7264
          %7266 = dma.done %s7262, 128
        $region160: #{tpu_custom_call.1} parent=155 // pred_fallthru
          _
      $region156: #{tpu_custom_call.1} parent=5 // pred_fallthru
        _
    $region6: #{tpu_custom_call.1} parent=1 // loop_footer
      %s42 = sadd.s32 1, %s38
    $region7: #{tpu_custom_call.1} parent=1 // loop_footer_branch
      %37 = sbr.rel target = $region3
    $region8: #{tpu_custom_call.1} parent=1 // loop_exit
      _
    %7267 = vsyncpa [#allocation3], 1
    %s7268 = scalar_lea.sflag [#allocation3], 1
    %7269 = vsyncpa %s7268, 1
    %7270 = vsyncpa [#allocation6], 1
    %7271 = vsyncpa [#allocation9], 1
    %7272 = vsyncpa [#allocation12], 1
    %7273 = vsyncpa [#allocation15], 1
    %7274 = vsyncpa [#allocation18], 1
    %7275 = vsyncpa [#allocation4], 1
    %s7276 = scalar_lea.sflag [#allocation4], 1
    %7277 = vsyncpa %s7276, 1

</llo_original>
